<compile_context>
chip_gen: v7x
topology: tpu7x:2x2x1
jax: 0.10.0
libtpu: 0.0.40
codegen_flags: <defaults>
</compile_context>

<pallas_src>
import functools
import numpy as np
import jax
import jax.numpy as jnp
from jax.experimental import pallas as pl
from jax.experimental.pallas import tpu as pltpu

EPS = 1e-5
K = 3            # kernel_size
GROUPS = 64


def _fused_conv_kernel(x_ref, w_ref, b_ref, out_ref, *, ib, H, W, C, Cout):
    # x_ref : (ib, H+2, W+2, C)  bf16  zero-padded NHWC slab
    # w_ref : (9, C, Cout)       bf16  per-tap fused weight (BN scales folded in)
    # b_ref : (1, Cout)          f32   summed BN shifts
    M = ib * H * W
    acc = jnp.zeros((M, Cout), jnp.float32)
    # 9 accumulating per-tap MXU matmuls (shifted windows of the padded input).
    for kh in range(K):
        for kw in range(K):
            lhs = x_ref[:, kh:kh + H, kw:kw + W, :].reshape(M, C)
            acc = acc + jnp.dot(lhs, w_ref[kh * K + kw],
                                preferred_element_type=jnp.float32)
    acc = acc + b_ref[...]                       # single fused bias
    out_ref[...] = acc.reshape(ib, H, W, Cout).astype(out_ref.dtype)


def paradise_a_conv_forward(x_nchw, packed, *, max_rows_per_step=2048):
    """x_nchw: (N, C, H, W) float32. Returns (N, Cout, H, W) float32."""
    N, C, H, W = x_nchw.shape
    w_taps = packed["w_taps"]       # (9, C, Cout) bf16
    bias = packed["bias"]           # (1, Cout) f32
    Cout = w_taps.shape[-1]

    # NCHW -> NHWC, zero-pad spatial by 1, cast to bf16 (native MXU rate,
    # halves HBM traffic for the activations).
    x_nhwc = jnp.transpose(x_nchw, (0, 2, 3, 1))
    x_pad = jnp.pad(x_nhwc, ((0, 0), (1, 1), (1, 1), (0, 0))).astype(jnp.bfloat16)

    # images per grid step: largest divisor of N keeping M = ib*H*W bounded.
    ib = 1
    for d in range(N, 0, -1):
        if N % d == 0 and d * H * W <= max_rows_per_step:
            ib = d
            break

    kernel = functools.partial(_fused_conv_kernel, ib=ib, H=H, W=W, C=C, Cout=Cout)

    out_nhwc = pl.pallas_call(
        kernel,
        out_shape=jax.ShapeDtypeStruct((N, H, W, Cout), jnp.float32),
        grid_spec=pltpu.PrefetchScalarGridSpec(
            num_scalar_prefetch=0,
            grid=(N // ib,),
            in_specs=[
                pl.BlockSpec((ib, H + 2, W + 2, C), lambda i: (i, 0, 0, 0)),
                pl.BlockSpec(w_taps.shape, lambda i: (0, 0, 0)),
                pl.BlockSpec(bias.shape, lambda i: (0, 0)),
            ],
            out_specs=pl.BlockSpec((ib, H, W, Cout), lambda i: (i, 0, 0, 0)),
        ),
        compiler_params=pltpu.CompilerParams(dimension_semantics=("parallel",)),
    )(x_pad, w_taps, bias)

    return jnp.transpose(out_nhwc, (0, 3, 1, 2))    # back to NCHW


# ---------------- deterministic parameter construction (synthetic) ----------------

def init_raw_params(key, cin, cout):
    keys = jax.random.split(key, 12)

    def conv_w(k_, shape):
        return jax.random.normal(k_, shape, jnp.float32) * 0.1

    raw = {
        "w_ori": conv_w(keys[0], (cout, cin, K, K)),
        "w_new": conv_w(keys[1], (cout, cin, K, K)),
        "w_sq":  conv_w(keys[2], (cout, cin, K, K)),
        "w_ver": conv_w(keys[3], (cout, cin, K, 1)),
        "w_hor": conv_w(keys[4], (cout, cin, 1, K)),
        "w_grp": conv_w(keys[5], (cout, cin // GROUPS, K, K)),
    }

    def bn(k_):
        k1, k2, k3, k4 = jax.random.split(k_, 4)
        gamma = jax.random.uniform(k1, (cout,), jnp.float32, 0.5, 1.5)
        beta = jax.random.normal(k2, (cout,), jnp.float32) * 0.1
        mean = jax.random.normal(k3, (cout,), jnp.float32) * 0.1
        var = jax.random.uniform(k4, (cout,), jnp.float32, 0.5, 1.5)
        return gamma, beta, mean, var

    # order: ori, new, square, ver, hor, group
    raw["bns"] = [bn(keys[6 + i]) for i in range(6)]
    return raw


def pack_params(raw, cin, cout):
    """Fuse all six conv+BN branches into one 3x3 weight + one bias (eval-mode)."""
    # Embed the (3,1)/(1,3) kernels into full 3x3 (zeros elsewhere): exact for
    # stride=1 with their respective paddings (1,0)/(0,1).
    w_ver_full = jnp.zeros((cout, cin, K, K), jnp.float32).at[:, :, :, K // 2].set(
        raw["w_ver"][:, :, :, 0])
    w_hor_full = jnp.zeros((cout, cin, K, K), jnp.float32).at[:, :, K // 2, :].set(
        raw["w_hor"][:, :, 0, :])

    # Embed the grouped conv (groups=64) as a block-diagonal dense 3x3 weight.
    og, ig = cout // GROUPS, cin // GROUPS
    w_grp_full = jnp.zeros((cout, cin, K, K), jnp.float32)
    for g in range(GROUPS):
        w_grp_full = w_grp_full.at[g * og:(g + 1) * og, g * ig:(g + 1) * ig].set(
            raw["w_grp"][g * og:(g + 1) * og])

    dense = [raw["w_ori"], raw["w_new"], raw["w_sq"],
             w_ver_full, w_hor_full, w_grp_full]

    # Fold each branch's eval-mode BN scale into its weights; sum the shifts.
    w_fused = jnp.zeros((cout, cin, K, K), jnp.float32)
    bias = jnp.zeros((cout,), jnp.float32)
    for w, (gamma, beta, mean, var) in zip(dense, raw["bns"]):
        s = gamma / jnp.sqrt(var + EPS)
        w_fused = w_fused + w * s[:, None, None, None]
        bias = bias + (beta - mean * s)

    # (Cout, Cin, KH, KW) -> (KH*KW, Cin, Cout), tap-major, bf16 for the MXU.
    w_taps = jnp.transpose(w_fused, (2, 3, 1, 0)).reshape(K * K, cin, cout)
    return {"w_taps": w_taps.astype(jnp.bfloat16),
            "bias": bias[None, :].astype(jnp.float32)}


# ---------------- pure-JAX reference (original per-branch, f32) ----------------

def reference_forward(x, raw):
    def conv(xx, w, pad, g=1):
        return jax.lax.conv_general_dilated(
            xx, w, (1, 1), pad,
            dimension_numbers=("NCHW", "OIHW", "NCHW"),
            feature_group_count=g,
            precision=jax.lax.Precision.HIGHEST)

    def bn(y, p):
        gamma, beta, mean, var = p
        c = lambda v: v[None, :, None, None]
        return (y - c(mean)) / jnp.sqrt(c(var) + EPS) * c(gamma) + c(beta)

    bns = raw["bns"]
    out = bn(conv(x, raw["w_ori"], ((1, 1), (1, 1))), bns[0])
    out = out + bn(conv(x, raw["w_new"], ((1, 1), (1, 1))), bns[1])
    out = out + bn(conv(x, raw["w_sq"], ((1, 1), (1, 1))), bns[2])
    out = out + bn(conv(x, raw["w_ver"], ((1, 1), (0, 0))), bns[3])
    out = out + bn(conv(x, raw["w_hor"], ((0, 0), (1, 1))), bns[4])
    out = out + bn(conv(x, raw["w_grp"], ((1, 1), (1, 1)), g=GROUPS), bns[5])
    return out


if __name__ == "__main__":
    key = jax.random.PRNGKey(0)
    k_x, k_p = jax.random.split(key)

    # groups=64 in the module requires channels to be a multiple of 64.
    N, C, H, W = 2, 64, 16, 16
    x = jax.random.normal(k_x, (N, C, H, W), jnp.float32)

    raw = init_raw_params(k_p, C, C)
    packed = pack_params(raw, C, C)

    out = jax.block_until_ready(paradise_a_conv_forward(x, packed))
    ref = jax.block_until_ready(reference_forward(x, raw))
    assert out.shape == (N, C, H, W)

    # bf16 activations/weights (f32 accumulation) vs. an f32 per-branch
    # reference -> tolerance loosened accordingly (errors ~1e-2 absolute).
    np.testing.assert_allclose(np.asarray(out), np.asarray(ref),
                               rtol=3e-2, atol=1.5e-1)

    print("KERNEL_OK")
</pallas_src>

<mosaic_0001>
module attributes {stable_mosaic.version = 11 : i64} {
  func.func @_fused_conv_kernel(%arg0: i32, %arg1: memref<2x18x18x64xbf16, #tpu.memory_space<vmem>>, %arg2: memref<9x64x64xbf16, #tpu.memory_space<vmem>>, %arg3: memref<1x64xf32, #tpu.memory_space<vmem>>, %arg4: memref<2x16x16x64xf32, #tpu.memory_space<vmem>>) attributes {dimension_semantics = [#tpu.dimension_semantics<parallel>], iteration_bounds = array<i64: 1>, scalar_prefetch = 0 : i64, scratch_operands = 0 : i64, tpu.core_type = #tpu.core_type<tc>, window_params = [{transform_indices = @transform_0, window_bounds = array<i64: 2, 18, 18, 64>}, {pipeline_mode = #tpu.pipeline_mode<synchronous>, transform_indices = @transform_1, window_bounds = array<i64: 9, 64, 64>}, {pipeline_mode = #tpu.pipeline_mode<synchronous>, transform_indices = @transform_2, window_bounds = array<i64: 1, 64>}, {transform_indices = @transform_3, window_bounds = array<i64: 2, 16, 16, 64>}]} {
    %cst = arith.constant 0.000000e+00 : f32
    %0 = vector.broadcast %cst : f32 to vector<512x64xf32>
    %c0 = arith.constant 0 : index
    %c0_0 = arith.constant 0 : index
    %c0_1 = arith.constant 0 : index
    %c0_2 = arith.constant 0 : index
    %1 = vector.load %arg1[%c0, %c0_0, %c0_1, %c0_2] : memref<2x18x18x64xbf16, #tpu.memory_space<vmem>>, vector<2x16x16x64xbf16>
    %2 = vector.shape_cast %1 : vector<2x16x16x64xbf16> to vector<512x64xbf16>
    %c0_3 = arith.constant 0 : index
    %c0_4 = arith.constant 0 : index
    %c0_5 = arith.constant 0 : index
    %3 = vector.load %arg2[%c0_3, %c0_4, %c0_5] : memref<9x64x64xbf16, #tpu.memory_space<vmem>>, vector<1x64x64xbf16>
    %4 = vector.shape_cast %3 : vector<1x64x64xbf16> to vector<64x64xbf16>
    %cst_6 = arith.constant dense<0.000000e+00> : vector<512x64xf32>
    %5 = tpu.matmul %2, %4, %cst_6 {dimension_numbers = #tpu.dot_dimension_numbers<[1], [0], [0], [1], [0, 0, 1, 1], [], []>} : vector<512x64xbf16>, vector<64x64xbf16>, vector<512x64xf32> -> vector<512x64xf32>
    %6 = arith.addf %0, %5 : vector<512x64xf32>
    %c0_7 = arith.constant 0 : index
    %c0_8 = arith.constant 0 : index
    %c1 = arith.constant 1 : index
    %c0_9 = arith.constant 0 : index
    %7 = vector.load %arg1[%c0_7, %c0_8, %c1, %c0_9] : memref<2x18x18x64xbf16, #tpu.memory_space<vmem>>, vector<2x16x16x64xbf16>
    %8 = vector.shape_cast %7 : vector<2x16x16x64xbf16> to vector<512x64xbf16>
    %c1_10 = arith.constant 1 : index
    %c0_11 = arith.constant 0 : index
    %c0_12 = arith.constant 0 : index
    %9 = vector.load %arg2[%c1_10, %c0_11, %c0_12] : memref<9x64x64xbf16, #tpu.memory_space<vmem>>, vector<1x64x64xbf16>
    %10 = vector.shape_cast %9 : vector<1x64x64xbf16> to vector<64x64xbf16>
    %cst_13 = arith.constant dense<0.000000e+00> : vector<512x64xf32>
    %11 = tpu.matmul %8, %10, %cst_13 {dimension_numbers = #tpu.dot_dimension_numbers<[1], [0], [0], [1], [0, 0, 1, 1], [], []>} : vector<512x64xbf16>, vector<64x64xbf16>, vector<512x64xf32> -> vector<512x64xf32>
    %12 = arith.addf %6, %11 : vector<512x64xf32>
    %c0_14 = arith.constant 0 : index
    %c0_15 = arith.constant 0 : index
    %c2 = arith.constant 2 : index
    %c0_16 = arith.constant 0 : index
    %13 = vector.load %arg1[%c0_14, %c0_15, %c2, %c0_16] : memref<2x18x18x64xbf16, #tpu.memory_space<vmem>>, vector<2x16x16x64xbf16>
    %14 = vector.shape_cast %13 : vector<2x16x16x64xbf16> to vector<512x64xbf16>
    %c2_17 = arith.constant 2 : index
    %c0_18 = arith.constant 0 : index
    %c0_19 = arith.constant 0 : index
    %15 = vector.load %arg2[%c2_17, %c0_18, %c0_19] : memref<9x64x64xbf16, #tpu.memory_space<vmem>>, vector<1x64x64xbf16>
    %16 = vector.shape_cast %15 : vector<1x64x64xbf16> to vector<64x64xbf16>
    %cst_20 = arith.constant dense<0.000000e+00> : vector<512x64xf32>
    %17 = tpu.matmul %14, %16, %cst_20 {dimension_numbers = #tpu.dot_dimension_numbers<[1], [0], [0], [1], [0, 0, 1, 1], [], []>} : vector<512x64xbf16>, vector<64x64xbf16>, vector<512x64xf32> -> vector<512x64xf32>
    %18 = arith.addf %12, %17 : vector<512x64xf32>
    %c0_21 = arith.constant 0 : index
    %c1_22 = arith.constant 1 : index
    %c0_23 = arith.constant 0 : index
    %c0_24 = arith.constant 0 : index
    %19 = vector.load %arg1[%c0_21, %c1_22, %c0_23, %c0_24] : memref<2x18x18x64xbf16, #tpu.memory_space<vmem>>, vector<2x16x16x64xbf16>
    %20 = vector.shape_cast %19 : vector<2x16x16x64xbf16> to vector<512x64xbf16>
    %c3 = arith.constant 3 : index
    %c0_25 = arith.constant 0 : index
    %c0_26 = arith.constant 0 : index
    %21 = vector.load %arg2[%c3, %c0_25, %c0_26] : memref<9x64x64xbf16, #tpu.memory_space<vmem>>, vector<1x64x64xbf16>
    %22 = vector.shape_cast %21 : vector<1x64x64xbf16> to vector<64x64xbf16>
    %cst_27 = arith.constant dense<0.000000e+00> : vector<512x64xf32>
    %23 = tpu.matmul %20, %22, %cst_27 {dimension_numbers = #tpu.dot_dimension_numbers<[1], [0], [0], [1], [0, 0, 1, 1], [], []>} : vector<512x64xbf16>, vector<64x64xbf16>, vector<512x64xf32> -> vector<512x64xf32>
    %24 = arith.addf %18, %23 : vector<512x64xf32>
    %c0_28 = arith.constant 0 : index
    %c1_29 = arith.constant 1 : index
    %c1_30 = arith.constant 1 : index
    %c0_31 = arith.constant 0 : index
    %25 = vector.load %arg1[%c0_28, %c1_29, %c1_30, %c0_31] : memref<2x18x18x64xbf16, #tpu.memory_space<vmem>>, vector<2x16x16x64xbf16>
    %26 = vector.shape_cast %25 : vector<2x16x16x64xbf16> to vector<512x64xbf16>
    %c4 = arith.constant 4 : index
    %c0_32 = arith.constant 0 : index
    %c0_33 = arith.constant 0 : index
    %27 = vector.load %arg2[%c4, %c0_32, %c0_33] : memref<9x64x64xbf16, #tpu.memory_space<vmem>>, vector<1x64x64xbf16>
    %28 = vector.shape_cast %27 : vector<1x64x64xbf16> to vector<64x64xbf16>
    %cst_34 = arith.constant dense<0.000000e+00> : vector<512x64xf32>
    %29 = tpu.matmul %26, %28, %cst_34 {dimension_numbers = #tpu.dot_dimension_numbers<[1], [0], [0], [1], [0, 0, 1, 1], [], []>} : vector<512x64xbf16>, vector<64x64xbf16>, vector<512x64xf32> -> vector<512x64xf32>
    %30 = arith.addf %24, %29 : vector<512x64xf32>
    %c0_35 = arith.constant 0 : index
    %c1_36 = arith.constant 1 : index
    %c2_37 = arith.constant 2 : index
    %c0_38 = arith.constant 0 : index
    %31 = vector.load %arg1[%c0_35, %c1_36, %c2_37, %c0_38] : memref<2x18x18x64xbf16, #tpu.memory_space<vmem>>, vector<2x16x16x64xbf16>
    %32 = vector.shape_cast %31 : vector<2x16x16x64xbf16> to vector<512x64xbf16>
    %c5 = arith.constant 5 : index
    %c0_39 = arith.constant 0 : index
    %c0_40 = arith.constant 0 : index
    %33 = vector.load %arg2[%c5, %c0_39, %c0_40] : memref<9x64x64xbf16, #tpu.memory_space<vmem>>, vector<1x64x64xbf16>
    %34 = vector.shape_cast %33 : vector<1x64x64xbf16> to vector<64x64xbf16>
    %cst_41 = arith.constant dense<0.000000e+00> : vector<512x64xf32>
    %35 = tpu.matmul %32, %34, %cst_41 {dimension_numbers = #tpu.dot_dimension_numbers<[1], [0], [0], [1], [0, 0, 1, 1], [], []>} : vector<512x64xbf16>, vector<64x64xbf16>, vector<512x64xf32> -> vector<512x64xf32>
    %36 = arith.addf %30, %35 : vector<512x64xf32>
    %c0_42 = arith.constant 0 : index
    %c2_43 = arith.constant 2 : index
    %c0_44 = arith.constant 0 : index
    %c0_45 = arith.constant 0 : index
    %37 = vector.load %arg1[%c0_42, %c2_43, %c0_44, %c0_45] : memref<2x18x18x64xbf16, #tpu.memory_space<vmem>>, vector<2x16x16x64xbf16>
    %38 = vector.shape_cast %37 : vector<2x16x16x64xbf16> to vector<512x64xbf16>
    %c6 = arith.constant 6 : index
    %c0_46 = arith.constant 0 : index
    %c0_47 = arith.constant 0 : index
    %39 = vector.load %arg2[%c6, %c0_46, %c0_47] : memref<9x64x64xbf16, #tpu.memory_space<vmem>>, vector<1x64x64xbf16>
    %40 = vector.shape_cast %39 : vector<1x64x64xbf16> to vector<64x64xbf16>
    %cst_48 = arith.constant dense<0.000000e+00> : vector<512x64xf32>
    %41 = tpu.matmul %38, %40, %cst_48 {dimension_numbers = #tpu.dot_dimension_numbers<[1], [0], [0], [1], [0, 0, 1, 1], [], []>} : vector<512x64xbf16>, vector<64x64xbf16>, vector<512x64xf32> -> vector<512x64xf32>
    %42 = arith.addf %36, %41 : vector<512x64xf32>
    %c0_49 = arith.constant 0 : index
    %c2_50 = arith.constant 2 : index
    %c1_51 = arith.constant 1 : index
    %c0_52 = arith.constant 0 : index
    %43 = vector.load %arg1[%c0_49, %c2_50, %c1_51, %c0_52] : memref<2x18x18x64xbf16, #tpu.memory_space<vmem>>, vector<2x16x16x64xbf16>
    %44 = vector.shape_cast %43 : vector<2x16x16x64xbf16> to vector<512x64xbf16>
    %c7 = arith.constant 7 : index
    %c0_53 = arith.constant 0 : index
    %c0_54 = arith.constant 0 : index
    %45 = vector.load %arg2[%c7, %c0_53, %c0_54] : memref<9x64x64xbf16, #tpu.memory_space<vmem>>, vector<1x64x64xbf16>
    %46 = vector.shape_cast %45 : vector<1x64x64xbf16> to vector<64x64xbf16>
    %cst_55 = arith.constant dense<0.000000e+00> : vector<512x64xf32>
    %47 = tpu.matmul %44, %46, %cst_55 {dimension_numbers = #tpu.dot_dimension_numbers<[1], [0], [0], [1], [0, 0, 1, 1], [], []>} : vector<512x64xbf16>, vector<64x64xbf16>, vector<512x64xf32> -> vector<512x64xf32>
    %48 = arith.addf %42, %47 : vector<512x64xf32>
    %c0_56 = arith.constant 0 : index
    %c2_57 = arith.constant 2 : index
    %c2_58 = arith.constant 2 : index
    %c0_59 = arith.constant 0 : index
    %49 = vector.load %arg1[%c0_56, %c2_57, %c2_58, %c0_59] : memref<2x18x18x64xbf16, #tpu.memory_space<vmem>>, vector<2x16x16x64xbf16>
    %50 = vector.shape_cast %49 : vector<2x16x16x64xbf16> to vector<512x64xbf16>
    %c8 = arith.constant 8 : index
    %c0_60 = arith.constant 0 : index
    %c0_61 = arith.constant 0 : index
    %51 = vector.load %arg2[%c8, %c0_60, %c0_61] : memref<9x64x64xbf16, #tpu.memory_space<vmem>>, vector<1x64x64xbf16>
    %52 = vector.shape_cast %51 : vector<1x64x64xbf16> to vector<64x64xbf16>
    %cst_62 = arith.constant dense<0.000000e+00> : vector<512x64xf32>
    %53 = tpu.matmul %50, %52, %cst_62 {dimension_numbers = #tpu.dot_dimension_numbers<[1], [0], [0], [1], [0, 0, 1, 1], [], []>} : vector<512x64xbf16>, vector<64x64xbf16>, vector<512x64xf32> -> vector<512x64xf32>
    %54 = arith.addf %48, %53 : vector<512x64xf32>
    %c0_63 = arith.constant 0 : index
    %c0_64 = arith.constant 0 : index
    %55 = vector.load %arg3[%c0_63, %c0_64] : memref<1x64xf32, #tpu.memory_space<vmem>>, vector<1x64xf32>
    %56 = vector.broadcast %55 : vector<1x64xf32> to vector<512x64xf32>
    %57 = arith.addf %54, %56 : vector<512x64xf32>
    %58 = vector.shape_cast %57 : vector<512x64xf32> to vector<2x16x16x64xf32>
    %c0_65 = arith.constant 0 : index
    %c0_66 = arith.constant 0 : index
    %c0_67 = arith.constant 0 : index
    %c0_68 = arith.constant 0 : index
    %59 = vector.load %arg4[%c0_65, %c0_66, %c0_67, %c0_68] : memref<2x16x16x64xf32, #tpu.memory_space<vmem>>, vector<2x16x16x64xf32>
    tpu.vector_store %arg4[%c0_65, %c0_66, %c0_67, %c0_68], %58 {strides = array<i32>} : memref<2x16x16x64xf32, #tpu.memory_space<vmem>>, vector<2x16x16x64xf32>,
    return
  }
  func.func @transform_0(%arg0: i32) -> (i32, i32, i32, i32) {
    %c0_i32 = arith.constant 0 : i32
    %c0_i32_0 = arith.constant 0 : i32
    %c0_i32_1 = arith.constant 0 : i32
    %c0_i32_2 = arith.constant 0 : i32
    return %arg0, %c0_i32, %c0_i32_0, %c0_i32_1 : i32, i32, i32, i32
  }
  func.func @transform_1(%arg0: i32) -> (i32, i32, i32) {
    %c0_i32 = arith.constant 0 : i32
    %c0_i32_0 = arith.constant 0 : i32
    %c0_i32_1 = arith.constant 0 : i32
    %c0_i32_2 = arith.constant 0 : i32
    return %c0_i32, %c0_i32_0, %c0_i32_1 : i32, i32, i32
  }
  func.func @transform_2(%arg0: i32) -> (i32, i32) {
    %c0_i32 = arith.constant 0 : i32
    %c0_i32_0 = arith.constant 0 : i32
    %c0_i32_1 = arith.constant 0 : i32
    return %c0_i32, %c0_i32_0 : i32, i32
  }
  func.func @transform_3(%arg0: i32) -> (i32, i32, i32, i32) {
    %c0_i32 = arith.constant 0 : i32
    %c0_i32_0 = arith.constant 0 : i32
    %c0_i32_1 = arith.constant 0 : i32
    %c0_i32_2 = arith.constant 0 : i32
    return %arg0, %c0_i32, %c0_i32_0, %c0_i32_1 : i32, i32, i32, i32
  }
}

</mosaic_0001>

<llo_original>
// kernel: tpu_custom_call.1
$region0: #{tpu_custom_call.1}
  #allocation0 [shape = 'u32[]', space=smem, size = 0x4, offset = 0x4, fixed_abs, tag = 'smem constant byte address 0x4 - core index']
  #allocation1 [shape = 'u32[144,128]{1,0:T(1,128)}', space=vmem, size = 0x12000, scoped, tag = 'internal scratch']
  %s0 = inlined_call_operand.vmem [shape: bf16[2,18,18,64], index: 0, kind: input, shape index: {}]
  %s1 = inlined_call_operand.vmem [shape: bf16[9,64,64], index: 1, kind: input, shape index: {}]
  %s2 = inlined_call_operand.vmem [shape: f32[1,64], index: 2, kind: input, shape index: {}]
  %s3 = inlined_call_operand.hbm [shape: f32[2,16,16,64], index: 3, kind: output, shape index: {}]
  %s4 = sld [smem:[#allocation0]]
  $region22: #{tpu_custom_call.1} parent=0
    _
  %s6 = ssub.s32 1, %s4
  %s7 = scalar_select 0, %s6, %s4
  $region1: #{tpu_custom_call.1} parent=0
    #allocation2 [shape = 'u8[262144]{0}', space=vmem, size = 0x40000, scoped, tag = 'output window, operand 0, single buffered']
    #allocation3 [shape = 's32[1]{0}', space=sflag, size = 0x4, scoped, tag = 'scoped memory for tpu_custom_call.1']
    %8 = vsyncpa [#allocation3], 0
    // Predicated region
    $region2: #{tpu_custom_call.1} parent=1 // pred_check
      _
    $region3: #{tpu_custom_call.1} parent=1 // pred_check_branch
      %10 = sbr.rel (0) target = $region5
    $region4: #{tpu_custom_call.1} parent=1 // pred_region
      _
    $region5: #{tpu_custom_call.1} parent=1 // pred_fallthru
      _
    // Predicated region
    $region6: #{tpu_custom_call.1} parent=1 // pred_check
      _
    $region7: #{tpu_custom_call.1} parent=1 // pred_check_branch
      %12 = sbr.rel (0) target = $region9
    $region8: #{tpu_custom_call.1} parent=1 // pred_region
      _
    $region9: #{tpu_custom_call.1} parent=1 // pred_fallthru
      _
    // Predicated region
    $region10: #{tpu_custom_call.1} parent=1 // pred_check
      _
    $region11: #{tpu_custom_call.1} parent=1 // pred_check_branch
      %14 = sbr.rel (0) target = $region13
    $region12: #{tpu_custom_call.1} parent=1 // pred_region
      _
    $region13: #{tpu_custom_call.1} parent=1 // pred_fallthru
      _
    %v16 = vld [vmem:[%s0] sm:$0xf]
    %v17 = vld [vmem:[%s0 + $0x4] sm:$0xf]
    %v18 = vld [vmem:[%s0 + $0xc] sm:$0xf]
    %v19 = vld [vmem:[%s0 + $0x10] sm:$0xf]
    %v20 = vld [vmem:[%s0 + $0x18] sm:$0xf]
    %v21 = vld [vmem:[%s0 + $0x1c] sm:$0xf]
    %v22 = vld [vmem:[%s0 + $0x24] sm:$0xf]
    %v23 = vld [vmem:[%s0 + $0x28] sm:$0xf]
    %v24 = vld [vmem:[%s0 + $0x30] sm:$0xf]
    %v25 = vld [vmem:[%s0 + $0x34] sm:$0xf]
    %v26 = vld [vmem:[%s0 + $0x3c] sm:$0xf]
    %v27 = vld [vmem:[%s0 + $0x40] sm:$0xf]
    %v28 = vld [vmem:[%s0 + $0x48] sm:$0xf]
    %v29 = vld [vmem:[%s0 + $0x4c] sm:$0xf]
    %v30 = vld [vmem:[%s0 + $0x54] sm:$0xf]
    %v31 = vld [vmem:[%s0 + $0x58] sm:$0xf]
    %v32 = vld [vmem:[%s0 + $0x60] sm:$0xf]
    %v33 = vld [vmem:[%s0 + $0x64] sm:$0xf]
    %v34 = vld [vmem:[%s0 + $0x6c] sm:$0xf]
    %v35 = vld [vmem:[%s0 + $0x70] sm:$0xf]
    %v36 = vld [vmem:[%s0 + $0x78] sm:$0xf]
    %v37 = vld [vmem:[%s0 + $0x7c] sm:$0xf]
    %v38 = vld [vmem:[%s0 + $0x84] sm:$0xf]
    %v39 = vld [vmem:[%s0 + $0x88] sm:$0xf]
    %v40 = vld [vmem:[%s0 + $0x90] sm:$0xf]
    %v41 = vld [vmem:[%s0 + $0x94] sm:$0xf]
    %v42 = vld [vmem:[%s0 + $0x9c] sm:$0xf]
    %v43 = vld [vmem:[%s0 + $0xa0] sm:$0xf]
    %v44 = vld [vmem:[%s0 + $0xa8] sm:$0xf]
    %v45 = vld [vmem:[%s0 + $0xac] sm:$0xf]
    %v46 = vld [vmem:[%s0 + $0xb4] sm:$0xf]
    %v47 = vld [vmem:[%s0 + $0xb8] sm:$0xf]
    %v48 = vld [vmem:[%s0 + $0xd8] sm:$0xf]
    %v49 = vld [vmem:[%s0 + $0xdc] sm:$0xf]
    %v50 = vld [vmem:[%s0 + $0xe4] sm:$0xf]
    %v51 = vld [vmem:[%s0 + $0xe8] sm:$0xf]
    %v52 = vld [vmem:[%s0 + $0xf0] sm:$0xf]
    %v53 = vld [vmem:[%s0 + $0xf4] sm:$0xf]
    %v54 = vld [vmem:[%s0 + $0xfc] sm:$0xf]
    %v55 = vld [vmem:[%s0 + $0x100] sm:$0xf]
    %v56 = vld [vmem:[%s0 + $0x108] sm:$0xf]
    %v57 = vld [vmem:[%s0 + $0x10c] sm:$0xf]
    %v58 = vld [vmem:[%s0 + $0x114] sm:$0xf]
    %v59 = vld [vmem:[%s0 + $0x118] sm:$0xf]
    %v60 = vld [vmem:[%s0 + $0x120] sm:$0xf]
    %v61 = vld [vmem:[%s0 + $0x124] sm:$0xf]
    %v62 = vld [vmem:[%s0 + $0x12c] sm:$0xf]
    %v63 = vld [vmem:[%s0 + $0x130] sm:$0xf]
    %v64 = vld [vmem:[%s0 + $0x138] sm:$0xf]
    %v65 = vld [vmem:[%s0 + $0x13c] sm:$0xf]
    %v66 = vld [vmem:[%s0 + $0x144] sm:$0xf]
    %v67 = vld [vmem:[%s0 + $0x148] sm:$0xf]
    %v68 = vld [vmem:[%s0 + $0x150] sm:$0xf]
    %v69 = vld [vmem:[%s0 + $0x154] sm:$0xf]
    %v70 = vld [vmem:[%s0 + $0x15c] sm:$0xf]
    %v71 = vld [vmem:[%s0 + $0x160] sm:$0xf]
    %v72 = vld [vmem:[%s0 + $0x168] sm:$0xf]
    %v73 = vld [vmem:[%s0 + $0x16c] sm:$0xf]
    %v74 = vld [vmem:[%s0 + $0x174] sm:$0xf]
    %v75 = vld [vmem:[%s0 + $0x178] sm:$0xf]
    %v76 = vld [vmem:[%s0 + $0x180] sm:$0xf]
    %v77 = vld [vmem:[%s0 + $0x184] sm:$0xf]
    %v78 = vld [vmem:[%s0 + $0x18c] sm:$0xf]
    %v79 = vld [vmem:[%s0 + $0x190] sm:$0xf]
    %v80 = vld [vmem:[%s1] sm:$0xf]
    %v81 = vld [vmem:[%s1 + $0x4] sm:$0xf]
    %v82 = vld [vmem:[%s1 + $0x8] sm:$0xf]
    %v83 = vld [vmem:[%s1 + $0xc] sm:$0xf]
    %v84 = vld [vmem:[%s1 + $0x10] sm:$0xf]
    %v85 = vld [vmem:[%s1 + $0x14] sm:$0xf]
    %v86 = vld [vmem:[%s1 + $0x18] sm:$0xf]
    %v87 = vld [vmem:[%s1 + $0x1c] sm:$0xf]
    %v88 = vld [vmem:[%s0 + $0x8] sm:$0x1]
    %v89 = vld [vmem:[%s0 + $0x14] sm:$0x1]
    %v90 = vld [vmem:[%s0 + $0x20] sm:$0x1]
    %v91 = vld [vmem:[%s0 + $0x2c] sm:$0x1]
    %v92 = vld [vmem:[%s0 + $0x38] sm:$0x1]
    %v93 = vld [vmem:[%s0 + $0x44] sm:$0x1]
    %v94 = vld [vmem:[%s0 + $0x50] sm:$0x1]
    %v95 = vld [vmem:[%s0 + $0x5c] sm:$0x1]
    %v96 = vld [vmem:[%s0 + $0x68] sm:$0x1]
    %v97 = vld [vmem:[%s0 + $0x74] sm:$0x1]
    %v98 = vld [vmem:[%s0 + $0x80] sm:$0x1]
    %v99 = vld [vmem:[%s0 + $0x8c] sm:$0x1]
    %v100 = vld [vmem:[%s0 + $0x98] sm:$0x1]
    %v101 = vld [vmem:[%s0 + $0xa4] sm:$0x1]
    %v102 = vld [vmem:[%s0 + $0xb0] sm:$0x1]
    %v103 = vld [vmem:[%s0 + $0xbc] sm:$0x1]
    %v104 = vld [vmem:[%s0 + $0xe0] sm:$0x1]
    %v105 = vld [vmem:[%s0 + $0xec] sm:$0x1]
    %v106 = vld [vmem:[%s0 + $0xf8] sm:$0x1]
    %v107 = vld [vmem:[%s0 + $0x104] sm:$0x1]
    %v108 = vld [vmem:[%s0 + $0x110] sm:$0x1]
    %v109 = vld [vmem:[%s0 + $0x11c] sm:$0x1]
    %v110 = vld [vmem:[%s0 + $0x128] sm:$0x1]
    %v111 = vld [vmem:[%s0 + $0x134] sm:$0x1]
    %v112 = vld [vmem:[%s0 + $0x140] sm:$0x1]
    %v113 = vld [vmem:[%s0 + $0x14c] sm:$0x1]
    %v114 = vld [vmem:[%s0 + $0x158] sm:$0x1]
    %v115 = vld [vmem:[%s0 + $0x164] sm:$0x1]
    %v116 = vld [vmem:[%s0 + $0x170] sm:$0x1]
    %v117 = vld [vmem:[%s0 + $0x17c] sm:$0x1]
    %v118 = vld [vmem:[%s0 + $0x188] sm:$0x1]
    %v119 = vld [vmem:[%s0 + $0x194] sm:$0x1]
    %vm120 = vsmask.f32 3328
    %vm121 = vsmask.f32 7440
    %vm122 = vmor %vm120, %vm121
    %v124 = vshrl.u32 %v16, 16
    %v126 = vrot.slane %v124, 4
    %v127 = vshll.u32 %v16, 16
    %v129 = vrot.slane %v127, 5
    %v130 = vor.u32 %v126, %v129
    %v131 = vrot.slane %v130, 4
    %v133 = vshll.u32 %v17, 16
    %v135 = vrot.slane %v133, 5
    %v136 = vsel %vm122, %v131, %v135
    %v137 = vshrl.u32 %v17, 16
    %v139 = vrot.slane %v137, 4
    %v140 = vor.u32 %v139, %v135
    %v141 = vrot.slane %v140, 4
    %v143 = vshll.u32 %v88, 16
    %v145 = vrot.slane %v143, 5
    %v146 = vsel %vm122, %v141, %v145
    %v148 = vshrl.u32 %v18, 16
    %v150 = vrot.slane %v148, 4
    %v151 = vshll.u32 %v18, 16
    %v153 = vrot.slane %v151, 5
    %v154 = vor.u32 %v150, %v153
    %v155 = vrot.slane %v154, 4
    %v157 = vshll.u32 %v19, 16
    %v159 = vrot.slane %v157, 5
    %v160 = vsel %vm122, %v155, %v159
    %v161 = vshrl.u32 %v19, 16
    %v163 = vrot.slane %v161, 4
    %v164 = vor.u32 %v163, %v159
    %v165 = vrot.slane %v164, 4
    %v167 = vshll.u32 %v89, 16
    %v169 = vrot.slane %v167, 5
    %v170 = vsel %vm122, %v165, %v169
    %v172 = vshrl.u32 %v20, 16
    %v174 = vrot.slane %v172, 4
    %v175 = vshll.u32 %v20, 16
    %v177 = vrot.slane %v175, 5
    %v178 = vor.u32 %v174, %v177
    %v179 = vrot.slane %v178, 4
    %v181 = vshll.u32 %v21, 16
    %v183 = vrot.slane %v181, 5
    %v184 = vsel %vm122, %v179, %v183
    %v185 = vshrl.u32 %v21, 16
    %v187 = vrot.slane %v185, 4
    %v188 = vor.u32 %v187, %v183
    %v189 = vrot.slane %v188, 4
    %v191 = vshll.u32 %v90, 16
    %v193 = vrot.slane %v191, 5
    %v194 = vsel %vm122, %v189, %v193
    %v196 = vshrl.u32 %v22, 16
    %v198 = vrot.slane %v196, 4
    %v199 = vshll.u32 %v22, 16
    %v201 = vrot.slane %v199, 5
    %v202 = vor.u32 %v198, %v201
    %v203 = vrot.slane %v202, 4
    %v205 = vshll.u32 %v23, 16
    %v207 = vrot.slane %v205, 5
    %v208 = vsel %vm122, %v203, %v207
    %v209 = vshrl.u32 %v23, 16
    %v211 = vrot.slane %v209, 4
    %v212 = vor.u32 %v211, %v207
    %v213 = vrot.slane %v212, 4
    %v215 = vshll.u32 %v91, 16
    %v217 = vrot.slane %v215, 5
    %v218 = vsel %vm122, %v213, %v217
    %v220 = vshrl.u32 %v24, 16
    %v222 = vrot.slane %v220, 4
    %v223 = vshll.u32 %v24, 16
    %v225 = vrot.slane %v223, 5
    %v226 = vor.u32 %v222, %v225
    %v227 = vrot.slane %v226, 4
    %v229 = vshll.u32 %v25, 16
    %v231 = vrot.slane %v229, 5
    %v232 = vsel %vm122, %v227, %v231
    %v233 = vshrl.u32 %v25, 16
    %v235 = vrot.slane %v233, 4
    %v236 = vor.u32 %v235, %v231
    %v237 = vrot.slane %v236, 4
    %v239 = vshll.u32 %v92, 16
    %v241 = vrot.slane %v239, 5
    %v242 = vsel %vm122, %v237, %v241
    %v244 = vshrl.u32 %v26, 16
    %v246 = vrot.slane %v244, 4
    %v247 = vshll.u32 %v26, 16
    %v249 = vrot.slane %v247, 5
    %v250 = vor.u32 %v246, %v249
    %v251 = vrot.slane %v250, 4
    %v253 = vshll.u32 %v27, 16
    %v255 = vrot.slane %v253, 5
    %v256 = vsel %vm122, %v251, %v255
    %v257 = vshrl.u32 %v27, 16
    %v259 = vrot.slane %v257, 4
    %v260 = vor.u32 %v259, %v255
    %v261 = vrot.slane %v260, 4
    %v263 = vshll.u32 %v93, 16
    %v265 = vrot.slane %v263, 5
    %v266 = vsel %vm122, %v261, %v265
    %v268 = vshrl.u32 %v28, 16
    %v270 = vrot.slane %v268, 4
    %v271 = vshll.u32 %v28, 16
    %v273 = vrot.slane %v271, 5
    %v274 = vor.u32 %v270, %v273
    %v275 = vrot.slane %v274, 4
    %v277 = vshll.u32 %v29, 16
    %v279 = vrot.slane %v277, 5
    %v280 = vsel %vm122, %v275, %v279
    %v281 = vshrl.u32 %v29, 16
    %v283 = vrot.slane %v281, 4
    %v284 = vor.u32 %v283, %v279
    %v285 = vrot.slane %v284, 4
    %v287 = vshll.u32 %v94, 16
    %v289 = vrot.slane %v287, 5
    %v290 = vsel %vm122, %v285, %v289
    %v292 = vshrl.u32 %v30, 16
    %v294 = vrot.slane %v292, 4
    %v295 = vshll.u32 %v30, 16
    %v297 = vrot.slane %v295, 5
    %v298 = vor.u32 %v294, %v297
    %v299 = vrot.slane %v298, 4
    %v301 = vshll.u32 %v31, 16
    %v303 = vrot.slane %v301, 5
    %v304 = vsel %vm122, %v299, %v303
    %v305 = vshrl.u32 %v31, 16
    %v307 = vrot.slane %v305, 4
    %v308 = vor.u32 %v307, %v303
    %v309 = vrot.slane %v308, 4
    %v311 = vshll.u32 %v95, 16
    %v313 = vrot.slane %v311, 5
    %v314 = vsel %vm122, %v309, %v313
    %v316 = vshrl.u32 %v32, 16
    %v318 = vrot.slane %v316, 4
    %v319 = vshll.u32 %v32, 16
    %v321 = vrot.slane %v319, 5
    %v322 = vor.u32 %v318, %v321
    %v323 = vrot.slane %v322, 4
    %v325 = vshll.u32 %v33, 16
    %v327 = vrot.slane %v325, 5
    %v328 = vsel %vm122, %v323, %v327
    %v329 = vshrl.u32 %v33, 16
    %v331 = vrot.slane %v329, 4
    %v332 = vor.u32 %v331, %v327
    %v333 = vrot.slane %v332, 4
    %v335 = vshll.u32 %v96, 16
    %v337 = vrot.slane %v335, 5
    %v338 = vsel %vm122, %v333, %v337
    %v340 = vshrl.u32 %v34, 16
    %v342 = vrot.slane %v340, 4
    %v343 = vshll.u32 %v34, 16
    %v345 = vrot.slane %v343, 5
    %v346 = vor.u32 %v342, %v345
    %v347 = vrot.slane %v346, 4
    %v349 = vshll.u32 %v35, 16
    %v351 = vrot.slane %v349, 5
    %v352 = vsel %vm122, %v347, %v351
    %v353 = vshrl.u32 %v35, 16
    %v355 = vrot.slane %v353, 4
    %v356 = vor.u32 %v355, %v351
    %v357 = vrot.slane %v356, 4
    %v359 = vshll.u32 %v97, 16
    %v361 = vrot.slane %v359, 5
    %v362 = vsel %vm122, %v357, %v361
    %v364 = vshrl.u32 %v36, 16
    %v366 = vrot.slane %v364, 4
    %v367 = vshll.u32 %v36, 16
    %v369 = vrot.slane %v367, 5
    %v370 = vor.u32 %v366, %v369
    %v371 = vrot.slane %v370, 4
    %v373 = vshll.u32 %v37, 16
    %v375 = vrot.slane %v373, 5
    %v376 = vsel %vm122, %v371, %v375
    %v377 = vshrl.u32 %v37, 16
    %v379 = vrot.slane %v377, 4
    %v380 = vor.u32 %v379, %v375
    %v381 = vrot.slane %v380, 4
    %v383 = vshll.u32 %v98, 16
    %v385 = vrot.slane %v383, 5
    %v386 = vsel %vm122, %v381, %v385
    %v388 = vshrl.u32 %v38, 16
    %v390 = vrot.slane %v388, 4
    %v391 = vshll.u32 %v38, 16
    %v393 = vrot.slane %v391, 5
    %v394 = vor.u32 %v390, %v393
    %v395 = vrot.slane %v394, 4
    %v397 = vshll.u32 %v39, 16
    %v399 = vrot.slane %v397, 5
    %v400 = vsel %vm122, %v395, %v399
    %v401 = vshrl.u32 %v39, 16
    %v403 = vrot.slane %v401, 4
    %v404 = vor.u32 %v403, %v399
    %v405 = vrot.slane %v404, 4
    %v407 = vshll.u32 %v99, 16
    %v409 = vrot.slane %v407, 5
    %v410 = vsel %vm122, %v405, %v409
    %v412 = vshrl.u32 %v40, 16
    %v414 = vrot.slane %v412, 4
    %v415 = vshll.u32 %v40, 16
    %v417 = vrot.slane %v415, 5
    %v418 = vor.u32 %v414, %v417
    %v419 = vrot.slane %v418, 4
    %v421 = vshll.u32 %v41, 16
    %v423 = vrot.slane %v421, 5
    %v424 = vsel %vm122, %v419, %v423
    %v425 = vshrl.u32 %v41, 16
    %v427 = vrot.slane %v425, 4
    %v428 = vor.u32 %v427, %v423
    %v429 = vrot.slane %v428, 4
    %v431 = vshll.u32 %v100, 16
    %v433 = vrot.slane %v431, 5
    %v434 = vsel %vm122, %v429, %v433
    %v436 = vshrl.u32 %v42, 16
    %v438 = vrot.slane %v436, 4
    %v439 = vshll.u32 %v42, 16
    %v441 = vrot.slane %v439, 5
    %v442 = vor.u32 %v438, %v441
    %v443 = vrot.slane %v442, 4
    %v445 = vshll.u32 %v43, 16
    %v447 = vrot.slane %v445, 5
    %v448 = vsel %vm122, %v443, %v447
    %v449 = vshrl.u32 %v43, 16
    %v451 = vrot.slane %v449, 4
    %v452 = vor.u32 %v451, %v447
    %v453 = vrot.slane %v452, 4
    %v455 = vshll.u32 %v101, 16
    %v457 = vrot.slane %v455, 5
    %v458 = vsel %vm122, %v453, %v457
    %v460 = vshrl.u32 %v44, 16
    %v462 = vrot.slane %v460, 4
    %v463 = vshll.u32 %v44, 16
    %v465 = vrot.slane %v463, 5
    %v466 = vor.u32 %v462, %v465
    %v467 = vrot.slane %v466, 4
    %v469 = vshll.u32 %v45, 16
    %v471 = vrot.slane %v469, 5
    %v472 = vsel %vm122, %v467, %v471
    %v473 = vshrl.u32 %v45, 16
    %v475 = vrot.slane %v473, 4
    %v476 = vor.u32 %v475, %v471
    %v477 = vrot.slane %v476, 4
    %v479 = vshll.u32 %v102, 16
    %v481 = vrot.slane %v479, 5
    %v482 = vsel %vm122, %v477, %v481
    %v484 = vshrl.u32 %v46, 16
    %v486 = vrot.slane %v484, 4
    %v487 = vshll.u32 %v46, 16
    %v489 = vrot.slane %v487, 5
    %v490 = vor.u32 %v486, %v489
    %v491 = vrot.slane %v490, 4
    %v493 = vshll.u32 %v47, 16
    %v495 = vrot.slane %v493, 5
    %v496 = vsel %vm122, %v491, %v495
    %v497 = vshrl.u32 %v47, 16
    %v499 = vrot.slane %v497, 4
    %v500 = vor.u32 %v499, %v495
    %v501 = vrot.slane %v500, 4
    %v503 = vshll.u32 %v103, 16
    %v505 = vrot.slane %v503, 5
    %v506 = vsel %vm122, %v501, %v505
    %v508 = vshrl.u32 %v48, 16
    %v510 = vrot.slane %v508, 4
    %v511 = vshll.u32 %v48, 16
    %v513 = vrot.slane %v511, 5
    %v514 = vor.u32 %v510, %v513
    %v515 = vrot.slane %v514, 4
    %v517 = vshll.u32 %v49, 16
    %v519 = vrot.slane %v517, 5
    %v520 = vsel %vm122, %v515, %v519
    %v521 = vshrl.u32 %v49, 16
    %v523 = vrot.slane %v521, 4
    %v524 = vor.u32 %v523, %v519
    %v525 = vrot.slane %v524, 4
    %v527 = vshll.u32 %v104, 16
    %v529 = vrot.slane %v527, 5
    %v530 = vsel %vm122, %v525, %v529
    %v532 = vshrl.u32 %v50, 16
    %v534 = vrot.slane %v532, 4
    %v535 = vshll.u32 %v50, 16
    %v537 = vrot.slane %v535, 5
    %v538 = vor.u32 %v534, %v537
    %v539 = vrot.slane %v538, 4
    %v541 = vshll.u32 %v51, 16
    %v543 = vrot.slane %v541, 5
    %v544 = vsel %vm122, %v539, %v543
    %v545 = vshrl.u32 %v51, 16
    %v547 = vrot.slane %v545, 4
    %v548 = vor.u32 %v547, %v543
    %v549 = vrot.slane %v548, 4
    %v551 = vshll.u32 %v105, 16
    %v553 = vrot.slane %v551, 5
    %v554 = vsel %vm122, %v549, %v553
    %v556 = vshrl.u32 %v52, 16
    %v558 = vrot.slane %v556, 4
    %v559 = vshll.u32 %v52, 16
    %v561 = vrot.slane %v559, 5
    %v562 = vor.u32 %v558, %v561
    %v563 = vrot.slane %v562, 4
    %v565 = vshll.u32 %v53, 16
    %v567 = vrot.slane %v565, 5
    %v568 = vsel %vm122, %v563, %v567
    %v569 = vshrl.u32 %v53, 16
    %v571 = vrot.slane %v569, 4
    %v572 = vor.u32 %v571, %v567
    %v573 = vrot.slane %v572, 4
    %v575 = vshll.u32 %v106, 16
    %v577 = vrot.slane %v575, 5
    %v578 = vsel %vm122, %v573, %v577
    %v580 = vshrl.u32 %v54, 16
    %v582 = vrot.slane %v580, 4
    %v583 = vshll.u32 %v54, 16
    %v585 = vrot.slane %v583, 5
    %v586 = vor.u32 %v582, %v585
    %v587 = vrot.slane %v586, 4
    %v589 = vshll.u32 %v55, 16
    %v591 = vrot.slane %v589, 5
    %v592 = vsel %vm122, %v587, %v591
    %v593 = vshrl.u32 %v55, 16
    %v595 = vrot.slane %v593, 4
    %v596 = vor.u32 %v595, %v591
    %v597 = vrot.slane %v596, 4
    %v599 = vshll.u32 %v107, 16
    %v601 = vrot.slane %v599, 5
    %v602 = vsel %vm122, %v597, %v601
    %v604 = vshrl.u32 %v56, 16
    %v606 = vrot.slane %v604, 4
    %v607 = vshll.u32 %v56, 16
    %v609 = vrot.slane %v607, 5
    %v610 = vor.u32 %v606, %v609
    %v611 = vrot.slane %v610, 4
    %v613 = vshll.u32 %v57, 16
    %v615 = vrot.slane %v613, 5
    %v616 = vsel %vm122, %v611, %v615
    %v617 = vshrl.u32 %v57, 16
    %v619 = vrot.slane %v617, 4
    %v620 = vor.u32 %v619, %v615
    %v621 = vrot.slane %v620, 4
    %v623 = vshll.u32 %v108, 16
    %v625 = vrot.slane %v623, 5
    %v626 = vsel %vm122, %v621, %v625
    %v628 = vshrl.u32 %v58, 16
    %v630 = vrot.slane %v628, 4
    %v631 = vshll.u32 %v58, 16
    %v633 = vrot.slane %v631, 5
    %v634 = vor.u32 %v630, %v633
    %v635 = vrot.slane %v634, 4
    %v637 = vshll.u32 %v59, 16
    %v639 = vrot.slane %v637, 5
    %v640 = vsel %vm122, %v635, %v639
    %v641 = vshrl.u32 %v59, 16
    %v643 = vrot.slane %v641, 4
    %v644 = vor.u32 %v643, %v639
    %v645 = vrot.slane %v644, 4
    %v647 = vshll.u32 %v109, 16
    %v649 = vrot.slane %v647, 5
    %v650 = vsel %vm122, %v645, %v649
    %v652 = vshrl.u32 %v60, 16
    %v654 = vrot.slane %v652, 4
    %v655 = vshll.u32 %v60, 16
    %v657 = vrot.slane %v655, 5
    %v658 = vor.u32 %v654, %v657
    %v659 = vrot.slane %v658, 4
    %v661 = vshll.u32 %v61, 16
    %v663 = vrot.slane %v661, 5
    %v664 = vsel %vm122, %v659, %v663
    %v665 = vshrl.u32 %v61, 16
    %v667 = vrot.slane %v665, 4
    %v668 = vor.u32 %v667, %v663
    %v669 = vrot.slane %v668, 4
    %v671 = vshll.u32 %v110, 16
    %v673 = vrot.slane %v671, 5
    %v674 = vsel %vm122, %v669, %v673
    %v676 = vshrl.u32 %v62, 16
    %v678 = vrot.slane %v676, 4
    %v679 = vshll.u32 %v62, 16
    %v681 = vrot.slane %v679, 5
    %v682 = vor.u32 %v678, %v681
    %v683 = vrot.slane %v682, 4
    %v685 = vshll.u32 %v63, 16
    %v687 = vrot.slane %v685, 5
    %v688 = vsel %vm122, %v683, %v687
    %v689 = vshrl.u32 %v63, 16
    %v691 = vrot.slane %v689, 4
    %v692 = vor.u32 %v691, %v687
    %v693 = vrot.slane %v692, 4
    %v695 = vshll.u32 %v111, 16
    %v697 = vrot.slane %v695, 5
    %v698 = vsel %vm122, %v693, %v697
    %v700 = vshrl.u32 %v64, 16
    %v702 = vrot.slane %v700, 4
    %v703 = vshll.u32 %v64, 16
    %v705 = vrot.slane %v703, 5
    %v706 = vor.u32 %v702, %v705
    %v707 = vrot.slane %v706, 4
    %v709 = vshll.u32 %v65, 16
    %v711 = vrot.slane %v709, 5
    %v712 = vsel %vm122, %v707, %v711
    %v713 = vshrl.u32 %v65, 16
    %v715 = vrot.slane %v713, 4
    %v716 = vor.u32 %v715, %v711
    %v717 = vrot.slane %v716, 4
    %v719 = vshll.u32 %v112, 16
    %v721 = vrot.slane %v719, 5
    %v722 = vsel %vm122, %v717, %v721
    %v724 = vshrl.u32 %v66, 16
    %v726 = vrot.slane %v724, 4
    %v727 = vshll.u32 %v66, 16
    %v729 = vrot.slane %v727, 5
    %v730 = vor.u32 %v726, %v729
    %v731 = vrot.slane %v730, 4
    %v733 = vshll.u32 %v67, 16
    %v735 = vrot.slane %v733, 5
    %v736 = vsel %vm122, %v731, %v735
    %v737 = vshrl.u32 %v67, 16
    %v739 = vrot.slane %v737, 4
    %v740 = vor.u32 %v739, %v735
    %v741 = vrot.slane %v740, 4
    %v743 = vshll.u32 %v113, 16
    %v745 = vrot.slane %v743, 5
    %v746 = vsel %vm122, %v741, %v745
    %v748 = vshrl.u32 %v68, 16
    %v750 = vrot.slane %v748, 4
    %v751 = vshll.u32 %v68, 16
    %v753 = vrot.slane %v751, 5
    %v754 = vor.u32 %v750, %v753
    %v755 = vrot.slane %v754, 4
    %v757 = vshll.u32 %v69, 16
    %v759 = vrot.slane %v757, 5
    %v760 = vsel %vm122, %v755, %v759
    %v761 = vshrl.u32 %v69, 16
    %v763 = vrot.slane %v761, 4
    %v764 = vor.u32 %v763, %v759
    %v765 = vrot.slane %v764, 4
    %v767 = vshll.u32 %v114, 16
    %v769 = vrot.slane %v767, 5
    %v770 = vsel %vm122, %v765, %v769
    %v772 = vshrl.u32 %v70, 16
    %v774 = vrot.slane %v772, 4
    %v775 = vshll.u32 %v70, 16
    %v777 = vrot.slane %v775, 5
    %v778 = vor.u32 %v774, %v777
    %v779 = vrot.slane %v778, 4
    %v781 = vshll.u32 %v71, 16
    %v783 = vrot.slane %v781, 5
    %v784 = vsel %vm122, %v779, %v783
    %v785 = vshrl.u32 %v71, 16
    %v787 = vrot.slane %v785, 4
    %v788 = vor.u32 %v787, %v783
    %v789 = vrot.slane %v788, 4
    %v791 = vshll.u32 %v115, 16
    %v793 = vrot.slane %v791, 5
    %v794 = vsel %vm122, %v789, %v793
    %v796 = vshrl.u32 %v72, 16
    %v798 = vrot.slane %v796, 4
    %v799 = vshll.u32 %v72, 16
    %v801 = vrot.slane %v799, 5
    %v802 = vor.u32 %v798, %v801
    %v803 = vrot.slane %v802, 4
    %v805 = vshll.u32 %v73, 16
    %v807 = vrot.slane %v805, 5
    %v808 = vsel %vm122, %v803, %v807
    %v809 = vshrl.u32 %v73, 16
    %v811 = vrot.slane %v809, 4
    %v812 = vor.u32 %v811, %v807
    %v813 = vrot.slane %v812, 4
    %v815 = vshll.u32 %v116, 16
    %v817 = vrot.slane %v815, 5
    %v818 = vsel %vm122, %v813, %v817
    %v820 = vshrl.u32 %v74, 16
    %v822 = vrot.slane %v820, 4
    %v823 = vshll.u32 %v74, 16
    %v825 = vrot.slane %v823, 5
    %v826 = vor.u32 %v822, %v825
    %v827 = vrot.slane %v826, 4
    %v829 = vshll.u32 %v75, 16
    %v831 = vrot.slane %v829, 5
    %v832 = vsel %vm122, %v827, %v831
    %v833 = vshrl.u32 %v75, 16
    %v835 = vrot.slane %v833, 4
    %v836 = vor.u32 %v835, %v831
    %v837 = vrot.slane %v836, 4
    %v839 = vshll.u32 %v117, 16
    %v841 = vrot.slane %v839, 5
    %v842 = vsel %vm122, %v837, %v841
    %v844 = vshrl.u32 %v76, 16
    %v846 = vrot.slane %v844, 4
    %v847 = vshll.u32 %v76, 16
    %v849 = vrot.slane %v847, 5
    %v850 = vor.u32 %v846, %v849
    %v851 = vrot.slane %v850, 4
    %v853 = vshll.u32 %v77, 16
    %v855 = vrot.slane %v853, 5
    %v856 = vsel %vm122, %v851, %v855
    %v857 = vshrl.u32 %v77, 16
    %v859 = vrot.slane %v857, 4
    %v860 = vor.u32 %v859, %v855
    %v861 = vrot.slane %v860, 4
    %v863 = vshll.u32 %v118, 16
    %v865 = vrot.slane %v863, 5
    %v866 = vsel %vm122, %v861, %v865
    %v868 = vshrl.u32 %v78, 16
    %v870 = vrot.slane %v868, 4
    %v871 = vshll.u32 %v78, 16
    %v873 = vrot.slane %v871, 5
    %v874 = vor.u32 %v870, %v873
    %v875 = vrot.slane %v874, 4
    %v877 = vshll.u32 %v79, 16
    %v879 = vrot.slane %v877, 5
    %v880 = vsel %vm122, %v875, %v879
    %v881 = vshrl.u32 %v79, 16
    %v883 = vrot.slane %v881, 4
    %v884 = vor.u32 %v883, %v879
    %v885 = vrot.slane %v884, 4
    %v887 = vshll.u32 %v119, 16
    %v889 = vrot.slane %v887, 5
    %v890 = vsel %vm122, %v885, %v889
    %s891 = scalar_lea.vmem %s1, 32
    %v892 = vld [vmem:[%s891] sm:$0xf]
    %v893 = vld [vmem:[%s891 + $0x4] sm:$0xf]
    %v894 = vld [vmem:[%s891 + $0x8] sm:$0xf]
    %v895 = vld [vmem:[%s891 + $0xc] sm:$0xf]
    %v896 = vld [vmem:[%s891 + $0x10] sm:$0xf]
    %v897 = vld [vmem:[%s891 + $0x14] sm:$0xf]
    %v898 = vld [vmem:[%s891 + $0x18] sm:$0xf]
    %v899 = vld [vmem:[%s891 + $0x1c] sm:$0xf]
    %v900 = vunpack.c.l.b16 %v136
    %v901 = vunpack.c.l.b16 %v146
    %v902 = vunpack.c.l.b16 %v160
    %v903 = vunpack.c.l.b16 %v170
    %v904 = vunpack.c.l.b16 %v184
    %v905 = vunpack.c.l.b16 %v194
    %v906 = vunpack.c.l.b16 %v208
    %v907 = vunpack.c.l.b16 %v218
    %v908 = vunpack.c.l.b16 %v232
    %v909 = vunpack.c.l.b16 %v242
    %v910 = vunpack.c.l.b16 %v256
    %v911 = vunpack.c.l.b16 %v266
    %v912 = vunpack.c.l.b16 %v280
    %v913 = vunpack.c.l.b16 %v290
    %v914 = vunpack.c.l.b16 %v304
    %v915 = vunpack.c.l.b16 %v314
    %v916 = vunpack.c.l.b16 %v328
    %v917 = vunpack.c.l.b16 %v338
    %v918 = vunpack.c.l.b16 %v352
    %v919 = vunpack.c.l.b16 %v362
    %v920 = vunpack.c.l.b16 %v376
    %v921 = vunpack.c.l.b16 %v386
    %v922 = vunpack.c.l.b16 %v400
    %v923 = vunpack.c.l.b16 %v410
    %v924 = vunpack.c.l.b16 %v424
    %v925 = vunpack.c.l.b16 %v434
    %v926 = vunpack.c.l.b16 %v448
    %v927 = vunpack.c.l.b16 %v458
    %v928 = vunpack.c.l.b16 %v472
    %v929 = vunpack.c.l.b16 %v482
    %v930 = vunpack.c.l.b16 %v496
    %v931 = vunpack.c.l.b16 %v506
    %v932 = vunpack.c.l.b16 %v520
    %v933 = vunpack.c.l.b16 %v530
    %v934 = vunpack.c.l.b16 %v544
    %v935 = vunpack.c.l.b16 %v554
    %v936 = vunpack.c.l.b16 %v568
    %v937 = vunpack.c.l.b16 %v578
    %v938 = vunpack.c.l.b16 %v592
    %v939 = vunpack.c.l.b16 %v602
    %v940 = vunpack.c.l.b16 %v616
    %v941 = vunpack.c.l.b16 %v626
    %v942 = vunpack.c.l.b16 %v640
    %v943 = vunpack.c.l.b16 %v650
    %v944 = vunpack.c.l.b16 %v664
    %v945 = vunpack.c.l.b16 %v674
    %v946 = vunpack.c.l.b16 %v688
    %v947 = vunpack.c.l.b16 %v698
    %v948 = vunpack.c.l.b16 %v712
    %v949 = vunpack.c.l.b16 %v722
    %v950 = vunpack.c.l.b16 %v736
    %v951 = vunpack.c.l.b16 %v746
    %v952 = vunpack.c.l.b16 %v760
    %v953 = vunpack.c.l.b16 %v770
    %v954 = vunpack.c.l.b16 %v784
    %v955 = vunpack.c.l.b16 %v794
    %v956 = vunpack.c.l.b16 %v808
    %v957 = vunpack.c.l.b16 %v818
    %v958 = vunpack.c.l.b16 %v832
    %v959 = vunpack.c.l.b16 %v842
    %v960 = vunpack.c.l.b16 %v856
    %v961 = vunpack.c.l.b16 %v866
    %v962 = vunpack.c.l.b16 %v880
    %v963 = vunpack.c.l.b16 %v890
    %v964 = vpack.c.b16 %v901, %v900
    %v965 = vpack.c.b16 %v903, %v902
    %v966 = vpack.c.b16 %v905, %v904
    %v967 = vpack.c.b16 %v907, %v906
    %v968 = vpack.c.b16 %v909, %v908
    %v969 = vpack.c.b16 %v911, %v910
    %v970 = vpack.c.b16 %v913, %v912
    %v971 = vpack.c.b16 %v915, %v914
    %v972 = vpack.c.b16 %v917, %v916
    %v973 = vpack.c.b16 %v919, %v918
    %v974 = vpack.c.b16 %v921, %v920
    %v975 = vpack.c.b16 %v923, %v922
    %v976 = vpack.c.b16 %v925, %v924
    %v977 = vpack.c.b16 %v927, %v926
    %v978 = vpack.c.b16 %v929, %v928
    %v979 = vpack.c.b16 %v931, %v930
    %v980 = vpack.c.b16 %v933, %v932
    %v981 = vpack.c.b16 %v935, %v934
    %v982 = vpack.c.b16 %v937, %v936
    %v983 = vpack.c.b16 %v939, %v938
    %v984 = vpack.c.b16 %v941, %v940
    %v985 = vpack.c.b16 %v943, %v942
    %v986 = vpack.c.b16 %v945, %v944
    %v987 = vpack.c.b16 %v947, %v946
    %v988 = vpack.c.b16 %v949, %v948
    %v989 = vpack.c.b16 %v951, %v950
    %v990 = vpack.c.b16 %v953, %v952
    %v991 = vpack.c.b16 %v955, %v954
    %v992 = vpack.c.b16 %v957, %v956
    %v993 = vpack.c.b16 %v959, %v958
    %v994 = vpack.c.b16 %v961, %v960
    %v995 = vpack.c.b16 %v963, %v962
    %v1004 = vunpack.c.l.b16 %v892
    %v1005 = vunpack.c.l.b16 %v893
    %v1006 = vunpack.c.l.b16 %v894
    %v1007 = vunpack.c.l.b16 %v895
    %v1008 = vunpack.c.l.b16 %v896
    %v1009 = vunpack.c.l.b16 %v897
    %v1010 = vunpack.c.l.b16 %v898
    %v1011 = vunpack.c.l.b16 %v899
    %v1012 = vpack.c.b16 %v1005, %v1004
    %v1013 = vpack.c.b16 %v1007, %v1006
    %v1014 = vpack.c.b16 %v1009, %v1008
    %v1015 = vpack.c.b16 %v1011, %v1010
    %vm1020 = vcmask 523264
    %v1022 = vsel %vm1020, %v964, 0
    %v1025 = vsel %vm1020, %v965, 0
    %v1028 = vsel %vm1020, %v966, 0
    %v1031 = vsel %vm1020, %v967, 0
    %v1034 = vsel %vm1020, %v968, 0
    %v1037 = vsel %vm1020, %v969, 0
    %v1040 = vsel %vm1020, %v970, 0
    %v1043 = vsel %vm1020, %v971, 0
    %v1046 = vsel %vm1020, %v972, 0
    %v1049 = vsel %vm1020, %v973, 0
    %v1052 = vsel %vm1020, %v974, 0
    %v1055 = vsel %vm1020, %v975, 0
    %v1058 = vsel %vm1020, %v976, 0
    %v1061 = vsel %vm1020, %v977, 0
    %v1064 = vsel %vm1020, %v978, 0
    %v1067 = vsel %vm1020, %v979, 0
    %v1070 = vsel %vm1020, %v980, 0
    %v1073 = vsel %vm1020, %v981, 0
    %v1076 = vsel %vm1020, %v982, 0
    %v1079 = vsel %vm1020, %v983, 0
    %v1082 = vsel %vm1020, %v984, 0
    %v1085 = vsel %vm1020, %v985, 0
    %v1088 = vsel %vm1020, %v986, 0
    %v1091 = vsel %vm1020, %v987, 0
    %v1094 = vsel %vm1020, %v988, 0
    %v1097 = vsel %vm1020, %v989, 0
    %v1100 = vsel %vm1020, %v990, 0
    %v1103 = vsel %vm1020, %v991, 0
    %v1106 = vsel %vm1020, %v992, 0
    %v1109 = vsel %vm1020, %v993, 0
    %v1112 = vsel %vm1020, %v994, 0
    %v1115 = vsel %vm1020, %v995, 0
    %1117 = vmatprep.subr.bf16.mxu0 0
    %1118 = vmatpush1.bf16.msra.mxu0 %v1012
    %1119 = vmatprep.subr.bf16.mxu0 0
    %1120 = vmatpush1.bf16.msra.mxu0 %v1013
    %1121 = vmatprep.subr.bf16.mxu0 0
    %1122 = vmatpush1.bf16.msra.mxu0 %v1014
    %1123 = vmatprep.subr.bf16.mxu0 0
    %1124 = vmatpush1.bf16.msra.mxu0 %v1015
    %1125 = vmatprep.subr.bf16.mxu0 0
    %1126 = vmatpush1.bf16.msra.mxu0 0
    %1127 = vmatprep.subr.bf16.mxu0 0
    %1128 = vmatpush1.bf16.msra.mxu0 0
    %1129 = vmatprep.subr.bf16.mxu0 0
    %1130 = vmatpush1.bf16.msra.mxu0 0
    %1131 = vmatprep.subr.bf16.mxu0 0
    %1132 = vmatpush1.bf16.msra.mxu0 0
    %1133 = vmatprep.subr.bf16.mxu0 0
    %1134 = vmatpush1.bf16.msra.mxu0 0
    %1135 = vmatprep.subr.bf16.mxu0 0
    %1136 = vmatpush1.bf16.msra.mxu0 0
    %1137 = vmatprep.subr.bf16.mxu0 0
    %1138 = vmatpush1.bf16.msra.mxu0 0
    %1139 = vmatprep.subr.bf16.mxu0 0
    %1140 = vmatpush1.bf16.msra.mxu0 0
    %1141 = vmatprep.subr.bf16.mxu0 0
    %1142 = vmatpush1.bf16.msra.mxu0 0
    %1143 = vmatprep.subr.bf16.mxu0 0
    %1144 = vmatpush1.bf16.msra.mxu0 0
    %1145 = vmatprep.subr.bf16.mxu0 0
    %1146 = vmatpush1.bf16.msra.mxu0 0
    %1147 = vmatprep.subr.bf16.mxu0 0
    %1148 = vmatpush1.bf16.msra.mxu0 0
    %1149 = vmatprep.mubr.bf16.mxu0 0
    %1150 = vmatmul.mubr.bf16.gmra.mrb[0].mxu0 %v1022
    %v1151 = vpop.f32.mrb[0].mxu0
    %v1152 = vadd.f32 0.0, %v1151
    %v1153 = vpop.f32.mrb[0].mxu0
    %v1154 = vpop.f32.mrb[0].mxu0
    %v1155 = vadd.f32 0.0, %v1154
    %v1156 = vpop.f32.mrb[0].mxu0
    %1157 = vmatprep.mubr.bf16.mxu0 0
    %1158 = vmatmul.mubr.bf16.gmra.mrb[0].mxu0 %v1025
    %v1159 = vpop.f32.mrb[0].mxu0
    %v1160 = vadd.f32 0.0, %v1159
    %v1161 = vpop.f32.mrb[0].mxu0
    %v1162 = vpop.f32.mrb[0].mxu0
    %v1163 = vadd.f32 0.0, %v1162
    %v1164 = vpop.f32.mrb[0].mxu0
    %1165 = vmatprep.mubr.bf16.mxu0 0
    %1166 = vmatmul.mubr.bf16.gmra.mrb[0].mxu0 %v1028
    %v1167 = vpop.f32.mrb[0].mxu0
    %v1168 = vadd.f32 0.0, %v1167
    %v1169 = vpop.f32.mrb[0].mxu0
    %v1170 = vpop.f32.mrb[0].mxu0
    %v1171 = vadd.f32 0.0, %v1170
    %v1172 = vpop.f32.mrb[0].mxu0
    %1173 = vmatprep.mubr.bf16.mxu0 0
    %1174 = vmatmul.mubr.bf16.gmra.mrb[0].mxu0 %v1031
    %v1175 = vpop.f32.mrb[0].mxu0
    %v1176 = vadd.f32 0.0, %v1175
    %v1177 = vpop.f32.mrb[0].mxu0
    %v1178 = vpop.f32.mrb[0].mxu0
    %v1179 = vadd.f32 0.0, %v1178
    %v1180 = vpop.f32.mrb[0].mxu0
    %1181 = vmatprep.mubr.bf16.mxu0 0
    %1182 = vmatmul.mubr.bf16.gmra.mrb[0].mxu0 %v1034
    %v1183 = vpop.f32.mrb[0].mxu0
    %v1184 = vadd.f32 0.0, %v1183
    %v1185 = vpop.f32.mrb[0].mxu0
    %v1186 = vpop.f32.mrb[0].mxu0
    %v1187 = vadd.f32 0.0, %v1186
    %v1188 = vpop.f32.mrb[0].mxu0
    %1189 = vmatprep.mubr.bf16.mxu0 0
    %1190 = vmatmul.mubr.bf16.gmra.mrb[0].mxu0 %v1037
    %v1191 = vpop.f32.mrb[0].mxu0
    %v1192 = vadd.f32 0.0, %v1191
    %v1193 = vpop.f32.mrb[0].mxu0
    %v1194 = vpop.f32.mrb[0].mxu0
    %v1195 = vadd.f32 0.0, %v1194
    %v1196 = vpop.f32.mrb[0].mxu0
    %1197 = vmatprep.mubr.bf16.mxu0 0
    %1198 = vmatmul.mubr.bf16.gmra.mrb[0].mxu0 %v1040
    %v1199 = vpop.f32.mrb[0].mxu0
    %v1200 = vadd.f32 0.0, %v1199
    %v1201 = vpop.f32.mrb[0].mxu0
    %v1202 = vpop.f32.mrb[0].mxu0
    %v1203 = vadd.f32 0.0, %v1202
    %v1204 = vpop.f32.mrb[0].mxu0
    %1205 = vmatprep.mubr.bf16.mxu0 0
    %1206 = vmatmul.mubr.bf16.gmra.mrb[0].mxu0 %v1043
    %v1207 = vpop.f32.mrb[0].mxu0
    %v1208 = vadd.f32 0.0, %v1207
    %v1209 = vpop.f32.mrb[0].mxu0
    %v1210 = vpop.f32.mrb[0].mxu0
    %v1211 = vadd.f32 0.0, %v1210
    %v1212 = vpop.f32.mrb[0].mxu0
    %1213 = vmatprep.mubr.bf16.mxu0 0
    %1214 = vmatmul.mubr.bf16.gmra.mrb[0].mxu0 %v1046
    %v1215 = vpop.f32.mrb[0].mxu0
    %v1216 = vadd.f32 0.0, %v1215
    %v1217 = vpop.f32.mrb[0].mxu0
    %v1218 = vpop.f32.mrb[0].mxu0
    %v1219 = vadd.f32 0.0, %v1218
    %v1220 = vpop.f32.mrb[0].mxu0
    %1221 = vmatprep.mubr.bf16.mxu0 0
    %1222 = vmatmul.mubr.bf16.gmra.mrb[0].mxu0 %v1049
    %v1223 = vpop.f32.mrb[0].mxu0
    %v1224 = vadd.f32 0.0, %v1223
    %v1225 = vpop.f32.mrb[0].mxu0
    %v1226 = vpop.f32.mrb[0].mxu0
    %v1227 = vadd.f32 0.0, %v1226
    %v1228 = vpop.f32.mrb[0].mxu0
    %1229 = vmatprep.mubr.bf16.mxu0 0
    %1230 = vmatmul.mubr.bf16.gmra.mrb[0].mxu0 %v1052
    %v1231 = vpop.f32.mrb[0].mxu0
    %v1232 = vadd.f32 0.0, %v1231
    %v1233 = vpop.f32.mrb[0].mxu0
    %v1234 = vpop.f32.mrb[0].mxu0
    %v1235 = vadd.f32 0.0, %v1234
    %v1236 = vpop.f32.mrb[0].mxu0
    %1237 = vmatprep.mubr.bf16.mxu0 0
    %1238 = vmatmul.mubr.bf16.gmra.mrb[0].mxu0 %v1055
    %v1239 = vpop.f32.mrb[0].mxu0
    %v1240 = vadd.f32 0.0, %v1239
    %v1241 = vpop.f32.mrb[0].mxu0
    %v1242 = vpop.f32.mrb[0].mxu0
    %v1243 = vadd.f32 0.0, %v1242
    %v1244 = vpop.f32.mrb[0].mxu0
    %1245 = vmatprep.mubr.bf16.mxu0 0
    %1246 = vmatmul.mubr.bf16.gmra.mrb[0].mxu0 %v1058
    %v1247 = vpop.f32.mrb[0].mxu0
    %v1248 = vadd.f32 0.0, %v1247
    %v1249 = vpop.f32.mrb[0].mxu0
    %v1250 = vpop.f32.mrb[0].mxu0
    %v1251 = vadd.f32 0.0, %v1250
    %v1252 = vpop.f32.mrb[0].mxu0
    %1253 = vmatprep.mubr.bf16.mxu0 0
    %1254 = vmatmul.mubr.bf16.gmra.mrb[0].mxu0 %v1061
    %v1255 = vpop.f32.mrb[0].mxu0
    %v1256 = vadd.f32 0.0, %v1255
    %v1257 = vpop.f32.mrb[0].mxu0
    %v1258 = vpop.f32.mrb[0].mxu0
    %v1259 = vadd.f32 0.0, %v1258
    %v1260 = vpop.f32.mrb[0].mxu0
    %1261 = vmatprep.mubr.bf16.mxu0 0
    %1262 = vmatmul.mubr.bf16.gmra.mrb[0].mxu0 %v1064
    %v1263 = vpop.f32.mrb[0].mxu0
    %v1264 = vadd.f32 0.0, %v1263
    %v1265 = vpop.f32.mrb[0].mxu0
    %v1266 = vpop.f32.mrb[0].mxu0
    %v1267 = vadd.f32 0.0, %v1266
    %v1268 = vpop.f32.mrb[0].mxu0
    %1269 = vmatprep.mubr.bf16.mxu0 0
    %1270 = vmatmul.mubr.bf16.gmra.mrb[0].mxu0 %v1067
    %v1271 = vpop.f32.mrb[0].mxu0
    %v1272 = vadd.f32 0.0, %v1271
    %v1273 = vpop.f32.mrb[0].mxu0
    %v1274 = vpop.f32.mrb[0].mxu0
    %v1275 = vadd.f32 0.0, %v1274
    %v1276 = vpop.f32.mrb[0].mxu0
    %1277 = vmatprep.mubr.bf16.mxu0 0
    %1278 = vmatmul.mubr.bf16.gmra.mrb[0].mxu0 %v1070
    %v1279 = vpop.f32.mrb[0].mxu0
    %v1280 = vadd.f32 0.0, %v1279
    %v1281 = vpop.f32.mrb[0].mxu0
    %v1282 = vpop.f32.mrb[0].mxu0
    %v1283 = vadd.f32 0.0, %v1282
    %v1284 = vpop.f32.mrb[0].mxu0
    %1285 = vmatprep.mubr.bf16.mxu0 0
    %1286 = vmatmul.mubr.bf16.gmra.mrb[0].mxu0 %v1073
    %v1287 = vpop.f32.mrb[0].mxu0
    %v1288 = vadd.f32 0.0, %v1287
    %v1289 = vpop.f32.mrb[0].mxu0
    %v1290 = vpop.f32.mrb[0].mxu0
    %v1291 = vadd.f32 0.0, %v1290
    %v1292 = vpop.f32.mrb[0].mxu0
    %1293 = vmatprep.mubr.bf16.mxu0 0
    %1294 = vmatmul.mubr.bf16.gmra.mrb[0].mxu0 %v1076
    %v1295 = vpop.f32.mrb[0].mxu0
    %v1296 = vadd.f32 0.0, %v1295
    %v1297 = vpop.f32.mrb[0].mxu0
    %v1298 = vpop.f32.mrb[0].mxu0
    %v1299 = vadd.f32 0.0, %v1298
    %v1300 = vpop.f32.mrb[0].mxu0
    %1301 = vmatprep.mubr.bf16.mxu0 0
    %1302 = vmatmul.mubr.bf16.gmra.mrb[0].mxu0 %v1079
    %v1303 = vpop.f32.mrb[0].mxu0
    %v1304 = vadd.f32 0.0, %v1303
    %v1305 = vpop.f32.mrb[0].mxu0
    %v1306 = vpop.f32.mrb[0].mxu0
    %v1307 = vadd.f32 0.0, %v1306
    %v1308 = vpop.f32.mrb[0].mxu0
    %1309 = vmatprep.mubr.bf16.mxu0 0
    %1310 = vmatmul.mubr.bf16.gmra.mrb[0].mxu0 %v1082
    %v1311 = vpop.f32.mrb[0].mxu0
    %v1312 = vadd.f32 0.0, %v1311
    %v1313 = vpop.f32.mrb[0].mxu0
    %v1314 = vpop.f32.mrb[0].mxu0
    %v1315 = vadd.f32 0.0, %v1314
    %v1316 = vpop.f32.mrb[0].mxu0
    %1317 = vmatprep.mubr.bf16.mxu0 0
    %1318 = vmatmul.mubr.bf16.gmra.mrb[0].mxu0 %v1085
    %v1319 = vpop.f32.mrb[0].mxu0
    %v1320 = vadd.f32 0.0, %v1319
    %v1321 = vpop.f32.mrb[0].mxu0
    %v1322 = vpop.f32.mrb[0].mxu0
    %v1323 = vadd.f32 0.0, %v1322
    %v1324 = vpop.f32.mrb[0].mxu0
    %1325 = vmatprep.mubr.bf16.mxu0 0
    %1326 = vmatmul.mubr.bf16.gmra.mrb[0].mxu0 %v1088
    %v1327 = vpop.f32.mrb[0].mxu0
    %v1328 = vadd.f32 0.0, %v1327
    %v1329 = vpop.f32.mrb[0].mxu0
    %v1330 = vpop.f32.mrb[0].mxu0
    %v1331 = vadd.f32 0.0, %v1330
    %v1332 = vpop.f32.mrb[0].mxu0
    %1333 = vmatprep.mubr.bf16.mxu0 0
    %1334 = vmatmul.mubr.bf16.gmra.mrb[0].mxu0 %v1091
    %v1335 = vpop.f32.mrb[0].mxu0
    %v1336 = vadd.f32 0.0, %v1335
    %v1337 = vpop.f32.mrb[0].mxu0
    %v1338 = vpop.f32.mrb[0].mxu0
    %v1339 = vadd.f32 0.0, %v1338
    %v1340 = vpop.f32.mrb[0].mxu0
    %1341 = vmatprep.mubr.bf16.mxu0 0
    %1342 = vmatmul.mubr.bf16.gmra.mrb[0].mxu0 %v1094
    %v1343 = vpop.f32.mrb[0].mxu0
    %v1344 = vadd.f32 0.0, %v1343
    %v1345 = vpop.f32.mrb[0].mxu0
    %v1346 = vpop.f32.mrb[0].mxu0
    %v1347 = vadd.f32 0.0, %v1346
    %v1348 = vpop.f32.mrb[0].mxu0
    %1349 = vmatprep.mubr.bf16.mxu0 0
    %1350 = vmatmul.mubr.bf16.gmra.mrb[0].mxu0 %v1097
    %v1351 = vpop.f32.mrb[0].mxu0
    %v1352 = vadd.f32 0.0, %v1351
    %v1353 = vpop.f32.mrb[0].mxu0
    %v1354 = vpop.f32.mrb[0].mxu0
    %v1355 = vadd.f32 0.0, %v1354
    %v1356 = vpop.f32.mrb[0].mxu0
    %1357 = vmatprep.mubr.bf16.mxu0 0
    %1358 = vmatmul.mubr.bf16.gmra.mrb[0].mxu0 %v1100
    %v1359 = vpop.f32.mrb[0].mxu0
    %v1360 = vadd.f32 0.0, %v1359
    %v1361 = vpop.f32.mrb[0].mxu0
    %v1362 = vpop.f32.mrb[0].mxu0
    %v1363 = vadd.f32 0.0, %v1362
    %v1364 = vpop.f32.mrb[0].mxu0
    %1365 = vmatprep.mubr.bf16.mxu0 0
    %1366 = vmatmul.mubr.bf16.gmra.mrb[0].mxu0 %v1103
    %v1367 = vpop.f32.mrb[0].mxu0
    %v1368 = vadd.f32 0.0, %v1367
    %v1369 = vpop.f32.mrb[0].mxu0
    %v1370 = vpop.f32.mrb[0].mxu0
    %v1371 = vadd.f32 0.0, %v1370
    %v1372 = vpop.f32.mrb[0].mxu0
    %1373 = vmatprep.mubr.bf16.mxu0 0
    %1374 = vmatmul.mubr.bf16.gmra.mrb[0].mxu0 %v1106
    %v1375 = vpop.f32.mrb[0].mxu0
    %v1376 = vadd.f32 0.0, %v1375
    %v1377 = vpop.f32.mrb[0].mxu0
    %v1378 = vpop.f32.mrb[0].mxu0
    %v1379 = vadd.f32 0.0, %v1378
    %v1380 = vpop.f32.mrb[0].mxu0
    %1381 = vmatprep.mubr.bf16.mxu0 0
    %1382 = vmatmul.mubr.bf16.gmra.mrb[0].mxu0 %v1109
    %v1383 = vpop.f32.mrb[0].mxu0
    %v1384 = vadd.f32 0.0, %v1383
    %v1385 = vpop.f32.mrb[0].mxu0
    %v1386 = vpop.f32.mrb[0].mxu0
    %v1387 = vadd.f32 0.0, %v1386
    %v1388 = vpop.f32.mrb[0].mxu0
    %1389 = vmatprep.mubr.bf16.mxu0 0
    %1390 = vmatmul.mubr.bf16.gmra.mrb[0].mxu0 %v1112
    %v1391 = vpop.f32.mrb[0].mxu0
    %v1392 = vadd.f32 0.0, %v1391
    %v1393 = vpop.f32.mrb[0].mxu0
    %v1394 = vpop.f32.mrb[0].mxu0
    %v1395 = vadd.f32 0.0, %v1394
    %v1396 = vpop.f32.mrb[0].mxu0
    %1397 = vmatprep.mubr.bf16.mxu0 0
    %1398 = vmatmul.mubr.bf16.gmra.mrb[0].mxu0 %v1115
    %v1399 = vpop.f32.mrb[0].mxu0
    %v1400 = vadd.f32 0.0, %v1399
    %v1401 = vpop.f32.mrb[0].mxu0
    %v1402 = vpop.f32.mrb[0].mxu0
    %v1403 = vadd.f32 0.0, %v1402
    %v1404 = vpop.f32.mrb[0].mxu0
    %1405 = vdwg.mxu0
    %v1470 = vunpack.c.l.b16 %v16
    %v1471 = vunpack.c.l.b16 %v17
    %v1472 = vunpack.c.l.b16 %v18
    %v1473 = vunpack.c.l.b16 %v19
    %v1474 = vunpack.c.l.b16 %v20
    %v1475 = vunpack.c.l.b16 %v21
    %v1476 = vunpack.c.l.b16 %v22
    %v1477 = vunpack.c.l.b16 %v23
    %v1478 = vunpack.c.l.b16 %v24
    %v1479 = vunpack.c.l.b16 %v25
    %v1480 = vunpack.c.l.b16 %v26
    %v1481 = vunpack.c.l.b16 %v27
    %v1482 = vunpack.c.l.b16 %v28
    %v1483 = vunpack.c.l.b16 %v29
    %v1484 = vunpack.c.l.b16 %v30
    %v1485 = vunpack.c.l.b16 %v31
    %v1486 = vunpack.c.l.b16 %v32
    %v1487 = vunpack.c.l.b16 %v33
    %v1488 = vunpack.c.l.b16 %v34
    %v1489 = vunpack.c.l.b16 %v35
    %v1490 = vunpack.c.l.b16 %v36
    %v1491 = vunpack.c.l.b16 %v37
    %v1492 = vunpack.c.l.b16 %v38
    %v1493 = vunpack.c.l.b16 %v39
    %v1494 = vunpack.c.l.b16 %v40
    %v1495 = vunpack.c.l.b16 %v41
    %v1496 = vunpack.c.l.b16 %v42
    %v1497 = vunpack.c.l.b16 %v43
    %v1498 = vunpack.c.l.b16 %v44
    %v1499 = vunpack.c.l.b16 %v45
    %v1500 = vunpack.c.l.b16 %v46
    %v1501 = vunpack.c.l.b16 %v47
    %v1502 = vunpack.c.l.b16 %v48
    %v1503 = vunpack.c.l.b16 %v49
    %v1504 = vunpack.c.l.b16 %v50
    %v1505 = vunpack.c.l.b16 %v51
    %v1506 = vunpack.c.l.b16 %v52
    %v1507 = vunpack.c.l.b16 %v53
    %v1508 = vunpack.c.l.b16 %v54
    %v1509 = vunpack.c.l.b16 %v55
    %v1510 = vunpack.c.l.b16 %v56
    %v1511 = vunpack.c.l.b16 %v57
    %v1512 = vunpack.c.l.b16 %v58
    %v1513 = vunpack.c.l.b16 %v59
    %v1514 = vunpack.c.l.b16 %v60
    %v1515 = vunpack.c.l.b16 %v61
    %v1516 = vunpack.c.l.b16 %v62
    %v1517 = vunpack.c.l.b16 %v63
    %v1518 = vunpack.c.l.b16 %v64
    %v1519 = vunpack.c.l.b16 %v65
    %v1520 = vunpack.c.l.b16 %v66
    %v1521 = vunpack.c.l.b16 %v67
    %v1522 = vunpack.c.l.b16 %v68
    %v1523 = vunpack.c.l.b16 %v69
    %v1524 = vunpack.c.l.b16 %v70
    %v1525 = vunpack.c.l.b16 %v71
    %v1526 = vunpack.c.l.b16 %v72
    %v1527 = vunpack.c.l.b16 %v73
    %v1528 = vunpack.c.l.b16 %v74
    %v1529 = vunpack.c.l.b16 %v75
    %v1530 = vunpack.c.l.b16 %v76
    %v1531 = vunpack.c.l.b16 %v77
    %v1532 = vunpack.c.l.b16 %v78
    %v1533 = vunpack.c.l.b16 %v79
    %v1534 = vpack.c.b16 %v1471, %v1470
    %v1535 = vpack.c.b16 %v1473, %v1472
    %v1536 = vpack.c.b16 %v1475, %v1474
    %v1537 = vpack.c.b16 %v1477, %v1476
    %v1538 = vpack.c.b16 %v1479, %v1478
    %v1539 = vpack.c.b16 %v1481, %v1480
    %v1540 = vpack.c.b16 %v1483, %v1482
    %v1541 = vpack.c.b16 %v1485, %v1484
    %v1542 = vpack.c.b16 %v1487, %v1486
    %v1543 = vpack.c.b16 %v1489, %v1488
    %v1544 = vpack.c.b16 %v1491, %v1490
    %v1545 = vpack.c.b16 %v1493, %v1492
    %v1546 = vpack.c.b16 %v1495, %v1494
    %v1547 = vpack.c.b16 %v1497, %v1496
    %v1548 = vpack.c.b16 %v1499, %v1498
    %v1549 = vpack.c.b16 %v1501, %v1500
    %v1550 = vpack.c.b16 %v1503, %v1502
    %v1551 = vpack.c.b16 %v1505, %v1504
    %v1552 = vpack.c.b16 %v1507, %v1506
    %v1553 = vpack.c.b16 %v1509, %v1508
    %v1554 = vpack.c.b16 %v1511, %v1510
    %v1555 = vpack.c.b16 %v1513, %v1512
    %v1556 = vpack.c.b16 %v1515, %v1514
    %v1557 = vpack.c.b16 %v1517, %v1516
    %v1558 = vpack.c.b16 %v1519, %v1518
    %v1559 = vpack.c.b16 %v1521, %v1520
    %v1560 = vpack.c.b16 %v1523, %v1522
    %v1561 = vpack.c.b16 %v1525, %v1524
    %v1562 = vpack.c.b16 %v1527, %v1526
    %v1563 = vpack.c.b16 %v1529, %v1528
    %v1564 = vpack.c.b16 %v1531, %v1530
    %v1565 = vpack.c.b16 %v1533, %v1532
    %v1574 = vunpack.c.l.b16 %v80
    %v1575 = vunpack.c.l.b16 %v81
    %v1576 = vunpack.c.l.b16 %v82
    %v1577 = vunpack.c.l.b16 %v83
    %v1578 = vunpack.c.l.b16 %v84
    %v1579 = vunpack.c.l.b16 %v85
    %v1580 = vunpack.c.l.b16 %v86
    %v1581 = vunpack.c.l.b16 %v87
    %v1582 = vpack.c.b16 %v1575, %v1574
    %v1583 = vpack.c.b16 %v1577, %v1576
    %v1584 = vpack.c.b16 %v1579, %v1578
    %v1585 = vpack.c.b16 %v1581, %v1580
    %v1591 = vsel %vm1020, %v1534, 0
    %v1594 = vsel %vm1020, %v1535, 0
    %v1597 = vsel %vm1020, %v1536, 0
    %v1600 = vsel %vm1020, %v1537, 0
    %v1603 = vsel %vm1020, %v1538, 0
    %v1606 = vsel %vm1020, %v1539, 0
    %v1609 = vsel %vm1020, %v1540, 0
    %v1612 = vsel %vm1020, %v1541, 0
    %v1615 = vsel %vm1020, %v1542, 0
    %v1618 = vsel %vm1020, %v1543, 0
    %v1621 = vsel %vm1020, %v1544, 0
    %v1624 = vsel %vm1020, %v1545, 0
    %v1627 = vsel %vm1020, %v1546, 0
    %v1630 = vsel %vm1020, %v1547, 0
    %v1633 = vsel %vm1020, %v1548, 0
    %v1636 = vsel %vm1020, %v1549, 0
    %v1639 = vsel %vm1020, %v1550, 0
    %v1642 = vsel %vm1020, %v1551, 0
    %v1645 = vsel %vm1020, %v1552, 0
    %v1648 = vsel %vm1020, %v1553, 0
    %v1651 = vsel %vm1020, %v1554, 0
    %v1654 = vsel %vm1020, %v1555, 0
    %v1657 = vsel %vm1020, %v1556, 0
    %v1660 = vsel %vm1020, %v1557, 0
    %v1663 = vsel %vm1020, %v1558, 0
    %v1666 = vsel %vm1020, %v1559, 0
    %v1669 = vsel %vm1020, %v1560, 0
    %v1672 = vsel %vm1020, %v1561, 0
    %v1675 = vsel %vm1020, %v1562, 0
    %v1678 = vsel %vm1020, %v1563, 0
    %v1681 = vsel %vm1020, %v1564, 0
    %v1684 = vsel %vm1020, %v1565, 0
    %1686 = vmatprep.subr.bf16.mxu0 0
    %1687 = vmatpush1.bf16.msra.mxu0 %v1582
    %1688 = vmatprep.subr.bf16.mxu0 0
    %1689 = vmatpush1.bf16.msra.mxu0 %v1583
    %1690 = vmatprep.subr.bf16.mxu0 0
    %1691 = vmatpush1.bf16.msra.mxu0 %v1584
    %1692 = vmatprep.subr.bf16.mxu0 0
    %1693 = vmatpush1.bf16.msra.mxu0 %v1585
    %1694 = vmatprep.subr.bf16.mxu0 0
    %1695 = vmatpush1.bf16.msra.mxu0 0
    %1696 = vmatprep.subr.bf16.mxu0 0
    %1697 = vmatpush1.bf16.msra.mxu0 0
    %1698 = vmatprep.subr.bf16.mxu0 0
    %1699 = vmatpush1.bf16.msra.mxu0 0
    %1700 = vmatprep.subr.bf16.mxu0 0
    %1701 = vmatpush1.bf16.msra.mxu0 0
    %1702 = vmatprep.subr.bf16.mxu0 0
    %1703 = vmatpush1.bf16.msra.mxu0 0
    %1704 = vmatprep.subr.bf16.mxu0 0
    %1705 = vmatpush1.bf16.msra.mxu0 0
    %1706 = vmatprep.subr.bf16.mxu0 0
    %1707 = vmatpush1.bf16.msra.mxu0 0
    %1708 = vmatprep.subr.bf16.mxu0 0
    %1709 = vmatpush1.bf16.msra.mxu0 0
    %1710 = vmatprep.subr.bf16.mxu0 0
    %1711 = vmatpush1.bf16.msra.mxu0 0
    %1712 = vmatprep.subr.bf16.mxu0 0
    %1713 = vmatpush1.bf16.msra.mxu0 0
    %1714 = vmatprep.subr.bf16.mxu0 0
    %1715 = vmatpush1.bf16.msra.mxu0 0
    %1716 = vmatprep.subr.bf16.mxu0 0
    %1717 = vmatpush1.bf16.msra.mxu0 0
    %1718 = vmatprep.mubr.bf16.mxu0 0
    %1719 = vmatmul.mubr.bf16.gmra.mrb[0].mxu0 %v1591
    %v1720 = vpop.f32.mrb[0].mxu0
    %v1721 = vadd.f32 %v1152, %v1720
    %v1722 = vpop.f32.mrb[0].mxu0
    %v1723 = vpop.f32.mrb[0].mxu0
    %v1724 = vadd.f32 %v1155, %v1723
    %v1725 = vpop.f32.mrb[0].mxu0
    %1726 = vmatprep.mubr.bf16.mxu0 0
    %1727 = vmatmul.mubr.bf16.gmra.mrb[0].mxu0 %v1594
    %v1728 = vpop.f32.mrb[0].mxu0
    %v1729 = vadd.f32 %v1160, %v1728
    %v1730 = vpop.f32.mrb[0].mxu0
    %v1731 = vpop.f32.mrb[0].mxu0
    %v1732 = vadd.f32 %v1163, %v1731
    %v1733 = vpop.f32.mrb[0].mxu0
    %1734 = vmatprep.mubr.bf16.mxu0 0
    %1735 = vmatmul.mubr.bf16.gmra.mrb[0].mxu0 %v1597
    %v1736 = vpop.f32.mrb[0].mxu0
    %v1737 = vadd.f32 %v1168, %v1736
    %v1738 = vpop.f32.mrb[0].mxu0
    %v1739 = vpop.f32.mrb[0].mxu0
    %v1740 = vadd.f32 %v1171, %v1739
    %v1741 = vpop.f32.mrb[0].mxu0
    %1742 = vmatprep.mubr.bf16.mxu0 0
    %1743 = vmatmul.mubr.bf16.gmra.mrb[0].mxu0 %v1600
    %v1744 = vpop.f32.mrb[0].mxu0
    %v1745 = vadd.f32 %v1176, %v1744
    %v1746 = vpop.f32.mrb[0].mxu0
    %v1747 = vpop.f32.mrb[0].mxu0
    %v1748 = vadd.f32 %v1179, %v1747
    %v1749 = vpop.f32.mrb[0].mxu0
    %1750 = vmatprep.mubr.bf16.mxu0 0
    %1751 = vmatmul.mubr.bf16.gmra.mrb[0].mxu0 %v1603
    %v1752 = vpop.f32.mrb[0].mxu0
    %v1753 = vadd.f32 %v1184, %v1752
    %v1754 = vpop.f32.mrb[0].mxu0
    %v1755 = vpop.f32.mrb[0].mxu0
    %v1756 = vadd.f32 %v1187, %v1755
    %v1757 = vpop.f32.mrb[0].mxu0
    %1758 = vmatprep.mubr.bf16.mxu0 0
    %1759 = vmatmul.mubr.bf16.gmra.mrb[0].mxu0 %v1606
    %v1760 = vpop.f32.mrb[0].mxu0
    %v1761 = vadd.f32 %v1192, %v1760
    %v1762 = vpop.f32.mrb[0].mxu0
    %v1763 = vpop.f32.mrb[0].mxu0
    %v1764 = vadd.f32 %v1195, %v1763
    %v1765 = vpop.f32.mrb[0].mxu0
    %1766 = vmatprep.mubr.bf16.mxu0 0
    %1767 = vmatmul.mubr.bf16.gmra.mrb[0].mxu0 %v1609
    %v1768 = vpop.f32.mrb[0].mxu0
    %v1769 = vadd.f32 %v1200, %v1768
    %v1770 = vpop.f32.mrb[0].mxu0
    %v1771 = vpop.f32.mrb[0].mxu0
    %v1772 = vadd.f32 %v1203, %v1771
    %v1773 = vpop.f32.mrb[0].mxu0
    %1774 = vmatprep.mubr.bf16.mxu0 0
    %1775 = vmatmul.mubr.bf16.gmra.mrb[0].mxu0 %v1612
    %v1776 = vpop.f32.mrb[0].mxu0
    %v1777 = vadd.f32 %v1208, %v1776
    %v1778 = vpop.f32.mrb[0].mxu0
    %v1779 = vpop.f32.mrb[0].mxu0
    %v1780 = vadd.f32 %v1211, %v1779
    %v1781 = vpop.f32.mrb[0].mxu0
    %1782 = vmatprep.mubr.bf16.mxu0 0
    %1783 = vmatmul.mubr.bf16.gmra.mrb[0].mxu0 %v1615
    %v1784 = vpop.f32.mrb[0].mxu0
    %v1785 = vadd.f32 %v1216, %v1784
    %v1786 = vpop.f32.mrb[0].mxu0
    %v1787 = vpop.f32.mrb[0].mxu0
    %v1788 = vadd.f32 %v1219, %v1787
    %v1789 = vpop.f32.mrb[0].mxu0
    %1790 = vmatprep.mubr.bf16.mxu0 0
    %1791 = vmatmul.mubr.bf16.gmra.mrb[0].mxu0 %v1618
    %v1792 = vpop.f32.mrb[0].mxu0
    %v1793 = vadd.f32 %v1224, %v1792
    %v1794 = vpop.f32.mrb[0].mxu0
    %v1795 = vpop.f32.mrb[0].mxu0
    %v1796 = vadd.f32 %v1227, %v1795
    %v1797 = vpop.f32.mrb[0].mxu0
    %1798 = vmatprep.mubr.bf16.mxu0 0
    %1799 = vmatmul.mubr.bf16.gmra.mrb[0].mxu0 %v1621
    %v1800 = vpop.f32.mrb[0].mxu0
    %v1801 = vadd.f32 %v1232, %v1800
    %v1802 = vpop.f32.mrb[0].mxu0
    %v1803 = vpop.f32.mrb[0].mxu0
    %v1804 = vadd.f32 %v1235, %v1803
    %v1805 = vpop.f32.mrb[0].mxu0
    %1806 = vmatprep.mubr.bf16.mxu0 0
    %1807 = vmatmul.mubr.bf16.gmra.mrb[0].mxu0 %v1624
    %v1808 = vpop.f32.mrb[0].mxu0
    %v1809 = vadd.f32 %v1240, %v1808
    %v1810 = vpop.f32.mrb[0].mxu0
    %v1811 = vpop.f32.mrb[0].mxu0
    %v1812 = vadd.f32 %v1243, %v1811
    %v1813 = vpop.f32.mrb[0].mxu0
    %1814 = vmatprep.mubr.bf16.mxu0 0
    %1815 = vmatmul.mubr.bf16.gmra.mrb[0].mxu0 %v1627
    %v1816 = vpop.f32.mrb[0].mxu0
    %v1817 = vadd.f32 %v1248, %v1816
    %v1818 = vpop.f32.mrb[0].mxu0
    %v1819 = vpop.f32.mrb[0].mxu0
    %v1820 = vadd.f32 %v1251, %v1819
    %v1821 = vpop.f32.mrb[0].mxu0
    %1822 = vmatprep.mubr.bf16.mxu0 0
    %1823 = vmatmul.mubr.bf16.gmra.mrb[0].mxu0 %v1630
    %v1824 = vpop.f32.mrb[0].mxu0
    %v1825 = vadd.f32 %v1256, %v1824
    %v1826 = vpop.f32.mrb[0].mxu0
    %v1827 = vpop.f32.mrb[0].mxu0
    %v1828 = vadd.f32 %v1259, %v1827
    %v1829 = vpop.f32.mrb[0].mxu0
    %1830 = vmatprep.mubr.bf16.mxu0 0
    %1831 = vmatmul.mubr.bf16.gmra.mrb[0].mxu0 %v1633
    %v1832 = vpop.f32.mrb[0].mxu0
    %v1833 = vadd.f32 %v1264, %v1832
    %v1834 = vpop.f32.mrb[0].mxu0
    %v1835 = vpop.f32.mrb[0].mxu0
    %v1836 = vadd.f32 %v1267, %v1835
    %v1837 = vpop.f32.mrb[0].mxu0
    %1838 = vmatprep.mubr.bf16.mxu0 0
    %1839 = vmatmul.mubr.bf16.gmra.mrb[0].mxu0 %v1636
    %v1840 = vpop.f32.mrb[0].mxu0
    %v1841 = vadd.f32 %v1272, %v1840
    %v1842 = vpop.f32.mrb[0].mxu0
    %v1843 = vpop.f32.mrb[0].mxu0
    %v1844 = vadd.f32 %v1275, %v1843
    %v1845 = vpop.f32.mrb[0].mxu0
    %1846 = vmatprep.mubr.bf16.mxu0 0
    %1847 = vmatmul.mubr.bf16.gmra.mrb[0].mxu0 %v1639
    %v1848 = vpop.f32.mrb[0].mxu0
    %v1849 = vadd.f32 %v1280, %v1848
    %v1850 = vpop.f32.mrb[0].mxu0
    %v1851 = vpop.f32.mrb[0].mxu0
    %v1852 = vadd.f32 %v1283, %v1851
    %v1853 = vpop.f32.mrb[0].mxu0
    %1854 = vmatprep.mubr.bf16.mxu0 0
    %1855 = vmatmul.mubr.bf16.gmra.mrb[0].mxu0 %v1642
    %v1856 = vpop.f32.mrb[0].mxu0
    %v1857 = vadd.f32 %v1288, %v1856
    %v1858 = vpop.f32.mrb[0].mxu0
    %v1859 = vpop.f32.mrb[0].mxu0
    %v1860 = vadd.f32 %v1291, %v1859
    %v1861 = vpop.f32.mrb[0].mxu0
    %1862 = vmatprep.mubr.bf16.mxu0 0
    %1863 = vmatmul.mubr.bf16.gmra.mrb[0].mxu0 %v1645
    %v1864 = vpop.f32.mrb[0].mxu0
    %v1865 = vadd.f32 %v1296, %v1864
    %v1866 = vpop.f32.mrb[0].mxu0
    %v1867 = vpop.f32.mrb[0].mxu0
    %v1868 = vadd.f32 %v1299, %v1867
    %v1869 = vpop.f32.mrb[0].mxu0
    %1870 = vmatprep.mubr.bf16.mxu0 0
    %1871 = vmatmul.mubr.bf16.gmra.mrb[0].mxu0 %v1648
    %v1872 = vpop.f32.mrb[0].mxu0
    %v1873 = vadd.f32 %v1304, %v1872
    %v1874 = vpop.f32.mrb[0].mxu0
    %v1875 = vpop.f32.mrb[0].mxu0
    %v1876 = vadd.f32 %v1307, %v1875
    %v1877 = vpop.f32.mrb[0].mxu0
    %1878 = vmatprep.mubr.bf16.mxu0 0
    %1879 = vmatmul.mubr.bf16.gmra.mrb[0].mxu0 %v1651
    %v1880 = vpop.f32.mrb[0].mxu0
    %v1881 = vadd.f32 %v1312, %v1880
    %v1882 = vpop.f32.mrb[0].mxu0
    %v1883 = vpop.f32.mrb[0].mxu0
    %v1884 = vadd.f32 %v1315, %v1883
    %v1885 = vpop.f32.mrb[0].mxu0
    %1886 = vmatprep.mubr.bf16.mxu0 0
    %1887 = vmatmul.mubr.bf16.gmra.mrb[0].mxu0 %v1654
    %v1888 = vpop.f32.mrb[0].mxu0
    %v1889 = vadd.f32 %v1320, %v1888
    %v1890 = vpop.f32.mrb[0].mxu0
    %v1891 = vpop.f32.mrb[0].mxu0
    %v1892 = vadd.f32 %v1323, %v1891
    %v1893 = vpop.f32.mrb[0].mxu0
    %1894 = vmatprep.mubr.bf16.mxu0 0
    %1895 = vmatmul.mubr.bf16.gmra.mrb[0].mxu0 %v1657
    %v1896 = vpop.f32.mrb[0].mxu0
    %v1897 = vadd.f32 %v1328, %v1896
    %v1898 = vpop.f32.mrb[0].mxu0
    %v1899 = vpop.f32.mrb[0].mxu0
    %v1900 = vadd.f32 %v1331, %v1899
    %v1901 = vpop.f32.mrb[0].mxu0
    %1902 = vmatprep.mubr.bf16.mxu0 0
    %1903 = vmatmul.mubr.bf16.gmra.mrb[0].mxu0 %v1660
    %v1904 = vpop.f32.mrb[0].mxu0
    %v1905 = vadd.f32 %v1336, %v1904
    %v1906 = vpop.f32.mrb[0].mxu0
    %v1907 = vpop.f32.mrb[0].mxu0
    %v1908 = vadd.f32 %v1339, %v1907
    %v1909 = vpop.f32.mrb[0].mxu0
    %1910 = vmatprep.mubr.bf16.mxu0 0
    %1911 = vmatmul.mubr.bf16.gmra.mrb[0].mxu0 %v1663
    %v1912 = vpop.f32.mrb[0].mxu0
    %v1913 = vadd.f32 %v1344, %v1912
    %v1914 = vpop.f32.mrb[0].mxu0
    %v1915 = vpop.f32.mrb[0].mxu0
    %v1916 = vadd.f32 %v1347, %v1915
    %v1917 = vpop.f32.mrb[0].mxu0
    %1918 = vmatprep.mubr.bf16.mxu0 0
    %1919 = vmatmul.mubr.bf16.gmra.mrb[0].mxu0 %v1666
    %v1920 = vpop.f32.mrb[0].mxu0
    %v1921 = vadd.f32 %v1352, %v1920
    %v1922 = vpop.f32.mrb[0].mxu0
    %v1923 = vpop.f32.mrb[0].mxu0
    %v1924 = vadd.f32 %v1355, %v1923
    %v1925 = vpop.f32.mrb[0].mxu0
    %1926 = vmatprep.mubr.bf16.mxu0 0
    %1927 = vmatmul.mubr.bf16.gmra.mrb[0].mxu0 %v1669
    %v1928 = vpop.f32.mrb[0].mxu0
    %v1929 = vadd.f32 %v1360, %v1928
    %v1930 = vpop.f32.mrb[0].mxu0
    %v1931 = vpop.f32.mrb[0].mxu0
    %v1932 = vadd.f32 %v1363, %v1931
    %v1933 = vpop.f32.mrb[0].mxu0
    %1934 = vmatprep.mubr.bf16.mxu0 0
    %1935 = vmatmul.mubr.bf16.gmra.mrb[0].mxu0 %v1672
    %v1936 = vpop.f32.mrb[0].mxu0
    %v1937 = vadd.f32 %v1368, %v1936
    %v1938 = vpop.f32.mrb[0].mxu0
    %v1939 = vpop.f32.mrb[0].mxu0
    %v1940 = vadd.f32 %v1371, %v1939
    %v1941 = vpop.f32.mrb[0].mxu0
    %1942 = vmatprep.mubr.bf16.mxu0 0
    %1943 = vmatmul.mubr.bf16.gmra.mrb[0].mxu0 %v1675
    %v1944 = vpop.f32.mrb[0].mxu0
    %v1945 = vadd.f32 %v1376, %v1944
    %v1946 = vpop.f32.mrb[0].mxu0
    %v1947 = vpop.f32.mrb[0].mxu0
    %v1948 = vadd.f32 %v1379, %v1947
    %v1949 = vpop.f32.mrb[0].mxu0
    %1950 = vmatprep.mubr.bf16.mxu0 0
    %1951 = vmatmul.mubr.bf16.gmra.mrb[0].mxu0 %v1678
    %v1952 = vpop.f32.mrb[0].mxu0
    %v1953 = vadd.f32 %v1384, %v1952
    %v1954 = vpop.f32.mrb[0].mxu0
    %v1955 = vpop.f32.mrb[0].mxu0
    %v1956 = vadd.f32 %v1387, %v1955
    %v1957 = vpop.f32.mrb[0].mxu0
    %1958 = vmatprep.mubr.bf16.mxu0 0
    %1959 = vmatmul.mubr.bf16.gmra.mrb[0].mxu0 %v1681
    %v1960 = vpop.f32.mrb[0].mxu0
    %v1961 = vadd.f32 %v1392, %v1960
    %v1962 = vpop.f32.mrb[0].mxu0
    %v1963 = vpop.f32.mrb[0].mxu0
    %v1964 = vadd.f32 %v1395, %v1963
    %v1965 = vpop.f32.mrb[0].mxu0
    %1966 = vmatprep.mubr.bf16.mxu0 0
    %1967 = vmatmul.mubr.bf16.gmra.mrb[0].mxu0 %v1684
    %v1968 = vpop.f32.mrb[0].mxu0
    %v1969 = vadd.f32 %v1400, %v1968
    %v1970 = vpop.f32.mrb[0].mxu0
    %v1971 = vpop.f32.mrb[0].mxu0
    %v1972 = vadd.f32 %v1403, %v1971
    %v1973 = vpop.f32.mrb[0].mxu0
    %1974 = vdwg.mxu0
    %v1975 = vld [vmem:[%s0] sm:$0xe]
    %v1976 = vld [vmem:[%s0 + $0xc] sm:$0xe]
    %v1977 = vld [vmem:[%s0 + $0x18] sm:$0xe]
    %v1978 = vld [vmem:[%s0 + $0x24] sm:$0xe]
    %v1979 = vld [vmem:[%s0 + $0x30] sm:$0xe]
    %v1980 = vld [vmem:[%s0 + $0x3c] sm:$0xe]
    %v1981 = vld [vmem:[%s0 + $0x48] sm:$0xe]
    %v1982 = vld [vmem:[%s0 + $0x54] sm:$0xe]
    %v1983 = vld [vmem:[%s0 + $0x60] sm:$0xe]
    %v1984 = vld [vmem:[%s0 + $0x6c] sm:$0xe]
    %v1985 = vld [vmem:[%s0 + $0x78] sm:$0xe]
    %v1986 = vld [vmem:[%s0 + $0x84] sm:$0xe]
    %v1987 = vld [vmem:[%s0 + $0x90] sm:$0xe]
    %v1988 = vld [vmem:[%s0 + $0x9c] sm:$0xe]
    %v1989 = vld [vmem:[%s0 + $0xa8] sm:$0xe]
    %v1990 = vld [vmem:[%s0 + $0xb4] sm:$0xe]
    %v1991 = vld [vmem:[%s0 + $0xd8] sm:$0xe]
    %v1992 = vld [vmem:[%s0 + $0xe4] sm:$0xe]
    %v1993 = vld [vmem:[%s0 + $0xf0] sm:$0xe]
    %v1994 = vld [vmem:[%s0 + $0xfc] sm:$0xe]
    %v1995 = vld [vmem:[%s0 + $0x108] sm:$0xe]
    %v1996 = vld [vmem:[%s0 + $0x114] sm:$0xe]
    %v1997 = vld [vmem:[%s0 + $0x120] sm:$0xe]
    %v1998 = vld [vmem:[%s0 + $0x12c] sm:$0xe]
    %v1999 = vld [vmem:[%s0 + $0x138] sm:$0xe]
    %v2000 = vld [vmem:[%s0 + $0x144] sm:$0xe]
    %v2001 = vld [vmem:[%s0 + $0x150] sm:$0xe]
    %v2002 = vld [vmem:[%s0 + $0x15c] sm:$0xe]
    %v2003 = vld [vmem:[%s0 + $0x168] sm:$0xe]
    %v2004 = vld [vmem:[%s0 + $0x174] sm:$0xe]
    %v2005 = vld [vmem:[%s0 + $0x180] sm:$0xe]
    %v2006 = vld [vmem:[%s0 + $0x18c] sm:$0xe]
    %vm2071 = vcmask 1042432
    %vm2072 = vcmask 1046532
    %vm2073 = vmor %vm2071, %vm2072
    %v2074 = vrot.slane %v1975, 5
    %v2075 = vrot.slane %v2074, 4
    %v2076 = vrot.slane %v17, 5
    %v2077 = vsel %vm2073, %v2075, %v2076
    %v2078 = vrot.slane %v2076, 4
    %v2079 = vrot.slane %v88, 5
    %v2080 = vsel %vm2073, %v2078, %v2079
    %v2081 = vrot.slane %v1976, 5
    %v2082 = vrot.slane %v2081, 4
    %v2083 = vrot.slane %v19, 5
    %v2084 = vsel %vm2073, %v2082, %v2083
    %v2085 = vrot.slane %v2083, 4
    %v2086 = vrot.slane %v89, 5
    %v2087 = vsel %vm2073, %v2085, %v2086
    %v2088 = vrot.slane %v1977, 5
    %v2089 = vrot.slane %v2088, 4
    %v2090 = vrot.slane %v21, 5
    %v2091 = vsel %vm2073, %v2089, %v2090
    %v2092 = vrot.slane %v2090, 4
    %v2093 = vrot.slane %v90, 5
    %v2094 = vsel %vm2073, %v2092, %v2093
    %v2095 = vrot.slane %v1978, 5
    %v2096 = vrot.slane %v2095, 4
    %v2097 = vrot.slane %v23, 5
    %v2098 = vsel %vm2073, %v2096, %v2097
    %v2099 = vrot.slane %v2097, 4
    %v2100 = vrot.slane %v91, 5
    %v2101 = vsel %vm2073, %v2099, %v2100
    %v2102 = vrot.slane %v1979, 5
    %v2103 = vrot.slane %v2102, 4
    %v2104 = vrot.slane %v25, 5
    %v2105 = vsel %vm2073, %v2103, %v2104
    %v2106 = vrot.slane %v2104, 4
    %v2107 = vrot.slane %v92, 5
    %v2108 = vsel %vm2073, %v2106, %v2107
    %v2109 = vrot.slane %v1980, 5
    %v2110 = vrot.slane %v2109, 4
    %v2111 = vrot.slane %v27, 5
    %v2112 = vsel %vm2073, %v2110, %v2111
    %v2113 = vrot.slane %v2111, 4
    %v2114 = vrot.slane %v93, 5
    %v2115 = vsel %vm2073, %v2113, %v2114
    %v2116 = vrot.slane %v1981, 5
    %v2117 = vrot.slane %v2116, 4
    %v2118 = vrot.slane %v29, 5
    %v2119 = vsel %vm2073, %v2117, %v2118
    %v2120 = vrot.slane %v2118, 4
    %v2121 = vrot.slane %v94, 5
    %v2122 = vsel %vm2073, %v2120, %v2121
    %v2123 = vrot.slane %v1982, 5
    %v2124 = vrot.slane %v2123, 4
    %v2125 = vrot.slane %v31, 5
    %v2126 = vsel %vm2073, %v2124, %v2125
    %v2127 = vrot.slane %v2125, 4
    %v2128 = vrot.slane %v95, 5
    %v2129 = vsel %vm2073, %v2127, %v2128
    %v2130 = vrot.slane %v1983, 5
    %v2131 = vrot.slane %v2130, 4
    %v2132 = vrot.slane %v33, 5
    %v2133 = vsel %vm2073, %v2131, %v2132
    %v2134 = vrot.slane %v2132, 4
    %v2135 = vrot.slane %v96, 5
    %v2136 = vsel %vm2073, %v2134, %v2135
    %v2137 = vrot.slane %v1984, 5
    %v2138 = vrot.slane %v2137, 4
    %v2139 = vrot.slane %v35, 5
    %v2140 = vsel %vm2073, %v2138, %v2139
    %v2141 = vrot.slane %v2139, 4
    %v2142 = vrot.slane %v97, 5
    %v2143 = vsel %vm2073, %v2141, %v2142
    %v2144 = vrot.slane %v1985, 5
    %v2145 = vrot.slane %v2144, 4
    %v2146 = vrot.slane %v37, 5
    %v2147 = vsel %vm2073, %v2145, %v2146
    %v2148 = vrot.slane %v2146, 4
    %v2149 = vrot.slane %v98, 5
    %v2150 = vsel %vm2073, %v2148, %v2149
    %v2151 = vrot.slane %v1986, 5
    %v2152 = vrot.slane %v2151, 4
    %v2153 = vrot.slane %v39, 5
    %v2154 = vsel %vm2073, %v2152, %v2153
    %v2155 = vrot.slane %v2153, 4
    %v2156 = vrot.slane %v99, 5
    %v2157 = vsel %vm2073, %v2155, %v2156
    %v2158 = vrot.slane %v1987, 5
    %v2159 = vrot.slane %v2158, 4
    %v2160 = vrot.slane %v41, 5
    %v2161 = vsel %vm2073, %v2159, %v2160
    %v2162 = vrot.slane %v2160, 4
    %v2163 = vrot.slane %v100, 5
    %v2164 = vsel %vm2073, %v2162, %v2163
    %v2165 = vrot.slane %v1988, 5
    %v2166 = vrot.slane %v2165, 4
    %v2167 = vrot.slane %v43, 5
    %v2168 = vsel %vm2073, %v2166, %v2167
    %v2169 = vrot.slane %v2167, 4
    %v2170 = vrot.slane %v101, 5
    %v2171 = vsel %vm2073, %v2169, %v2170
    %v2172 = vrot.slane %v1989, 5
    %v2173 = vrot.slane %v2172, 4
    %v2174 = vrot.slane %v45, 5
    %v2175 = vsel %vm2073, %v2173, %v2174
    %v2176 = vrot.slane %v2174, 4
    %v2177 = vrot.slane %v102, 5
    %v2178 = vsel %vm2073, %v2176, %v2177
    %v2179 = vrot.slane %v1990, 5
    %v2180 = vrot.slane %v2179, 4
    %v2181 = vrot.slane %v47, 5
    %v2182 = vsel %vm2073, %v2180, %v2181
    %v2183 = vrot.slane %v2181, 4
    %v2184 = vrot.slane %v103, 5
    %v2185 = vsel %vm2073, %v2183, %v2184
    %v2186 = vrot.slane %v1991, 5
    %v2187 = vrot.slane %v2186, 4
    %v2188 = vrot.slane %v49, 5
    %v2189 = vsel %vm2073, %v2187, %v2188
    %v2190 = vrot.slane %v2188, 4
    %v2191 = vrot.slane %v104, 5
    %v2192 = vsel %vm2073, %v2190, %v2191
    %v2193 = vrot.slane %v1992, 5
    %v2194 = vrot.slane %v2193, 4
    %v2195 = vrot.slane %v51, 5
    %v2196 = vsel %vm2073, %v2194, %v2195
    %v2197 = vrot.slane %v2195, 4
    %v2198 = vrot.slane %v105, 5
    %v2199 = vsel %vm2073, %v2197, %v2198
    %v2200 = vrot.slane %v1993, 5
    %v2201 = vrot.slane %v2200, 4
    %v2202 = vrot.slane %v53, 5
    %v2203 = vsel %vm2073, %v2201, %v2202
    %v2204 = vrot.slane %v2202, 4
    %v2205 = vrot.slane %v106, 5
    %v2206 = vsel %vm2073, %v2204, %v2205
    %v2207 = vrot.slane %v1994, 5
    %v2208 = vrot.slane %v2207, 4
    %v2209 = vrot.slane %v55, 5
    %v2210 = vsel %vm2073, %v2208, %v2209
    %v2211 = vrot.slane %v2209, 4
    %v2212 = vrot.slane %v107, 5
    %v2213 = vsel %vm2073, %v2211, %v2212
    %v2214 = vrot.slane %v1995, 5
    %v2215 = vrot.slane %v2214, 4
    %v2216 = vrot.slane %v57, 5
    %v2217 = vsel %vm2073, %v2215, %v2216
    %v2218 = vrot.slane %v2216, 4
    %v2219 = vrot.slane %v108, 5
    %v2220 = vsel %vm2073, %v2218, %v2219
    %v2221 = vrot.slane %v1996, 5
    %v2222 = vrot.slane %v2221, 4
    %v2223 = vrot.slane %v59, 5
    %v2224 = vsel %vm2073, %v2222, %v2223
    %v2225 = vrot.slane %v2223, 4
    %v2226 = vrot.slane %v109, 5
    %v2227 = vsel %vm2073, %v2225, %v2226
    %v2228 = vrot.slane %v1997, 5
    %v2229 = vrot.slane %v2228, 4
    %v2230 = vrot.slane %v61, 5
    %v2231 = vsel %vm2073, %v2229, %v2230
    %v2232 = vrot.slane %v2230, 4
    %v2233 = vrot.slane %v110, 5
    %v2234 = vsel %vm2073, %v2232, %v2233
    %v2235 = vrot.slane %v1998, 5
    %v2236 = vrot.slane %v2235, 4
    %v2237 = vrot.slane %v63, 5
    %v2238 = vsel %vm2073, %v2236, %v2237
    %v2239 = vrot.slane %v2237, 4
    %v2240 = vrot.slane %v111, 5
    %v2241 = vsel %vm2073, %v2239, %v2240
    %v2242 = vrot.slane %v1999, 5
    %v2243 = vrot.slane %v2242, 4
    %v2244 = vrot.slane %v65, 5
    %v2245 = vsel %vm2073, %v2243, %v2244
    %v2246 = vrot.slane %v2244, 4
    %v2247 = vrot.slane %v112, 5
    %v2248 = vsel %vm2073, %v2246, %v2247
    %v2249 = vrot.slane %v2000, 5
    %v2250 = vrot.slane %v2249, 4
    %v2251 = vrot.slane %v67, 5
    %v2252 = vsel %vm2073, %v2250, %v2251
    %v2253 = vrot.slane %v2251, 4
    %v2254 = vrot.slane %v113, 5
    %v2255 = vsel %vm2073, %v2253, %v2254
    %v2256 = vrot.slane %v2001, 5
    %v2257 = vrot.slane %v2256, 4
    %v2258 = vrot.slane %v69, 5
    %v2259 = vsel %vm2073, %v2257, %v2258
    %v2260 = vrot.slane %v2258, 4
    %v2261 = vrot.slane %v114, 5
    %v2262 = vsel %vm2073, %v2260, %v2261
    %v2263 = vrot.slane %v2002, 5
    %v2264 = vrot.slane %v2263, 4
    %v2265 = vrot.slane %v71, 5
    %v2266 = vsel %vm2073, %v2264, %v2265
    %v2267 = vrot.slane %v2265, 4
    %v2268 = vrot.slane %v115, 5
    %v2269 = vsel %vm2073, %v2267, %v2268
    %v2270 = vrot.slane %v2003, 5
    %v2271 = vrot.slane %v2270, 4
    %v2272 = vrot.slane %v73, 5
    %v2273 = vsel %vm2073, %v2271, %v2272
    %v2274 = vrot.slane %v2272, 4
    %v2275 = vrot.slane %v116, 5
    %v2276 = vsel %vm2073, %v2274, %v2275
    %v2277 = vrot.slane %v2004, 5
    %v2278 = vrot.slane %v2277, 4
    %v2279 = vrot.slane %v75, 5
    %v2280 = vsel %vm2073, %v2278, %v2279
    %v2281 = vrot.slane %v2279, 4
    %v2282 = vrot.slane %v117, 5
    %v2283 = vsel %vm2073, %v2281, %v2282
    %v2284 = vrot.slane %v2005, 5
    %v2285 = vrot.slane %v2284, 4
    %v2286 = vrot.slane %v77, 5
    %v2287 = vsel %vm2073, %v2285, %v2286
    %v2288 = vrot.slane %v2286, 4
    %v2289 = vrot.slane %v118, 5
    %v2290 = vsel %vm2073, %v2288, %v2289
    %v2291 = vrot.slane %v2006, 5
    %v2292 = vrot.slane %v2291, 4
    %v2293 = vrot.slane %v79, 5
    %v2294 = vsel %vm2073, %v2292, %v2293
    %v2295 = vrot.slane %v2293, 4
    %v2296 = vrot.slane %v119, 5
    %v2297 = vsel %vm2073, %v2295, %v2296
    %s2298 = scalar_lea.vmem %s1, 64
    %v2299 = vld [vmem:[%s2298] sm:$0xf]
    %v2300 = vld [vmem:[%s2298 + $0x4] sm:$0xf]
    %v2301 = vld [vmem:[%s2298 + $0x8] sm:$0xf]
    %v2302 = vld [vmem:[%s2298 + $0xc] sm:$0xf]
    %v2303 = vld [vmem:[%s2298 + $0x10] sm:$0xf]
    %v2304 = vld [vmem:[%s2298 + $0x14] sm:$0xf]
    %v2305 = vld [vmem:[%s2298 + $0x18] sm:$0xf]
    %v2306 = vld [vmem:[%s2298 + $0x1c] sm:$0xf]
    %v2307 = vunpack.c.l.b16 %v2077
    %v2308 = vunpack.c.l.b16 %v2080
    %v2309 = vunpack.c.l.b16 %v2084
    %v2310 = vunpack.c.l.b16 %v2087
    %v2311 = vunpack.c.l.b16 %v2091
    %v2312 = vunpack.c.l.b16 %v2094
    %v2313 = vunpack.c.l.b16 %v2098
    %v2314 = vunpack.c.l.b16 %v2101
    %v2315 = vunpack.c.l.b16 %v2105
    %v2316 = vunpack.c.l.b16 %v2108
    %v2317 = vunpack.c.l.b16 %v2112
    %v2318 = vunpack.c.l.b16 %v2115
    %v2319 = vunpack.c.l.b16 %v2119
    %v2320 = vunpack.c.l.b16 %v2122
    %v2321 = vunpack.c.l.b16 %v2126
    %v2322 = vunpack.c.l.b16 %v2129
    %v2323 = vunpack.c.l.b16 %v2133
    %v2324 = vunpack.c.l.b16 %v2136
    %v2325 = vunpack.c.l.b16 %v2140
    %v2326 = vunpack.c.l.b16 %v2143
    %v2327 = vunpack.c.l.b16 %v2147
    %v2328 = vunpack.c.l.b16 %v2150
    %v2329 = vunpack.c.l.b16 %v2154
    %v2330 = vunpack.c.l.b16 %v2157
    %v2331 = vunpack.c.l.b16 %v2161
    %v2332 = vunpack.c.l.b16 %v2164
    %v2333 = vunpack.c.l.b16 %v2168
    %v2334 = vunpack.c.l.b16 %v2171
    %v2335 = vunpack.c.l.b16 %v2175
    %v2336 = vunpack.c.l.b16 %v2178
    %v2337 = vunpack.c.l.b16 %v2182
    %v2338 = vunpack.c.l.b16 %v2185
    %v2339 = vunpack.c.l.b16 %v2189
    %v2340 = vunpack.c.l.b16 %v2192
    %v2341 = vunpack.c.l.b16 %v2196
    %v2342 = vunpack.c.l.b16 %v2199
    %v2343 = vunpack.c.l.b16 %v2203
    %v2344 = vunpack.c.l.b16 %v2206
    %v2345 = vunpack.c.l.b16 %v2210
    %v2346 = vunpack.c.l.b16 %v2213
    %v2347 = vunpack.c.l.b16 %v2217
    %v2348 = vunpack.c.l.b16 %v2220
    %v2349 = vunpack.c.l.b16 %v2224
    %v2350 = vunpack.c.l.b16 %v2227
    %v2351 = vunpack.c.l.b16 %v2231
    %v2352 = vunpack.c.l.b16 %v2234
    %v2353 = vunpack.c.l.b16 %v2238
    %v2354 = vunpack.c.l.b16 %v2241
    %v2355 = vunpack.c.l.b16 %v2245
    %v2356 = vunpack.c.l.b16 %v2248
    %v2357 = vunpack.c.l.b16 %v2252
    %v2358 = vunpack.c.l.b16 %v2255
    %v2359 = vunpack.c.l.b16 %v2259
    %v2360 = vunpack.c.l.b16 %v2262
    %v2361 = vunpack.c.l.b16 %v2266
    %v2362 = vunpack.c.l.b16 %v2269
    %v2363 = vunpack.c.l.b16 %v2273
    %v2364 = vunpack.c.l.b16 %v2276
    %v2365 = vunpack.c.l.b16 %v2280
    %v2366 = vunpack.c.l.b16 %v2283
    %v2367 = vunpack.c.l.b16 %v2287
    %v2368 = vunpack.c.l.b16 %v2290
    %v2369 = vunpack.c.l.b16 %v2294
    %v2370 = vunpack.c.l.b16 %v2297
    %v2371 = vpack.c.b16 %v2308, %v2307
    %v2372 = vpack.c.b16 %v2310, %v2309
    %v2373 = vpack.c.b16 %v2312, %v2311
    %v2374 = vpack.c.b16 %v2314, %v2313
    %v2375 = vpack.c.b16 %v2316, %v2315
    %v2376 = vpack.c.b16 %v2318, %v2317
    %v2377 = vpack.c.b16 %v2320, %v2319
    %v2378 = vpack.c.b16 %v2322, %v2321
    %v2379 = vpack.c.b16 %v2324, %v2323
    %v2380 = vpack.c.b16 %v2326, %v2325
    %v2381 = vpack.c.b16 %v2328, %v2327
    %v2382 = vpack.c.b16 %v2330, %v2329
    %v2383 = vpack.c.b16 %v2332, %v2331
    %v2384 = vpack.c.b16 %v2334, %v2333
    %v2385 = vpack.c.b16 %v2336, %v2335
    %v2386 = vpack.c.b16 %v2338, %v2337
    %v2387 = vpack.c.b16 %v2340, %v2339
    %v2388 = vpack.c.b16 %v2342, %v2341
    %v2389 = vpack.c.b16 %v2344, %v2343
    %v2390 = vpack.c.b16 %v2346, %v2345
    %v2391 = vpack.c.b16 %v2348, %v2347
    %v2392 = vpack.c.b16 %v2350, %v2349
    %v2393 = vpack.c.b16 %v2352, %v2351
    %v2394 = vpack.c.b16 %v2354, %v2353
    %v2395 = vpack.c.b16 %v2356, %v2355
    %v2396 = vpack.c.b16 %v2358, %v2357
    %v2397 = vpack.c.b16 %v2360, %v2359
    %v2398 = vpack.c.b16 %v2362, %v2361
    %v2399 = vpack.c.b16 %v2364, %v2363
    %v2400 = vpack.c.b16 %v2366, %v2365
    %v2401 = vpack.c.b16 %v2368, %v2367
    %v2402 = vpack.c.b16 %v2370, %v2369
    %v2411 = vunpack.c.l.b16 %v2299
    %v2412 = vunpack.c.l.b16 %v2300
    %v2413 = vunpack.c.l.b16 %v2301
    %v2414 = vunpack.c.l.b16 %v2302
    %v2415 = vunpack.c.l.b16 %v2303
    %v2416 = vunpack.c.l.b16 %v2304
    %v2417 = vunpack.c.l.b16 %v2305
    %v2418 = vunpack.c.l.b16 %v2306
    %v2419 = vpack.c.b16 %v2412, %v2411
    %v2420 = vpack.c.b16 %v2414, %v2413
    %v2421 = vpack.c.b16 %v2416, %v2415
    %v2422 = vpack.c.b16 %v2418, %v2417
    %v2428 = vsel %vm1020, %v2371, 0
    %v2431 = vsel %vm1020, %v2372, 0
    %v2434 = vsel %vm1020, %v2373, 0
    %v2437 = vsel %vm1020, %v2374, 0
    %v2440 = vsel %vm1020, %v2375, 0
    %v2443 = vsel %vm1020, %v2376, 0
    %v2446 = vsel %vm1020, %v2377, 0
    %v2449 = vsel %vm1020, %v2378, 0
    %v2452 = vsel %vm1020, %v2379, 0
    %v2455 = vsel %vm1020, %v2380, 0
    %v2458 = vsel %vm1020, %v2381, 0
    %v2461 = vsel %vm1020, %v2382, 0
    %v2464 = vsel %vm1020, %v2383, 0
    %v2467 = vsel %vm1020, %v2384, 0
    %v2470 = vsel %vm1020, %v2385, 0
    %v2473 = vsel %vm1020, %v2386, 0
    %v2476 = vsel %vm1020, %v2387, 0
    %v2479 = vsel %vm1020, %v2388, 0
    %v2482 = vsel %vm1020, %v2389, 0
    %v2485 = vsel %vm1020, %v2390, 0
    %v2488 = vsel %vm1020, %v2391, 0
    %v2491 = vsel %vm1020, %v2392, 0
    %v2494 = vsel %vm1020, %v2393, 0
    %v2497 = vsel %vm1020, %v2394, 0
    %v2500 = vsel %vm1020, %v2395, 0
    %v2503 = vsel %vm1020, %v2396, 0
    %v2506 = vsel %vm1020, %v2397, 0
    %v2509 = vsel %vm1020, %v2398, 0
    %v2512 = vsel %vm1020, %v2399, 0
    %v2515 = vsel %vm1020, %v2400, 0
    %v2518 = vsel %vm1020, %v2401, 0
    %v2521 = vsel %vm1020, %v2402, 0
    %2523 = vmatprep.subr.bf16.mxu0 0
    %2524 = vmatpush1.bf16.msra.mxu0 %v2419
    %2525 = vmatprep.subr.bf16.mxu0 0
    %2526 = vmatpush1.bf16.msra.mxu0 %v2420
    %2527 = vmatprep.subr.bf16.mxu0 0
    %2528 = vmatpush1.bf16.msra.mxu0 %v2421
    %2529 = vmatprep.subr.bf16.mxu0 0
    %2530 = vmatpush1.bf16.msra.mxu0 %v2422
    %2531 = vmatprep.subr.bf16.mxu0 0
    %2532 = vmatpush1.bf16.msra.mxu0 0
    %2533 = vmatprep.subr.bf16.mxu0 0
    %2534 = vmatpush1.bf16.msra.mxu0 0
    %2535 = vmatprep.subr.bf16.mxu0 0
    %2536 = vmatpush1.bf16.msra.mxu0 0
    %2537 = vmatprep.subr.bf16.mxu0 0
    %2538 = vmatpush1.bf16.msra.mxu0 0
    %2539 = vmatprep.subr.bf16.mxu0 0
    %2540 = vmatpush1.bf16.msra.mxu0 0
    %2541 = vmatprep.subr.bf16.mxu0 0
    %2542 = vmatpush1.bf16.msra.mxu0 0
    %2543 = vmatprep.subr.bf16.mxu0 0
    %2544 = vmatpush1.bf16.msra.mxu0 0
    %2545 = vmatprep.subr.bf16.mxu0 0
    %2546 = vmatpush1.bf16.msra.mxu0 0
    %2547 = vmatprep.subr.bf16.mxu0 0
    %2548 = vmatpush1.bf16.msra.mxu0 0
    %2549 = vmatprep.subr.bf16.mxu0 0
    %2550 = vmatpush1.bf16.msra.mxu0 0
    %2551 = vmatprep.subr.bf16.mxu0 0
    %2552 = vmatpush1.bf16.msra.mxu0 0
    %2553 = vmatprep.subr.bf16.mxu0 0
    %2554 = vmatpush1.bf16.msra.mxu0 0
    %2555 = vmatprep.mubr.bf16.mxu0 0
    %2556 = vmatmul.mubr.bf16.gmra.mrb[0].mxu0 %v2428
    %v2557 = vpop.f32.mrb[0].mxu0
    %v2558 = vadd.f32 0.0, %v2557
    %v2559 = vpop.f32.mrb[0].mxu0
    %v2560 = vpop.f32.mrb[0].mxu0
    %v2561 = vadd.f32 0.0, %v2560
    %v2562 = vpop.f32.mrb[0].mxu0
    %2563 = vmatprep.mubr.bf16.mxu0 0
    %2564 = vmatmul.mubr.bf16.gmra.mrb[0].mxu0 %v2431
    %v2565 = vpop.f32.mrb[0].mxu0
    %v2566 = vadd.f32 0.0, %v2565
    %v2567 = vpop.f32.mrb[0].mxu0
    %v2568 = vpop.f32.mrb[0].mxu0
    %v2569 = vadd.f32 0.0, %v2568
    %v2570 = vpop.f32.mrb[0].mxu0
    %2571 = vmatprep.mubr.bf16.mxu0 0
    %2572 = vmatmul.mubr.bf16.gmra.mrb[0].mxu0 %v2434
    %v2573 = vpop.f32.mrb[0].mxu0
    %v2574 = vadd.f32 0.0, %v2573
    %v2575 = vpop.f32.mrb[0].mxu0
    %v2576 = vpop.f32.mrb[0].mxu0
    %v2577 = vadd.f32 0.0, %v2576
    %v2578 = vpop.f32.mrb[0].mxu0
    %2579 = vmatprep.mubr.bf16.mxu0 0
    %2580 = vmatmul.mubr.bf16.gmra.mrb[0].mxu0 %v2437
    %v2581 = vpop.f32.mrb[0].mxu0
    %v2582 = vadd.f32 0.0, %v2581
    %v2583 = vpop.f32.mrb[0].mxu0
    %v2584 = vpop.f32.mrb[0].mxu0
    %v2585 = vadd.f32 0.0, %v2584
    %v2586 = vpop.f32.mrb[0].mxu0
    %2587 = vmatprep.mubr.bf16.mxu0 0
    %2588 = vmatmul.mubr.bf16.gmra.mrb[0].mxu0 %v2440
    %v2589 = vpop.f32.mrb[0].mxu0
    %v2590 = vadd.f32 0.0, %v2589
    %v2591 = vpop.f32.mrb[0].mxu0
    %v2592 = vpop.f32.mrb[0].mxu0
    %v2593 = vadd.f32 0.0, %v2592
    %v2594 = vpop.f32.mrb[0].mxu0
    %2595 = vmatprep.mubr.bf16.mxu0 0
    %2596 = vmatmul.mubr.bf16.gmra.mrb[0].mxu0 %v2443
    %v2597 = vpop.f32.mrb[0].mxu0
    %v2598 = vadd.f32 0.0, %v2597
    %v2599 = vpop.f32.mrb[0].mxu0
    %v2600 = vpop.f32.mrb[0].mxu0
    %v2601 = vadd.f32 0.0, %v2600
    %v2602 = vpop.f32.mrb[0].mxu0
    %2603 = vmatprep.mubr.bf16.mxu0 0
    %2604 = vmatmul.mubr.bf16.gmra.mrb[0].mxu0 %v2446
    %v2605 = vpop.f32.mrb[0].mxu0
    %v2606 = vadd.f32 0.0, %v2605
    %v2607 = vpop.f32.mrb[0].mxu0
    %v2608 = vpop.f32.mrb[0].mxu0
    %v2609 = vadd.f32 0.0, %v2608
    %v2610 = vpop.f32.mrb[0].mxu0
    %2611 = vmatprep.mubr.bf16.mxu0 0
    %2612 = vmatmul.mubr.bf16.gmra.mrb[0].mxu0 %v2449
    %v2613 = vpop.f32.mrb[0].mxu0
    %v2614 = vadd.f32 0.0, %v2613
    %v2615 = vpop.f32.mrb[0].mxu0
    %v2616 = vpop.f32.mrb[0].mxu0
    %v2617 = vadd.f32 0.0, %v2616
    %v2618 = vpop.f32.mrb[0].mxu0
    %2619 = vmatprep.mubr.bf16.mxu0 0
    %2620 = vmatmul.mubr.bf16.gmra.mrb[0].mxu0 %v2452
    %v2621 = vpop.f32.mrb[0].mxu0
    %v2622 = vadd.f32 0.0, %v2621
    %v2623 = vpop.f32.mrb[0].mxu0
    %v2624 = vpop.f32.mrb[0].mxu0
    %v2625 = vadd.f32 0.0, %v2624
    %v2626 = vpop.f32.mrb[0].mxu0
    %2627 = vmatprep.mubr.bf16.mxu0 0
    %2628 = vmatmul.mubr.bf16.gmra.mrb[0].mxu0 %v2455
    %v2629 = vpop.f32.mrb[0].mxu0
    %v2630 = vadd.f32 0.0, %v2629
    %v2631 = vpop.f32.mrb[0].mxu0
    %v2632 = vpop.f32.mrb[0].mxu0
    %v2633 = vadd.f32 0.0, %v2632
    %v2634 = vpop.f32.mrb[0].mxu0
    %2635 = vmatprep.mubr.bf16.mxu0 0
    %2636 = vmatmul.mubr.bf16.gmra.mrb[0].mxu0 %v2458
    %v2637 = vpop.f32.mrb[0].mxu0
    %v2638 = vadd.f32 0.0, %v2637
    %v2639 = vpop.f32.mrb[0].mxu0
    %v2640 = vpop.f32.mrb[0].mxu0
    %v2641 = vadd.f32 0.0, %v2640
    %v2642 = vpop.f32.mrb[0].mxu0
    %2643 = vmatprep.mubr.bf16.mxu0 0
    %2644 = vmatmul.mubr.bf16.gmra.mrb[0].mxu0 %v2461
    %v2645 = vpop.f32.mrb[0].mxu0
    %v2646 = vadd.f32 0.0, %v2645
    %v2647 = vpop.f32.mrb[0].mxu0
    %v2648 = vpop.f32.mrb[0].mxu0
    %v2649 = vadd.f32 0.0, %v2648
    %v2650 = vpop.f32.mrb[0].mxu0
    %2651 = vmatprep.mubr.bf16.mxu0 0
    %2652 = vmatmul.mubr.bf16.gmra.mrb[0].mxu0 %v2464
    %v2653 = vpop.f32.mrb[0].mxu0
    %v2654 = vadd.f32 0.0, %v2653
    %v2655 = vpop.f32.mrb[0].mxu0
    %v2656 = vpop.f32.mrb[0].mxu0
    %v2657 = vadd.f32 0.0, %v2656
    %v2658 = vpop.f32.mrb[0].mxu0
    %2659 = vmatprep.mubr.bf16.mxu0 0
    %2660 = vmatmul.mubr.bf16.gmra.mrb[0].mxu0 %v2467
    %v2661 = vpop.f32.mrb[0].mxu0
    %v2662 = vadd.f32 0.0, %v2661
    %v2663 = vpop.f32.mrb[0].mxu0
    %v2664 = vpop.f32.mrb[0].mxu0
    %v2665 = vadd.f32 0.0, %v2664
    %v2666 = vpop.f32.mrb[0].mxu0
    %2667 = vmatprep.mubr.bf16.mxu0 0
    %2668 = vmatmul.mubr.bf16.gmra.mrb[0].mxu0 %v2470
    %v2669 = vpop.f32.mrb[0].mxu0
    %v2670 = vadd.f32 0.0, %v2669
    %v2671 = vpop.f32.mrb[0].mxu0
    %v2672 = vpop.f32.mrb[0].mxu0
    %v2673 = vadd.f32 0.0, %v2672
    %v2674 = vpop.f32.mrb[0].mxu0
    %2675 = vmatprep.mubr.bf16.mxu0 0
    %2676 = vmatmul.mubr.bf16.gmra.mrb[0].mxu0 %v2473
    %v2677 = vpop.f32.mrb[0].mxu0
    %v2678 = vadd.f32 0.0, %v2677
    %v2679 = vpop.f32.mrb[0].mxu0
    %v2680 = vpop.f32.mrb[0].mxu0
    %v2681 = vadd.f32 0.0, %v2680
    %v2682 = vpop.f32.mrb[0].mxu0
    %2683 = vmatprep.mubr.bf16.mxu0 0
    %2684 = vmatmul.mubr.bf16.gmra.mrb[0].mxu0 %v2476
    %v2685 = vpop.f32.mrb[0].mxu0
    %v2686 = vadd.f32 0.0, %v2685
    %v2687 = vpop.f32.mrb[0].mxu0
    %v2688 = vpop.f32.mrb[0].mxu0
    %v2689 = vadd.f32 0.0, %v2688
    %v2690 = vpop.f32.mrb[0].mxu0
    %2691 = vmatprep.mubr.bf16.mxu0 0
    %2692 = vmatmul.mubr.bf16.gmra.mrb[0].mxu0 %v2479
    %v2693 = vpop.f32.mrb[0].mxu0
    %v2694 = vadd.f32 0.0, %v2693
    %v2695 = vpop.f32.mrb[0].mxu0
    %v2696 = vpop.f32.mrb[0].mxu0
    %v2697 = vadd.f32 0.0, %v2696
    %v2698 = vpop.f32.mrb[0].mxu0
    %2699 = vmatprep.mubr.bf16.mxu0 0
    %2700 = vmatmul.mubr.bf16.gmra.mrb[0].mxu0 %v2482
    %v2701 = vpop.f32.mrb[0].mxu0
    %v2702 = vadd.f32 0.0, %v2701
    %v2703 = vpop.f32.mrb[0].mxu0
    %v2704 = vpop.f32.mrb[0].mxu0
    %v2705 = vadd.f32 0.0, %v2704
    %v2706 = vpop.f32.mrb[0].mxu0
    %2707 = vmatprep.mubr.bf16.mxu0 0
    %2708 = vmatmul.mubr.bf16.gmra.mrb[0].mxu0 %v2485
    %v2709 = vpop.f32.mrb[0].mxu0
    %v2710 = vadd.f32 0.0, %v2709
    %v2711 = vpop.f32.mrb[0].mxu0
    %v2712 = vpop.f32.mrb[0].mxu0
    %v2713 = vadd.f32 0.0, %v2712
    %v2714 = vpop.f32.mrb[0].mxu0
    %2715 = vmatprep.mubr.bf16.mxu0 0
    %2716 = vmatmul.mubr.bf16.gmra.mrb[0].mxu0 %v2488
    %v2717 = vpop.f32.mrb[0].mxu0
    %v2718 = vadd.f32 0.0, %v2717
    %v2719 = vpop.f32.mrb[0].mxu0
    %v2720 = vpop.f32.mrb[0].mxu0
    %v2721 = vadd.f32 0.0, %v2720
    %v2722 = vpop.f32.mrb[0].mxu0
    %2723 = vmatprep.mubr.bf16.mxu0 0
    %2724 = vmatmul.mubr.bf16.gmra.mrb[0].mxu0 %v2491
    %v2725 = vpop.f32.mrb[0].mxu0
    %v2726 = vadd.f32 0.0, %v2725
    %v2727 = vpop.f32.mrb[0].mxu0
    %v2728 = vpop.f32.mrb[0].mxu0
    %v2729 = vadd.f32 0.0, %v2728
    %v2730 = vpop.f32.mrb[0].mxu0
    %2731 = vmatprep.mubr.bf16.mxu0 0
    %2732 = vmatmul.mubr.bf16.gmra.mrb[0].mxu0 %v2494
    %v2733 = vpop.f32.mrb[0].mxu0
    %v2734 = vadd.f32 0.0, %v2733
    %v2735 = vpop.f32.mrb[0].mxu0
    %v2736 = vpop.f32.mrb[0].mxu0
    %v2737 = vadd.f32 0.0, %v2736
    %v2738 = vpop.f32.mrb[0].mxu0
    %2739 = vmatprep.mubr.bf16.mxu0 0
    %2740 = vmatmul.mubr.bf16.gmra.mrb[0].mxu0 %v2497
    %v2741 = vpop.f32.mrb[0].mxu0
    %v2742 = vadd.f32 0.0, %v2741
    %v2743 = vpop.f32.mrb[0].mxu0
    %v2744 = vpop.f32.mrb[0].mxu0
    %v2745 = vadd.f32 0.0, %v2744
    %v2746 = vpop.f32.mrb[0].mxu0
    %2747 = vmatprep.mubr.bf16.mxu0 0
    %2748 = vmatmul.mubr.bf16.gmra.mrb[0].mxu0 %v2500
    %v2749 = vpop.f32.mrb[0].mxu0
    %v2750 = vadd.f32 0.0, %v2749
    %v2751 = vpop.f32.mrb[0].mxu0
    %v2752 = vpop.f32.mrb[0].mxu0
    %v2753 = vadd.f32 0.0, %v2752
    %v2754 = vpop.f32.mrb[0].mxu0
    %2755 = vmatprep.mubr.bf16.mxu0 0
    %2756 = vmatmul.mubr.bf16.gmra.mrb[0].mxu0 %v2503
    %v2757 = vpop.f32.mrb[0].mxu0
    %v2758 = vadd.f32 0.0, %v2757
    %v2759 = vpop.f32.mrb[0].mxu0
    %v2760 = vpop.f32.mrb[0].mxu0
    %v2761 = vadd.f32 0.0, %v2760
    %v2762 = vpop.f32.mrb[0].mxu0
    %2763 = vmatprep.mubr.bf16.mxu0 0
    %2764 = vmatmul.mubr.bf16.gmra.mrb[0].mxu0 %v2506
    %v2765 = vpop.f32.mrb[0].mxu0
    %v2766 = vadd.f32 0.0, %v2765
    %v2767 = vpop.f32.mrb[0].mxu0
    %v2768 = vpop.f32.mrb[0].mxu0
    %v2769 = vadd.f32 0.0, %v2768
    %v2770 = vpop.f32.mrb[0].mxu0
    %2771 = vmatprep.mubr.bf16.mxu0 0
    %2772 = vmatmul.mubr.bf16.gmra.mrb[0].mxu0 %v2509
    %v2773 = vpop.f32.mrb[0].mxu0
    %v2774 = vadd.f32 0.0, %v2773
    %v2775 = vpop.f32.mrb[0].mxu0
    %v2776 = vpop.f32.mrb[0].mxu0
    %v2777 = vadd.f32 0.0, %v2776
    %v2778 = vpop.f32.mrb[0].mxu0
    %2779 = vmatprep.mubr.bf16.mxu0 0
    %2780 = vmatmul.mubr.bf16.gmra.mrb[0].mxu0 %v2512
    %v2781 = vpop.f32.mrb[0].mxu0
    %v2782 = vadd.f32 0.0, %v2781
    %v2783 = vpop.f32.mrb[0].mxu0
    %v2784 = vpop.f32.mrb[0].mxu0
    %v2785 = vadd.f32 0.0, %v2784
    %v2786 = vpop.f32.mrb[0].mxu0
    %2787 = vmatprep.mubr.bf16.mxu0 0
    %2788 = vmatmul.mubr.bf16.gmra.mrb[0].mxu0 %v2515
    %v2789 = vpop.f32.mrb[0].mxu0
    %v2790 = vadd.f32 0.0, %v2789
    %v2791 = vpop.f32.mrb[0].mxu0
    %v2792 = vpop.f32.mrb[0].mxu0
    %v2793 = vadd.f32 0.0, %v2792
    %v2794 = vpop.f32.mrb[0].mxu0
    %2795 = vmatprep.mubr.bf16.mxu0 0
    %2796 = vmatmul.mubr.bf16.gmra.mrb[0].mxu0 %v2518
    %v2797 = vpop.f32.mrb[0].mxu0
    %v2798 = vadd.f32 0.0, %v2797
    %v2799 = vpop.f32.mrb[0].mxu0
    %v2800 = vpop.f32.mrb[0].mxu0
    %v2801 = vadd.f32 0.0, %v2800
    %v2802 = vpop.f32.mrb[0].mxu0
    %2803 = vmatprep.mubr.bf16.mxu0 0
    %2804 = vmatmul.mubr.bf16.gmra.mrb[0].mxu0 %v2521
    %v2805 = vpop.f32.mrb[0].mxu0
    %v2806 = vadd.f32 0.0, %v2805
    %v2807 = vpop.f32.mrb[0].mxu0
    %v2808 = vpop.f32.mrb[0].mxu0
    %v2809 = vadd.f32 0.0, %v2808
    %v2810 = vpop.f32.mrb[0].mxu0
    %2811 = vdwg.mxu0
    %v2812 = vadd.f32 %v1721, %v2558
    %v2813 = vadd.f32 %v1724, %v2561
    %v2814 = vadd.f32 %v1729, %v2566
    %v2815 = vadd.f32 %v1732, %v2569
    %v2816 = vadd.f32 %v1737, %v2574
    %v2817 = vadd.f32 %v1740, %v2577
    %v2818 = vadd.f32 %v1745, %v2582
    %v2819 = vadd.f32 %v1748, %v2585
    %v2820 = vadd.f32 %v1753, %v2590
    %v2821 = vadd.f32 %v1756, %v2593
    %v2822 = vadd.f32 %v1761, %v2598
    %v2823 = vadd.f32 %v1764, %v2601
    %v2824 = vadd.f32 %v1769, %v2606
    %v2825 = vadd.f32 %v1772, %v2609
    %v2826 = vadd.f32 %v1777, %v2614
    %v2827 = vadd.f32 %v1780, %v2617
    %v2828 = vadd.f32 %v1785, %v2622
    %v2829 = vadd.f32 %v1788, %v2625
    %v2830 = vadd.f32 %v1793, %v2630
    %v2831 = vadd.f32 %v1796, %v2633
    %v2832 = vadd.f32 %v1801, %v2638
    %v2833 = vadd.f32 %v1804, %v2641
    %v2834 = vadd.f32 %v1809, %v2646
    %v2835 = vadd.f32 %v1812, %v2649
    %v2836 = vadd.f32 %v1817, %v2654
    %v2837 = vadd.f32 %v1820, %v2657
    %v2838 = vadd.f32 %v1825, %v2662
    %v2839 = vadd.f32 %v1828, %v2665
    %v2840 = vadd.f32 %v1833, %v2670
    %v2841 = vadd.f32 %v1836, %v2673
    %v2842 = vadd.f32 %v1841, %v2678
    %v2843 = vadd.f32 %v1844, %v2681
    %v2844 = vadd.f32 %v1849, %v2686
    %v2845 = vadd.f32 %v1852, %v2689
    %v2846 = vadd.f32 %v1857, %v2694
    %v2847 = vadd.f32 %v1860, %v2697
    %v2848 = vadd.f32 %v1865, %v2702
    %v2849 = vadd.f32 %v1868, %v2705
    %v2850 = vadd.f32 %v1873, %v2710
    %v2851 = vadd.f32 %v1876, %v2713
    %v2852 = vadd.f32 %v1881, %v2718
    %v2853 = vadd.f32 %v1884, %v2721
    %v2854 = vadd.f32 %v1889, %v2726
    %v2855 = vadd.f32 %v1892, %v2729
    %v2856 = vadd.f32 %v1897, %v2734
    %v2857 = vadd.f32 %v1900, %v2737
    %v2858 = vadd.f32 %v1905, %v2742
    %v2859 = vadd.f32 %v1908, %v2745
    %v2860 = vadd.f32 %v1913, %v2750
    %v2861 = vadd.f32 %v1916, %v2753
    %v2862 = vadd.f32 %v1921, %v2758
    %v2863 = vadd.f32 %v1924, %v2761
    %v2864 = vadd.f32 %v1929, %v2766
    %v2865 = vadd.f32 %v1932, %v2769
    %v2866 = vadd.f32 %v1937, %v2774
    %v2867 = vadd.f32 %v1940, %v2777
    %v2868 = vadd.f32 %v1945, %v2782
    %v2869 = vadd.f32 %v1948, %v2785
    %v2870 = vadd.f32 %v1953, %v2790
    %v2871 = vadd.f32 %v1956, %v2793
    %v2872 = vadd.f32 %v1961, %v2798
    %v2873 = vadd.f32 %v1964, %v2801
    %v2874 = vadd.f32 %v1969, %v2806
    %v2875 = vadd.f32 %v1972, %v2809
    %s2876 = scalar_lea.vmem %s0, 12
    %v2877 = vld [vmem:[%s2876] sm:$0xf]
    %v2878 = vld [vmem:[%s2876 + $0x4] sm:$0xf]
    %v2879 = vld [vmem:[%s2876 + $0xc] sm:$0xf]
    %v2880 = vld [vmem:[%s2876 + $0x10] sm:$0xf]
    %v2881 = vld [vmem:[%s2876 + $0x18] sm:$0xf]
    %v2882 = vld [vmem:[%s2876 + $0x1c] sm:$0xf]
    %v2883 = vld [vmem:[%s2876 + $0x24] sm:$0xf]
    %v2884 = vld [vmem:[%s2876 + $0x28] sm:$0xf]
    %v2885 = vld [vmem:[%s2876 + $0x30] sm:$0xf]
    %v2886 = vld [vmem:[%s2876 + $0x34] sm:$0xf]
    %v2887 = vld [vmem:[%s2876 + $0x3c] sm:$0xf]
    %v2888 = vld [vmem:[%s2876 + $0x40] sm:$0xf]
    %v2889 = vld [vmem:[%s2876 + $0x48] sm:$0xf]
    %v2890 = vld [vmem:[%s2876 + $0x4c] sm:$0xf]
    %v2891 = vld [vmem:[%s2876 + $0x54] sm:$0xf]
    %v2892 = vld [vmem:[%s2876 + $0x58] sm:$0xf]
    %v2893 = vld [vmem:[%s2876 + $0x60] sm:$0xf]
    %v2894 = vld [vmem:[%s2876 + $0x64] sm:$0xf]
    %v2895 = vld [vmem:[%s2876 + $0x6c] sm:$0xf]
    %v2896 = vld [vmem:[%s2876 + $0x70] sm:$0xf]
    %v2897 = vld [vmem:[%s2876 + $0x78] sm:$0xf]
    %v2898 = vld [vmem:[%s2876 + $0x7c] sm:$0xf]
    %v2899 = vld [vmem:[%s2876 + $0x84] sm:$0xf]
    %v2900 = vld [vmem:[%s2876 + $0x88] sm:$0xf]
    %v2901 = vld [vmem:[%s2876 + $0x90] sm:$0xf]
    %v2902 = vld [vmem:[%s2876 + $0x94] sm:$0xf]
    %v2903 = vld [vmem:[%s2876 + $0x9c] sm:$0xf]
    %v2904 = vld [vmem:[%s2876 + $0xa0] sm:$0xf]
    %v2905 = vld [vmem:[%s2876 + $0xa8] sm:$0xf]
    %v2906 = vld [vmem:[%s2876 + $0xac] sm:$0xf]
    %v2907 = vld [vmem:[%s2876 + $0xb4] sm:$0xf]
    %v2908 = vld [vmem:[%s2876 + $0xb8] sm:$0xf]
    %v2909 = vld [vmem:[%s2876 + $0xd8] sm:$0xf]
    %v2910 = vld [vmem:[%s2876 + $0xdc] sm:$0xf]
    %v2911 = vld [vmem:[%s2876 + $0xe4] sm:$0xf]
    %v2912 = vld [vmem:[%s2876 + $0xe8] sm:$0xf]
    %v2913 = vld [vmem:[%s2876 + $0xf0] sm:$0xf]
    %v2914 = vld [vmem:[%s2876 + $0xf4] sm:$0xf]
    %v2915 = vld [vmem:[%s2876 + $0xfc] sm:$0xf]
    %v2916 = vld [vmem:[%s2876 + $0x100] sm:$0xf]
    %v2917 = vld [vmem:[%s2876 + $0x108] sm:$0xf]
    %v2918 = vld [vmem:[%s2876 + $0x10c] sm:$0xf]
    %v2919 = vld [vmem:[%s2876 + $0x114] sm:$0xf]
    %v2920 = vld [vmem:[%s2876 + $0x118] sm:$0xf]
    %v2921 = vld [vmem:[%s2876 + $0x120] sm:$0xf]
    %v2922 = vld [vmem:[%s2876 + $0x124] sm:$0xf]
    %v2923 = vld [vmem:[%s2876 + $0x12c] sm:$0xf]
    %v2924 = vld [vmem:[%s2876 + $0x130] sm:$0xf]
    %v2925 = vld [vmem:[%s2876 + $0x138] sm:$0xf]
    %v2926 = vld [vmem:[%s2876 + $0x13c] sm:$0xf]
    %v2927 = vld [vmem:[%s2876 + $0x144] sm:$0xf]
    %v2928 = vld [vmem:[%s2876 + $0x148] sm:$0xf]
    %v2929 = vld [vmem:[%s2876 + $0x150] sm:$0xf]
    %v2930 = vld [vmem:[%s2876 + $0x154] sm:$0xf]
    %v2931 = vld [vmem:[%s2876 + $0x15c] sm:$0xf]
    %v2932 = vld [vmem:[%s2876 + $0x160] sm:$0xf]
    %v2933 = vld [vmem:[%s2876 + $0x168] sm:$0xf]
    %v2934 = vld [vmem:[%s2876 + $0x16c] sm:$0xf]
    %v2935 = vld [vmem:[%s2876 + $0x174] sm:$0xf]
    %v2936 = vld [vmem:[%s2876 + $0x178] sm:$0xf]
    %v2937 = vld [vmem:[%s2876 + $0x180] sm:$0xf]
    %v2938 = vld [vmem:[%s2876 + $0x184] sm:$0xf]
    %v2939 = vld [vmem:[%s2876 + $0x18c] sm:$0xf]
    %v2940 = vld [vmem:[%s2876 + $0x190] sm:$0xf]
    %s2941 = scalar_lea.vmem %s1, 96
    %v2942 = vld [vmem:[%s2941] sm:$0xf]
    %v2943 = vld [vmem:[%s2941 + $0x4] sm:$0xf]
    %v2944 = vld [vmem:[%s2941 + $0x8] sm:$0xf]
    %v2945 = vld [vmem:[%s2941 + $0xc] sm:$0xf]
    %v2946 = vld [vmem:[%s2941 + $0x10] sm:$0xf]
    %v2947 = vld [vmem:[%s2941 + $0x14] sm:$0xf]
    %v2948 = vld [vmem:[%s2941 + $0x18] sm:$0xf]
    %v2949 = vld [vmem:[%s2941 + $0x1c] sm:$0xf]
    %v3014 = vunpack.c.l.b16 %v2877
    %v3015 = vunpack.c.l.b16 %v2878
    %v3016 = vunpack.c.l.b16 %v2879
    %v3017 = vunpack.c.l.b16 %v2880
    %v3018 = vunpack.c.l.b16 %v2881
    %v3019 = vunpack.c.l.b16 %v2882
    %v3020 = vunpack.c.l.b16 %v2883
    %v3021 = vunpack.c.l.b16 %v2884
    %v3022 = vunpack.c.l.b16 %v2885
    %v3023 = vunpack.c.l.b16 %v2886
    %v3024 = vunpack.c.l.b16 %v2887
    %v3025 = vunpack.c.l.b16 %v2888
    %v3026 = vunpack.c.l.b16 %v2889
    %v3027 = vunpack.c.l.b16 %v2890
    %v3028 = vunpack.c.l.b16 %v2891
    %v3029 = vunpack.c.l.b16 %v2892
    %v3030 = vunpack.c.l.b16 %v2893
    %v3031 = vunpack.c.l.b16 %v2894
    %v3032 = vunpack.c.l.b16 %v2895
    %v3033 = vunpack.c.l.b16 %v2896
    %v3034 = vunpack.c.l.b16 %v2897
    %v3035 = vunpack.c.l.b16 %v2898
    %v3036 = vunpack.c.l.b16 %v2899
    %v3037 = vunpack.c.l.b16 %v2900
    %v3038 = vunpack.c.l.b16 %v2901
    %v3039 = vunpack.c.l.b16 %v2902
    %v3040 = vunpack.c.l.b16 %v2903
    %v3041 = vunpack.c.l.b16 %v2904
    %v3042 = vunpack.c.l.b16 %v2905
    %v3043 = vunpack.c.l.b16 %v2906
    %v3044 = vunpack.c.l.b16 %v2907
    %v3045 = vunpack.c.l.b16 %v2908
    %v3046 = vunpack.c.l.b16 %v2909
    %v3047 = vunpack.c.l.b16 %v2910
    %v3048 = vunpack.c.l.b16 %v2911
    %v3049 = vunpack.c.l.b16 %v2912
    %v3050 = vunpack.c.l.b16 %v2913
    %v3051 = vunpack.c.l.b16 %v2914
    %v3052 = vunpack.c.l.b16 %v2915
    %v3053 = vunpack.c.l.b16 %v2916
    %v3054 = vunpack.c.l.b16 %v2917
    %v3055 = vunpack.c.l.b16 %v2918
    %v3056 = vunpack.c.l.b16 %v2919
    %v3057 = vunpack.c.l.b16 %v2920
    %v3058 = vunpack.c.l.b16 %v2921
    %v3059 = vunpack.c.l.b16 %v2922
    %v3060 = vunpack.c.l.b16 %v2923
    %v3061 = vunpack.c.l.b16 %v2924
    %v3062 = vunpack.c.l.b16 %v2925
    %v3063 = vunpack.c.l.b16 %v2926
    %v3064 = vunpack.c.l.b16 %v2927
    %v3065 = vunpack.c.l.b16 %v2928
    %v3066 = vunpack.c.l.b16 %v2929
    %v3067 = vunpack.c.l.b16 %v2930
    %v3068 = vunpack.c.l.b16 %v2931
    %v3069 = vunpack.c.l.b16 %v2932
    %v3070 = vunpack.c.l.b16 %v2933
    %v3071 = vunpack.c.l.b16 %v2934
    %v3072 = vunpack.c.l.b16 %v2935
    %v3073 = vunpack.c.l.b16 %v2936
    %v3074 = vunpack.c.l.b16 %v2937
    %v3075 = vunpack.c.l.b16 %v2938
    %v3076 = vunpack.c.l.b16 %v2939
    %v3077 = vunpack.c.l.b16 %v2940
    %v3078 = vpack.c.b16 %v3015, %v3014
    %v3079 = vpack.c.b16 %v3017, %v3016
    %v3080 = vpack.c.b16 %v3019, %v3018
    %v3081 = vpack.c.b16 %v3021, %v3020
    %v3082 = vpack.c.b16 %v3023, %v3022
    %v3083 = vpack.c.b16 %v3025, %v3024
    %v3084 = vpack.c.b16 %v3027, %v3026
    %v3085 = vpack.c.b16 %v3029, %v3028
    %v3086 = vpack.c.b16 %v3031, %v3030
    %v3087 = vpack.c.b16 %v3033, %v3032
    %v3088 = vpack.c.b16 %v3035, %v3034
    %v3089 = vpack.c.b16 %v3037, %v3036
    %v3090 = vpack.c.b16 %v3039, %v3038
    %v3091 = vpack.c.b16 %v3041, %v3040
    %v3092 = vpack.c.b16 %v3043, %v3042
    %v3093 = vpack.c.b16 %v3045, %v3044
    %v3094 = vpack.c.b16 %v3047, %v3046
    %v3095 = vpack.c.b16 %v3049, %v3048
    %v3096 = vpack.c.b16 %v3051, %v3050
    %v3097 = vpack.c.b16 %v3053, %v3052
    %v3098 = vpack.c.b16 %v3055, %v3054
    %v3099 = vpack.c.b16 %v3057, %v3056
    %v3100 = vpack.c.b16 %v3059, %v3058
    %v3101 = vpack.c.b16 %v3061, %v3060
    %v3102 = vpack.c.b16 %v3063, %v3062
    %v3103 = vpack.c.b16 %v3065, %v3064
    %v3104 = vpack.c.b16 %v3067, %v3066
    %v3105 = vpack.c.b16 %v3069, %v3068
    %v3106 = vpack.c.b16 %v3071, %v3070
    %v3107 = vpack.c.b16 %v3073, %v3072
    %v3108 = vpack.c.b16 %v3075, %v3074
    %v3109 = vpack.c.b16 %v3077, %v3076
    %v3118 = vunpack.c.l.b16 %v2942
    %v3119 = vunpack.c.l.b16 %v2943
    %v3120 = vunpack.c.l.b16 %v2944
    %v3121 = vunpack.c.l.b16 %v2945
    %v3122 = vunpack.c.l.b16 %v2946
    %v3123 = vunpack.c.l.b16 %v2947
    %v3124 = vunpack.c.l.b16 %v2948
    %v3125 = vunpack.c.l.b16 %v2949
    %v3126 = vpack.c.b16 %v3119, %v3118
    %v3127 = vpack.c.b16 %v3121, %v3120
    %v3128 = vpack.c.b16 %v3123, %v3122
    %v3129 = vpack.c.b16 %v3125, %v3124
    %v3135 = vsel %vm1020, %v3078, 0
    %v3138 = vsel %vm1020, %v3079, 0
    %v3141 = vsel %vm1020, %v3080, 0
    %v3144 = vsel %vm1020, %v3081, 0
    %v3147 = vsel %vm1020, %v3082, 0
    %v3150 = vsel %vm1020, %v3083, 0
    %v3153 = vsel %vm1020, %v3084, 0
    %v3156 = vsel %vm1020, %v3085, 0
    %v3159 = vsel %vm1020, %v3086, 0
    %v3162 = vsel %vm1020, %v3087, 0
    %v3165 = vsel %vm1020, %v3088, 0
    %v3168 = vsel %vm1020, %v3089, 0
    %v3171 = vsel %vm1020, %v3090, 0
    %v3174 = vsel %vm1020, %v3091, 0
    %v3177 = vsel %vm1020, %v3092, 0
    %v3180 = vsel %vm1020, %v3093, 0
    %v3183 = vsel %vm1020, %v3094, 0
    %v3186 = vsel %vm1020, %v3095, 0
    %v3189 = vsel %vm1020, %v3096, 0
    %v3192 = vsel %vm1020, %v3097, 0
    %v3195 = vsel %vm1020, %v3098, 0
    %v3198 = vsel %vm1020, %v3099, 0
    %v3201 = vsel %vm1020, %v3100, 0
    %v3204 = vsel %vm1020, %v3101, 0
    %v3207 = vsel %vm1020, %v3102, 0
    %v3210 = vsel %vm1020, %v3103, 0
    %v3213 = vsel %vm1020, %v3104, 0
    %v3216 = vsel %vm1020, %v3105, 0
    %v3219 = vsel %vm1020, %v3106, 0
    %v3222 = vsel %vm1020, %v3107, 0
    %v3225 = vsel %vm1020, %v3108, 0
    %v3228 = vsel %vm1020, %v3109, 0
    %3230 = vmatprep.subr.bf16.mxu0 0
    %3231 = vmatpush1.bf16.msra.mxu0 %v3126
    %3232 = vmatprep.subr.bf16.mxu0 0
    %3233 = vmatpush1.bf16.msra.mxu0 %v3127
    %3234 = vmatprep.subr.bf16.mxu0 0
    %3235 = vmatpush1.bf16.msra.mxu0 %v3128
    %3236 = vmatprep.subr.bf16.mxu0 0
    %3237 = vmatpush1.bf16.msra.mxu0 %v3129
    %3238 = vmatprep.subr.bf16.mxu0 0
    %3239 = vmatpush1.bf16.msra.mxu0 0
    %3240 = vmatprep.subr.bf16.mxu0 0
    %3241 = vmatpush1.bf16.msra.mxu0 0
    %3242 = vmatprep.subr.bf16.mxu0 0
    %3243 = vmatpush1.bf16.msra.mxu0 0
    %3244 = vmatprep.subr.bf16.mxu0 0
    %3245 = vmatpush1.bf16.msra.mxu0 0
    %3246 = vmatprep.subr.bf16.mxu0 0
    %3247 = vmatpush1.bf16.msra.mxu0 0
    %3248 = vmatprep.subr.bf16.mxu0 0
    %3249 = vmatpush1.bf16.msra.mxu0 0
    %3250 = vmatprep.subr.bf16.mxu0 0
    %3251 = vmatpush1.bf16.msra.mxu0 0
    %3252 = vmatprep.subr.bf16.mxu0 0
    %3253 = vmatpush1.bf16.msra.mxu0 0
    %3254 = vmatprep.subr.bf16.mxu0 0
    %3255 = vmatpush1.bf16.msra.mxu0 0
    %3256 = vmatprep.subr.bf16.mxu0 0
    %3257 = vmatpush1.bf16.msra.mxu0 0
    %3258 = vmatprep.subr.bf16.mxu0 0
    %3259 = vmatpush1.bf16.msra.mxu0 0
    %3260 = vmatprep.subr.bf16.mxu0 0
    %3261 = vmatpush1.bf16.msra.mxu0 0
    %3262 = vmatprep.mubr.bf16.mxu0 0
    %3263 = vmatmul.mubr.bf16.gmra.mrb[0].mxu0 %v3135
    %v3264 = vpop.f32.mrb[0].mxu0
    %v3265 = vadd.f32 0.0, %v3264
    %v3266 = vpop.f32.mrb[0].mxu0
    %v3267 = vpop.f32.mrb[0].mxu0
    %v3268 = vadd.f32 0.0, %v3267
    %v3269 = vpop.f32.mrb[0].mxu0
    %3270 = vmatprep.mubr.bf16.mxu0 0
    %3271 = vmatmul.mubr.bf16.gmra.mrb[0].mxu0 %v3138
    %v3272 = vpop.f32.mrb[0].mxu0
    %v3273 = vadd.f32 0.0, %v3272
    %v3274 = vpop.f32.mrb[0].mxu0
    %v3275 = vpop.f32.mrb[0].mxu0
    %v3276 = vadd.f32 0.0, %v3275
    %v3277 = vpop.f32.mrb[0].mxu0
    %3278 = vmatprep.mubr.bf16.mxu0 0
    %3279 = vmatmul.mubr.bf16.gmra.mrb[0].mxu0 %v3141
    %v3280 = vpop.f32.mrb[0].mxu0
    %v3281 = vadd.f32 0.0, %v3280
    %v3282 = vpop.f32.mrb[0].mxu0
    %v3283 = vpop.f32.mrb[0].mxu0
    %v3284 = vadd.f32 0.0, %v3283
    %v3285 = vpop.f32.mrb[0].mxu0
    %3286 = vmatprep.mubr.bf16.mxu0 0
    %3287 = vmatmul.mubr.bf16.gmra.mrb[0].mxu0 %v3144
    %v3288 = vpop.f32.mrb[0].mxu0
    %v3289 = vadd.f32 0.0, %v3288
    %v3290 = vpop.f32.mrb[0].mxu0
    %v3291 = vpop.f32.mrb[0].mxu0
    %v3292 = vadd.f32 0.0, %v3291
    %v3293 = vpop.f32.mrb[0].mxu0
    %3294 = vmatprep.mubr.bf16.mxu0 0
    %3295 = vmatmul.mubr.bf16.gmra.mrb[0].mxu0 %v3147
    %v3296 = vpop.f32.mrb[0].mxu0
    %v3297 = vadd.f32 0.0, %v3296
    %v3298 = vpop.f32.mrb[0].mxu0
    %v3299 = vpop.f32.mrb[0].mxu0
    %v3300 = vadd.f32 0.0, %v3299
    %v3301 = vpop.f32.mrb[0].mxu0
    %3302 = vmatprep.mubr.bf16.mxu0 0
    %3303 = vmatmul.mubr.bf16.gmra.mrb[0].mxu0 %v3150
    %v3304 = vpop.f32.mrb[0].mxu0
    %v3305 = vadd.f32 0.0, %v3304
    %v3306 = vpop.f32.mrb[0].mxu0
    %v3307 = vpop.f32.mrb[0].mxu0
    %v3308 = vadd.f32 0.0, %v3307
    %v3309 = vpop.f32.mrb[0].mxu0
    %3310 = vmatprep.mubr.bf16.mxu0 0
    %3311 = vmatmul.mubr.bf16.gmra.mrb[0].mxu0 %v3153
    %v3312 = vpop.f32.mrb[0].mxu0
    %v3313 = vadd.f32 0.0, %v3312
    %v3314 = vpop.f32.mrb[0].mxu0
    %v3315 = vpop.f32.mrb[0].mxu0
    %v3316 = vadd.f32 0.0, %v3315
    %v3317 = vpop.f32.mrb[0].mxu0
    %3318 = vmatprep.mubr.bf16.mxu0 0
    %3319 = vmatmul.mubr.bf16.gmra.mrb[0].mxu0 %v3156
    %v3320 = vpop.f32.mrb[0].mxu0
    %v3321 = vadd.f32 0.0, %v3320
    %v3322 = vpop.f32.mrb[0].mxu0
    %v3323 = vpop.f32.mrb[0].mxu0
    %v3324 = vadd.f32 0.0, %v3323
    %v3325 = vpop.f32.mrb[0].mxu0
    %3326 = vmatprep.mubr.bf16.mxu0 0
    %3327 = vmatmul.mubr.bf16.gmra.mrb[0].mxu0 %v3159
    %v3328 = vpop.f32.mrb[0].mxu0
    %v3329 = vadd.f32 0.0, %v3328
    %v3330 = vpop.f32.mrb[0].mxu0
    %v3331 = vpop.f32.mrb[0].mxu0
    %v3332 = vadd.f32 0.0, %v3331
    %v3333 = vpop.f32.mrb[0].mxu0
    %3334 = vmatprep.mubr.bf16.mxu0 0
    %3335 = vmatmul.mubr.bf16.gmra.mrb[0].mxu0 %v3162
    %v3336 = vpop.f32.mrb[0].mxu0
    %v3337 = vadd.f32 0.0, %v3336
    %v3338 = vpop.f32.mrb[0].mxu0
    %v3339 = vpop.f32.mrb[0].mxu0
    %v3340 = vadd.f32 0.0, %v3339
    %v3341 = vpop.f32.mrb[0].mxu0
    %3342 = vmatprep.mubr.bf16.mxu0 0
    %3343 = vmatmul.mubr.bf16.gmra.mrb[0].mxu0 %v3165
    %v3344 = vpop.f32.mrb[0].mxu0
    %v3345 = vadd.f32 0.0, %v3344
    %v3346 = vpop.f32.mrb[0].mxu0
    %v3347 = vpop.f32.mrb[0].mxu0
    %v3348 = vadd.f32 0.0, %v3347
    %v3349 = vpop.f32.mrb[0].mxu0
    %3350 = vmatprep.mubr.bf16.mxu0 0
    %3351 = vmatmul.mubr.bf16.gmra.mrb[0].mxu0 %v3168
    %v3352 = vpop.f32.mrb[0].mxu0
    %v3353 = vadd.f32 0.0, %v3352
    %v3354 = vpop.f32.mrb[0].mxu0
    %v3355 = vpop.f32.mrb[0].mxu0
    %v3356 = vadd.f32 0.0, %v3355
    %v3357 = vpop.f32.mrb[0].mxu0
    %3358 = vmatprep.mubr.bf16.mxu0 0
    %3359 = vmatmul.mubr.bf16.gmra.mrb[0].mxu0 %v3171
    %v3360 = vpop.f32.mrb[0].mxu0
    %v3361 = vadd.f32 0.0, %v3360
    %v3362 = vpop.f32.mrb[0].mxu0
    %v3363 = vpop.f32.mrb[0].mxu0
    %v3364 = vadd.f32 0.0, %v3363
    %v3365 = vpop.f32.mrb[0].mxu0
    %3366 = vmatprep.mubr.bf16.mxu0 0
    %3367 = vmatmul.mubr.bf16.gmra.mrb[0].mxu0 %v3174
    %v3368 = vpop.f32.mrb[0].mxu0
    %v3369 = vadd.f32 0.0, %v3368
    %v3370 = vpop.f32.mrb[0].mxu0
    %v3371 = vpop.f32.mrb[0].mxu0
    %v3372 = vadd.f32 0.0, %v3371
    %v3373 = vpop.f32.mrb[0].mxu0
    %3374 = vmatprep.mubr.bf16.mxu0 0
    %3375 = vmatmul.mubr.bf16.gmra.mrb[0].mxu0 %v3177
    %v3376 = vpop.f32.mrb[0].mxu0
    %v3377 = vadd.f32 0.0, %v3376
    %v3378 = vpop.f32.mrb[0].mxu0
    %v3379 = vpop.f32.mrb[0].mxu0
    %v3380 = vadd.f32 0.0, %v3379
    %v3381 = vpop.f32.mrb[0].mxu0
    %3382 = vmatprep.mubr.bf16.mxu0 0
    %3383 = vmatmul.mubr.bf16.gmra.mrb[0].mxu0 %v3180
    %v3384 = vpop.f32.mrb[0].mxu0
    %v3385 = vadd.f32 0.0, %v3384
    %v3386 = vpop.f32.mrb[0].mxu0
    %v3387 = vpop.f32.mrb[0].mxu0
    %v3388 = vadd.f32 0.0, %v3387
    %v3389 = vpop.f32.mrb[0].mxu0
    %3390 = vmatprep.mubr.bf16.mxu0 0
    %3391 = vmatmul.mubr.bf16.gmra.mrb[0].mxu0 %v3183
    %v3392 = vpop.f32.mrb[0].mxu0
    %v3393 = vadd.f32 0.0, %v3392
    %v3394 = vpop.f32.mrb[0].mxu0
    %v3395 = vpop.f32.mrb[0].mxu0
    %v3396 = vadd.f32 0.0, %v3395
    %v3397 = vpop.f32.mrb[0].mxu0
    %3398 = vmatprep.mubr.bf16.mxu0 0
    %3399 = vmatmul.mubr.bf16.gmra.mrb[0].mxu0 %v3186
    %v3400 = vpop.f32.mrb[0].mxu0
    %v3401 = vadd.f32 0.0, %v3400
    %v3402 = vpop.f32.mrb[0].mxu0
    %v3403 = vpop.f32.mrb[0].mxu0
    %v3404 = vadd.f32 0.0, %v3403
    %v3405 = vpop.f32.mrb[0].mxu0
    %3406 = vmatprep.mubr.bf16.mxu0 0
    %3407 = vmatmul.mubr.bf16.gmra.mrb[0].mxu0 %v3189
    %v3408 = vpop.f32.mrb[0].mxu0
    %v3409 = vadd.f32 0.0, %v3408
    %v3410 = vpop.f32.mrb[0].mxu0
    %v3411 = vpop.f32.mrb[0].mxu0
    %v3412 = vadd.f32 0.0, %v3411
    %v3413 = vpop.f32.mrb[0].mxu0
    %3414 = vmatprep.mubr.bf16.mxu0 0
    %3415 = vmatmul.mubr.bf16.gmra.mrb[0].mxu0 %v3192
    %v3416 = vpop.f32.mrb[0].mxu0
    %v3417 = vadd.f32 0.0, %v3416
    %v3418 = vpop.f32.mrb[0].mxu0
    %v3419 = vpop.f32.mrb[0].mxu0
    %v3420 = vadd.f32 0.0, %v3419
    %v3421 = vpop.f32.mrb[0].mxu0
    %3422 = vmatprep.mubr.bf16.mxu0 0
    %3423 = vmatmul.mubr.bf16.gmra.mrb[0].mxu0 %v3195
    %v3424 = vpop.f32.mrb[0].mxu0
    %v3425 = vadd.f32 0.0, %v3424
    %v3426 = vpop.f32.mrb[0].mxu0
    %v3427 = vpop.f32.mrb[0].mxu0
    %v3428 = vadd.f32 0.0, %v3427
    %v3429 = vpop.f32.mrb[0].mxu0
    %3430 = vmatprep.mubr.bf16.mxu0 0
    %3431 = vmatmul.mubr.bf16.gmra.mrb[0].mxu0 %v3198
    %v3432 = vpop.f32.mrb[0].mxu0
    %v3433 = vadd.f32 0.0, %v3432
    %v3434 = vpop.f32.mrb[0].mxu0
    %v3435 = vpop.f32.mrb[0].mxu0
    %v3436 = vadd.f32 0.0, %v3435
    %v3437 = vpop.f32.mrb[0].mxu0
    %3438 = vmatprep.mubr.bf16.mxu0 0
    %3439 = vmatmul.mubr.bf16.gmra.mrb[0].mxu0 %v3201
    %v3440 = vpop.f32.mrb[0].mxu0
    %v3441 = vadd.f32 0.0, %v3440
    %v3442 = vpop.f32.mrb[0].mxu0
    %v3443 = vpop.f32.mrb[0].mxu0
    %v3444 = vadd.f32 0.0, %v3443
    %v3445 = vpop.f32.mrb[0].mxu0
    %3446 = vmatprep.mubr.bf16.mxu0 0
    %3447 = vmatmul.mubr.bf16.gmra.mrb[0].mxu0 %v3204
    %v3448 = vpop.f32.mrb[0].mxu0
    %v3449 = vadd.f32 0.0, %v3448
    %v3450 = vpop.f32.mrb[0].mxu0
    %v3451 = vpop.f32.mrb[0].mxu0
    %v3452 = vadd.f32 0.0, %v3451
    %v3453 = vpop.f32.mrb[0].mxu0
    %3454 = vmatprep.mubr.bf16.mxu0 0
    %3455 = vmatmul.mubr.bf16.gmra.mrb[0].mxu0 %v3207
    %v3456 = vpop.f32.mrb[0].mxu0
    %v3457 = vadd.f32 0.0, %v3456
    %v3458 = vpop.f32.mrb[0].mxu0
    %v3459 = vpop.f32.mrb[0].mxu0
    %v3460 = vadd.f32 0.0, %v3459
    %v3461 = vpop.f32.mrb[0].mxu0
    %3462 = vmatprep.mubr.bf16.mxu0 0
    %3463 = vmatmul.mubr.bf16.gmra.mrb[0].mxu0 %v3210
    %v3464 = vpop.f32.mrb[0].mxu0
    %v3465 = vadd.f32 0.0, %v3464
    %v3466 = vpop.f32.mrb[0].mxu0
    %v3467 = vpop.f32.mrb[0].mxu0
    %v3468 = vadd.f32 0.0, %v3467
    %v3469 = vpop.f32.mrb[0].mxu0
    %3470 = vmatprep.mubr.bf16.mxu0 0
    %3471 = vmatmul.mubr.bf16.gmra.mrb[0].mxu0 %v3213
    %v3472 = vpop.f32.mrb[0].mxu0
    %v3473 = vadd.f32 0.0, %v3472
    %v3474 = vpop.f32.mrb[0].mxu0
    %v3475 = vpop.f32.mrb[0].mxu0
    %v3476 = vadd.f32 0.0, %v3475
    %v3477 = vpop.f32.mrb[0].mxu0
    %3478 = vmatprep.mubr.bf16.mxu0 0
    %3479 = vmatmul.mubr.bf16.gmra.mrb[0].mxu0 %v3216
    %v3480 = vpop.f32.mrb[0].mxu0
    %v3481 = vadd.f32 0.0, %v3480
    %v3482 = vpop.f32.mrb[0].mxu0
    %v3483 = vpop.f32.mrb[0].mxu0
    %v3484 = vadd.f32 0.0, %v3483
    %v3485 = vpop.f32.mrb[0].mxu0
    %3486 = vmatprep.mubr.bf16.mxu0 0
    %3487 = vmatmul.mubr.bf16.gmra.mrb[0].mxu0 %v3219
    %v3488 = vpop.f32.mrb[0].mxu0
    %v3489 = vadd.f32 0.0, %v3488
    %v3490 = vpop.f32.mrb[0].mxu0
    %v3491 = vpop.f32.mrb[0].mxu0
    %v3492 = vadd.f32 0.0, %v3491
    %v3493 = vpop.f32.mrb[0].mxu0
    %3494 = vmatprep.mubr.bf16.mxu0 0
    %3495 = vmatmul.mubr.bf16.gmra.mrb[0].mxu0 %v3222
    %v3496 = vpop.f32.mrb[0].mxu0
    %v3497 = vadd.f32 0.0, %v3496
    %v3498 = vpop.f32.mrb[0].mxu0
    %v3499 = vpop.f32.mrb[0].mxu0
    %v3500 = vadd.f32 0.0, %v3499
    %v3501 = vpop.f32.mrb[0].mxu0
    %3502 = vmatprep.mubr.bf16.mxu0 0
    %3503 = vmatmul.mubr.bf16.gmra.mrb[0].mxu0 %v3225
    %v3504 = vpop.f32.mrb[0].mxu0
    %v3505 = vadd.f32 0.0, %v3504
    %v3506 = vpop.f32.mrb[0].mxu0
    %v3507 = vpop.f32.mrb[0].mxu0
    %v3508 = vadd.f32 0.0, %v3507
    %v3509 = vpop.f32.mrb[0].mxu0
    %3510 = vmatprep.mubr.bf16.mxu0 0
    %3511 = vmatmul.mubr.bf16.gmra.mrb[0].mxu0 %v3228
    %v3512 = vpop.f32.mrb[0].mxu0
    %v3513 = vadd.f32 0.0, %v3512
    %v3514 = vpop.f32.mrb[0].mxu0
    %v3515 = vpop.f32.mrb[0].mxu0
    %v3516 = vadd.f32 0.0, %v3515
    %v3517 = vpop.f32.mrb[0].mxu0
    %3518 = vdwg.mxu0
    %v3519 = vadd.f32 %v2812, %v3265
    %v3520 = vadd.f32 %v2813, %v3268
    %v3521 = vadd.f32 %v2814, %v3273
    %v3522 = vadd.f32 %v2815, %v3276
    %v3523 = vadd.f32 %v2816, %v3281
    %v3524 = vadd.f32 %v2817, %v3284
    %v3525 = vadd.f32 %v2818, %v3289
    %v3526 = vadd.f32 %v2819, %v3292
    %v3527 = vadd.f32 %v2820, %v3297
    %v3528 = vadd.f32 %v2821, %v3300
    %v3529 = vadd.f32 %v2822, %v3305
    %v3530 = vadd.f32 %v2823, %v3308
    %v3531 = vadd.f32 %v2824, %v3313
    %v3532 = vadd.f32 %v2825, %v3316
    %v3533 = vadd.f32 %v2826, %v3321
    %v3534 = vadd.f32 %v2827, %v3324
    %v3535 = vadd.f32 %v2828, %v3329
    %v3536 = vadd.f32 %v2829, %v3332
    %v3537 = vadd.f32 %v2830, %v3337
    %v3538 = vadd.f32 %v2831, %v3340
    %v3539 = vadd.f32 %v2832, %v3345
    %v3540 = vadd.f32 %v2833, %v3348
    %v3541 = vadd.f32 %v2834, %v3353
    %v3542 = vadd.f32 %v2835, %v3356
    %v3543 = vadd.f32 %v2836, %v3361
    %v3544 = vadd.f32 %v2837, %v3364
    %v3545 = vadd.f32 %v2838, %v3369
    %v3546 = vadd.f32 %v2839, %v3372
    %v3547 = vadd.f32 %v2840, %v3377
    %v3548 = vadd.f32 %v2841, %v3380
    %v3549 = vadd.f32 %v2842, %v3385
    %v3550 = vadd.f32 %v2843, %v3388
    %v3551 = vadd.f32 %v2844, %v3393
    %v3552 = vadd.f32 %v2845, %v3396
    %v3553 = vadd.f32 %v2846, %v3401
    %v3554 = vadd.f32 %v2847, %v3404
    %v3555 = vadd.f32 %v2848, %v3409
    %v3556 = vadd.f32 %v2849, %v3412
    %v3557 = vadd.f32 %v2850, %v3417
    %v3558 = vadd.f32 %v2851, %v3420
    %v3559 = vadd.f32 %v2852, %v3425
    %v3560 = vadd.f32 %v2853, %v3428
    %v3561 = vadd.f32 %v2854, %v3433
    %v3562 = vadd.f32 %v2855, %v3436
    %v3563 = vadd.f32 %v2856, %v3441
    %v3564 = vadd.f32 %v2857, %v3444
    %v3565 = vadd.f32 %v2858, %v3449
    %v3566 = vadd.f32 %v2859, %v3452
    %v3567 = vadd.f32 %v2860, %v3457
    %v3568 = vadd.f32 %v2861, %v3460
    %v3569 = vadd.f32 %v2862, %v3465
    %v3570 = vadd.f32 %v2863, %v3468
    %v3571 = vadd.f32 %v2864, %v3473
    %v3572 = vadd.f32 %v2865, %v3476
    %v3573 = vadd.f32 %v2866, %v3481
    %v3574 = vadd.f32 %v2867, %v3484
    %v3575 = vadd.f32 %v2868, %v3489
    %v3576 = vadd.f32 %v2869, %v3492
    %v3577 = vadd.f32 %v2870, %v3497
    %v3578 = vadd.f32 %v2871, %v3500
    %v3579 = vadd.f32 %v2872, %v3505
    %v3580 = vadd.f32 %v2873, %v3508
    %v3581 = vadd.f32 %v2874, %v3513
    %v3582 = vadd.f32 %v2875, %v3516
    %v3583 = vld [vmem:[%s2876] sm:$0xf]
    %v3584 = vld [vmem:[%s2876 + $0x4] sm:$0xf]
    %v3585 = vld [vmem:[%s2876 + $0x8] sm:$0x1]
    %v3586 = vld [vmem:[%s2876 + $0xc] sm:$0xf]
    %v3587 = vld [vmem:[%s2876 + $0x10] sm:$0xf]
    %v3588 = vld [vmem:[%s2876 + $0x14] sm:$0x1]
    %v3589 = vld [vmem:[%s2876 + $0x18] sm:$0xf]
    %v3590 = vld [vmem:[%s2876 + $0x1c] sm:$0xf]
    %v3591 = vld [vmem:[%s2876 + $0x20] sm:$0x1]
    %v3592 = vld [vmem:[%s2876 + $0x24] sm:$0xf]
    %v3593 = vld [vmem:[%s2876 + $0x28] sm:$0xf]
    %v3594 = vld [vmem:[%s2876 + $0x2c] sm:$0x1]
    %v3595 = vld [vmem:[%s2876 + $0x30] sm:$0xf]
    %v3596 = vld [vmem:[%s2876 + $0x34] sm:$0xf]
    %v3597 = vld [vmem:[%s2876 + $0x38] sm:$0x1]
    %v3598 = vld [vmem:[%s2876 + $0x3c] sm:$0xf]
    %v3599 = vld [vmem:[%s2876 + $0x40] sm:$0xf]
    %v3600 = vld [vmem:[%s2876 + $0x44] sm:$0x1]
    %v3601 = vld [vmem:[%s2876 + $0x48] sm:$0xf]
    %v3602 = vld [vmem:[%s2876 + $0x4c] sm:$0xf]
    %v3603 = vld [vmem:[%s2876 + $0x50] sm:$0x1]
    %v3604 = vld [vmem:[%s2876 + $0x54] sm:$0xf]
    %v3605 = vld [vmem:[%s2876 + $0x58] sm:$0xf]
    %v3606 = vld [vmem:[%s2876 + $0x5c] sm:$0x1]
    %v3607 = vld [vmem:[%s2876 + $0x60] sm:$0xf]
    %v3608 = vld [vmem:[%s2876 + $0x64] sm:$0xf]
    %v3609 = vld [vmem:[%s2876 + $0x68] sm:$0x1]
    %v3610 = vld [vmem:[%s2876 + $0x6c] sm:$0xf]
    %v3611 = vld [vmem:[%s2876 + $0x70] sm:$0xf]
    %v3612 = vld [vmem:[%s2876 + $0x74] sm:$0x1]
    %v3613 = vld [vmem:[%s2876 + $0x78] sm:$0xf]
    %v3614 = vld [vmem:[%s2876 + $0x7c] sm:$0xf]
    %v3615 = vld [vmem:[%s2876 + $0x80] sm:$0x1]
    %v3616 = vld [vmem:[%s2876 + $0x84] sm:$0xf]
    %v3617 = vld [vmem:[%s2876 + $0x88] sm:$0xf]
    %v3618 = vld [vmem:[%s2876 + $0x8c] sm:$0x1]
    %v3619 = vld [vmem:[%s2876 + $0x90] sm:$0xf]
    %v3620 = vld [vmem:[%s2876 + $0x94] sm:$0xf]
    %v3621 = vld [vmem:[%s2876 + $0x98] sm:$0x1]
    %v3622 = vld [vmem:[%s2876 + $0x9c] sm:$0xf]
    %v3623 = vld [vmem:[%s2876 + $0xa0] sm:$0xf]
    %v3624 = vld [vmem:[%s2876 + $0xa4] sm:$0x1]
    %v3625 = vld [vmem:[%s2876 + $0xa8] sm:$0xf]
    %v3626 = vld [vmem:[%s2876 + $0xac] sm:$0xf]
    %v3627 = vld [vmem:[%s2876 + $0xb0] sm:$0x1]
    %v3628 = vld [vmem:[%s2876 + $0xb4] sm:$0xf]
    %v3629 = vld [vmem:[%s2876 + $0xb8] sm:$0xf]
    %v3630 = vld [vmem:[%s2876 + $0xbc] sm:$0x1]
    %v3631 = vld [vmem:[%s2876 + $0xd8] sm:$0xf]
    %v3632 = vld [vmem:[%s2876 + $0xdc] sm:$0xf]
    %v3633 = vld [vmem:[%s2876 + $0xe0] sm:$0x1]
    %v3634 = vld [vmem:[%s2876 + $0xe4] sm:$0xf]
    %v3635 = vld [vmem:[%s2876 + $0xe8] sm:$0xf]
    %v3636 = vld [vmem:[%s2876 + $0xec] sm:$0x1]
    %v3637 = vld [vmem:[%s2876 + $0xf0] sm:$0xf]
    %v3638 = vld [vmem:[%s2876 + $0xf4] sm:$0xf]
    %v3639 = vld [vmem:[%s2876 + $0xf8] sm:$0x1]
    %v3640 = vld [vmem:[%s2876 + $0xfc] sm:$0xf]
    %v3641 = vld [vmem:[%s2876 + $0x100] sm:$0xf]
    %v3642 = vld [vmem:[%s2876 + $0x104] sm:$0x1]
    %v3643 = vld [vmem:[%s2876 + $0x108] sm:$0xf]
    %v3644 = vld [vmem:[%s2876 + $0x10c] sm:$0xf]
    %v3645 = vld [vmem:[%s2876 + $0x110] sm:$0x1]
    %v3646 = vld [vmem:[%s2876 + $0x114] sm:$0xf]
    %v3647 = vld [vmem:[%s2876 + $0x118] sm:$0xf]
    %v3648 = vld [vmem:[%s2876 + $0x11c] sm:$0x1]
    %v3649 = vld [vmem:[%s2876 + $0x120] sm:$0xf]
    %v3650 = vld [vmem:[%s2876 + $0x124] sm:$0xf]
    %v3651 = vld [vmem:[%s2876 + $0x128] sm:$0x1]
    %v3652 = vld [vmem:[%s2876 + $0x12c] sm:$0xf]
    %v3653 = vld [vmem:[%s2876 + $0x130] sm:$0xf]
    %v3654 = vld [vmem:[%s2876 + $0x134] sm:$0x1]
    %v3655 = vld [vmem:[%s2876 + $0x138] sm:$0xf]
    %v3656 = vld [vmem:[%s2876 + $0x13c] sm:$0xf]
    %v3657 = vld [vmem:[%s2876 + $0x140] sm:$0x1]
    %v3658 = vld [vmem:[%s2876 + $0x144] sm:$0xf]
    %v3659 = vld [vmem:[%s2876 + $0x148] sm:$0xf]
    %v3660 = vld [vmem:[%s2876 + $0x14c] sm:$0x1]
    %v3661 = vld [vmem:[%s2876 + $0x150] sm:$0xf]
    %v3662 = vld [vmem:[%s2876 + $0x154] sm:$0xf]
    %v3663 = vld [vmem:[%s2876 + $0x158] sm:$0x1]
    %v3664 = vld [vmem:[%s2876 + $0x15c] sm:$0xf]
    %v3665 = vld [vmem:[%s2876 + $0x160] sm:$0xf]
    %v3666 = vld [vmem:[%s2876 + $0x164] sm:$0x1]
    %v3667 = vld [vmem:[%s2876 + $0x168] sm:$0xf]
    %v3668 = vld [vmem:[%s2876 + $0x16c] sm:$0xf]
    %v3669 = vld [vmem:[%s2876 + $0x170] sm:$0x1]
    %v3670 = vld [vmem:[%s2876 + $0x174] sm:$0xf]
    %v3671 = vld [vmem:[%s2876 + $0x178] sm:$0xf]
    %v3672 = vld [vmem:[%s2876 + $0x17c] sm:$0x1]
    %v3673 = vld [vmem:[%s2876 + $0x180] sm:$0xf]
    %v3674 = vld [vmem:[%s2876 + $0x184] sm:$0xf]
    %v3675 = vld [vmem:[%s2876 + $0x188] sm:$0x1]
    %v3676 = vld [vmem:[%s2876 + $0x18c] sm:$0xf]
    %v3677 = vld [vmem:[%s2876 + $0x190] sm:$0xf]
    %v3678 = vld [vmem:[%s2876 + $0x194] sm:$0x1]
    %v3680 = vshrl.u32 %v3583, 16
    %v3682 = vrot.slane %v3680, 4
    %v3683 = vshll.u32 %v3583, 16
    %v3685 = vrot.slane %v3683, 5
    %v3686 = vor.u32 %v3682, %v3685
    %v3687 = vrot.slane %v3686, 4
    %v3689 = vshll.u32 %v3584, 16
    %v3691 = vrot.slane %v3689, 5
    %v3692 = vsel %vm122, %v3687, %v3691
    %v3693 = vshrl.u32 %v3584, 16
    %v3695 = vrot.slane %v3693, 4
    %v3696 = vor.u32 %v3695, %v3691
    %v3697 = vrot.slane %v3696, 4
    %v3699 = vshll.u32 %v3585, 16
    %v3701 = vrot.slane %v3699, 5
    %v3702 = vsel %vm122, %v3697, %v3701
    %v3704 = vshrl.u32 %v3586, 16
    %v3706 = vrot.slane %v3704, 4
    %v3707 = vshll.u32 %v3586, 16
    %v3709 = vrot.slane %v3707, 5
    %v3710 = vor.u32 %v3706, %v3709
    %v3711 = vrot.slane %v3710, 4
    %v3713 = vshll.u32 %v3587, 16
    %v3715 = vrot.slane %v3713, 5
    %v3716 = vsel %vm122, %v3711, %v3715
    %v3717 = vshrl.u32 %v3587, 16
    %v3719 = vrot.slane %v3717, 4
    %v3720 = vor.u32 %v3719, %v3715
    %v3721 = vrot.slane %v3720, 4
    %v3723 = vshll.u32 %v3588, 16
    %v3725 = vrot.slane %v3723, 5
    %v3726 = vsel %vm122, %v3721, %v3725
    %v3728 = vshrl.u32 %v3589, 16
    %v3730 = vrot.slane %v3728, 4
    %v3731 = vshll.u32 %v3589, 16
    %v3733 = vrot.slane %v3731, 5
    %v3734 = vor.u32 %v3730, %v3733
    %v3735 = vrot.slane %v3734, 4
    %v3737 = vshll.u32 %v3590, 16
    %v3739 = vrot.slane %v3737, 5
    %v3740 = vsel %vm122, %v3735, %v3739
    %v3741 = vshrl.u32 %v3590, 16
    %v3743 = vrot.slane %v3741, 4
    %v3744 = vor.u32 %v3743, %v3739
    %v3745 = vrot.slane %v3744, 4
    %v3747 = vshll.u32 %v3591, 16
    %v3749 = vrot.slane %v3747, 5
    %v3750 = vsel %vm122, %v3745, %v3749
    %v3752 = vshrl.u32 %v3592, 16
    %v3754 = vrot.slane %v3752, 4
    %v3755 = vshll.u32 %v3592, 16
    %v3757 = vrot.slane %v3755, 5
    %v3758 = vor.u32 %v3754, %v3757
    %v3759 = vrot.slane %v3758, 4
    %v3761 = vshll.u32 %v3593, 16
    %v3763 = vrot.slane %v3761, 5
    %v3764 = vsel %vm122, %v3759, %v3763
    %v3765 = vshrl.u32 %v3593, 16
    %v3767 = vrot.slane %v3765, 4
    %v3768 = vor.u32 %v3767, %v3763
    %v3769 = vrot.slane %v3768, 4
    %v3771 = vshll.u32 %v3594, 16
    %v3773 = vrot.slane %v3771, 5
    %v3774 = vsel %vm122, %v3769, %v3773
    %v3776 = vshrl.u32 %v3595, 16
    %v3778 = vrot.slane %v3776, 4
    %v3779 = vshll.u32 %v3595, 16
    %v3781 = vrot.slane %v3779, 5
    %v3782 = vor.u32 %v3778, %v3781
    %v3783 = vrot.slane %v3782, 4
    %v3785 = vshll.u32 %v3596, 16
    %v3787 = vrot.slane %v3785, 5
    %v3788 = vsel %vm122, %v3783, %v3787
    %v3789 = vshrl.u32 %v3596, 16
    %v3791 = vrot.slane %v3789, 4
    %v3792 = vor.u32 %v3791, %v3787
    %v3793 = vrot.slane %v3792, 4
    %v3795 = vshll.u32 %v3597, 16
    %v3797 = vrot.slane %v3795, 5
    %v3798 = vsel %vm122, %v3793, %v3797
    %v3800 = vshrl.u32 %v3598, 16
    %v3802 = vrot.slane %v3800, 4
    %v3803 = vshll.u32 %v3598, 16
    %v3805 = vrot.slane %v3803, 5
    %v3806 = vor.u32 %v3802, %v3805
    %v3807 = vrot.slane %v3806, 4
    %v3809 = vshll.u32 %v3599, 16
    %v3811 = vrot.slane %v3809, 5
    %v3812 = vsel %vm122, %v3807, %v3811
    %v3813 = vshrl.u32 %v3599, 16
    %v3815 = vrot.slane %v3813, 4
    %v3816 = vor.u32 %v3815, %v3811
    %v3817 = vrot.slane %v3816, 4
    %v3819 = vshll.u32 %v3600, 16
    %v3821 = vrot.slane %v3819, 5
    %v3822 = vsel %vm122, %v3817, %v3821
    %v3824 = vshrl.u32 %v3601, 16
    %v3826 = vrot.slane %v3824, 4
    %v3827 = vshll.u32 %v3601, 16
    %v3829 = vrot.slane %v3827, 5
    %v3830 = vor.u32 %v3826, %v3829
    %v3831 = vrot.slane %v3830, 4
    %v3833 = vshll.u32 %v3602, 16
    %v3835 = vrot.slane %v3833, 5
    %v3836 = vsel %vm122, %v3831, %v3835
    %v3837 = vshrl.u32 %v3602, 16
    %v3839 = vrot.slane %v3837, 4
    %v3840 = vor.u32 %v3839, %v3835
    %v3841 = vrot.slane %v3840, 4
    %v3843 = vshll.u32 %v3603, 16
    %v3845 = vrot.slane %v3843, 5
    %v3846 = vsel %vm122, %v3841, %v3845
    %v3848 = vshrl.u32 %v3604, 16
    %v3850 = vrot.slane %v3848, 4
    %v3851 = vshll.u32 %v3604, 16
    %v3853 = vrot.slane %v3851, 5
    %v3854 = vor.u32 %v3850, %v3853
    %v3855 = vrot.slane %v3854, 4
    %v3857 = vshll.u32 %v3605, 16
    %v3859 = vrot.slane %v3857, 5
    %v3860 = vsel %vm122, %v3855, %v3859
    %v3861 = vshrl.u32 %v3605, 16
    %v3863 = vrot.slane %v3861, 4
    %v3864 = vor.u32 %v3863, %v3859
    %v3865 = vrot.slane %v3864, 4
    %v3867 = vshll.u32 %v3606, 16
    %v3869 = vrot.slane %v3867, 5
    %v3870 = vsel %vm122, %v3865, %v3869
    %v3872 = vshrl.u32 %v3607, 16
    %v3874 = vrot.slane %v3872, 4
    %v3875 = vshll.u32 %v3607, 16
    %v3877 = vrot.slane %v3875, 5
    %v3878 = vor.u32 %v3874, %v3877
    %v3879 = vrot.slane %v3878, 4
    %v3881 = vshll.u32 %v3608, 16
    %v3883 = vrot.slane %v3881, 5
    %v3884 = vsel %vm122, %v3879, %v3883
    %v3885 = vshrl.u32 %v3608, 16
    %v3887 = vrot.slane %v3885, 4
    %v3888 = vor.u32 %v3887, %v3883
    %v3889 = vrot.slane %v3888, 4
    %v3891 = vshll.u32 %v3609, 16
    %v3893 = vrot.slane %v3891, 5
    %v3894 = vsel %vm122, %v3889, %v3893
    %v3896 = vshrl.u32 %v3610, 16
    %v3898 = vrot.slane %v3896, 4
    %v3899 = vshll.u32 %v3610, 16
    %v3901 = vrot.slane %v3899, 5
    %v3902 = vor.u32 %v3898, %v3901
    %v3903 = vrot.slane %v3902, 4
    %v3905 = vshll.u32 %v3611, 16
    %v3907 = vrot.slane %v3905, 5
    %v3908 = vsel %vm122, %v3903, %v3907
    %v3909 = vshrl.u32 %v3611, 16
    %v3911 = vrot.slane %v3909, 4
    %v3912 = vor.u32 %v3911, %v3907
    %v3913 = vrot.slane %v3912, 4
    %v3915 = vshll.u32 %v3612, 16
    %v3917 = vrot.slane %v3915, 5
    %v3918 = vsel %vm122, %v3913, %v3917
    %v3920 = vshrl.u32 %v3613, 16
    %v3922 = vrot.slane %v3920, 4
    %v3923 = vshll.u32 %v3613, 16
    %v3925 = vrot.slane %v3923, 5
    %v3926 = vor.u32 %v3922, %v3925
    %v3927 = vrot.slane %v3926, 4
    %v3929 = vshll.u32 %v3614, 16
    %v3931 = vrot.slane %v3929, 5
    %v3932 = vsel %vm122, %v3927, %v3931
    %v3933 = vshrl.u32 %v3614, 16
    %v3935 = vrot.slane %v3933, 4
    %v3936 = vor.u32 %v3935, %v3931
    %v3937 = vrot.slane %v3936, 4
    %v3939 = vshll.u32 %v3615, 16
    %v3941 = vrot.slane %v3939, 5
    %v3942 = vsel %vm122, %v3937, %v3941
    %v3944 = vshrl.u32 %v3616, 16
    %v3946 = vrot.slane %v3944, 4
    %v3947 = vshll.u32 %v3616, 16
    %v3949 = vrot.slane %v3947, 5
    %v3950 = vor.u32 %v3946, %v3949
    %v3951 = vrot.slane %v3950, 4
    %v3953 = vshll.u32 %v3617, 16
    %v3955 = vrot.slane %v3953, 5
    %v3956 = vsel %vm122, %v3951, %v3955
    %v3957 = vshrl.u32 %v3617, 16
    %v3959 = vrot.slane %v3957, 4
    %v3960 = vor.u32 %v3959, %v3955
    %v3961 = vrot.slane %v3960, 4
    %v3963 = vshll.u32 %v3618, 16
    %v3965 = vrot.slane %v3963, 5
    %v3966 = vsel %vm122, %v3961, %v3965
    %v3968 = vshrl.u32 %v3619, 16
    %v3970 = vrot.slane %v3968, 4
    %v3971 = vshll.u32 %v3619, 16
    %v3973 = vrot.slane %v3971, 5
    %v3974 = vor.u32 %v3970, %v3973
    %v3975 = vrot.slane %v3974, 4
    %v3977 = vshll.u32 %v3620, 16
    %v3979 = vrot.slane %v3977, 5
    %v3980 = vsel %vm122, %v3975, %v3979
    %v3981 = vshrl.u32 %v3620, 16
    %v3983 = vrot.slane %v3981, 4
    %v3984 = vor.u32 %v3983, %v3979
    %v3985 = vrot.slane %v3984, 4
    %v3987 = vshll.u32 %v3621, 16
    %v3989 = vrot.slane %v3987, 5
    %v3990 = vsel %vm122, %v3985, %v3989
    %v3992 = vshrl.u32 %v3622, 16
    %v3994 = vrot.slane %v3992, 4
    %v3995 = vshll.u32 %v3622, 16
    %v3997 = vrot.slane %v3995, 5
    %v3998 = vor.u32 %v3994, %v3997
    %v3999 = vrot.slane %v3998, 4
    %v4001 = vshll.u32 %v3623, 16
    %v4003 = vrot.slane %v4001, 5
    %v4004 = vsel %vm122, %v3999, %v4003
    %v4005 = vshrl.u32 %v3623, 16
    %v4007 = vrot.slane %v4005, 4
    %v4008 = vor.u32 %v4007, %v4003
    %v4009 = vrot.slane %v4008, 4
    %v4011 = vshll.u32 %v3624, 16
    %v4013 = vrot.slane %v4011, 5
    %v4014 = vsel %vm122, %v4009, %v4013
    %v4016 = vshrl.u32 %v3625, 16
    %v4018 = vrot.slane %v4016, 4
    %v4019 = vshll.u32 %v3625, 16
    %v4021 = vrot.slane %v4019, 5
    %v4022 = vor.u32 %v4018, %v4021
    %v4023 = vrot.slane %v4022, 4
    %v4025 = vshll.u32 %v3626, 16
    %v4027 = vrot.slane %v4025, 5
    %v4028 = vsel %vm122, %v4023, %v4027
    %v4029 = vshrl.u32 %v3626, 16
    %v4031 = vrot.slane %v4029, 4
    %v4032 = vor.u32 %v4031, %v4027
    %v4033 = vrot.slane %v4032, 4
    %v4035 = vshll.u32 %v3627, 16
    %v4037 = vrot.slane %v4035, 5
    %v4038 = vsel %vm122, %v4033, %v4037
    %v4040 = vshrl.u32 %v3628, 16
    %v4042 = vrot.slane %v4040, 4
    %v4043 = vshll.u32 %v3628, 16
    %v4045 = vrot.slane %v4043, 5
    %v4046 = vor.u32 %v4042, %v4045
    %v4047 = vrot.slane %v4046, 4
    %v4049 = vshll.u32 %v3629, 16
    %v4051 = vrot.slane %v4049, 5
    %v4052 = vsel %vm122, %v4047, %v4051
    %v4053 = vshrl.u32 %v3629, 16
    %v4055 = vrot.slane %v4053, 4
    %v4056 = vor.u32 %v4055, %v4051
    %v4057 = vrot.slane %v4056, 4
    %v4059 = vshll.u32 %v3630, 16
    %v4061 = vrot.slane %v4059, 5
    %v4062 = vsel %vm122, %v4057, %v4061
    %v4064 = vshrl.u32 %v3631, 16
    %v4066 = vrot.slane %v4064, 4
    %v4067 = vshll.u32 %v3631, 16
    %v4069 = vrot.slane %v4067, 5
    %v4070 = vor.u32 %v4066, %v4069
    %v4071 = vrot.slane %v4070, 4
    %v4073 = vshll.u32 %v3632, 16
    %v4075 = vrot.slane %v4073, 5
    %v4076 = vsel %vm122, %v4071, %v4075
    %v4077 = vshrl.u32 %v3632, 16
    %v4079 = vrot.slane %v4077, 4
    %v4080 = vor.u32 %v4079, %v4075
    %v4081 = vrot.slane %v4080, 4
    %v4083 = vshll.u32 %v3633, 16
    %v4085 = vrot.slane %v4083, 5
    %v4086 = vsel %vm122, %v4081, %v4085
    %v4088 = vshrl.u32 %v3634, 16
    %v4090 = vrot.slane %v4088, 4
    %v4091 = vshll.u32 %v3634, 16
    %v4093 = vrot.slane %v4091, 5
    %v4094 = vor.u32 %v4090, %v4093
    %v4095 = vrot.slane %v4094, 4
    %v4097 = vshll.u32 %v3635, 16
    %v4099 = vrot.slane %v4097, 5
    %v4100 = vsel %vm122, %v4095, %v4099
    %v4101 = vshrl.u32 %v3635, 16
    %v4103 = vrot.slane %v4101, 4
    %v4104 = vor.u32 %v4103, %v4099
    %v4105 = vrot.slane %v4104, 4
    %v4107 = vshll.u32 %v3636, 16
    %v4109 = vrot.slane %v4107, 5
    %v4110 = vsel %vm122, %v4105, %v4109
    %v4112 = vshrl.u32 %v3637, 16
    %v4114 = vrot.slane %v4112, 4
    %v4115 = vshll.u32 %v3637, 16
    %v4117 = vrot.slane %v4115, 5
    %v4118 = vor.u32 %v4114, %v4117
    %v4119 = vrot.slane %v4118, 4
    %v4121 = vshll.u32 %v3638, 16
    %v4123 = vrot.slane %v4121, 5
    %v4124 = vsel %vm122, %v4119, %v4123
    %v4125 = vshrl.u32 %v3638, 16
    %v4127 = vrot.slane %v4125, 4
    %v4128 = vor.u32 %v4127, %v4123
    %v4129 = vrot.slane %v4128, 4
    %v4131 = vshll.u32 %v3639, 16
    %v4133 = vrot.slane %v4131, 5
    %v4134 = vsel %vm122, %v4129, %v4133
    %v4136 = vshrl.u32 %v3640, 16
    %v4138 = vrot.slane %v4136, 4
    %v4139 = vshll.u32 %v3640, 16
    %v4141 = vrot.slane %v4139, 5
    %v4142 = vor.u32 %v4138, %v4141
    %v4143 = vrot.slane %v4142, 4
    %v4145 = vshll.u32 %v3641, 16
    %v4147 = vrot.slane %v4145, 5
    %v4148 = vsel %vm122, %v4143, %v4147
    %v4149 = vshrl.u32 %v3641, 16
    %v4151 = vrot.slane %v4149, 4
    %v4152 = vor.u32 %v4151, %v4147
    %v4153 = vrot.slane %v4152, 4
    %v4155 = vshll.u32 %v3642, 16
    %v4157 = vrot.slane %v4155, 5
    %v4158 = vsel %vm122, %v4153, %v4157
    %v4160 = vshrl.u32 %v3643, 16
    %v4162 = vrot.slane %v4160, 4
    %v4163 = vshll.u32 %v3643, 16
    %v4165 = vrot.slane %v4163, 5
    %v4166 = vor.u32 %v4162, %v4165
    %v4167 = vrot.slane %v4166, 4
    %v4169 = vshll.u32 %v3644, 16
    %v4171 = vrot.slane %v4169, 5
    %v4172 = vsel %vm122, %v4167, %v4171
    %v4173 = vshrl.u32 %v3644, 16
    %v4175 = vrot.slane %v4173, 4
    %v4176 = vor.u32 %v4175, %v4171
    %v4177 = vrot.slane %v4176, 4
    %v4179 = vshll.u32 %v3645, 16
    %v4181 = vrot.slane %v4179, 5
    %v4182 = vsel %vm122, %v4177, %v4181
    %v4184 = vshrl.u32 %v3646, 16
    %v4186 = vrot.slane %v4184, 4
    %v4187 = vshll.u32 %v3646, 16
    %v4189 = vrot.slane %v4187, 5
    %v4190 = vor.u32 %v4186, %v4189
    %v4191 = vrot.slane %v4190, 4
    %v4193 = vshll.u32 %v3647, 16
    %v4195 = vrot.slane %v4193, 5
    %v4196 = vsel %vm122, %v4191, %v4195
    %v4197 = vshrl.u32 %v3647, 16
    %v4199 = vrot.slane %v4197, 4
    %v4200 = vor.u32 %v4199, %v4195
    %v4201 = vrot.slane %v4200, 4
    %v4203 = vshll.u32 %v3648, 16
    %v4205 = vrot.slane %v4203, 5
    %v4206 = vsel %vm122, %v4201, %v4205
    %v4208 = vshrl.u32 %v3649, 16
    %v4210 = vrot.slane %v4208, 4
    %v4211 = vshll.u32 %v3649, 16
    %v4213 = vrot.slane %v4211, 5
    %v4214 = vor.u32 %v4210, %v4213
    %v4215 = vrot.slane %v4214, 4
    %v4217 = vshll.u32 %v3650, 16
    %v4219 = vrot.slane %v4217, 5
    %v4220 = vsel %vm122, %v4215, %v4219
    %v4221 = vshrl.u32 %v3650, 16
    %v4223 = vrot.slane %v4221, 4
    %v4224 = vor.u32 %v4223, %v4219
    %v4225 = vrot.slane %v4224, 4
    %v4227 = vshll.u32 %v3651, 16
    %v4229 = vrot.slane %v4227, 5
    %v4230 = vsel %vm122, %v4225, %v4229
    %v4232 = vshrl.u32 %v3652, 16
    %v4234 = vrot.slane %v4232, 4
    %v4235 = vshll.u32 %v3652, 16
    %v4237 = vrot.slane %v4235, 5
    %v4238 = vor.u32 %v4234, %v4237
    %v4239 = vrot.slane %v4238, 4
    %v4241 = vshll.u32 %v3653, 16
    %v4243 = vrot.slane %v4241, 5
    %v4244 = vsel %vm122, %v4239, %v4243
    %v4245 = vshrl.u32 %v3653, 16
    %v4247 = vrot.slane %v4245, 4
    %v4248 = vor.u32 %v4247, %v4243
    %v4249 = vrot.slane %v4248, 4
    %v4251 = vshll.u32 %v3654, 16
    %v4253 = vrot.slane %v4251, 5
    %v4254 = vsel %vm122, %v4249, %v4253
    %v4256 = vshrl.u32 %v3655, 16
    %v4258 = vrot.slane %v4256, 4
    %v4259 = vshll.u32 %v3655, 16
    %v4261 = vrot.slane %v4259, 5
    %v4262 = vor.u32 %v4258, %v4261
    %v4263 = vrot.slane %v4262, 4
    %v4265 = vshll.u32 %v3656, 16
    %v4267 = vrot.slane %v4265, 5
    %v4268 = vsel %vm122, %v4263, %v4267
    %v4269 = vshrl.u32 %v3656, 16
    %v4271 = vrot.slane %v4269, 4
    %v4272 = vor.u32 %v4271, %v4267
    %v4273 = vrot.slane %v4272, 4
    %v4275 = vshll.u32 %v3657, 16
    %v4277 = vrot.slane %v4275, 5
    %v4278 = vsel %vm122, %v4273, %v4277
    %v4280 = vshrl.u32 %v3658, 16
    %v4282 = vrot.slane %v4280, 4
    %v4283 = vshll.u32 %v3658, 16
    %v4285 = vrot.slane %v4283, 5
    %v4286 = vor.u32 %v4282, %v4285
    %v4287 = vrot.slane %v4286, 4
    %v4289 = vshll.u32 %v3659, 16
    %v4291 = vrot.slane %v4289, 5
    %v4292 = vsel %vm122, %v4287, %v4291
    %v4293 = vshrl.u32 %v3659, 16
    %v4295 = vrot.slane %v4293, 4
    %v4296 = vor.u32 %v4295, %v4291
    %v4297 = vrot.slane %v4296, 4
    %v4299 = vshll.u32 %v3660, 16
    %v4301 = vrot.slane %v4299, 5
    %v4302 = vsel %vm122, %v4297, %v4301
    %v4304 = vshrl.u32 %v3661, 16
    %v4306 = vrot.slane %v4304, 4
    %v4307 = vshll.u32 %v3661, 16
    %v4309 = vrot.slane %v4307, 5
    %v4310 = vor.u32 %v4306, %v4309
    %v4311 = vrot.slane %v4310, 4
    %v4313 = vshll.u32 %v3662, 16
    %v4315 = vrot.slane %v4313, 5
    %v4316 = vsel %vm122, %v4311, %v4315
    %v4317 = vshrl.u32 %v3662, 16
    %v4319 = vrot.slane %v4317, 4
    %v4320 = vor.u32 %v4319, %v4315
    %v4321 = vrot.slane %v4320, 4
    %v4323 = vshll.u32 %v3663, 16
    %v4325 = vrot.slane %v4323, 5
    %v4326 = vsel %vm122, %v4321, %v4325
    %v4328 = vshrl.u32 %v3664, 16
    %v4330 = vrot.slane %v4328, 4
    %v4331 = vshll.u32 %v3664, 16
    %v4333 = vrot.slane %v4331, 5
    %v4334 = vor.u32 %v4330, %v4333
    %v4335 = vrot.slane %v4334, 4
    %v4337 = vshll.u32 %v3665, 16
    %v4339 = vrot.slane %v4337, 5
    %v4340 = vsel %vm122, %v4335, %v4339
    %v4341 = vshrl.u32 %v3665, 16
    %v4343 = vrot.slane %v4341, 4
    %v4344 = vor.u32 %v4343, %v4339
    %v4345 = vrot.slane %v4344, 4
    %v4347 = vshll.u32 %v3666, 16
    %v4349 = vrot.slane %v4347, 5
    %v4350 = vsel %vm122, %v4345, %v4349
    %v4352 = vshrl.u32 %v3667, 16
    %v4354 = vrot.slane %v4352, 4
    %v4355 = vshll.u32 %v3667, 16
    %v4357 = vrot.slane %v4355, 5
    %v4358 = vor.u32 %v4354, %v4357
    %v4359 = vrot.slane %v4358, 4
    %v4361 = vshll.u32 %v3668, 16
    %v4363 = vrot.slane %v4361, 5
    %v4364 = vsel %vm122, %v4359, %v4363
    %v4365 = vshrl.u32 %v3668, 16
    %v4367 = vrot.slane %v4365, 4
    %v4368 = vor.u32 %v4367, %v4363
    %v4369 = vrot.slane %v4368, 4
    %v4371 = vshll.u32 %v3669, 16
    %v4373 = vrot.slane %v4371, 5
    %v4374 = vsel %vm122, %v4369, %v4373
    %v4376 = vshrl.u32 %v3670, 16
    %v4378 = vrot.slane %v4376, 4
    %v4379 = vshll.u32 %v3670, 16
    %v4381 = vrot.slane %v4379, 5
    %v4382 = vor.u32 %v4378, %v4381
    %v4383 = vrot.slane %v4382, 4
    %v4385 = vshll.u32 %v3671, 16
    %v4387 = vrot.slane %v4385, 5
    %v4388 = vsel %vm122, %v4383, %v4387
    %v4389 = vshrl.u32 %v3671, 16
    %v4391 = vrot.slane %v4389, 4
    %v4392 = vor.u32 %v4391, %v4387
    %v4393 = vrot.slane %v4392, 4
    %v4395 = vshll.u32 %v3672, 16
    %v4397 = vrot.slane %v4395, 5
    %v4398 = vsel %vm122, %v4393, %v4397
    %v4400 = vshrl.u32 %v3673, 16
    %v4402 = vrot.slane %v4400, 4
    %v4403 = vshll.u32 %v3673, 16
    %v4405 = vrot.slane %v4403, 5
    %v4406 = vor.u32 %v4402, %v4405
    %v4407 = vrot.slane %v4406, 4
    %v4409 = vshll.u32 %v3674, 16
    %v4411 = vrot.slane %v4409, 5
    %v4412 = vsel %vm122, %v4407, %v4411
    %v4413 = vshrl.u32 %v3674, 16
    %v4415 = vrot.slane %v4413, 4
    %v4416 = vor.u32 %v4415, %v4411
    %v4417 = vrot.slane %v4416, 4
    %v4419 = vshll.u32 %v3675, 16
    %v4421 = vrot.slane %v4419, 5
    %v4422 = vsel %vm122, %v4417, %v4421
    %v4424 = vshrl.u32 %v3676, 16
    %v4426 = vrot.slane %v4424, 4
    %v4427 = vshll.u32 %v3676, 16
    %v4429 = vrot.slane %v4427, 5
    %v4430 = vor.u32 %v4426, %v4429
    %v4431 = vrot.slane %v4430, 4
    %v4433 = vshll.u32 %v3677, 16
    %v4435 = vrot.slane %v4433, 5
    %v4436 = vsel %vm122, %v4431, %v4435
    %v4437 = vshrl.u32 %v3677, 16
    %v4439 = vrot.slane %v4437, 4
    %v4440 = vor.u32 %v4439, %v4435
    %v4441 = vrot.slane %v4440, 4
    %v4443 = vshll.u32 %v3678, 16
    %v4445 = vrot.slane %v4443, 5
    %v4446 = vsel %vm122, %v4441, %v4445
    %s4447 = scalar_lea.vmem %s1, 128
    %v4448 = vld [vmem:[%s4447] sm:$0xf]
    %v4449 = vld [vmem:[%s4447 + $0x4] sm:$0xf]
    %v4450 = vld [vmem:[%s4447 + $0x8] sm:$0xf]
    %v4451 = vld [vmem:[%s4447 + $0xc] sm:$0xf]
    %v4452 = vld [vmem:[%s4447 + $0x10] sm:$0xf]
    %v4453 = vld [vmem:[%s4447 + $0x14] sm:$0xf]
    %v4454 = vld [vmem:[%s4447 + $0x18] sm:$0xf]
    %v4455 = vld [vmem:[%s4447 + $0x1c] sm:$0xf]
    %v4456 = vunpack.c.l.b16 %v3692
    %v4457 = vunpack.c.l.b16 %v3702
    %v4458 = vunpack.c.l.b16 %v3716
    %v4459 = vunpack.c.l.b16 %v3726
    %v4460 = vunpack.c.l.b16 %v3740
    %v4461 = vunpack.c.l.b16 %v3750
    %v4462 = vunpack.c.l.b16 %v3764
    %v4463 = vunpack.c.l.b16 %v3774
    %v4464 = vunpack.c.l.b16 %v3788
    %v4465 = vunpack.c.l.b16 %v3798
    %v4466 = vunpack.c.l.b16 %v3812
    %v4467 = vunpack.c.l.b16 %v3822
    %v4468 = vunpack.c.l.b16 %v3836
    %v4469 = vunpack.c.l.b16 %v3846
    %v4470 = vunpack.c.l.b16 %v3860
    %v4471 = vunpack.c.l.b16 %v3870
    %v4472 = vunpack.c.l.b16 %v3884
    %v4473 = vunpack.c.l.b16 %v3894
    %v4474 = vunpack.c.l.b16 %v3908
    %v4475 = vunpack.c.l.b16 %v3918
    %v4476 = vunpack.c.l.b16 %v3932
    %v4477 = vunpack.c.l.b16 %v3942
    %v4478 = vunpack.c.l.b16 %v3956
    %v4479 = vunpack.c.l.b16 %v3966
    %v4480 = vunpack.c.l.b16 %v3980
    %v4481 = vunpack.c.l.b16 %v3990
    %v4482 = vunpack.c.l.b16 %v4004
    %v4483 = vunpack.c.l.b16 %v4014
    %v4484 = vunpack.c.l.b16 %v4028
    %v4485 = vunpack.c.l.b16 %v4038
    %v4486 = vunpack.c.l.b16 %v4052
    %v4487 = vunpack.c.l.b16 %v4062
    %v4488 = vunpack.c.l.b16 %v4076
    %v4489 = vunpack.c.l.b16 %v4086
    %v4490 = vunpack.c.l.b16 %v4100
    %v4491 = vunpack.c.l.b16 %v4110
    %v4492 = vunpack.c.l.b16 %v4124
    %v4493 = vunpack.c.l.b16 %v4134
    %v4494 = vunpack.c.l.b16 %v4148
    %v4495 = vunpack.c.l.b16 %v4158
    %v4496 = vunpack.c.l.b16 %v4172
    %v4497 = vunpack.c.l.b16 %v4182
    %v4498 = vunpack.c.l.b16 %v4196
    %v4499 = vunpack.c.l.b16 %v4206
    %v4500 = vunpack.c.l.b16 %v4220
    %v4501 = vunpack.c.l.b16 %v4230
    %v4502 = vunpack.c.l.b16 %v4244
    %v4503 = vunpack.c.l.b16 %v4254
    %v4504 = vunpack.c.l.b16 %v4268
    %v4505 = vunpack.c.l.b16 %v4278
    %v4506 = vunpack.c.l.b16 %v4292
    %v4507 = vunpack.c.l.b16 %v4302
    %v4508 = vunpack.c.l.b16 %v4316
    %v4509 = vunpack.c.l.b16 %v4326
    %v4510 = vunpack.c.l.b16 %v4340
    %v4511 = vunpack.c.l.b16 %v4350
    %v4512 = vunpack.c.l.b16 %v4364
    %v4513 = vunpack.c.l.b16 %v4374
    %v4514 = vunpack.c.l.b16 %v4388
    %v4515 = vunpack.c.l.b16 %v4398
    %v4516 = vunpack.c.l.b16 %v4412
    %v4517 = vunpack.c.l.b16 %v4422
    %v4518 = vunpack.c.l.b16 %v4436
    %v4519 = vunpack.c.l.b16 %v4446
    %v4520 = vpack.c.b16 %v4457, %v4456
    %v4521 = vpack.c.b16 %v4459, %v4458
    %v4522 = vpack.c.b16 %v4461, %v4460
    %v4523 = vpack.c.b16 %v4463, %v4462
    %v4524 = vpack.c.b16 %v4465, %v4464
    %v4525 = vpack.c.b16 %v4467, %v4466
    %v4526 = vpack.c.b16 %v4469, %v4468
    %v4527 = vpack.c.b16 %v4471, %v4470
    %v4528 = vpack.c.b16 %v4473, %v4472
    %v4529 = vpack.c.b16 %v4475, %v4474
    %v4530 = vpack.c.b16 %v4477, %v4476
    %v4531 = vpack.c.b16 %v4479, %v4478
    %v4532 = vpack.c.b16 %v4481, %v4480
    %v4533 = vpack.c.b16 %v4483, %v4482
    %v4534 = vpack.c.b16 %v4485, %v4484
    %v4535 = vpack.c.b16 %v4487, %v4486
    %v4536 = vpack.c.b16 %v4489, %v4488
    %v4537 = vpack.c.b16 %v4491, %v4490
    %v4538 = vpack.c.b16 %v4493, %v4492
    %v4539 = vpack.c.b16 %v4495, %v4494
    %v4540 = vpack.c.b16 %v4497, %v4496
    %v4541 = vpack.c.b16 %v4499, %v4498
    %v4542 = vpack.c.b16 %v4501, %v4500
    %v4543 = vpack.c.b16 %v4503, %v4502
    %v4544 = vpack.c.b16 %v4505, %v4504
    %v4545 = vpack.c.b16 %v4507, %v4506
    %v4546 = vpack.c.b16 %v4509, %v4508
    %v4547 = vpack.c.b16 %v4511, %v4510
    %v4548 = vpack.c.b16 %v4513, %v4512
    %v4549 = vpack.c.b16 %v4515, %v4514
    %v4550 = vpack.c.b16 %v4517, %v4516
    %v4551 = vpack.c.b16 %v4519, %v4518
    %v4560 = vunpack.c.l.b16 %v4448
    %v4561 = vunpack.c.l.b16 %v4449
    %v4562 = vunpack.c.l.b16 %v4450
    %v4563 = vunpack.c.l.b16 %v4451
    %v4564 = vunpack.c.l.b16 %v4452
    %v4565 = vunpack.c.l.b16 %v4453
    %v4566 = vunpack.c.l.b16 %v4454
    %v4567 = vunpack.c.l.b16 %v4455
    %v4568 = vpack.c.b16 %v4561, %v4560
    %v4569 = vpack.c.b16 %v4563, %v4562
    %v4570 = vpack.c.b16 %v4565, %v4564
    %v4571 = vpack.c.b16 %v4567, %v4566
    %v4577 = vsel %vm1020, %v4520, 0
    %v4580 = vsel %vm1020, %v4521, 0
    %v4583 = vsel %vm1020, %v4522, 0
    %v4586 = vsel %vm1020, %v4523, 0
    %v4589 = vsel %vm1020, %v4524, 0
    %v4592 = vsel %vm1020, %v4525, 0
    %v4595 = vsel %vm1020, %v4526, 0
    %v4598 = vsel %vm1020, %v4527, 0
    %v4601 = vsel %vm1020, %v4528, 0
    %v4604 = vsel %vm1020, %v4529, 0
    %v4607 = vsel %vm1020, %v4530, 0
    %v4610 = vsel %vm1020, %v4531, 0
    %v4613 = vsel %vm1020, %v4532, 0
    %v4616 = vsel %vm1020, %v4533, 0
    %v4619 = vsel %vm1020, %v4534, 0
    %v4622 = vsel %vm1020, %v4535, 0
    %v4625 = vsel %vm1020, %v4536, 0
    %v4628 = vsel %vm1020, %v4537, 0
    %v4631 = vsel %vm1020, %v4538, 0
    %v4634 = vsel %vm1020, %v4539, 0
    %v4637 = vsel %vm1020, %v4540, 0
    %v4640 = vsel %vm1020, %v4541, 0
    %v4643 = vsel %vm1020, %v4542, 0
    %v4646 = vsel %vm1020, %v4543, 0
    %v4649 = vsel %vm1020, %v4544, 0
    %v4652 = vsel %vm1020, %v4545, 0
    %v4655 = vsel %vm1020, %v4546, 0
    %v4658 = vsel %vm1020, %v4547, 0
    %v4661 = vsel %vm1020, %v4548, 0
    %v4664 = vsel %vm1020, %v4549, 0
    %v4667 = vsel %vm1020, %v4550, 0
    %v4670 = vsel %vm1020, %v4551, 0
    %4672 = vmatprep.subr.bf16.mxu0 0
    %4673 = vmatpush1.bf16.msra.mxu0 %v4568
    %4674 = vmatprep.subr.bf16.mxu0 0
    %4675 = vmatpush1.bf16.msra.mxu0 %v4569
    %4676 = vmatprep.subr.bf16.mxu0 0
    %4677 = vmatpush1.bf16.msra.mxu0 %v4570
    %4678 = vmatprep.subr.bf16.mxu0 0
    %4679 = vmatpush1.bf16.msra.mxu0 %v4571
    %4680 = vmatprep.subr.bf16.mxu0 0
    %4681 = vmatpush1.bf16.msra.mxu0 0
    %4682 = vmatprep.subr.bf16.mxu0 0
    %4683 = vmatpush1.bf16.msra.mxu0 0
    %4684 = vmatprep.subr.bf16.mxu0 0
    %4685 = vmatpush1.bf16.msra.mxu0 0
    %4686 = vmatprep.subr.bf16.mxu0 0
    %4687 = vmatpush1.bf16.msra.mxu0 0
    %4688 = vmatprep.subr.bf16.mxu0 0
    %4689 = vmatpush1.bf16.msra.mxu0 0
    %4690 = vmatprep.subr.bf16.mxu0 0
    %4691 = vmatpush1.bf16.msra.mxu0 0
    %4692 = vmatprep.subr.bf16.mxu0 0
    %4693 = vmatpush1.bf16.msra.mxu0 0
    %4694 = vmatprep.subr.bf16.mxu0 0
    %4695 = vmatpush1.bf16.msra.mxu0 0
    %4696 = vmatprep.subr.bf16.mxu0 0
    %4697 = vmatpush1.bf16.msra.mxu0 0
    %4698 = vmatprep.subr.bf16.mxu0 0
    %4699 = vmatpush1.bf16.msra.mxu0 0
    %4700 = vmatprep.subr.bf16.mxu0 0
    %4701 = vmatpush1.bf16.msra.mxu0 0
    %4702 = vmatprep.subr.bf16.mxu0 0
    %4703 = vmatpush1.bf16.msra.mxu0 0
    %4704 = vmatprep.mubr.bf16.mxu0 0
    %4705 = vmatmul.mubr.bf16.gmra.mrb[0].mxu0 %v4577
    %v4706 = vpop.f32.mrb[0].mxu0
    %v4707 = vadd.f32 0.0, %v4706
    %v4708 = vpop.f32.mrb[0].mxu0
    %v4709 = vpop.f32.mrb[0].mxu0
    %v4710 = vadd.f32 0.0, %v4709
    %v4711 = vpop.f32.mrb[0].mxu0
    %4712 = vmatprep.mubr.bf16.mxu0 0
    %4713 = vmatmul.mubr.bf16.gmra.mrb[0].mxu0 %v4580
    %v4714 = vpop.f32.mrb[0].mxu0
    %v4715 = vadd.f32 0.0, %v4714
    %v4716 = vpop.f32.mrb[0].mxu0
    %v4717 = vpop.f32.mrb[0].mxu0
    %v4718 = vadd.f32 0.0, %v4717
    %v4719 = vpop.f32.mrb[0].mxu0
    %4720 = vmatprep.mubr.bf16.mxu0 0
    %4721 = vmatmul.mubr.bf16.gmra.mrb[0].mxu0 %v4583
    %v4722 = vpop.f32.mrb[0].mxu0
    %v4723 = vadd.f32 0.0, %v4722
    %v4724 = vpop.f32.mrb[0].mxu0
    %v4725 = vpop.f32.mrb[0].mxu0
    %v4726 = vadd.f32 0.0, %v4725
    %v4727 = vpop.f32.mrb[0].mxu0
    %4728 = vmatprep.mubr.bf16.mxu0 0
    %4729 = vmatmul.mubr.bf16.gmra.mrb[0].mxu0 %v4586
    %v4730 = vpop.f32.mrb[0].mxu0
    %v4731 = vadd.f32 0.0, %v4730
    %v4732 = vpop.f32.mrb[0].mxu0
    %v4733 = vpop.f32.mrb[0].mxu0
    %v4734 = vadd.f32 0.0, %v4733
    %v4735 = vpop.f32.mrb[0].mxu0
    %4736 = vmatprep.mubr.bf16.mxu0 0
    %4737 = vmatmul.mubr.bf16.gmra.mrb[0].mxu0 %v4589
    %v4738 = vpop.f32.mrb[0].mxu0
    %v4739 = vadd.f32 0.0, %v4738
    %v4740 = vpop.f32.mrb[0].mxu0
    %v4741 = vpop.f32.mrb[0].mxu0
    %v4742 = vadd.f32 0.0, %v4741
    %v4743 = vpop.f32.mrb[0].mxu0
    %4744 = vmatprep.mubr.bf16.mxu0 0
    %4745 = vmatmul.mubr.bf16.gmra.mrb[0].mxu0 %v4592
    %v4746 = vpop.f32.mrb[0].mxu0
    %v4747 = vadd.f32 0.0, %v4746
    %v4748 = vpop.f32.mrb[0].mxu0
    %v4749 = vpop.f32.mrb[0].mxu0
    %v4750 = vadd.f32 0.0, %v4749
    %v4751 = vpop.f32.mrb[0].mxu0
    %4752 = vmatprep.mubr.bf16.mxu0 0
    %4753 = vmatmul.mubr.bf16.gmra.mrb[0].mxu0 %v4595
    %v4754 = vpop.f32.mrb[0].mxu0
    %v4755 = vadd.f32 0.0, %v4754
    %v4756 = vpop.f32.mrb[0].mxu0
    %v4757 = vpop.f32.mrb[0].mxu0
    %v4758 = vadd.f32 0.0, %v4757
    %v4759 = vpop.f32.mrb[0].mxu0
    %4760 = vmatprep.mubr.bf16.mxu0 0
    %4761 = vmatmul.mubr.bf16.gmra.mrb[0].mxu0 %v4598
    %v4762 = vpop.f32.mrb[0].mxu0
    %v4763 = vadd.f32 0.0, %v4762
    %v4764 = vpop.f32.mrb[0].mxu0
    %v4765 = vpop.f32.mrb[0].mxu0
    %v4766 = vadd.f32 0.0, %v4765
    %v4767 = vpop.f32.mrb[0].mxu0
    %4768 = vmatprep.mubr.bf16.mxu0 0
    %4769 = vmatmul.mubr.bf16.gmra.mrb[0].mxu0 %v4601
    %v4770 = vpop.f32.mrb[0].mxu0
    %v4771 = vadd.f32 0.0, %v4770
    %v4772 = vpop.f32.mrb[0].mxu0
    %v4773 = vpop.f32.mrb[0].mxu0
    %v4774 = vadd.f32 0.0, %v4773
    %v4775 = vpop.f32.mrb[0].mxu0
    %4776 = vmatprep.mubr.bf16.mxu0 0
    %4777 = vmatmul.mubr.bf16.gmra.mrb[0].mxu0 %v4604
    %v4778 = vpop.f32.mrb[0].mxu0
    %v4779 = vadd.f32 0.0, %v4778
    %v4780 = vpop.f32.mrb[0].mxu0
    %v4781 = vpop.f32.mrb[0].mxu0
    %v4782 = vadd.f32 0.0, %v4781
    %v4783 = vpop.f32.mrb[0].mxu0
    %4784 = vmatprep.mubr.bf16.mxu0 0
    %4785 = vmatmul.mubr.bf16.gmra.mrb[0].mxu0 %v4607
    %v4786 = vpop.f32.mrb[0].mxu0
    %v4787 = vadd.f32 0.0, %v4786
    %v4788 = vpop.f32.mrb[0].mxu0
    %v4789 = vpop.f32.mrb[0].mxu0
    %v4790 = vadd.f32 0.0, %v4789
    %v4791 = vpop.f32.mrb[0].mxu0
    %4792 = vmatprep.mubr.bf16.mxu0 0
    %4793 = vmatmul.mubr.bf16.gmra.mrb[0].mxu0 %v4610
    %v4794 = vpop.f32.mrb[0].mxu0
    %v4795 = vadd.f32 0.0, %v4794
    %v4796 = vpop.f32.mrb[0].mxu0
    %v4797 = vpop.f32.mrb[0].mxu0
    %v4798 = vadd.f32 0.0, %v4797
    %v4799 = vpop.f32.mrb[0].mxu0
    %4800 = vmatprep.mubr.bf16.mxu0 0
    %4801 = vmatmul.mubr.bf16.gmra.mrb[0].mxu0 %v4613
    %v4802 = vpop.f32.mrb[0].mxu0
    %v4803 = vadd.f32 0.0, %v4802
    %v4804 = vpop.f32.mrb[0].mxu0
    %v4805 = vpop.f32.mrb[0].mxu0
    %v4806 = vadd.f32 0.0, %v4805
    %v4807 = vpop.f32.mrb[0].mxu0
    %4808 = vmatprep.mubr.bf16.mxu0 0
    %4809 = vmatmul.mubr.bf16.gmra.mrb[0].mxu0 %v4616
    %v4810 = vpop.f32.mrb[0].mxu0
    %v4811 = vadd.f32 0.0, %v4810
    %v4812 = vpop.f32.mrb[0].mxu0
    %v4813 = vpop.f32.mrb[0].mxu0
    %v4814 = vadd.f32 0.0, %v4813
    %v4815 = vpop.f32.mrb[0].mxu0
    %4816 = vmatprep.mubr.bf16.mxu0 0
    %4817 = vmatmul.mubr.bf16.gmra.mrb[0].mxu0 %v4619
    %v4818 = vpop.f32.mrb[0].mxu0
    %v4819 = vadd.f32 0.0, %v4818
    %v4820 = vpop.f32.mrb[0].mxu0
    %v4821 = vpop.f32.mrb[0].mxu0
    %v4822 = vadd.f32 0.0, %v4821
    %v4823 = vpop.f32.mrb[0].mxu0
    %4824 = vmatprep.mubr.bf16.mxu0 0
    %4825 = vmatmul.mubr.bf16.gmra.mrb[0].mxu0 %v4622
    %v4826 = vpop.f32.mrb[0].mxu0
    %v4827 = vadd.f32 0.0, %v4826
    %v4828 = vpop.f32.mrb[0].mxu0
    %v4829 = vpop.f32.mrb[0].mxu0
    %v4830 = vadd.f32 0.0, %v4829
    %v4831 = vpop.f32.mrb[0].mxu0
    %4832 = vmatprep.mubr.bf16.mxu0 0
    %4833 = vmatmul.mubr.bf16.gmra.mrb[0].mxu0 %v4625
    %v4834 = vpop.f32.mrb[0].mxu0
    %v4835 = vadd.f32 0.0, %v4834
    %v4836 = vpop.f32.mrb[0].mxu0
    %v4837 = vpop.f32.mrb[0].mxu0
    %v4838 = vadd.f32 0.0, %v4837
    %v4839 = vpop.f32.mrb[0].mxu0
    %4840 = vmatprep.mubr.bf16.mxu0 0
    %4841 = vmatmul.mubr.bf16.gmra.mrb[0].mxu0 %v4628
    %v4842 = vpop.f32.mrb[0].mxu0
    %v4843 = vadd.f32 0.0, %v4842
    %v4844 = vpop.f32.mrb[0].mxu0
    %v4845 = vpop.f32.mrb[0].mxu0
    %v4846 = vadd.f32 0.0, %v4845
    %v4847 = vpop.f32.mrb[0].mxu0
    %4848 = vmatprep.mubr.bf16.mxu0 0
    %4849 = vmatmul.mubr.bf16.gmra.mrb[0].mxu0 %v4631
    %v4850 = vpop.f32.mrb[0].mxu0
    %v4851 = vadd.f32 0.0, %v4850
    %v4852 = vpop.f32.mrb[0].mxu0
    %v4853 = vpop.f32.mrb[0].mxu0
    %v4854 = vadd.f32 0.0, %v4853
    %v4855 = vpop.f32.mrb[0].mxu0
    %4856 = vmatprep.mubr.bf16.mxu0 0
    %4857 = vmatmul.mubr.bf16.gmra.mrb[0].mxu0 %v4634
    %v4858 = vpop.f32.mrb[0].mxu0
    %v4859 = vadd.f32 0.0, %v4858
    %v4860 = vpop.f32.mrb[0].mxu0
    %v4861 = vpop.f32.mrb[0].mxu0
    %v4862 = vadd.f32 0.0, %v4861
    %v4863 = vpop.f32.mrb[0].mxu0
    %4864 = vmatprep.mubr.bf16.mxu0 0
    %4865 = vmatmul.mubr.bf16.gmra.mrb[0].mxu0 %v4637
    %v4866 = vpop.f32.mrb[0].mxu0
    %v4867 = vadd.f32 0.0, %v4866
    %v4868 = vpop.f32.mrb[0].mxu0
    %v4869 = vpop.f32.mrb[0].mxu0
    %v4870 = vadd.f32 0.0, %v4869
    %v4871 = vpop.f32.mrb[0].mxu0
    %4872 = vmatprep.mubr.bf16.mxu0 0
    %4873 = vmatmul.mubr.bf16.gmra.mrb[0].mxu0 %v4640
    %v4874 = vpop.f32.mrb[0].mxu0
    %v4875 = vadd.f32 0.0, %v4874
    %v4876 = vpop.f32.mrb[0].mxu0
    %v4877 = vpop.f32.mrb[0].mxu0
    %v4878 = vadd.f32 0.0, %v4877
    %v4879 = vpop.f32.mrb[0].mxu0
    %4880 = vmatprep.mubr.bf16.mxu0 0
    %4881 = vmatmul.mubr.bf16.gmra.mrb[0].mxu0 %v4643
    %v4882 = vpop.f32.mrb[0].mxu0
    %v4883 = vadd.f32 0.0, %v4882
    %v4884 = vpop.f32.mrb[0].mxu0
    %v4885 = vpop.f32.mrb[0].mxu0
    %v4886 = vadd.f32 0.0, %v4885
    %v4887 = vpop.f32.mrb[0].mxu0
    %4888 = vmatprep.mubr.bf16.mxu0 0
    %4889 = vmatmul.mubr.bf16.gmra.mrb[0].mxu0 %v4646
    %v4890 = vpop.f32.mrb[0].mxu0
    %v4891 = vadd.f32 0.0, %v4890
    %v4892 = vpop.f32.mrb[0].mxu0
    %v4893 = vpop.f32.mrb[0].mxu0
    %v4894 = vadd.f32 0.0, %v4893
    %v4895 = vpop.f32.mrb[0].mxu0
    %4896 = vmatprep.mubr.bf16.mxu0 0
    %4897 = vmatmul.mubr.bf16.gmra.mrb[0].mxu0 %v4649
    %v4898 = vpop.f32.mrb[0].mxu0
    %v4899 = vadd.f32 0.0, %v4898
    %v4900 = vpop.f32.mrb[0].mxu0
    %v4901 = vpop.f32.mrb[0].mxu0
    %v4902 = vadd.f32 0.0, %v4901
    %v4903 = vpop.f32.mrb[0].mxu0
    %4904 = vmatprep.mubr.bf16.mxu0 0
    %4905 = vmatmul.mubr.bf16.gmra.mrb[0].mxu0 %v4652
    %v4906 = vpop.f32.mrb[0].mxu0
    %v4907 = vadd.f32 0.0, %v4906
    %v4908 = vpop.f32.mrb[0].mxu0
    %v4909 = vpop.f32.mrb[0].mxu0
    %v4910 = vadd.f32 0.0, %v4909
    %v4911 = vpop.f32.mrb[0].mxu0
    %4912 = vmatprep.mubr.bf16.mxu0 0
    %4913 = vmatmul.mubr.bf16.gmra.mrb[0].mxu0 %v4655
    %v4914 = vpop.f32.mrb[0].mxu0
    %v4915 = vadd.f32 0.0, %v4914
    %v4916 = vpop.f32.mrb[0].mxu0
    %v4917 = vpop.f32.mrb[0].mxu0
    %v4918 = vadd.f32 0.0, %v4917
    %v4919 = vpop.f32.mrb[0].mxu0
    %4920 = vmatprep.mubr.bf16.mxu0 0
    %4921 = vmatmul.mubr.bf16.gmra.mrb[0].mxu0 %v4658
    %v4922 = vpop.f32.mrb[0].mxu0
    %v4923 = vadd.f32 0.0, %v4922
    %v4924 = vpop.f32.mrb[0].mxu0
    %v4925 = vpop.f32.mrb[0].mxu0
    %v4926 = vadd.f32 0.0, %v4925
    %v4927 = vpop.f32.mrb[0].mxu0
    %4928 = vmatprep.mubr.bf16.mxu0 0
    %4929 = vmatmul.mubr.bf16.gmra.mrb[0].mxu0 %v4661
    %v4930 = vpop.f32.mrb[0].mxu0
    %v4931 = vadd.f32 0.0, %v4930
    %v4932 = vpop.f32.mrb[0].mxu0
    %v4933 = vpop.f32.mrb[0].mxu0
    %v4934 = vadd.f32 0.0, %v4933
    %v4935 = vpop.f32.mrb[0].mxu0
    %4936 = vmatprep.mubr.bf16.mxu0 0
    %4937 = vmatmul.mubr.bf16.gmra.mrb[0].mxu0 %v4664
    %v4938 = vpop.f32.mrb[0].mxu0
    %v4939 = vadd.f32 0.0, %v4938
    %v4940 = vpop.f32.mrb[0].mxu0
    %v4941 = vpop.f32.mrb[0].mxu0
    %v4942 = vadd.f32 0.0, %v4941
    %v4943 = vpop.f32.mrb[0].mxu0
    %4944 = vmatprep.mubr.bf16.mxu0 0
    %4945 = vmatmul.mubr.bf16.gmra.mrb[0].mxu0 %v4667
    %v4946 = vpop.f32.mrb[0].mxu0
    %v4947 = vadd.f32 0.0, %v4946
    %v4948 = vpop.f32.mrb[0].mxu0
    %v4949 = vpop.f32.mrb[0].mxu0
    %v4950 = vadd.f32 0.0, %v4949
    %v4951 = vpop.f32.mrb[0].mxu0
    %4952 = vmatprep.mubr.bf16.mxu0 0
    %4953 = vmatmul.mubr.bf16.gmra.mrb[0].mxu0 %v4670
    %v4954 = vpop.f32.mrb[0].mxu0
    %v4955 = vadd.f32 0.0, %v4954
    %v4956 = vpop.f32.mrb[0].mxu0
    %v4957 = vpop.f32.mrb[0].mxu0
    %v4958 = vadd.f32 0.0, %v4957
    %v4959 = vpop.f32.mrb[0].mxu0
    %4960 = vdwg.mxu0
    %v4961 = vadd.f32 %v3519, %v4707
    %v4962 = vadd.f32 %v3520, %v4710
    %v4963 = vadd.f32 %v3521, %v4715
    %v4964 = vadd.f32 %v3522, %v4718
    %v4965 = vadd.f32 %v3523, %v4723
    %v4966 = vadd.f32 %v3524, %v4726
    %v4967 = vadd.f32 %v3525, %v4731
    %v4968 = vadd.f32 %v3526, %v4734
    %v4969 = vadd.f32 %v3527, %v4739
    %v4970 = vadd.f32 %v3528, %v4742
    %v4971 = vadd.f32 %v3529, %v4747
    %v4972 = vadd.f32 %v3530, %v4750
    %v4973 = vadd.f32 %v3531, %v4755
    %v4974 = vadd.f32 %v3532, %v4758
    %v4975 = vadd.f32 %v3533, %v4763
    %v4976 = vadd.f32 %v3534, %v4766
    %v4977 = vadd.f32 %v3535, %v4771
    %v4978 = vadd.f32 %v3536, %v4774
    %v4979 = vadd.f32 %v3537, %v4779
    %v4980 = vadd.f32 %v3538, %v4782
    %v4981 = vadd.f32 %v3539, %v4787
    %v4982 = vadd.f32 %v3540, %v4790
    %v4983 = vadd.f32 %v3541, %v4795
    %v4984 = vadd.f32 %v3542, %v4798
    %v4985 = vadd.f32 %v3543, %v4803
    %v4986 = vadd.f32 %v3544, %v4806
    %v4987 = vadd.f32 %v3545, %v4811
    %v4988 = vadd.f32 %v3546, %v4814
    %v4989 = vadd.f32 %v3547, %v4819
    %v4990 = vadd.f32 %v3548, %v4822
    %v4991 = vadd.f32 %v3549, %v4827
    %v4992 = vadd.f32 %v3550, %v4830
    %v4993 = vadd.f32 %v3551, %v4835
    %v4994 = vadd.f32 %v3552, %v4838
    %v4995 = vadd.f32 %v3553, %v4843
    %v4996 = vadd.f32 %v3554, %v4846
    %v4997 = vadd.f32 %v3555, %v4851
    %v4998 = vadd.f32 %v3556, %v4854
    %v4999 = vadd.f32 %v3557, %v4859
    %v5000 = vadd.f32 %v3558, %v4862
    %v5001 = vadd.f32 %v3559, %v4867
    %v5002 = vadd.f32 %v3560, %v4870
    %v5003 = vadd.f32 %v3561, %v4875
    %v5004 = vadd.f32 %v3562, %v4878
    %v5005 = vadd.f32 %v3563, %v4883
    %v5006 = vadd.f32 %v3564, %v4886
    %v5007 = vadd.f32 %v3565, %v4891
    %v5008 = vadd.f32 %v3566, %v4894
    %v5009 = vadd.f32 %v3567, %v4899
    %v5010 = vadd.f32 %v3568, %v4902
    %v5011 = vadd.f32 %v3569, %v4907
    %v5012 = vadd.f32 %v3570, %v4910
    %v5013 = vadd.f32 %v3571, %v4915
    %v5014 = vadd.f32 %v3572, %v4918
    %v5015 = vadd.f32 %v3573, %v4923
    %v5016 = vadd.f32 %v3574, %v4926
    %v5017 = vadd.f32 %v3575, %v4931
    %v5018 = vadd.f32 %v3576, %v4934
    %v5019 = vadd.f32 %v3577, %v4939
    %v5020 = vadd.f32 %v3578, %v4942
    %v5021 = vadd.f32 %v3579, %v4947
    %v5022 = vadd.f32 %v3580, %v4950
    %v5023 = vadd.f32 %v3581, %v4955
    %v5024 = vadd.f32 %v3582, %v4958
    %v5025 = vld [vmem:[%s2876] sm:$0xe]
    %v5026 = vld [vmem:[%s2876 + $0xc] sm:$0xe]
    %v5027 = vld [vmem:[%s2876 + $0x18] sm:$0xe]
    %v5028 = vld [vmem:[%s2876 + $0x24] sm:$0xe]
    %v5029 = vld [vmem:[%s2876 + $0x30] sm:$0xe]
    %v5030 = vld [vmem:[%s2876 + $0x3c] sm:$0xe]
    %v5031 = vld [vmem:[%s2876 + $0x48] sm:$0xe]
    %v5032 = vld [vmem:[%s2876 + $0x54] sm:$0xe]
    %v5033 = vld [vmem:[%s2876 + $0x60] sm:$0xe]
    %v5034 = vld [vmem:[%s2876 + $0x6c] sm:$0xe]
    %v5035 = vld [vmem:[%s2876 + $0x78] sm:$0xe]
    %v5036 = vld [vmem:[%s2876 + $0x84] sm:$0xe]
    %v5037 = vld [vmem:[%s2876 + $0x90] sm:$0xe]
    %v5038 = vld [vmem:[%s2876 + $0x9c] sm:$0xe]
    %v5039 = vld [vmem:[%s2876 + $0xa8] sm:$0xe]
    %v5040 = vld [vmem:[%s2876 + $0xb4] sm:$0xe]
    %v5041 = vld [vmem:[%s2876 + $0xd8] sm:$0xe]
    %v5042 = vld [vmem:[%s2876 + $0xe4] sm:$0xe]
    %v5043 = vld [vmem:[%s2876 + $0xf0] sm:$0xe]
    %v5044 = vld [vmem:[%s2876 + $0xfc] sm:$0xe]
    %v5045 = vld [vmem:[%s2876 + $0x108] sm:$0xe]
    %v5046 = vld [vmem:[%s2876 + $0x114] sm:$0xe]
    %v5047 = vld [vmem:[%s2876 + $0x120] sm:$0xe]
    %v5048 = vld [vmem:[%s2876 + $0x12c] sm:$0xe]
    %v5049 = vld [vmem:[%s2876 + $0x138] sm:$0xe]
    %v5050 = vld [vmem:[%s2876 + $0x144] sm:$0xe]
    %v5051 = vld [vmem:[%s2876 + $0x150] sm:$0xe]
    %v5052 = vld [vmem:[%s2876 + $0x15c] sm:$0xe]
    %v5053 = vld [vmem:[%s2876 + $0x168] sm:$0xe]
    %v5054 = vld [vmem:[%s2876 + $0x174] sm:$0xe]
    %v5055 = vld [vmem:[%s2876 + $0x180] sm:$0xe]
    %v5056 = vld [vmem:[%s2876 + $0x18c] sm:$0xe]
    %v5153 = vrot.slane %v5025, 5
    %v5154 = vrot.slane %v5153, 4
    %v5155 = vrot.slane %v3584, 5
    %v5156 = vsel %vm2073, %v5154, %v5155
    %v5157 = vrot.slane %v5155, 4
    %v5158 = vrot.slane %v3585, 5
    %v5159 = vsel %vm2073, %v5157, %v5158
    %v5160 = vrot.slane %v5026, 5
    %v5161 = vrot.slane %v5160, 4
    %v5162 = vrot.slane %v3587, 5
    %v5163 = vsel %vm2073, %v5161, %v5162
    %v5164 = vrot.slane %v5162, 4
    %v5165 = vrot.slane %v3588, 5
    %v5166 = vsel %vm2073, %v5164, %v5165
    %v5167 = vrot.slane %v5027, 5
    %v5168 = vrot.slane %v5167, 4
    %v5169 = vrot.slane %v3590, 5
    %v5170 = vsel %vm2073, %v5168, %v5169
    %v5171 = vrot.slane %v5169, 4
    %v5172 = vrot.slane %v3591, 5
    %v5173 = vsel %vm2073, %v5171, %v5172
    %v5174 = vrot.slane %v5028, 5
    %v5175 = vrot.slane %v5174, 4
    %v5176 = vrot.slane %v3593, 5
    %v5177 = vsel %vm2073, %v5175, %v5176
    %v5178 = vrot.slane %v5176, 4
    %v5179 = vrot.slane %v3594, 5
    %v5180 = vsel %vm2073, %v5178, %v5179
    %v5181 = vrot.slane %v5029, 5
    %v5182 = vrot.slane %v5181, 4
    %v5183 = vrot.slane %v3596, 5
    %v5184 = vsel %vm2073, %v5182, %v5183
    %v5185 = vrot.slane %v5183, 4
    %v5186 = vrot.slane %v3597, 5
    %v5187 = vsel %vm2073, %v5185, %v5186
    %v5188 = vrot.slane %v5030, 5
    %v5189 = vrot.slane %v5188, 4
    %v5190 = vrot.slane %v3599, 5
    %v5191 = vsel %vm2073, %v5189, %v5190
    %v5192 = vrot.slane %v5190, 4
    %v5193 = vrot.slane %v3600, 5
    %v5194 = vsel %vm2073, %v5192, %v5193
    %v5195 = vrot.slane %v5031, 5
    %v5196 = vrot.slane %v5195, 4
    %v5197 = vrot.slane %v3602, 5
    %v5198 = vsel %vm2073, %v5196, %v5197
    %v5199 = vrot.slane %v5197, 4
    %v5200 = vrot.slane %v3603, 5
    %v5201 = vsel %vm2073, %v5199, %v5200
    %v5202 = vrot.slane %v5032, 5
    %v5203 = vrot.slane %v5202, 4
    %v5204 = vrot.slane %v3605, 5
    %v5205 = vsel %vm2073, %v5203, %v5204
    %v5206 = vrot.slane %v5204, 4
    %v5207 = vrot.slane %v3606, 5
    %v5208 = vsel %vm2073, %v5206, %v5207
    %v5209 = vrot.slane %v5033, 5
    %v5210 = vrot.slane %v5209, 4
    %v5211 = vrot.slane %v3608, 5
    %v5212 = vsel %vm2073, %v5210, %v5211
    %v5213 = vrot.slane %v5211, 4
    %v5214 = vrot.slane %v3609, 5
    %v5215 = vsel %vm2073, %v5213, %v5214
    %v5216 = vrot.slane %v5034, 5
    %v5217 = vrot.slane %v5216, 4
    %v5218 = vrot.slane %v3611, 5
    %v5219 = vsel %vm2073, %v5217, %v5218
    %v5220 = vrot.slane %v5218, 4
    %v5221 = vrot.slane %v3612, 5
    %v5222 = vsel %vm2073, %v5220, %v5221
    %v5223 = vrot.slane %v5035, 5
    %v5224 = vrot.slane %v5223, 4
    %v5225 = vrot.slane %v3614, 5
    %v5226 = vsel %vm2073, %v5224, %v5225
    %v5227 = vrot.slane %v5225, 4
    %v5228 = vrot.slane %v3615, 5
    %v5229 = vsel %vm2073, %v5227, %v5228
    %v5230 = vrot.slane %v5036, 5
    %v5231 = vrot.slane %v5230, 4
    %v5232 = vrot.slane %v3617, 5
    %v5233 = vsel %vm2073, %v5231, %v5232
    %v5234 = vrot.slane %v5232, 4
    %v5235 = vrot.slane %v3618, 5
    %v5236 = vsel %vm2073, %v5234, %v5235
    %v5237 = vrot.slane %v5037, 5
    %v5238 = vrot.slane %v5237, 4
    %v5239 = vrot.slane %v3620, 5
    %v5240 = vsel %vm2073, %v5238, %v5239
    %v5241 = vrot.slane %v5239, 4
    %v5242 = vrot.slane %v3621, 5
    %v5243 = vsel %vm2073, %v5241, %v5242
    %v5244 = vrot.slane %v5038, 5
    %v5245 = vrot.slane %v5244, 4
    %v5246 = vrot.slane %v3623, 5
    %v5247 = vsel %vm2073, %v5245, %v5246
    %v5248 = vrot.slane %v5246, 4
    %v5249 = vrot.slane %v3624, 5
    %v5250 = vsel %vm2073, %v5248, %v5249
    %v5251 = vrot.slane %v5039, 5
    %v5252 = vrot.slane %v5251, 4
    %v5253 = vrot.slane %v3626, 5
    %v5254 = vsel %vm2073, %v5252, %v5253
    %v5255 = vrot.slane %v5253, 4
    %v5256 = vrot.slane %v3627, 5
    %v5257 = vsel %vm2073, %v5255, %v5256
    %v5258 = vrot.slane %v5040, 5
    %v5259 = vrot.slane %v5258, 4
    %v5260 = vrot.slane %v3629, 5
    %v5261 = vsel %vm2073, %v5259, %v5260
    %v5262 = vrot.slane %v5260, 4
    %v5263 = vrot.slane %v3630, 5
    %v5264 = vsel %vm2073, %v5262, %v5263
    %v5265 = vrot.slane %v5041, 5
    %v5266 = vrot.slane %v5265, 4
    %v5267 = vrot.slane %v3632, 5
    %v5268 = vsel %vm2073, %v5266, %v5267
    %v5269 = vrot.slane %v5267, 4
    %v5270 = vrot.slane %v3633, 5
    %v5271 = vsel %vm2073, %v5269, %v5270
    %v5272 = vrot.slane %v5042, 5
    %v5273 = vrot.slane %v5272, 4
    %v5274 = vrot.slane %v3635, 5
    %v5275 = vsel %vm2073, %v5273, %v5274
    %v5276 = vrot.slane %v5274, 4
    %v5277 = vrot.slane %v3636, 5
    %v5278 = vsel %vm2073, %v5276, %v5277
    %v5279 = vrot.slane %v5043, 5
    %v5280 = vrot.slane %v5279, 4
    %v5281 = vrot.slane %v3638, 5
    %v5282 = vsel %vm2073, %v5280, %v5281
    %v5283 = vrot.slane %v5281, 4
    %v5284 = vrot.slane %v3639, 5
    %v5285 = vsel %vm2073, %v5283, %v5284
    %v5286 = vrot.slane %v5044, 5
    %v5287 = vrot.slane %v5286, 4
    %v5288 = vrot.slane %v3641, 5
    %v5289 = vsel %vm2073, %v5287, %v5288
    %v5290 = vrot.slane %v5288, 4
    %v5291 = vrot.slane %v3642, 5
    %v5292 = vsel %vm2073, %v5290, %v5291
    %v5293 = vrot.slane %v5045, 5
    %v5294 = vrot.slane %v5293, 4
    %v5295 = vrot.slane %v3644, 5
    %v5296 = vsel %vm2073, %v5294, %v5295
    %v5297 = vrot.slane %v5295, 4
    %v5298 = vrot.slane %v3645, 5
    %v5299 = vsel %vm2073, %v5297, %v5298
    %v5300 = vrot.slane %v5046, 5
    %v5301 = vrot.slane %v5300, 4
    %v5302 = vrot.slane %v3647, 5
    %v5303 = vsel %vm2073, %v5301, %v5302
    %v5304 = vrot.slane %v5302, 4
    %v5305 = vrot.slane %v3648, 5
    %v5306 = vsel %vm2073, %v5304, %v5305
    %v5307 = vrot.slane %v5047, 5
    %v5308 = vrot.slane %v5307, 4
    %v5309 = vrot.slane %v3650, 5
    %v5310 = vsel %vm2073, %v5308, %v5309
    %v5311 = vrot.slane %v5309, 4
    %v5312 = vrot.slane %v3651, 5
    %v5313 = vsel %vm2073, %v5311, %v5312
    %v5314 = vrot.slane %v5048, 5
    %v5315 = vrot.slane %v5314, 4
    %v5316 = vrot.slane %v3653, 5
    %v5317 = vsel %vm2073, %v5315, %v5316
    %v5318 = vrot.slane %v5316, 4
    %v5319 = vrot.slane %v3654, 5
    %v5320 = vsel %vm2073, %v5318, %v5319
    %v5321 = vrot.slane %v5049, 5
    %v5322 = vrot.slane %v5321, 4
    %v5323 = vrot.slane %v3656, 5
    %v5324 = vsel %vm2073, %v5322, %v5323
    %v5325 = vrot.slane %v5323, 4
    %v5326 = vrot.slane %v3657, 5
    %v5327 = vsel %vm2073, %v5325, %v5326
    %v5328 = vrot.slane %v5050, 5
    %v5329 = vrot.slane %v5328, 4
    %v5330 = vrot.slane %v3659, 5
    %v5331 = vsel %vm2073, %v5329, %v5330
    %v5332 = vrot.slane %v5330, 4
    %v5333 = vrot.slane %v3660, 5
    %v5334 = vsel %vm2073, %v5332, %v5333
    %v5335 = vrot.slane %v5051, 5
    %v5336 = vrot.slane %v5335, 4
    %v5337 = vrot.slane %v3662, 5
    %v5338 = vsel %vm2073, %v5336, %v5337
    %v5339 = vrot.slane %v5337, 4
    %v5340 = vrot.slane %v3663, 5
    %v5341 = vsel %vm2073, %v5339, %v5340
    %v5342 = vrot.slane %v5052, 5
    %v5343 = vrot.slane %v5342, 4
    %v5344 = vrot.slane %v3665, 5
    %v5345 = vsel %vm2073, %v5343, %v5344
    %v5346 = vrot.slane %v5344, 4
    %v5347 = vrot.slane %v3666, 5
    %v5348 = vsel %vm2073, %v5346, %v5347
    %v5349 = vrot.slane %v5053, 5
    %v5350 = vrot.slane %v5349, 4
    %v5351 = vrot.slane %v3668, 5
    %v5352 = vsel %vm2073, %v5350, %v5351
    %v5353 = vrot.slane %v5351, 4
    %v5354 = vrot.slane %v3669, 5
    %v5355 = vsel %vm2073, %v5353, %v5354
    %v5356 = vrot.slane %v5054, 5
    %v5357 = vrot.slane %v5356, 4
    %v5358 = vrot.slane %v3671, 5
    %v5359 = vsel %vm2073, %v5357, %v5358
    %v5360 = vrot.slane %v5358, 4
    %v5361 = vrot.slane %v3672, 5
    %v5362 = vsel %vm2073, %v5360, %v5361
    %v5363 = vrot.slane %v5055, 5
    %v5364 = vrot.slane %v5363, 4
    %v5365 = vrot.slane %v3674, 5
    %v5366 = vsel %vm2073, %v5364, %v5365
    %v5367 = vrot.slane %v5365, 4
    %v5368 = vrot.slane %v3675, 5
    %v5369 = vsel %vm2073, %v5367, %v5368
    %v5370 = vrot.slane %v5056, 5
    %v5371 = vrot.slane %v5370, 4
    %v5372 = vrot.slane %v3677, 5
    %v5373 = vsel %vm2073, %v5371, %v5372
    %v5374 = vrot.slane %v5372, 4
    %v5375 = vrot.slane %v3678, 5
    %v5376 = vsel %vm2073, %v5374, %v5375
    %s5377 = scalar_lea.vmem %s1, 160
    %v5378 = vld [vmem:[%s5377] sm:$0xf]
    %v5379 = vld [vmem:[%s5377 + $0x4] sm:$0xf]
    %v5380 = vld [vmem:[%s5377 + $0x8] sm:$0xf]
    %v5381 = vld [vmem:[%s5377 + $0xc] sm:$0xf]
    %v5382 = vld [vmem:[%s5377 + $0x10] sm:$0xf]
    %v5383 = vld [vmem:[%s5377 + $0x14] sm:$0xf]
    %v5384 = vld [vmem:[%s5377 + $0x18] sm:$0xf]
    %v5385 = vld [vmem:[%s5377 + $0x1c] sm:$0xf]
    %v5386 = vunpack.c.l.b16 %v5156
    %v5387 = vunpack.c.l.b16 %v5159
    %v5388 = vunpack.c.l.b16 %v5163
    %v5389 = vunpack.c.l.b16 %v5166
    %v5390 = vunpack.c.l.b16 %v5170
    %v5391 = vunpack.c.l.b16 %v5173
    %v5392 = vunpack.c.l.b16 %v5177
    %v5393 = vunpack.c.l.b16 %v5180
    %v5394 = vunpack.c.l.b16 %v5184
    %v5395 = vunpack.c.l.b16 %v5187
    %v5396 = vunpack.c.l.b16 %v5191
    %v5397 = vunpack.c.l.b16 %v5194
    %v5398 = vunpack.c.l.b16 %v5198
    %v5399 = vunpack.c.l.b16 %v5201
    %v5400 = vunpack.c.l.b16 %v5205
    %v5401 = vunpack.c.l.b16 %v5208
    %v5402 = vunpack.c.l.b16 %v5212
    %v5403 = vunpack.c.l.b16 %v5215
    %v5404 = vunpack.c.l.b16 %v5219
    %v5405 = vunpack.c.l.b16 %v5222
    %v5406 = vunpack.c.l.b16 %v5226
    %v5407 = vunpack.c.l.b16 %v5229
    %v5408 = vunpack.c.l.b16 %v5233
    %v5409 = vunpack.c.l.b16 %v5236
    %v5410 = vunpack.c.l.b16 %v5240
    %v5411 = vunpack.c.l.b16 %v5243
    %v5412 = vunpack.c.l.b16 %v5247
    %v5413 = vunpack.c.l.b16 %v5250
    %v5414 = vunpack.c.l.b16 %v5254
    %v5415 = vunpack.c.l.b16 %v5257
    %v5416 = vunpack.c.l.b16 %v5261
    %v5417 = vunpack.c.l.b16 %v5264
    %v5418 = vunpack.c.l.b16 %v5268
    %v5419 = vunpack.c.l.b16 %v5271
    %v5420 = vunpack.c.l.b16 %v5275
    %v5421 = vunpack.c.l.b16 %v5278
    %v5422 = vunpack.c.l.b16 %v5282
    %v5423 = vunpack.c.l.b16 %v5285
    %v5424 = vunpack.c.l.b16 %v5289
    %v5425 = vunpack.c.l.b16 %v5292
    %v5426 = vunpack.c.l.b16 %v5296
    %v5427 = vunpack.c.l.b16 %v5299
    %v5428 = vunpack.c.l.b16 %v5303
    %v5429 = vunpack.c.l.b16 %v5306
    %v5430 = vunpack.c.l.b16 %v5310
    %v5431 = vunpack.c.l.b16 %v5313
    %v5432 = vunpack.c.l.b16 %v5317
    %v5433 = vunpack.c.l.b16 %v5320
    %v5434 = vunpack.c.l.b16 %v5324
    %v5435 = vunpack.c.l.b16 %v5327
    %v5436 = vunpack.c.l.b16 %v5331
    %v5437 = vunpack.c.l.b16 %v5334
    %v5438 = vunpack.c.l.b16 %v5338
    %v5439 = vunpack.c.l.b16 %v5341
    %v5440 = vunpack.c.l.b16 %v5345
    %v5441 = vunpack.c.l.b16 %v5348
    %v5442 = vunpack.c.l.b16 %v5352
    %v5443 = vunpack.c.l.b16 %v5355
    %v5444 = vunpack.c.l.b16 %v5359
    %v5445 = vunpack.c.l.b16 %v5362
    %v5446 = vunpack.c.l.b16 %v5366
    %v5447 = vunpack.c.l.b16 %v5369
    %v5448 = vunpack.c.l.b16 %v5373
    %v5449 = vunpack.c.l.b16 %v5376
    %v5450 = vpack.c.b16 %v5387, %v5386
    %v5451 = vpack.c.b16 %v5389, %v5388
    %v5452 = vpack.c.b16 %v5391, %v5390
    %v5453 = vpack.c.b16 %v5393, %v5392
    %v5454 = vpack.c.b16 %v5395, %v5394
    %v5455 = vpack.c.b16 %v5397, %v5396
    %v5456 = vpack.c.b16 %v5399, %v5398
    %v5457 = vpack.c.b16 %v5401, %v5400
    %v5458 = vpack.c.b16 %v5403, %v5402
    %v5459 = vpack.c.b16 %v5405, %v5404
    %v5460 = vpack.c.b16 %v5407, %v5406
    %v5461 = vpack.c.b16 %v5409, %v5408
    %v5462 = vpack.c.b16 %v5411, %v5410
    %v5463 = vpack.c.b16 %v5413, %v5412
    %v5464 = vpack.c.b16 %v5415, %v5414
    %v5465 = vpack.c.b16 %v5417, %v5416
    %v5466 = vpack.c.b16 %v5419, %v5418
    %v5467 = vpack.c.b16 %v5421, %v5420
    %v5468 = vpack.c.b16 %v5423, %v5422
    %v5469 = vpack.c.b16 %v5425, %v5424
    %v5470 = vpack.c.b16 %v5427, %v5426
    %v5471 = vpack.c.b16 %v5429, %v5428
    %v5472 = vpack.c.b16 %v5431, %v5430
    %v5473 = vpack.c.b16 %v5433, %v5432
    %v5474 = vpack.c.b16 %v5435, %v5434
    %v5475 = vpack.c.b16 %v5437, %v5436
    %v5476 = vpack.c.b16 %v5439, %v5438
    %v5477 = vpack.c.b16 %v5441, %v5440
    %v5478 = vpack.c.b16 %v5443, %v5442
    %v5479 = vpack.c.b16 %v5445, %v5444
    %v5480 = vpack.c.b16 %v5447, %v5446
    %v5481 = vpack.c.b16 %v5449, %v5448
    %v5490 = vunpack.c.l.b16 %v5378
    %v5491 = vunpack.c.l.b16 %v5379
    %v5492 = vunpack.c.l.b16 %v5380
    %v5493 = vunpack.c.l.b16 %v5381
    %v5494 = vunpack.c.l.b16 %v5382
    %v5495 = vunpack.c.l.b16 %v5383
    %v5496 = vunpack.c.l.b16 %v5384
    %v5497 = vunpack.c.l.b16 %v5385
    %v5498 = vpack.c.b16 %v5491, %v5490
    %v5499 = vpack.c.b16 %v5493, %v5492
    %v5500 = vpack.c.b16 %v5495, %v5494
    %v5501 = vpack.c.b16 %v5497, %v5496
    %v5507 = vsel %vm1020, %v5450, 0
    %v5510 = vsel %vm1020, %v5451, 0
    %v5513 = vsel %vm1020, %v5452, 0
    %v5516 = vsel %vm1020, %v5453, 0
    %v5519 = vsel %vm1020, %v5454, 0
    %v5522 = vsel %vm1020, %v5455, 0
    %v5525 = vsel %vm1020, %v5456, 0
    %v5528 = vsel %vm1020, %v5457, 0
    %v5531 = vsel %vm1020, %v5458, 0
    %v5534 = vsel %vm1020, %v5459, 0
    %v5537 = vsel %vm1020, %v5460, 0
    %v5540 = vsel %vm1020, %v5461, 0
    %v5543 = vsel %vm1020, %v5462, 0
    %v5546 = vsel %vm1020, %v5463, 0
    %v5549 = vsel %vm1020, %v5464, 0
    %v5552 = vsel %vm1020, %v5465, 0
    %v5555 = vsel %vm1020, %v5466, 0
    %v5558 = vsel %vm1020, %v5467, 0
    %v5561 = vsel %vm1020, %v5468, 0
    %v5564 = vsel %vm1020, %v5469, 0
    %v5567 = vsel %vm1020, %v5470, 0
    %v5570 = vsel %vm1020, %v5471, 0
    %v5573 = vsel %vm1020, %v5472, 0
    %v5576 = vsel %vm1020, %v5473, 0
    %v5579 = vsel %vm1020, %v5474, 0
    %v5582 = vsel %vm1020, %v5475, 0
    %v5585 = vsel %vm1020, %v5476, 0
    %v5588 = vsel %vm1020, %v5477, 0
    %v5591 = vsel %vm1020, %v5478, 0
    %v5594 = vsel %vm1020, %v5479, 0
    %v5597 = vsel %vm1020, %v5480, 0
    %v5600 = vsel %vm1020, %v5481, 0
    %5602 = vmatprep.subr.bf16.mxu0 0
    %5603 = vmatpush1.bf16.msra.mxu0 %v5498
    %5604 = vmatprep.subr.bf16.mxu0 0
    %5605 = vmatpush1.bf16.msra.mxu0 %v5499
    %5606 = vmatprep.subr.bf16.mxu0 0
    %5607 = vmatpush1.bf16.msra.mxu0 %v5500
    %5608 = vmatprep.subr.bf16.mxu0 0
    %5609 = vmatpush1.bf16.msra.mxu0 %v5501
    %5610 = vmatprep.subr.bf16.mxu0 0
    %5611 = vmatpush1.bf16.msra.mxu0 0
    %5612 = vmatprep.subr.bf16.mxu0 0
    %5613 = vmatpush1.bf16.msra.mxu0 0
    %5614 = vmatprep.subr.bf16.mxu0 0
    %5615 = vmatpush1.bf16.msra.mxu0 0
    %5616 = vmatprep.subr.bf16.mxu0 0
    %5617 = vmatpush1.bf16.msra.mxu0 0
    %5618 = vmatprep.subr.bf16.mxu0 0
    %5619 = vmatpush1.bf16.msra.mxu0 0
    %5620 = vmatprep.subr.bf16.mxu0 0
    %5621 = vmatpush1.bf16.msra.mxu0 0
    %5622 = vmatprep.subr.bf16.mxu0 0
    %5623 = vmatpush1.bf16.msra.mxu0 0
    %5624 = vmatprep.subr.bf16.mxu0 0
    %5625 = vmatpush1.bf16.msra.mxu0 0
    %5626 = vmatprep.subr.bf16.mxu0 0
    %5627 = vmatpush1.bf16.msra.mxu0 0
    %5628 = vmatprep.subr.bf16.mxu0 0
    %5629 = vmatpush1.bf16.msra.mxu0 0
    %5630 = vmatprep.subr.bf16.mxu0 0
    %5631 = vmatpush1.bf16.msra.mxu0 0
    %5632 = vmatprep.subr.bf16.mxu0 0
    %5633 = vmatpush1.bf16.msra.mxu0 0
    %5634 = vmatprep.mubr.bf16.mxu0 0
    %5635 = vmatmul.mubr.bf16.gmra.mrb[0].mxu0 %v5507
    %v5636 = vpop.f32.mrb[0].mxu0
    %v5637 = vadd.f32 0.0, %v5636
    %v5638 = vpop.f32.mrb[0].mxu0
    %v5639 = vpop.f32.mrb[0].mxu0
    %v5640 = vadd.f32 0.0, %v5639
    %v5641 = vpop.f32.mrb[0].mxu0
    %5642 = vmatprep.mubr.bf16.mxu0 0
    %5643 = vmatmul.mubr.bf16.gmra.mrb[0].mxu0 %v5510
    %v5644 = vpop.f32.mrb[0].mxu0
    %v5645 = vadd.f32 0.0, %v5644
    %v5646 = vpop.f32.mrb[0].mxu0
    %v5647 = vpop.f32.mrb[0].mxu0
    %v5648 = vadd.f32 0.0, %v5647
    %v5649 = vpop.f32.mrb[0].mxu0
    %5650 = vmatprep.mubr.bf16.mxu0 0
    %5651 = vmatmul.mubr.bf16.gmra.mrb[0].mxu0 %v5513
    %v5652 = vpop.f32.mrb[0].mxu0
    %v5653 = vadd.f32 0.0, %v5652
    %v5654 = vpop.f32.mrb[0].mxu0
    %v5655 = vpop.f32.mrb[0].mxu0
    %v5656 = vadd.f32 0.0, %v5655
    %v5657 = vpop.f32.mrb[0].mxu0
    %5658 = vmatprep.mubr.bf16.mxu0 0
    %5659 = vmatmul.mubr.bf16.gmra.mrb[0].mxu0 %v5516
    %v5660 = vpop.f32.mrb[0].mxu0
    %v5661 = vadd.f32 0.0, %v5660
    %v5662 = vpop.f32.mrb[0].mxu0
    %v5663 = vpop.f32.mrb[0].mxu0
    %v5664 = vadd.f32 0.0, %v5663
    %v5665 = vpop.f32.mrb[0].mxu0
    %5666 = vmatprep.mubr.bf16.mxu0 0
    %5667 = vmatmul.mubr.bf16.gmra.mrb[0].mxu0 %v5519
    %v5668 = vpop.f32.mrb[0].mxu0
    %v5669 = vadd.f32 0.0, %v5668
    %v5670 = vpop.f32.mrb[0].mxu0
    %v5671 = vpop.f32.mrb[0].mxu0
    %v5672 = vadd.f32 0.0, %v5671
    %v5673 = vpop.f32.mrb[0].mxu0
    %5674 = vmatprep.mubr.bf16.mxu0 0
    %5675 = vmatmul.mubr.bf16.gmra.mrb[0].mxu0 %v5522
    %v5676 = vpop.f32.mrb[0].mxu0
    %v5677 = vadd.f32 0.0, %v5676
    %v5678 = vpop.f32.mrb[0].mxu0
    %v5679 = vpop.f32.mrb[0].mxu0
    %v5680 = vadd.f32 0.0, %v5679
    %v5681 = vpop.f32.mrb[0].mxu0
    %5682 = vmatprep.mubr.bf16.mxu0 0
    %5683 = vmatmul.mubr.bf16.gmra.mrb[0].mxu0 %v5525
    %v5684 = vpop.f32.mrb[0].mxu0
    %v5685 = vadd.f32 0.0, %v5684
    %v5686 = vpop.f32.mrb[0].mxu0
    %v5687 = vpop.f32.mrb[0].mxu0
    %v5688 = vadd.f32 0.0, %v5687
    %v5689 = vpop.f32.mrb[0].mxu0
    %5690 = vmatprep.mubr.bf16.mxu0 0
    %5691 = vmatmul.mubr.bf16.gmra.mrb[0].mxu0 %v5528
    %v5692 = vpop.f32.mrb[0].mxu0
    %v5693 = vadd.f32 0.0, %v5692
    %v5694 = vpop.f32.mrb[0].mxu0
    %v5695 = vpop.f32.mrb[0].mxu0
    %v5696 = vadd.f32 0.0, %v5695
    %v5697 = vpop.f32.mrb[0].mxu0
    %5698 = vmatprep.mubr.bf16.mxu0 0
    %5699 = vmatmul.mubr.bf16.gmra.mrb[0].mxu0 %v5531
    %v5700 = vpop.f32.mrb[0].mxu0
    %v5701 = vadd.f32 0.0, %v5700
    %v5702 = vpop.f32.mrb[0].mxu0
    %v5703 = vpop.f32.mrb[0].mxu0
    %v5704 = vadd.f32 0.0, %v5703
    %v5705 = vpop.f32.mrb[0].mxu0
    %5706 = vmatprep.mubr.bf16.mxu0 0
    %5707 = vmatmul.mubr.bf16.gmra.mrb[0].mxu0 %v5534
    %v5708 = vpop.f32.mrb[0].mxu0
    %v5709 = vadd.f32 0.0, %v5708
    %v5710 = vpop.f32.mrb[0].mxu0
    %v5711 = vpop.f32.mrb[0].mxu0
    %v5712 = vadd.f32 0.0, %v5711
    %v5713 = vpop.f32.mrb[0].mxu0
    %5714 = vmatprep.mubr.bf16.mxu0 0
    %5715 = vmatmul.mubr.bf16.gmra.mrb[0].mxu0 %v5537
    %v5716 = vpop.f32.mrb[0].mxu0
    %v5717 = vadd.f32 0.0, %v5716
    %v5718 = vpop.f32.mrb[0].mxu0
    %v5719 = vpop.f32.mrb[0].mxu0
    %v5720 = vadd.f32 0.0, %v5719
    %v5721 = vpop.f32.mrb[0].mxu0
    %5722 = vmatprep.mubr.bf16.mxu0 0
    %5723 = vmatmul.mubr.bf16.gmra.mrb[0].mxu0 %v5540
    %v5724 = vpop.f32.mrb[0].mxu0
    %v5725 = vadd.f32 0.0, %v5724
    %v5726 = vpop.f32.mrb[0].mxu0
    %v5727 = vpop.f32.mrb[0].mxu0
    %v5728 = vadd.f32 0.0, %v5727
    %v5729 = vpop.f32.mrb[0].mxu0
    %5730 = vmatprep.mubr.bf16.mxu0 0
    %5731 = vmatmul.mubr.bf16.gmra.mrb[0].mxu0 %v5543
    %v5732 = vpop.f32.mrb[0].mxu0
    %v5733 = vadd.f32 0.0, %v5732
    %v5734 = vpop.f32.mrb[0].mxu0
    %v5735 = vpop.f32.mrb[0].mxu0
    %v5736 = vadd.f32 0.0, %v5735
    %v5737 = vpop.f32.mrb[0].mxu0
    %5738 = vmatprep.mubr.bf16.mxu0 0
    %5739 = vmatmul.mubr.bf16.gmra.mrb[0].mxu0 %v5546
    %v5740 = vpop.f32.mrb[0].mxu0
    %v5741 = vadd.f32 0.0, %v5740
    %v5742 = vpop.f32.mrb[0].mxu0
    %v5743 = vpop.f32.mrb[0].mxu0
    %v5744 = vadd.f32 0.0, %v5743
    %v5745 = vpop.f32.mrb[0].mxu0
    %5746 = vmatprep.mubr.bf16.mxu0 0
    %5747 = vmatmul.mubr.bf16.gmra.mrb[0].mxu0 %v5549
    %v5748 = vpop.f32.mrb[0].mxu0
    %v5749 = vadd.f32 0.0, %v5748
    %v5750 = vpop.f32.mrb[0].mxu0
    %v5751 = vpop.f32.mrb[0].mxu0
    %v5752 = vadd.f32 0.0, %v5751
    %v5753 = vpop.f32.mrb[0].mxu0
    %5754 = vmatprep.mubr.bf16.mxu0 0
    %5755 = vmatmul.mubr.bf16.gmra.mrb[0].mxu0 %v5552
    %v5756 = vpop.f32.mrb[0].mxu0
    %v5757 = vadd.f32 0.0, %v5756
    %v5758 = vpop.f32.mrb[0].mxu0
    %v5759 = vpop.f32.mrb[0].mxu0
    %v5760 = vadd.f32 0.0, %v5759
    %v5761 = vpop.f32.mrb[0].mxu0
    %5762 = vmatprep.mubr.bf16.mxu0 0
    %5763 = vmatmul.mubr.bf16.gmra.mrb[0].mxu0 %v5555
    %v5764 = vpop.f32.mrb[0].mxu0
    %v5765 = vadd.f32 0.0, %v5764
    %v5766 = vpop.f32.mrb[0].mxu0
    %v5767 = vpop.f32.mrb[0].mxu0
    %v5768 = vadd.f32 0.0, %v5767
    %v5769 = vpop.f32.mrb[0].mxu0
    %5770 = vmatprep.mubr.bf16.mxu0 0
    %5771 = vmatmul.mubr.bf16.gmra.mrb[0].mxu0 %v5558
    %v5772 = vpop.f32.mrb[0].mxu0
    %v5773 = vadd.f32 0.0, %v5772
    %v5774 = vpop.f32.mrb[0].mxu0
    %v5775 = vpop.f32.mrb[0].mxu0
    %v5776 = vadd.f32 0.0, %v5775
    %v5777 = vpop.f32.mrb[0].mxu0
    %5778 = vmatprep.mubr.bf16.mxu0 0
    %5779 = vmatmul.mubr.bf16.gmra.mrb[0].mxu0 %v5561
    %v5780 = vpop.f32.mrb[0].mxu0
    %v5781 = vadd.f32 0.0, %v5780
    %v5782 = vpop.f32.mrb[0].mxu0
    %v5783 = vpop.f32.mrb[0].mxu0
    %v5784 = vadd.f32 0.0, %v5783
    %v5785 = vpop.f32.mrb[0].mxu0
    %5786 = vmatprep.mubr.bf16.mxu0 0
    %5787 = vmatmul.mubr.bf16.gmra.mrb[0].mxu0 %v5564
    %v5788 = vpop.f32.mrb[0].mxu0
    %v5789 = vadd.f32 0.0, %v5788
    %v5790 = vpop.f32.mrb[0].mxu0
    %v5791 = vpop.f32.mrb[0].mxu0
    %v5792 = vadd.f32 0.0, %v5791
    %v5793 = vpop.f32.mrb[0].mxu0
    %5794 = vmatprep.mubr.bf16.mxu0 0
    %5795 = vmatmul.mubr.bf16.gmra.mrb[0].mxu0 %v5567
    %v5796 = vpop.f32.mrb[0].mxu0
    %v5797 = vadd.f32 0.0, %v5796
    %v5798 = vpop.f32.mrb[0].mxu0
    %v5799 = vpop.f32.mrb[0].mxu0
    %v5800 = vadd.f32 0.0, %v5799
    %v5801 = vpop.f32.mrb[0].mxu0
    %5802 = vmatprep.mubr.bf16.mxu0 0
    %5803 = vmatmul.mubr.bf16.gmra.mrb[0].mxu0 %v5570
    %v5804 = vpop.f32.mrb[0].mxu0
    %v5805 = vadd.f32 0.0, %v5804
    %v5806 = vpop.f32.mrb[0].mxu0
    %v5807 = vpop.f32.mrb[0].mxu0
    %v5808 = vadd.f32 0.0, %v5807
    %v5809 = vpop.f32.mrb[0].mxu0
    %5810 = vmatprep.mubr.bf16.mxu0 0
    %5811 = vmatmul.mubr.bf16.gmra.mrb[0].mxu0 %v5573
    %v5812 = vpop.f32.mrb[0].mxu0
    %v5813 = vadd.f32 0.0, %v5812
    %v5814 = vpop.f32.mrb[0].mxu0
    %v5815 = vpop.f32.mrb[0].mxu0
    %v5816 = vadd.f32 0.0, %v5815
    %v5817 = vpop.f32.mrb[0].mxu0
    %5818 = vmatprep.mubr.bf16.mxu0 0
    %5819 = vmatmul.mubr.bf16.gmra.mrb[0].mxu0 %v5576
    %v5820 = vpop.f32.mrb[0].mxu0
    %v5821 = vadd.f32 0.0, %v5820
    %v5822 = vpop.f32.mrb[0].mxu0
    %v5823 = vpop.f32.mrb[0].mxu0
    %v5824 = vadd.f32 0.0, %v5823
    %v5825 = vpop.f32.mrb[0].mxu0
    %5826 = vmatprep.mubr.bf16.mxu0 0
    %5827 = vmatmul.mubr.bf16.gmra.mrb[0].mxu0 %v5579
    %v5828 = vpop.f32.mrb[0].mxu0
    %v5829 = vadd.f32 0.0, %v5828
    %v5830 = vpop.f32.mrb[0].mxu0
    %v5831 = vpop.f32.mrb[0].mxu0
    %v5832 = vadd.f32 0.0, %v5831
    %v5833 = vpop.f32.mrb[0].mxu0
    %5834 = vmatprep.mubr.bf16.mxu0 0
    %5835 = vmatmul.mubr.bf16.gmra.mrb[0].mxu0 %v5582
    %v5836 = vpop.f32.mrb[0].mxu0
    %v5837 = vadd.f32 0.0, %v5836
    %v5838 = vpop.f32.mrb[0].mxu0
    %v5839 = vpop.f32.mrb[0].mxu0
    %v5840 = vadd.f32 0.0, %v5839
    %v5841 = vpop.f32.mrb[0].mxu0
    %5842 = vmatprep.mubr.bf16.mxu0 0
    %5843 = vmatmul.mubr.bf16.gmra.mrb[0].mxu0 %v5585
    %v5844 = vpop.f32.mrb[0].mxu0
    %v5845 = vadd.f32 0.0, %v5844
    %v5846 = vpop.f32.mrb[0].mxu0
    %v5847 = vpop.f32.mrb[0].mxu0
    %v5848 = vadd.f32 0.0, %v5847
    %v5849 = vpop.f32.mrb[0].mxu0
    %5850 = vmatprep.mubr.bf16.mxu0 0
    %5851 = vmatmul.mubr.bf16.gmra.mrb[0].mxu0 %v5588
    %v5852 = vpop.f32.mrb[0].mxu0
    %v5853 = vadd.f32 0.0, %v5852
    %v5854 = vpop.f32.mrb[0].mxu0
    %v5855 = vpop.f32.mrb[0].mxu0
    %v5856 = vadd.f32 0.0, %v5855
    %v5857 = vpop.f32.mrb[0].mxu0
    %5858 = vmatprep.mubr.bf16.mxu0 0
    %5859 = vmatmul.mubr.bf16.gmra.mrb[0].mxu0 %v5591
    %v5860 = vpop.f32.mrb[0].mxu0
    %v5861 = vadd.f32 0.0, %v5860
    %v5862 = vpop.f32.mrb[0].mxu0
    %v5863 = vpop.f32.mrb[0].mxu0
    %v5864 = vadd.f32 0.0, %v5863
    %v5865 = vpop.f32.mrb[0].mxu0
    %5866 = vmatprep.mubr.bf16.mxu0 0
    %5867 = vmatmul.mubr.bf16.gmra.mrb[0].mxu0 %v5594
    %v5868 = vpop.f32.mrb[0].mxu0
    %v5869 = vadd.f32 0.0, %v5868
    %v5870 = vpop.f32.mrb[0].mxu0
    %v5871 = vpop.f32.mrb[0].mxu0
    %v5872 = vadd.f32 0.0, %v5871
    %v5873 = vpop.f32.mrb[0].mxu0
    %5874 = vmatprep.mubr.bf16.mxu0 0
    %5875 = vmatmul.mubr.bf16.gmra.mrb[0].mxu0 %v5597
    %v5876 = vpop.f32.mrb[0].mxu0
    %v5877 = vadd.f32 0.0, %v5876
    %v5878 = vpop.f32.mrb[0].mxu0
    %v5879 = vpop.f32.mrb[0].mxu0
    %v5880 = vadd.f32 0.0, %v5879
    %v5881 = vpop.f32.mrb[0].mxu0
    %5882 = vmatprep.mubr.bf16.mxu0 0
    %5883 = vmatmul.mubr.bf16.gmra.mrb[0].mxu0 %v5600
    %v5884 = vpop.f32.mrb[0].mxu0
    %v5885 = vadd.f32 0.0, %v5884
    %v5886 = vpop.f32.mrb[0].mxu0
    %v5887 = vpop.f32.mrb[0].mxu0
    %v5888 = vadd.f32 0.0, %v5887
    %v5889 = vpop.f32.mrb[0].mxu0
    %5890 = vdwg.mxu0
    %v5891 = vadd.f32 %v4961, %v5637
    %v5892 = vadd.f32 %v4962, %v5640
    %v5893 = vadd.f32 %v4963, %v5645
    %v5894 = vadd.f32 %v4964, %v5648
    %v5895 = vadd.f32 %v4965, %v5653
    %v5896 = vadd.f32 %v4966, %v5656
    %v5897 = vadd.f32 %v4967, %v5661
    %v5898 = vadd.f32 %v4968, %v5664
    %v5899 = vadd.f32 %v4969, %v5669
    %v5900 = vadd.f32 %v4970, %v5672
    %v5901 = vadd.f32 %v4971, %v5677
    %v5902 = vadd.f32 %v4972, %v5680
    %v5903 = vadd.f32 %v4973, %v5685
    %v5904 = vadd.f32 %v4974, %v5688
    %v5905 = vadd.f32 %v4975, %v5693
    %v5906 = vadd.f32 %v4976, %v5696
    %v5907 = vadd.f32 %v4977, %v5701
    %v5908 = vadd.f32 %v4978, %v5704
    %v5909 = vadd.f32 %v4979, %v5709
    %v5910 = vadd.f32 %v4980, %v5712
    %v5911 = vadd.f32 %v4981, %v5717
    %v5912 = vadd.f32 %v4982, %v5720
    %v5913 = vadd.f32 %v4983, %v5725
    %v5914 = vadd.f32 %v4984, %v5728
    %v5915 = vadd.f32 %v4985, %v5733
    %v5916 = vadd.f32 %v4986, %v5736
    %v5917 = vadd.f32 %v4987, %v5741
    %v5918 = vadd.f32 %v4988, %v5744
    %v5919 = vadd.f32 %v4989, %v5749
    %v5920 = vadd.f32 %v4990, %v5752
    %v5921 = vadd.f32 %v4991, %v5757
    %v5922 = vadd.f32 %v4992, %v5760
    %v5923 = vadd.f32 %v4993, %v5765
    %v5924 = vadd.f32 %v4994, %v5768
    %v5925 = vadd.f32 %v4995, %v5773
    %v5926 = vadd.f32 %v4996, %v5776
    %v5927 = vadd.f32 %v4997, %v5781
    %v5928 = vadd.f32 %v4998, %v5784
    %v5929 = vadd.f32 %v4999, %v5789
    %v5930 = vadd.f32 %v5000, %v5792
    %v5931 = vadd.f32 %v5001, %v5797
    %v5932 = vadd.f32 %v5002, %v5800
    %v5933 = vadd.f32 %v5003, %v5805
    %v5934 = vadd.f32 %v5004, %v5808
    %v5935 = vadd.f32 %v5005, %v5813
    %v5936 = vadd.f32 %v5006, %v5816
    %v5937 = vadd.f32 %v5007, %v5821
    %v5938 = vadd.f32 %v5008, %v5824
    %v5939 = vadd.f32 %v5009, %v5829
    %v5940 = vadd.f32 %v5010, %v5832
    %v5941 = vadd.f32 %v5011, %v5837
    %v5942 = vadd.f32 %v5012, %v5840
    %v5943 = vadd.f32 %v5013, %v5845
    %v5944 = vadd.f32 %v5014, %v5848
    %v5945 = vadd.f32 %v5015, %v5853
    %v5946 = vadd.f32 %v5016, %v5856
    %v5947 = vadd.f32 %v5017, %v5861
    %v5948 = vadd.f32 %v5018, %v5864
    %v5949 = vadd.f32 %v5019, %v5869
    %v5950 = vadd.f32 %v5020, %v5872
    %v5951 = vadd.f32 %v5021, %v5877
    %v5952 = vadd.f32 %v5022, %v5880
    %v5953 = vadd.f32 %v5023, %v5885
    %v5954 = vadd.f32 %v5024, %v5888
    %s5955 = scalar_lea.vmem %s0, 24
    %v5956 = vld [vmem:[%s5955] sm:$0xf]
    %v5957 = vld [vmem:[%s5955 + $0x4] sm:$0xf]
    %v5958 = vld [vmem:[%s5955 + $0xc] sm:$0xf]
    %v5959 = vld [vmem:[%s5955 + $0x10] sm:$0xf]
    %v5960 = vld [vmem:[%s5955 + $0x18] sm:$0xf]
    %v5961 = vld [vmem:[%s5955 + $0x1c] sm:$0xf]
    %v5962 = vld [vmem:[%s5955 + $0x24] sm:$0xf]
    %v5963 = vld [vmem:[%s5955 + $0x28] sm:$0xf]
    %v5964 = vld [vmem:[%s5955 + $0x30] sm:$0xf]
    %v5965 = vld [vmem:[%s5955 + $0x34] sm:$0xf]
    %v5966 = vld [vmem:[%s5955 + $0x3c] sm:$0xf]
    %v5967 = vld [vmem:[%s5955 + $0x40] sm:$0xf]
    %v5968 = vld [vmem:[%s5955 + $0x48] sm:$0xf]
    %v5969 = vld [vmem:[%s5955 + $0x4c] sm:$0xf]
    %v5970 = vld [vmem:[%s5955 + $0x54] sm:$0xf]
    %v5971 = vld [vmem:[%s5955 + $0x58] sm:$0xf]
    %v5972 = vld [vmem:[%s5955 + $0x60] sm:$0xf]
    %v5973 = vld [vmem:[%s5955 + $0x64] sm:$0xf]
    %v5974 = vld [vmem:[%s5955 + $0x6c] sm:$0xf]
    %v5975 = vld [vmem:[%s5955 + $0x70] sm:$0xf]
    %v5976 = vld [vmem:[%s5955 + $0x78] sm:$0xf]
    %v5977 = vld [vmem:[%s5955 + $0x7c] sm:$0xf]
    %v5978 = vld [vmem:[%s5955 + $0x84] sm:$0xf]
    %v5979 = vld [vmem:[%s5955 + $0x88] sm:$0xf]
    %v5980 = vld [vmem:[%s5955 + $0x90] sm:$0xf]
    %v5981 = vld [vmem:[%s5955 + $0x94] sm:$0xf]
    %v5982 = vld [vmem:[%s5955 + $0x9c] sm:$0xf]
    %v5983 = vld [vmem:[%s5955 + $0xa0] sm:$0xf]
    %v5984 = vld [vmem:[%s5955 + $0xa8] sm:$0xf]
    %v5985 = vld [vmem:[%s5955 + $0xac] sm:$0xf]
    %v5986 = vld [vmem:[%s5955 + $0xb4] sm:$0xf]
    %v5987 = vld [vmem:[%s5955 + $0xb8] sm:$0xf]
    %v5988 = vld [vmem:[%s5955 + $0xd8] sm:$0xf]
    %v5989 = vld [vmem:[%s5955 + $0xdc] sm:$0xf]
    %v5990 = vld [vmem:[%s5955 + $0xe4] sm:$0xf]
    %v5991 = vld [vmem:[%s5955 + $0xe8] sm:$0xf]
    %v5992 = vld [vmem:[%s5955 + $0xf0] sm:$0xf]
    %v5993 = vld [vmem:[%s5955 + $0xf4] sm:$0xf]
    %v5994 = vld [vmem:[%s5955 + $0xfc] sm:$0xf]
    %v5995 = vld [vmem:[%s5955 + $0x100] sm:$0xf]
    %v5996 = vld [vmem:[%s5955 + $0x108] sm:$0xf]
    %v5997 = vld [vmem:[%s5955 + $0x10c] sm:$0xf]
    %v5998 = vld [vmem:[%s5955 + $0x114] sm:$0xf]
    %v5999 = vld [vmem:[%s5955 + $0x118] sm:$0xf]
    %v6000 = vld [vmem:[%s5955 + $0x120] sm:$0xf]
    %v6001 = vld [vmem:[%s5955 + $0x124] sm:$0xf]
    %v6002 = vld [vmem:[%s5955 + $0x12c] sm:$0xf]
    %v6003 = vld [vmem:[%s5955 + $0x130] sm:$0xf]
    %v6004 = vld [vmem:[%s5955 + $0x138] sm:$0xf]
    %v6005 = vld [vmem:[%s5955 + $0x13c] sm:$0xf]
    %v6006 = vld [vmem:[%s5955 + $0x144] sm:$0xf]
    %v6007 = vld [vmem:[%s5955 + $0x148] sm:$0xf]
    %v6008 = vld [vmem:[%s5955 + $0x150] sm:$0xf]
    %v6009 = vld [vmem:[%s5955 + $0x154] sm:$0xf]
    %v6010 = vld [vmem:[%s5955 + $0x15c] sm:$0xf]
    %v6011 = vld [vmem:[%s5955 + $0x160] sm:$0xf]
    %v6012 = vld [vmem:[%s5955 + $0x168] sm:$0xf]
    %v6013 = vld [vmem:[%s5955 + $0x16c] sm:$0xf]
    %v6014 = vld [vmem:[%s5955 + $0x174] sm:$0xf]
    %v6015 = vld [vmem:[%s5955 + $0x178] sm:$0xf]
    %v6016 = vld [vmem:[%s5955 + $0x180] sm:$0xf]
    %v6017 = vld [vmem:[%s5955 + $0x184] sm:$0xf]
    %v6018 = vld [vmem:[%s5955 + $0x18c] sm:$0xf]
    %v6019 = vld [vmem:[%s5955 + $0x190] sm:$0xf]
    %s6020 = scalar_lea.vmem %s1, 192
    %v6021 = vld [vmem:[%s6020] sm:$0xf]
    %v6022 = vld [vmem:[%s6020 + $0x4] sm:$0xf]
    %v6023 = vld [vmem:[%s6020 + $0x8] sm:$0xf]
    %v6024 = vld [vmem:[%s6020 + $0xc] sm:$0xf]
    %v6025 = vld [vmem:[%s6020 + $0x10] sm:$0xf]
    %v6026 = vld [vmem:[%s6020 + $0x14] sm:$0xf]
    %v6027 = vld [vmem:[%s6020 + $0x18] sm:$0xf]
    %v6028 = vld [vmem:[%s6020 + $0x1c] sm:$0xf]
    %v6093 = vunpack.c.l.b16 %v5956
    %v6094 = vunpack.c.l.b16 %v5957
    %v6095 = vunpack.c.l.b16 %v5958
    %v6096 = vunpack.c.l.b16 %v5959
    %v6097 = vunpack.c.l.b16 %v5960
    %v6098 = vunpack.c.l.b16 %v5961
    %v6099 = vunpack.c.l.b16 %v5962
    %v6100 = vunpack.c.l.b16 %v5963
    %v6101 = vunpack.c.l.b16 %v5964
    %v6102 = vunpack.c.l.b16 %v5965
    %v6103 = vunpack.c.l.b16 %v5966
    %v6104 = vunpack.c.l.b16 %v5967
    %v6105 = vunpack.c.l.b16 %v5968
    %v6106 = vunpack.c.l.b16 %v5969
    %v6107 = vunpack.c.l.b16 %v5970
    %v6108 = vunpack.c.l.b16 %v5971
    %v6109 = vunpack.c.l.b16 %v5972
    %v6110 = vunpack.c.l.b16 %v5973
    %v6111 = vunpack.c.l.b16 %v5974
    %v6112 = vunpack.c.l.b16 %v5975
    %v6113 = vunpack.c.l.b16 %v5976
    %v6114 = vunpack.c.l.b16 %v5977
    %v6115 = vunpack.c.l.b16 %v5978
    %v6116 = vunpack.c.l.b16 %v5979
    %v6117 = vunpack.c.l.b16 %v5980
    %v6118 = vunpack.c.l.b16 %v5981
    %v6119 = vunpack.c.l.b16 %v5982
    %v6120 = vunpack.c.l.b16 %v5983
    %v6121 = vunpack.c.l.b16 %v5984
    %v6122 = vunpack.c.l.b16 %v5985
    %v6123 = vunpack.c.l.b16 %v5986
    %v6124 = vunpack.c.l.b16 %v5987
    %v6125 = vunpack.c.l.b16 %v5988
    %v6126 = vunpack.c.l.b16 %v5989
    %v6127 = vunpack.c.l.b16 %v5990
    %v6128 = vunpack.c.l.b16 %v5991
    %v6129 = vunpack.c.l.b16 %v5992
    %v6130 = vunpack.c.l.b16 %v5993
    %v6131 = vunpack.c.l.b16 %v5994
    %v6132 = vunpack.c.l.b16 %v5995
    %v6133 = vunpack.c.l.b16 %v5996
    %v6134 = vunpack.c.l.b16 %v5997
    %v6135 = vunpack.c.l.b16 %v5998
    %v6136 = vunpack.c.l.b16 %v5999
    %v6137 = vunpack.c.l.b16 %v6000
    %v6138 = vunpack.c.l.b16 %v6001
    %v6139 = vunpack.c.l.b16 %v6002
    %v6140 = vunpack.c.l.b16 %v6003
    %v6141 = vunpack.c.l.b16 %v6004
    %v6142 = vunpack.c.l.b16 %v6005
    %v6143 = vunpack.c.l.b16 %v6006
    %v6144 = vunpack.c.l.b16 %v6007
    %v6145 = vunpack.c.l.b16 %v6008
    %v6146 = vunpack.c.l.b16 %v6009
    %v6147 = vunpack.c.l.b16 %v6010
    %v6148 = vunpack.c.l.b16 %v6011
    %v6149 = vunpack.c.l.b16 %v6012
    %v6150 = vunpack.c.l.b16 %v6013
    %v6151 = vunpack.c.l.b16 %v6014
    %v6152 = vunpack.c.l.b16 %v6015
    %v6153 = vunpack.c.l.b16 %v6016
    %v6154 = vunpack.c.l.b16 %v6017
    %v6155 = vunpack.c.l.b16 %v6018
    %v6156 = vunpack.c.l.b16 %v6019
    %v6157 = vpack.c.b16 %v6094, %v6093
    %v6158 = vpack.c.b16 %v6096, %v6095
    %v6159 = vpack.c.b16 %v6098, %v6097
    %v6160 = vpack.c.b16 %v6100, %v6099
    %v6161 = vpack.c.b16 %v6102, %v6101
    %v6162 = vpack.c.b16 %v6104, %v6103
    %v6163 = vpack.c.b16 %v6106, %v6105
    %v6164 = vpack.c.b16 %v6108, %v6107
    %v6165 = vpack.c.b16 %v6110, %v6109
    %v6166 = vpack.c.b16 %v6112, %v6111
    %v6167 = vpack.c.b16 %v6114, %v6113
    %v6168 = vpack.c.b16 %v6116, %v6115
    %v6169 = vpack.c.b16 %v6118, %v6117
    %v6170 = vpack.c.b16 %v6120, %v6119
    %v6171 = vpack.c.b16 %v6122, %v6121
    %v6172 = vpack.c.b16 %v6124, %v6123
    %v6173 = vpack.c.b16 %v6126, %v6125
    %v6174 = vpack.c.b16 %v6128, %v6127
    %v6175 = vpack.c.b16 %v6130, %v6129
    %v6176 = vpack.c.b16 %v6132, %v6131
    %v6177 = vpack.c.b16 %v6134, %v6133
    %v6178 = vpack.c.b16 %v6136, %v6135
    %v6179 = vpack.c.b16 %v6138, %v6137
    %v6180 = vpack.c.b16 %v6140, %v6139
    %v6181 = vpack.c.b16 %v6142, %v6141
    %v6182 = vpack.c.b16 %v6144, %v6143
    %v6183 = vpack.c.b16 %v6146, %v6145
    %v6184 = vpack.c.b16 %v6148, %v6147
    %v6185 = vpack.c.b16 %v6150, %v6149
    %v6186 = vpack.c.b16 %v6152, %v6151
    %v6187 = vpack.c.b16 %v6154, %v6153
    %v6188 = vpack.c.b16 %v6156, %v6155
    %v6197 = vunpack.c.l.b16 %v6021
    %v6198 = vunpack.c.l.b16 %v6022
    %v6199 = vunpack.c.l.b16 %v6023
    %v6200 = vunpack.c.l.b16 %v6024
    %v6201 = vunpack.c.l.b16 %v6025
    %v6202 = vunpack.c.l.b16 %v6026
    %v6203 = vunpack.c.l.b16 %v6027
    %v6204 = vunpack.c.l.b16 %v6028
    %v6205 = vpack.c.b16 %v6198, %v6197
    %v6206 = vpack.c.b16 %v6200, %v6199
    %v6207 = vpack.c.b16 %v6202, %v6201
    %v6208 = vpack.c.b16 %v6204, %v6203
    %v6214 = vsel %vm1020, %v6157, 0
    %v6217 = vsel %vm1020, %v6158, 0
    %v6220 = vsel %vm1020, %v6159, 0
    %v6223 = vsel %vm1020, %v6160, 0
    %v6226 = vsel %vm1020, %v6161, 0
    %v6229 = vsel %vm1020, %v6162, 0
    %v6232 = vsel %vm1020, %v6163, 0
    %v6235 = vsel %vm1020, %v6164, 0
    %v6238 = vsel %vm1020, %v6165, 0
    %v6241 = vsel %vm1020, %v6166, 0
    %v6244 = vsel %vm1020, %v6167, 0
    %v6247 = vsel %vm1020, %v6168, 0
    %v6250 = vsel %vm1020, %v6169, 0
    %v6253 = vsel %vm1020, %v6170, 0
    %v6256 = vsel %vm1020, %v6171, 0
    %v6259 = vsel %vm1020, %v6172, 0
    %v6262 = vsel %vm1020, %v6173, 0
    %v6265 = vsel %vm1020, %v6174, 0
    %v6268 = vsel %vm1020, %v6175, 0
    %v6271 = vsel %vm1020, %v6176, 0
    %v6274 = vsel %vm1020, %v6177, 0
    %v6277 = vsel %vm1020, %v6178, 0
    %v6280 = vsel %vm1020, %v6179, 0
    %v6283 = vsel %vm1020, %v6180, 0
    %v6286 = vsel %vm1020, %v6181, 0
    %v6289 = vsel %vm1020, %v6182, 0
    %v6292 = vsel %vm1020, %v6183, 0
    %v6295 = vsel %vm1020, %v6184, 0
    %v6298 = vsel %vm1020, %v6185, 0
    %v6301 = vsel %vm1020, %v6186, 0
    %v6304 = vsel %vm1020, %v6187, 0
    %v6307 = vsel %vm1020, %v6188, 0
    %6309 = vmatprep.subr.bf16.mxu0 0
    %6310 = vmatpush1.bf16.msra.mxu0 %v6205
    %6311 = vmatprep.subr.bf16.mxu0 0
    %6312 = vmatpush1.bf16.msra.mxu0 %v6206
    %6313 = vmatprep.subr.bf16.mxu0 0
    %6314 = vmatpush1.bf16.msra.mxu0 %v6207
    %6315 = vmatprep.subr.bf16.mxu0 0
    %6316 = vmatpush1.bf16.msra.mxu0 %v6208
    %6317 = vmatprep.subr.bf16.mxu0 0
    %6318 = vmatpush1.bf16.msra.mxu0 0
    %6319 = vmatprep.subr.bf16.mxu0 0
    %6320 = vmatpush1.bf16.msra.mxu0 0
    %6321 = vmatprep.subr.bf16.mxu0 0
    %6322 = vmatpush1.bf16.msra.mxu0 0
    %6323 = vmatprep.subr.bf16.mxu0 0
    %6324 = vmatpush1.bf16.msra.mxu0 0
    %6325 = vmatprep.subr.bf16.mxu0 0
    %6326 = vmatpush1.bf16.msra.mxu0 0
    %6327 = vmatprep.subr.bf16.mxu0 0
    %6328 = vmatpush1.bf16.msra.mxu0 0
    %6329 = vmatprep.subr.bf16.mxu0 0
    %6330 = vmatpush1.bf16.msra.mxu0 0
    %6331 = vmatprep.subr.bf16.mxu0 0
    %6332 = vmatpush1.bf16.msra.mxu0 0
    %6333 = vmatprep.subr.bf16.mxu0 0
    %6334 = vmatpush1.bf16.msra.mxu0 0
    %6335 = vmatprep.subr.bf16.mxu0 0
    %6336 = vmatpush1.bf16.msra.mxu0 0
    %6337 = vmatprep.subr.bf16.mxu0 0
    %6338 = vmatpush1.bf16.msra.mxu0 0
    %6339 = vmatprep.subr.bf16.mxu0 0
    %6340 = vmatpush1.bf16.msra.mxu0 0
    %6341 = vmatprep.mubr.bf16.mxu0 0
    %6342 = vmatmul.mubr.bf16.gmra.mrb[0].mxu0 %v6214
    %v6343 = vpop.f32.mrb[0].mxu0
    %v6344 = vadd.f32 0.0, %v6343
    %v6345 = vpop.f32.mrb[0].mxu0
    %v6346 = vpop.f32.mrb[0].mxu0
    %v6347 = vadd.f32 0.0, %v6346
    %v6348 = vpop.f32.mrb[0].mxu0
    %6349 = vmatprep.mubr.bf16.mxu0 0
    %6350 = vmatmul.mubr.bf16.gmra.mrb[0].mxu0 %v6217
    %v6351 = vpop.f32.mrb[0].mxu0
    %v6352 = vadd.f32 0.0, %v6351
    %v6353 = vpop.f32.mrb[0].mxu0
    %v6354 = vpop.f32.mrb[0].mxu0
    %v6355 = vadd.f32 0.0, %v6354
    %v6356 = vpop.f32.mrb[0].mxu0
    %6357 = vmatprep.mubr.bf16.mxu0 0
    %6358 = vmatmul.mubr.bf16.gmra.mrb[0].mxu0 %v6220
    %v6359 = vpop.f32.mrb[0].mxu0
    %v6360 = vadd.f32 0.0, %v6359
    %v6361 = vpop.f32.mrb[0].mxu0
    %v6362 = vpop.f32.mrb[0].mxu0
    %v6363 = vadd.f32 0.0, %v6362
    %v6364 = vpop.f32.mrb[0].mxu0
    %6365 = vmatprep.mubr.bf16.mxu0 0
    %6366 = vmatmul.mubr.bf16.gmra.mrb[0].mxu0 %v6223
    %v6367 = vpop.f32.mrb[0].mxu0
    %v6368 = vadd.f32 0.0, %v6367
    %v6369 = vpop.f32.mrb[0].mxu0
    %v6370 = vpop.f32.mrb[0].mxu0
    %v6371 = vadd.f32 0.0, %v6370
    %v6372 = vpop.f32.mrb[0].mxu0
    %6373 = vmatprep.mubr.bf16.mxu0 0
    %6374 = vmatmul.mubr.bf16.gmra.mrb[0].mxu0 %v6226
    %v6375 = vpop.f32.mrb[0].mxu0
    %v6376 = vadd.f32 0.0, %v6375
    %v6377 = vpop.f32.mrb[0].mxu0
    %v6378 = vpop.f32.mrb[0].mxu0
    %v6379 = vadd.f32 0.0, %v6378
    %v6380 = vpop.f32.mrb[0].mxu0
    %6381 = vmatprep.mubr.bf16.mxu0 0
    %6382 = vmatmul.mubr.bf16.gmra.mrb[0].mxu0 %v6229
    %v6383 = vpop.f32.mrb[0].mxu0
    %v6384 = vadd.f32 0.0, %v6383
    %v6385 = vpop.f32.mrb[0].mxu0
    %v6386 = vpop.f32.mrb[0].mxu0
    %v6387 = vadd.f32 0.0, %v6386
    %v6388 = vpop.f32.mrb[0].mxu0
    %6389 = vmatprep.mubr.bf16.mxu0 0
    %6390 = vmatmul.mubr.bf16.gmra.mrb[0].mxu0 %v6232
    %v6391 = vpop.f32.mrb[0].mxu0
    %v6392 = vadd.f32 0.0, %v6391
    %v6393 = vpop.f32.mrb[0].mxu0
    %v6394 = vpop.f32.mrb[0].mxu0
    %v6395 = vadd.f32 0.0, %v6394
    %v6396 = vpop.f32.mrb[0].mxu0
    %6397 = vmatprep.mubr.bf16.mxu0 0
    %6398 = vmatmul.mubr.bf16.gmra.mrb[0].mxu0 %v6235
    %v6399 = vpop.f32.mrb[0].mxu0
    %v6400 = vadd.f32 0.0, %v6399
    %v6401 = vpop.f32.mrb[0].mxu0
    %v6402 = vpop.f32.mrb[0].mxu0
    %v6403 = vadd.f32 0.0, %v6402
    %v6404 = vpop.f32.mrb[0].mxu0
    %6405 = vmatprep.mubr.bf16.mxu0 0
    %6406 = vmatmul.mubr.bf16.gmra.mrb[0].mxu0 %v6238
    %v6407 = vpop.f32.mrb[0].mxu0
    %v6408 = vadd.f32 0.0, %v6407
    %v6409 = vpop.f32.mrb[0].mxu0
    %v6410 = vpop.f32.mrb[0].mxu0
    %v6411 = vadd.f32 0.0, %v6410
    %v6412 = vpop.f32.mrb[0].mxu0
    %6413 = vmatprep.mubr.bf16.mxu0 0
    %6414 = vmatmul.mubr.bf16.gmra.mrb[0].mxu0 %v6241
    %v6415 = vpop.f32.mrb[0].mxu0
    %v6416 = vadd.f32 0.0, %v6415
    %v6417 = vpop.f32.mrb[0].mxu0
    %v6418 = vpop.f32.mrb[0].mxu0
    %v6419 = vadd.f32 0.0, %v6418
    %v6420 = vpop.f32.mrb[0].mxu0
    %6421 = vmatprep.mubr.bf16.mxu0 0
    %6422 = vmatmul.mubr.bf16.gmra.mrb[0].mxu0 %v6244
    %v6423 = vpop.f32.mrb[0].mxu0
    %v6424 = vadd.f32 0.0, %v6423
    %v6425 = vpop.f32.mrb[0].mxu0
    %v6426 = vpop.f32.mrb[0].mxu0
    %v6427 = vadd.f32 0.0, %v6426
    %v6428 = vpop.f32.mrb[0].mxu0
    %6429 = vmatprep.mubr.bf16.mxu0 0
    %6430 = vmatmul.mubr.bf16.gmra.mrb[0].mxu0 %v6247
    %v6431 = vpop.f32.mrb[0].mxu0
    %v6432 = vadd.f32 0.0, %v6431
    %v6433 = vpop.f32.mrb[0].mxu0
    %v6434 = vpop.f32.mrb[0].mxu0
    %v6435 = vadd.f32 0.0, %v6434
    %v6436 = vpop.f32.mrb[0].mxu0
    %6437 = vmatprep.mubr.bf16.mxu0 0
    %6438 = vmatmul.mubr.bf16.gmra.mrb[0].mxu0 %v6250
    %v6439 = vpop.f32.mrb[0].mxu0
    %v6440 = vadd.f32 0.0, %v6439
    %v6441 = vpop.f32.mrb[0].mxu0
    %v6442 = vpop.f32.mrb[0].mxu0
    %v6443 = vadd.f32 0.0, %v6442
    %v6444 = vpop.f32.mrb[0].mxu0
    %6445 = vmatprep.mubr.bf16.mxu0 0
    %6446 = vmatmul.mubr.bf16.gmra.mrb[0].mxu0 %v6253
    %v6447 = vpop.f32.mrb[0].mxu0
    %v6448 = vadd.f32 0.0, %v6447
    %v6449 = vpop.f32.mrb[0].mxu0
    %v6450 = vpop.f32.mrb[0].mxu0
    %v6451 = vadd.f32 0.0, %v6450
    %v6452 = vpop.f32.mrb[0].mxu0
    %6453 = vmatprep.mubr.bf16.mxu0 0
    %6454 = vmatmul.mubr.bf16.gmra.mrb[0].mxu0 %v6256
    %v6455 = vpop.f32.mrb[0].mxu0
    %v6456 = vadd.f32 0.0, %v6455
    %v6457 = vpop.f32.mrb[0].mxu0
    %v6458 = vpop.f32.mrb[0].mxu0
    %v6459 = vadd.f32 0.0, %v6458
    %v6460 = vpop.f32.mrb[0].mxu0
    %6461 = vmatprep.mubr.bf16.mxu0 0
    %6462 = vmatmul.mubr.bf16.gmra.mrb[0].mxu0 %v6259
    %v6463 = vpop.f32.mrb[0].mxu0
    %v6464 = vadd.f32 0.0, %v6463
    %v6465 = vpop.f32.mrb[0].mxu0
    %v6466 = vpop.f32.mrb[0].mxu0
    %v6467 = vadd.f32 0.0, %v6466
    %v6468 = vpop.f32.mrb[0].mxu0
    %6469 = vmatprep.mubr.bf16.mxu0 0
    %6470 = vmatmul.mubr.bf16.gmra.mrb[0].mxu0 %v6262
    %v6471 = vpop.f32.mrb[0].mxu0
    %v6472 = vadd.f32 0.0, %v6471
    %v6473 = vpop.f32.mrb[0].mxu0
    %v6474 = vpop.f32.mrb[0].mxu0
    %v6475 = vadd.f32 0.0, %v6474
    %v6476 = vpop.f32.mrb[0].mxu0
    %6477 = vmatprep.mubr.bf16.mxu0 0
    %6478 = vmatmul.mubr.bf16.gmra.mrb[0].mxu0 %v6265
    %v6479 = vpop.f32.mrb[0].mxu0
    %v6480 = vadd.f32 0.0, %v6479
    %v6481 = vpop.f32.mrb[0].mxu0
    %v6482 = vpop.f32.mrb[0].mxu0
    %v6483 = vadd.f32 0.0, %v6482
    %v6484 = vpop.f32.mrb[0].mxu0
    %6485 = vmatprep.mubr.bf16.mxu0 0
    %6486 = vmatmul.mubr.bf16.gmra.mrb[0].mxu0 %v6268
    %v6487 = vpop.f32.mrb[0].mxu0
    %v6488 = vadd.f32 0.0, %v6487
    %v6489 = vpop.f32.mrb[0].mxu0
    %v6490 = vpop.f32.mrb[0].mxu0
    %v6491 = vadd.f32 0.0, %v6490
    %v6492 = vpop.f32.mrb[0].mxu0
    %6493 = vmatprep.mubr.bf16.mxu0 0
    %6494 = vmatmul.mubr.bf16.gmra.mrb[0].mxu0 %v6271
    %v6495 = vpop.f32.mrb[0].mxu0
    %v6496 = vadd.f32 0.0, %v6495
    %v6497 = vpop.f32.mrb[0].mxu0
    %v6498 = vpop.f32.mrb[0].mxu0
    %v6499 = vadd.f32 0.0, %v6498
    %v6500 = vpop.f32.mrb[0].mxu0
    %6501 = vmatprep.mubr.bf16.mxu0 0
    %6502 = vmatmul.mubr.bf16.gmra.mrb[0].mxu0 %v6274
    %v6503 = vpop.f32.mrb[0].mxu0
    %v6504 = vadd.f32 0.0, %v6503
    %v6505 = vpop.f32.mrb[0].mxu0
    %v6506 = vpop.f32.mrb[0].mxu0
    %v6507 = vadd.f32 0.0, %v6506
    %v6508 = vpop.f32.mrb[0].mxu0
    %6509 = vmatprep.mubr.bf16.mxu0 0
    %6510 = vmatmul.mubr.bf16.gmra.mrb[0].mxu0 %v6277
    %v6511 = vpop.f32.mrb[0].mxu0
    %v6512 = vadd.f32 0.0, %v6511
    %v6513 = vpop.f32.mrb[0].mxu0
    %v6514 = vpop.f32.mrb[0].mxu0
    %v6515 = vadd.f32 0.0, %v6514
    %v6516 = vpop.f32.mrb[0].mxu0
    %6517 = vmatprep.mubr.bf16.mxu0 0
    %6518 = vmatmul.mubr.bf16.gmra.mrb[0].mxu0 %v6280
    %v6519 = vpop.f32.mrb[0].mxu0
    %v6520 = vadd.f32 0.0, %v6519
    %v6521 = vpop.f32.mrb[0].mxu0
    %v6522 = vpop.f32.mrb[0].mxu0
    %v6523 = vadd.f32 0.0, %v6522
    %v6524 = vpop.f32.mrb[0].mxu0
    %6525 = vmatprep.mubr.bf16.mxu0 0
    %6526 = vmatmul.mubr.bf16.gmra.mrb[0].mxu0 %v6283
    %v6527 = vpop.f32.mrb[0].mxu0
    %v6528 = vadd.f32 0.0, %v6527
    %v6529 = vpop.f32.mrb[0].mxu0
    %v6530 = vpop.f32.mrb[0].mxu0
    %v6531 = vadd.f32 0.0, %v6530
    %v6532 = vpop.f32.mrb[0].mxu0
    %6533 = vmatprep.mubr.bf16.mxu0 0
    %6534 = vmatmul.mubr.bf16.gmra.mrb[0].mxu0 %v6286
    %v6535 = vpop.f32.mrb[0].mxu0
    %v6536 = vadd.f32 0.0, %v6535
    %v6537 = vpop.f32.mrb[0].mxu0
    %v6538 = vpop.f32.mrb[0].mxu0
    %v6539 = vadd.f32 0.0, %v6538
    %v6540 = vpop.f32.mrb[0].mxu0
    %6541 = vmatprep.mubr.bf16.mxu0 0
    %6542 = vmatmul.mubr.bf16.gmra.mrb[0].mxu0 %v6289
    %v6543 = vpop.f32.mrb[0].mxu0
    %v6544 = vadd.f32 0.0, %v6543
    %v6545 = vpop.f32.mrb[0].mxu0
    %v6546 = vpop.f32.mrb[0].mxu0
    %v6547 = vadd.f32 0.0, %v6546
    %v6548 = vpop.f32.mrb[0].mxu0
    %6549 = vmatprep.mubr.bf16.mxu0 0
    %6550 = vmatmul.mubr.bf16.gmra.mrb[0].mxu0 %v6292
    %v6551 = vpop.f32.mrb[0].mxu0
    %v6552 = vadd.f32 0.0, %v6551
    %v6553 = vpop.f32.mrb[0].mxu0
    %v6554 = vpop.f32.mrb[0].mxu0
    %v6555 = vadd.f32 0.0, %v6554
    %v6556 = vpop.f32.mrb[0].mxu0
    %6557 = vmatprep.mubr.bf16.mxu0 0
    %6558 = vmatmul.mubr.bf16.gmra.mrb[0].mxu0 %v6295
    %v6559 = vpop.f32.mrb[0].mxu0
    %v6560 = vadd.f32 0.0, %v6559
    %v6561 = vpop.f32.mrb[0].mxu0
    %v6562 = vpop.f32.mrb[0].mxu0
    %v6563 = vadd.f32 0.0, %v6562
    %v6564 = vpop.f32.mrb[0].mxu0
    %6565 = vmatprep.mubr.bf16.mxu0 0
    %6566 = vmatmul.mubr.bf16.gmra.mrb[0].mxu0 %v6298
    %v6567 = vpop.f32.mrb[0].mxu0
    %v6568 = vadd.f32 0.0, %v6567
    %v6569 = vpop.f32.mrb[0].mxu0
    %v6570 = vpop.f32.mrb[0].mxu0
    %v6571 = vadd.f32 0.0, %v6570
    %v6572 = vpop.f32.mrb[0].mxu0
    %6573 = vmatprep.mubr.bf16.mxu0 0
    %6574 = vmatmul.mubr.bf16.gmra.mrb[0].mxu0 %v6301
    %v6575 = vpop.f32.mrb[0].mxu0
    %v6576 = vadd.f32 0.0, %v6575
    %v6577 = vpop.f32.mrb[0].mxu0
    %v6578 = vpop.f32.mrb[0].mxu0
    %v6579 = vadd.f32 0.0, %v6578
    %v6580 = vpop.f32.mrb[0].mxu0
    %6581 = vmatprep.mubr.bf16.mxu0 0
    %6582 = vmatmul.mubr.bf16.gmra.mrb[0].mxu0 %v6304
    %v6583 = vpop.f32.mrb[0].mxu0
    %v6584 = vadd.f32 0.0, %v6583
    %v6585 = vpop.f32.mrb[0].mxu0
    %v6586 = vpop.f32.mrb[0].mxu0
    %v6587 = vadd.f32 0.0, %v6586
    %v6588 = vpop.f32.mrb[0].mxu0
    %6589 = vmatprep.mubr.bf16.mxu0 0
    %6590 = vmatmul.mubr.bf16.gmra.mrb[0].mxu0 %v6307
    %v6591 = vpop.f32.mrb[0].mxu0
    %v6592 = vadd.f32 0.0, %v6591
    %v6593 = vpop.f32.mrb[0].mxu0
    %v6594 = vpop.f32.mrb[0].mxu0
    %v6595 = vadd.f32 0.0, %v6594
    %v6596 = vpop.f32.mrb[0].mxu0
    %6597 = vdwg.mxu0
    %v6598 = vadd.f32 %v5891, %v6344
    %v6599 = vadd.f32 %v5892, %v6347
    %v6600 = vadd.f32 %v5893, %v6352
    %v6601 = vadd.f32 %v5894, %v6355
    %v6602 = vadd.f32 %v5895, %v6360
    %v6603 = vadd.f32 %v5896, %v6363
    %v6604 = vadd.f32 %v5897, %v6368
    %v6605 = vadd.f32 %v5898, %v6371
    %v6606 = vadd.f32 %v5899, %v6376
    %v6607 = vadd.f32 %v5900, %v6379
    %v6608 = vadd.f32 %v5901, %v6384
    %v6609 = vadd.f32 %v5902, %v6387
    %v6610 = vadd.f32 %v5903, %v6392
    %v6611 = vadd.f32 %v5904, %v6395
    %v6612 = vadd.f32 %v5905, %v6400
    %v6613 = vadd.f32 %v5906, %v6403
    %v6614 = vadd.f32 %v5907, %v6408
    %v6615 = vadd.f32 %v5908, %v6411
    %v6616 = vadd.f32 %v5909, %v6416
    %v6617 = vadd.f32 %v5910, %v6419
    %v6618 = vadd.f32 %v5911, %v6424
    %v6619 = vadd.f32 %v5912, %v6427
    %v6620 = vadd.f32 %v5913, %v6432
    %v6621 = vadd.f32 %v5914, %v6435
    %v6622 = vadd.f32 %v5915, %v6440
    %v6623 = vadd.f32 %v5916, %v6443
    %v6624 = vadd.f32 %v5917, %v6448
    %v6625 = vadd.f32 %v5918, %v6451
    %v6626 = vadd.f32 %v5919, %v6456
    %v6627 = vadd.f32 %v5920, %v6459
    %v6628 = vadd.f32 %v5921, %v6464
    %v6629 = vadd.f32 %v5922, %v6467
    %v6630 = vadd.f32 %v5923, %v6472
    %v6631 = vadd.f32 %v5924, %v6475
    %v6632 = vadd.f32 %v5925, %v6480
    %v6633 = vadd.f32 %v5926, %v6483
    %v6634 = vadd.f32 %v5927, %v6488
    %v6635 = vadd.f32 %v5928, %v6491
    %v6636 = vadd.f32 %v5929, %v6496
    %v6637 = vadd.f32 %v5930, %v6499
    %v6638 = vadd.f32 %v5931, %v6504
    %v6639 = vadd.f32 %v5932, %v6507
    %v6640 = vadd.f32 %v5933, %v6512
    %v6641 = vadd.f32 %v5934, %v6515
    %v6642 = vadd.f32 %v5935, %v6520
    %v6643 = vadd.f32 %v5936, %v6523
    %v6644 = vadd.f32 %v5937, %v6528
    %v6645 = vadd.f32 %v5938, %v6531
    %v6646 = vadd.f32 %v5939, %v6536
    %v6647 = vadd.f32 %v5940, %v6539
    %v6648 = vadd.f32 %v5941, %v6544
    %v6649 = vadd.f32 %v5942, %v6547
    %v6650 = vadd.f32 %v5943, %v6552
    %v6651 = vadd.f32 %v5944, %v6555
    %v6652 = vadd.f32 %v5945, %v6560
    %v6653 = vadd.f32 %v5946, %v6563
    %v6654 = vadd.f32 %v5947, %v6568
    %v6655 = vadd.f32 %v5948, %v6571
    %v6656 = vadd.f32 %v5949, %v6576
    %v6657 = vadd.f32 %v5950, %v6579
    %v6658 = vadd.f32 %v5951, %v6584
    %v6659 = vadd.f32 %v5952, %v6587
    %v6660 = vadd.f32 %v5953, %v6592
    %v6661 = vadd.f32 %v5954, %v6595
    %v6662 = vld [vmem:[%s5955] sm:$0xf]
    %v6663 = vld [vmem:[%s5955 + $0x4] sm:$0xf]
    %v6664 = vld [vmem:[%s5955 + $0x8] sm:$0x1]
    %v6665 = vld [vmem:[%s5955 + $0xc] sm:$0xf]
    %v6666 = vld [vmem:[%s5955 + $0x10] sm:$0xf]
    %v6667 = vld [vmem:[%s5955 + $0x14] sm:$0x1]
    %v6668 = vld [vmem:[%s5955 + $0x18] sm:$0xf]
    %v6669 = vld [vmem:[%s5955 + $0x1c] sm:$0xf]
    %v6670 = vld [vmem:[%s5955 + $0x20] sm:$0x1]
    %v6671 = vld [vmem:[%s5955 + $0x24] sm:$0xf]
    %v6672 = vld [vmem:[%s5955 + $0x28] sm:$0xf]
    %v6673 = vld [vmem:[%s5955 + $0x2c] sm:$0x1]
    %v6674 = vld [vmem:[%s5955 + $0x30] sm:$0xf]
    %v6675 = vld [vmem:[%s5955 + $0x34] sm:$0xf]
    %v6676 = vld [vmem:[%s5955 + $0x38] sm:$0x1]
    %v6677 = vld [vmem:[%s5955 + $0x3c] sm:$0xf]
    %v6678 = vld [vmem:[%s5955 + $0x40] sm:$0xf]
    %v6679 = vld [vmem:[%s5955 + $0x44] sm:$0x1]
    %v6680 = vld [vmem:[%s5955 + $0x48] sm:$0xf]
    %v6681 = vld [vmem:[%s5955 + $0x4c] sm:$0xf]
    %v6682 = vld [vmem:[%s5955 + $0x50] sm:$0x1]
    %v6683 = vld [vmem:[%s5955 + $0x54] sm:$0xf]
    %v6684 = vld [vmem:[%s5955 + $0x58] sm:$0xf]
    %v6685 = vld [vmem:[%s5955 + $0x5c] sm:$0x1]
    %v6686 = vld [vmem:[%s5955 + $0x60] sm:$0xf]
    %v6687 = vld [vmem:[%s5955 + $0x64] sm:$0xf]
    %v6688 = vld [vmem:[%s5955 + $0x68] sm:$0x1]
    %v6689 = vld [vmem:[%s5955 + $0x6c] sm:$0xf]
    %v6690 = vld [vmem:[%s5955 + $0x70] sm:$0xf]
    %v6691 = vld [vmem:[%s5955 + $0x74] sm:$0x1]
    %v6692 = vld [vmem:[%s5955 + $0x78] sm:$0xf]
    %v6693 = vld [vmem:[%s5955 + $0x7c] sm:$0xf]
    %v6694 = vld [vmem:[%s5955 + $0x80] sm:$0x1]
    %v6695 = vld [vmem:[%s5955 + $0x84] sm:$0xf]
    %v6696 = vld [vmem:[%s5955 + $0x88] sm:$0xf]
    %v6697 = vld [vmem:[%s5955 + $0x8c] sm:$0x1]
    %v6698 = vld [vmem:[%s5955 + $0x90] sm:$0xf]
    %v6699 = vld [vmem:[%s5955 + $0x94] sm:$0xf]
    %v6700 = vld [vmem:[%s5955 + $0x98] sm:$0x1]
    %v6701 = vld [vmem:[%s5955 + $0x9c] sm:$0xf]
    %v6702 = vld [vmem:[%s5955 + $0xa0] sm:$0xf]
    %v6703 = vld [vmem:[%s5955 + $0xa4] sm:$0x1]
    %v6704 = vld [vmem:[%s5955 + $0xa8] sm:$0xf]
    %v6705 = vld [vmem:[%s5955 + $0xac] sm:$0xf]
    %v6706 = vld [vmem:[%s5955 + $0xb0] sm:$0x1]
    %v6707 = vld [vmem:[%s5955 + $0xb4] sm:$0xf]
    %v6708 = vld [vmem:[%s5955 + $0xb8] sm:$0xf]
    %v6709 = vld [vmem:[%s5955 + $0xbc] sm:$0x1]
    %v6710 = vld [vmem:[%s5955 + $0xd8] sm:$0xf]
    %v6711 = vld [vmem:[%s5955 + $0xdc] sm:$0xf]
    %v6712 = vld [vmem:[%s5955 + $0xe0] sm:$0x1]
    %v6713 = vld [vmem:[%s5955 + $0xe4] sm:$0xf]
    %v6714 = vld [vmem:[%s5955 + $0xe8] sm:$0xf]
    %v6715 = vld [vmem:[%s5955 + $0xec] sm:$0x1]
    %v6716 = vld [vmem:[%s5955 + $0xf0] sm:$0xf]
    %v6717 = vld [vmem:[%s5955 + $0xf4] sm:$0xf]
    %v6718 = vld [vmem:[%s5955 + $0xf8] sm:$0x1]
    %v6719 = vld [vmem:[%s5955 + $0xfc] sm:$0xf]
    %v6720 = vld [vmem:[%s5955 + $0x100] sm:$0xf]
    %v6721 = vld [vmem:[%s5955 + $0x104] sm:$0x1]
    %v6722 = vld [vmem:[%s5955 + $0x108] sm:$0xf]
    %v6723 = vld [vmem:[%s5955 + $0x10c] sm:$0xf]
    %v6724 = vld [vmem:[%s5955 + $0x110] sm:$0x1]
    %v6725 = vld [vmem:[%s5955 + $0x114] sm:$0xf]
    %v6726 = vld [vmem:[%s5955 + $0x118] sm:$0xf]
    %v6727 = vld [vmem:[%s5955 + $0x11c] sm:$0x1]
    %v6728 = vld [vmem:[%s5955 + $0x120] sm:$0xf]
    %v6729 = vld [vmem:[%s5955 + $0x124] sm:$0xf]
    %v6730 = vld [vmem:[%s5955 + $0x128] sm:$0x1]
    %v6731 = vld [vmem:[%s5955 + $0x12c] sm:$0xf]
    %v6732 = vld [vmem:[%s5955 + $0x130] sm:$0xf]
    %v6733 = vld [vmem:[%s5955 + $0x134] sm:$0x1]
    %v6734 = vld [vmem:[%s5955 + $0x138] sm:$0xf]
    %v6735 = vld [vmem:[%s5955 + $0x13c] sm:$0xf]
    %v6736 = vld [vmem:[%s5955 + $0x140] sm:$0x1]
    %v6737 = vld [vmem:[%s5955 + $0x144] sm:$0xf]
    %v6738 = vld [vmem:[%s5955 + $0x148] sm:$0xf]
    %v6739 = vld [vmem:[%s5955 + $0x14c] sm:$0x1]
    %v6740 = vld [vmem:[%s5955 + $0x150] sm:$0xf]
    %v6741 = vld [vmem:[%s5955 + $0x154] sm:$0xf]
    %v6742 = vld [vmem:[%s5955 + $0x158] sm:$0x1]
    %v6743 = vld [vmem:[%s5955 + $0x15c] sm:$0xf]
    %v6744 = vld [vmem:[%s5955 + $0x160] sm:$0xf]
    %v6745 = vld [vmem:[%s5955 + $0x164] sm:$0x1]
    %v6746 = vld [vmem:[%s5955 + $0x168] sm:$0xf]
    %v6747 = vld [vmem:[%s5955 + $0x16c] sm:$0xf]
    %v6748 = vld [vmem:[%s5955 + $0x170] sm:$0x1]
    %v6749 = vld [vmem:[%s5955 + $0x174] sm:$0xf]
    %v6750 = vld [vmem:[%s5955 + $0x178] sm:$0xf]
    %v6751 = vld [vmem:[%s5955 + $0x17c] sm:$0x1]
    %v6752 = vld [vmem:[%s5955 + $0x180] sm:$0xf]
    %v6753 = vld [vmem:[%s5955 + $0x184] sm:$0xf]
    %v6754 = vld [vmem:[%s5955 + $0x188] sm:$0x1]
    %v6755 = vld [vmem:[%s5955 + $0x18c] sm:$0xf]
    %v6756 = vld [vmem:[%s5955 + $0x190] sm:$0xf]
    %v6757 = vld [vmem:[%s5955 + $0x194] sm:$0x1]
    %v6759 = vshrl.u32 %v6662, 16
    %v6761 = vrot.slane %v6759, 4
    %v6762 = vshll.u32 %v6662, 16
    %v6764 = vrot.slane %v6762, 5
    %v6765 = vor.u32 %v6761, %v6764
    %v6766 = vrot.slane %v6765, 4
    %v6768 = vshll.u32 %v6663, 16
    %v6770 = vrot.slane %v6768, 5
    %v6771 = vsel %vm122, %v6766, %v6770
    %v6772 = vshrl.u32 %v6663, 16
    %v6774 = vrot.slane %v6772, 4
    %v6775 = vor.u32 %v6774, %v6770
    %v6776 = vrot.slane %v6775, 4
    %v6778 = vshll.u32 %v6664, 16
    %v6780 = vrot.slane %v6778, 5
    %v6781 = vsel %vm122, %v6776, %v6780
    %v6783 = vshrl.u32 %v6665, 16
    %v6785 = vrot.slane %v6783, 4
    %v6786 = vshll.u32 %v6665, 16
    %v6788 = vrot.slane %v6786, 5
    %v6789 = vor.u32 %v6785, %v6788
    %v6790 = vrot.slane %v6789, 4
    %v6792 = vshll.u32 %v6666, 16
    %v6794 = vrot.slane %v6792, 5
    %v6795 = vsel %vm122, %v6790, %v6794
    %v6796 = vshrl.u32 %v6666, 16
    %v6798 = vrot.slane %v6796, 4
    %v6799 = vor.u32 %v6798, %v6794
    %v6800 = vrot.slane %v6799, 4
    %v6802 = vshll.u32 %v6667, 16
    %v6804 = vrot.slane %v6802, 5
    %v6805 = vsel %vm122, %v6800, %v6804
    %v6807 = vshrl.u32 %v6668, 16
    %v6809 = vrot.slane %v6807, 4
    %v6810 = vshll.u32 %v6668, 16
    %v6812 = vrot.slane %v6810, 5
    %v6813 = vor.u32 %v6809, %v6812
    %v6814 = vrot.slane %v6813, 4
    %v6816 = vshll.u32 %v6669, 16
    %v6818 = vrot.slane %v6816, 5
    %v6819 = vsel %vm122, %v6814, %v6818
    %v6820 = vshrl.u32 %v6669, 16
    %v6822 = vrot.slane %v6820, 4
    %v6823 = vor.u32 %v6822, %v6818
    %v6824 = vrot.slane %v6823, 4
    %v6826 = vshll.u32 %v6670, 16
    %v6828 = vrot.slane %v6826, 5
    %v6829 = vsel %vm122, %v6824, %v6828
    %v6831 = vshrl.u32 %v6671, 16
    %v6833 = vrot.slane %v6831, 4
    %v6834 = vshll.u32 %v6671, 16
    %v6836 = vrot.slane %v6834, 5
    %v6837 = vor.u32 %v6833, %v6836
    %v6838 = vrot.slane %v6837, 4
    %v6840 = vshll.u32 %v6672, 16
    %v6842 = vrot.slane %v6840, 5
    %v6843 = vsel %vm122, %v6838, %v6842
    %v6844 = vshrl.u32 %v6672, 16
    %v6846 = vrot.slane %v6844, 4
    %v6847 = vor.u32 %v6846, %v6842
    %v6848 = vrot.slane %v6847, 4
    %v6850 = vshll.u32 %v6673, 16
    %v6852 = vrot.slane %v6850, 5
    %v6853 = vsel %vm122, %v6848, %v6852
    %v6855 = vshrl.u32 %v6674, 16
    %v6857 = vrot.slane %v6855, 4
    %v6858 = vshll.u32 %v6674, 16
    %v6860 = vrot.slane %v6858, 5
    %v6861 = vor.u32 %v6857, %v6860
    %v6862 = vrot.slane %v6861, 4
    %v6864 = vshll.u32 %v6675, 16
    %v6866 = vrot.slane %v6864, 5
    %v6867 = vsel %vm122, %v6862, %v6866
    %v6868 = vshrl.u32 %v6675, 16
    %v6870 = vrot.slane %v6868, 4
    %v6871 = vor.u32 %v6870, %v6866
    %v6872 = vrot.slane %v6871, 4
    %v6874 = vshll.u32 %v6676, 16
    %v6876 = vrot.slane %v6874, 5
    %v6877 = vsel %vm122, %v6872, %v6876
    %v6879 = vshrl.u32 %v6677, 16
    %v6881 = vrot.slane %v6879, 4
    %v6882 = vshll.u32 %v6677, 16
    %v6884 = vrot.slane %v6882, 5
    %v6885 = vor.u32 %v6881, %v6884
    %v6886 = vrot.slane %v6885, 4
    %v6888 = vshll.u32 %v6678, 16
    %v6890 = vrot.slane %v6888, 5
    %v6891 = vsel %vm122, %v6886, %v6890
    %v6892 = vshrl.u32 %v6678, 16
    %v6894 = vrot.slane %v6892, 4
    %v6895 = vor.u32 %v6894, %v6890
    %v6896 = vrot.slane %v6895, 4
    %v6898 = vshll.u32 %v6679, 16
    %v6900 = vrot.slane %v6898, 5
    %v6901 = vsel %vm122, %v6896, %v6900
    %v6903 = vshrl.u32 %v6680, 16
    %v6905 = vrot.slane %v6903, 4
    %v6906 = vshll.u32 %v6680, 16
    %v6908 = vrot.slane %v6906, 5
    %v6909 = vor.u32 %v6905, %v6908
    %v6910 = vrot.slane %v6909, 4
    %v6912 = vshll.u32 %v6681, 16
    %v6914 = vrot.slane %v6912, 5
    %v6915 = vsel %vm122, %v6910, %v6914
    %v6916 = vshrl.u32 %v6681, 16
    %v6918 = vrot.slane %v6916, 4
    %v6919 = vor.u32 %v6918, %v6914
    %v6920 = vrot.slane %v6919, 4
    %v6922 = vshll.u32 %v6682, 16
    %v6924 = vrot.slane %v6922, 5
    %v6925 = vsel %vm122, %v6920, %v6924
    %v6927 = vshrl.u32 %v6683, 16
    %v6929 = vrot.slane %v6927, 4
    %v6930 = vshll.u32 %v6683, 16
    %v6932 = vrot.slane %v6930, 5
    %v6933 = vor.u32 %v6929, %v6932
    %v6934 = vrot.slane %v6933, 4
    %v6936 = vshll.u32 %v6684, 16
    %v6938 = vrot.slane %v6936, 5
    %v6939 = vsel %vm122, %v6934, %v6938
    %v6940 = vshrl.u32 %v6684, 16
    %v6942 = vrot.slane %v6940, 4
    %v6943 = vor.u32 %v6942, %v6938
    %v6944 = vrot.slane %v6943, 4
    %v6946 = vshll.u32 %v6685, 16
    %v6948 = vrot.slane %v6946, 5
    %v6949 = vsel %vm122, %v6944, %v6948
    %v6951 = vshrl.u32 %v6686, 16
    %v6953 = vrot.slane %v6951, 4
    %v6954 = vshll.u32 %v6686, 16
    %v6956 = vrot.slane %v6954, 5
    %v6957 = vor.u32 %v6953, %v6956
    %v6958 = vrot.slane %v6957, 4
    %v6960 = vshll.u32 %v6687, 16
    %v6962 = vrot.slane %v6960, 5
    %v6963 = vsel %vm122, %v6958, %v6962
    %v6964 = vshrl.u32 %v6687, 16
    %v6966 = vrot.slane %v6964, 4
    %v6967 = vor.u32 %v6966, %v6962
    %v6968 = vrot.slane %v6967, 4
    %v6970 = vshll.u32 %v6688, 16
    %v6972 = vrot.slane %v6970, 5
    %v6973 = vsel %vm122, %v6968, %v6972
    %v6975 = vshrl.u32 %v6689, 16
    %v6977 = vrot.slane %v6975, 4
    %v6978 = vshll.u32 %v6689, 16
    %v6980 = vrot.slane %v6978, 5
    %v6981 = vor.u32 %v6977, %v6980
    %v6982 = vrot.slane %v6981, 4
    %v6984 = vshll.u32 %v6690, 16
    %v6986 = vrot.slane %v6984, 5
    %v6987 = vsel %vm122, %v6982, %v6986
    %v6988 = vshrl.u32 %v6690, 16
    %v6990 = vrot.slane %v6988, 4
    %v6991 = vor.u32 %v6990, %v6986
    %v6992 = vrot.slane %v6991, 4
    %v6994 = vshll.u32 %v6691, 16
    %v6996 = vrot.slane %v6994, 5
    %v6997 = vsel %vm122, %v6992, %v6996
    %v6999 = vshrl.u32 %v6692, 16
    %v7001 = vrot.slane %v6999, 4
    %v7002 = vshll.u32 %v6692, 16
    %v7004 = vrot.slane %v7002, 5
    %v7005 = vor.u32 %v7001, %v7004
    %v7006 = vrot.slane %v7005, 4
    %v7008 = vshll.u32 %v6693, 16
    %v7010 = vrot.slane %v7008, 5
    %v7011 = vsel %vm122, %v7006, %v7010
    %v7012 = vshrl.u32 %v6693, 16
    %v7014 = vrot.slane %v7012, 4
    %v7015 = vor.u32 %v7014, %v7010
    %v7016 = vrot.slane %v7015, 4
    %v7018 = vshll.u32 %v6694, 16
    %v7020 = vrot.slane %v7018, 5
    %v7021 = vsel %vm122, %v7016, %v7020
    %v7023 = vshrl.u32 %v6695, 16
    %v7025 = vrot.slane %v7023, 4
    %v7026 = vshll.u32 %v6695, 16
    %v7028 = vrot.slane %v7026, 5
    %v7029 = vor.u32 %v7025, %v7028
    %v7030 = vrot.slane %v7029, 4
    %v7032 = vshll.u32 %v6696, 16
    %v7034 = vrot.slane %v7032, 5
    %v7035 = vsel %vm122, %v7030, %v7034
    %v7036 = vshrl.u32 %v6696, 16
    %v7038 = vrot.slane %v7036, 4
    %v7039 = vor.u32 %v7038, %v7034
    %v7040 = vrot.slane %v7039, 4
    %v7042 = vshll.u32 %v6697, 16
    %v7044 = vrot.slane %v7042, 5
    %v7045 = vsel %vm122, %v7040, %v7044
    %v7047 = vshrl.u32 %v6698, 16
    %v7049 = vrot.slane %v7047, 4
    %v7050 = vshll.u32 %v6698, 16
    %v7052 = vrot.slane %v7050, 5
    %v7053 = vor.u32 %v7049, %v7052
    %v7054 = vrot.slane %v7053, 4
    %v7056 = vshll.u32 %v6699, 16
    %v7058 = vrot.slane %v7056, 5
    %v7059 = vsel %vm122, %v7054, %v7058
    %v7060 = vshrl.u32 %v6699, 16
    %v7062 = vrot.slane %v7060, 4
    %v7063 = vor.u32 %v7062, %v7058
    %v7064 = vrot.slane %v7063, 4
    %v7066 = vshll.u32 %v6700, 16
    %v7068 = vrot.slane %v7066, 5
    %v7069 = vsel %vm122, %v7064, %v7068
    %v7071 = vshrl.u32 %v6701, 16
    %v7073 = vrot.slane %v7071, 4
    %v7074 = vshll.u32 %v6701, 16
    %v7076 = vrot.slane %v7074, 5
    %v7077 = vor.u32 %v7073, %v7076
    %v7078 = vrot.slane %v7077, 4
    %v7080 = vshll.u32 %v6702, 16
    %v7082 = vrot.slane %v7080, 5
    %v7083 = vsel %vm122, %v7078, %v7082
    %v7084 = vshrl.u32 %v6702, 16
    %v7086 = vrot.slane %v7084, 4
    %v7087 = vor.u32 %v7086, %v7082
    %v7088 = vrot.slane %v7087, 4
    %v7090 = vshll.u32 %v6703, 16
    %v7092 = vrot.slane %v7090, 5
    %v7093 = vsel %vm122, %v7088, %v7092
    %v7095 = vshrl.u32 %v6704, 16
    %v7097 = vrot.slane %v7095, 4
    %v7098 = vshll.u32 %v6704, 16
    %v7100 = vrot.slane %v7098, 5
    %v7101 = vor.u32 %v7097, %v7100
    %v7102 = vrot.slane %v7101, 4
    %v7104 = vshll.u32 %v6705, 16
    %v7106 = vrot.slane %v7104, 5
    %v7107 = vsel %vm122, %v7102, %v7106
    %v7108 = vshrl.u32 %v6705, 16
    %v7110 = vrot.slane %v7108, 4
    %v7111 = vor.u32 %v7110, %v7106
    %v7112 = vrot.slane %v7111, 4
    %v7114 = vshll.u32 %v6706, 16
    %v7116 = vrot.slane %v7114, 5
    %v7117 = vsel %vm122, %v7112, %v7116
    %v7119 = vshrl.u32 %v6707, 16
    %v7121 = vrot.slane %v7119, 4
    %v7122 = vshll.u32 %v6707, 16
    %v7124 = vrot.slane %v7122, 5
    %v7125 = vor.u32 %v7121, %v7124
    %v7126 = vrot.slane %v7125, 4
    %v7128 = vshll.u32 %v6708, 16
    %v7130 = vrot.slane %v7128, 5
    %v7131 = vsel %vm122, %v7126, %v7130
    %v7132 = vshrl.u32 %v6708, 16
    %v7134 = vrot.slane %v7132, 4
    %v7135 = vor.u32 %v7134, %v7130
    %v7136 = vrot.slane %v7135, 4
    %v7138 = vshll.u32 %v6709, 16
    %v7140 = vrot.slane %v7138, 5
    %v7141 = vsel %vm122, %v7136, %v7140
    %v7143 = vshrl.u32 %v6710, 16
    %v7145 = vrot.slane %v7143, 4
    %v7146 = vshll.u32 %v6710, 16
    %v7148 = vrot.slane %v7146, 5
    %v7149 = vor.u32 %v7145, %v7148
    %v7150 = vrot.slane %v7149, 4
    %v7152 = vshll.u32 %v6711, 16
    %v7154 = vrot.slane %v7152, 5
    %v7155 = vsel %vm122, %v7150, %v7154
    %v7156 = vshrl.u32 %v6711, 16
    %v7158 = vrot.slane %v7156, 4
    %v7159 = vor.u32 %v7158, %v7154
    %v7160 = vrot.slane %v7159, 4
    %v7162 = vshll.u32 %v6712, 16
    %v7164 = vrot.slane %v7162, 5
    %v7165 = vsel %vm122, %v7160, %v7164
    %v7167 = vshrl.u32 %v6713, 16
    %v7169 = vrot.slane %v7167, 4
    %v7170 = vshll.u32 %v6713, 16
    %v7172 = vrot.slane %v7170, 5
    %v7173 = vor.u32 %v7169, %v7172
    %v7174 = vrot.slane %v7173, 4
    %v7176 = vshll.u32 %v6714, 16
    %v7178 = vrot.slane %v7176, 5
    %v7179 = vsel %vm122, %v7174, %v7178
    %v7180 = vshrl.u32 %v6714, 16
    %v7182 = vrot.slane %v7180, 4
    %v7183 = vor.u32 %v7182, %v7178
    %v7184 = vrot.slane %v7183, 4
    %v7186 = vshll.u32 %v6715, 16
    %v7188 = vrot.slane %v7186, 5
    %v7189 = vsel %vm122, %v7184, %v7188
    %v7191 = vshrl.u32 %v6716, 16
    %v7193 = vrot.slane %v7191, 4
    %v7194 = vshll.u32 %v6716, 16
    %v7196 = vrot.slane %v7194, 5
    %v7197 = vor.u32 %v7193, %v7196
    %v7198 = vrot.slane %v7197, 4
    %v7200 = vshll.u32 %v6717, 16
    %v7202 = vrot.slane %v7200, 5
    %v7203 = vsel %vm122, %v7198, %v7202
    %v7204 = vshrl.u32 %v6717, 16
    %v7206 = vrot.slane %v7204, 4
    %v7207 = vor.u32 %v7206, %v7202
    %v7208 = vrot.slane %v7207, 4
    %v7210 = vshll.u32 %v6718, 16
    %v7212 = vrot.slane %v7210, 5
    %v7213 = vsel %vm122, %v7208, %v7212
    %v7215 = vshrl.u32 %v6719, 16
    %v7217 = vrot.slane %v7215, 4
    %v7218 = vshll.u32 %v6719, 16
    %v7220 = vrot.slane %v7218, 5
    %v7221 = vor.u32 %v7217, %v7220
    %v7222 = vrot.slane %v7221, 4
    %v7224 = vshll.u32 %v6720, 16
    %v7226 = vrot.slane %v7224, 5
    %v7227 = vsel %vm122, %v7222, %v7226
    %v7228 = vshrl.u32 %v6720, 16
    %v7230 = vrot.slane %v7228, 4
    %v7231 = vor.u32 %v7230, %v7226
    %v7232 = vrot.slane %v7231, 4
    %v7234 = vshll.u32 %v6721, 16
    %v7236 = vrot.slane %v7234, 5
    %v7237 = vsel %vm122, %v7232, %v7236
    %v7239 = vshrl.u32 %v6722, 16
    %v7241 = vrot.slane %v7239, 4
    %v7242 = vshll.u32 %v6722, 16
    %v7244 = vrot.slane %v7242, 5
    %v7245 = vor.u32 %v7241, %v7244
    %v7246 = vrot.slane %v7245, 4
    %v7248 = vshll.u32 %v6723, 16
    %v7250 = vrot.slane %v7248, 5
    %v7251 = vsel %vm122, %v7246, %v7250
    %v7252 = vshrl.u32 %v6723, 16
    %v7254 = vrot.slane %v7252, 4
    %v7255 = vor.u32 %v7254, %v7250
    %v7256 = vrot.slane %v7255, 4
    %v7258 = vshll.u32 %v6724, 16
    %v7260 = vrot.slane %v7258, 5
    %v7261 = vsel %vm122, %v7256, %v7260
    %v7263 = vshrl.u32 %v6725, 16
    %v7265 = vrot.slane %v7263, 4
    %v7266 = vshll.u32 %v6725, 16
    %v7268 = vrot.slane %v7266, 5
    %v7269 = vor.u32 %v7265, %v7268
    %v7270 = vrot.slane %v7269, 4
    %v7272 = vshll.u32 %v6726, 16
    %v7274 = vrot.slane %v7272, 5
    %v7275 = vsel %vm122, %v7270, %v7274
    %v7276 = vshrl.u32 %v6726, 16
    %v7278 = vrot.slane %v7276, 4
    %v7279 = vor.u32 %v7278, %v7274
    %v7280 = vrot.slane %v7279, 4
    %v7282 = vshll.u32 %v6727, 16
    %v7284 = vrot.slane %v7282, 5
    %v7285 = vsel %vm122, %v7280, %v7284
    %v7287 = vshrl.u32 %v6728, 16
    %v7289 = vrot.slane %v7287, 4
    %v7290 = vshll.u32 %v6728, 16
    %v7292 = vrot.slane %v7290, 5
    %v7293 = vor.u32 %v7289, %v7292
    %v7294 = vrot.slane %v7293, 4
    %v7296 = vshll.u32 %v6729, 16
    %v7298 = vrot.slane %v7296, 5
    %v7299 = vsel %vm122, %v7294, %v7298
    %v7300 = vshrl.u32 %v6729, 16
    %v7302 = vrot.slane %v7300, 4
    %v7303 = vor.u32 %v7302, %v7298
    %v7304 = vrot.slane %v7303, 4
    %v7306 = vshll.u32 %v6730, 16
    %v7308 = vrot.slane %v7306, 5
    %v7309 = vsel %vm122, %v7304, %v7308
    %v7311 = vshrl.u32 %v6731, 16
    %v7313 = vrot.slane %v7311, 4
    %v7314 = vshll.u32 %v6731, 16
    %v7316 = vrot.slane %v7314, 5
    %v7317 = vor.u32 %v7313, %v7316
    %v7318 = vrot.slane %v7317, 4
    %v7320 = vshll.u32 %v6732, 16
    %v7322 = vrot.slane %v7320, 5
    %v7323 = vsel %vm122, %v7318, %v7322
    %v7324 = vshrl.u32 %v6732, 16
    %v7326 = vrot.slane %v7324, 4
    %v7327 = vor.u32 %v7326, %v7322
    %v7328 = vrot.slane %v7327, 4
    %v7330 = vshll.u32 %v6733, 16
    %v7332 = vrot.slane %v7330, 5
    %v7333 = vsel %vm122, %v7328, %v7332
    %v7335 = vshrl.u32 %v6734, 16
    %v7337 = vrot.slane %v7335, 4
    %v7338 = vshll.u32 %v6734, 16
    %v7340 = vrot.slane %v7338, 5
    %v7341 = vor.u32 %v7337, %v7340
    %v7342 = vrot.slane %v7341, 4
    %v7344 = vshll.u32 %v6735, 16
    %v7346 = vrot.slane %v7344, 5
    %v7347 = vsel %vm122, %v7342, %v7346
    %v7348 = vshrl.u32 %v6735, 16
    %v7350 = vrot.slane %v7348, 4
    %v7351 = vor.u32 %v7350, %v7346
    %v7352 = vrot.slane %v7351, 4
    %v7354 = vshll.u32 %v6736, 16
    %v7356 = vrot.slane %v7354, 5
    %v7357 = vsel %vm122, %v7352, %v7356
    %v7359 = vshrl.u32 %v6737, 16
    %v7361 = vrot.slane %v7359, 4
    %v7362 = vshll.u32 %v6737, 16
    %v7364 = vrot.slane %v7362, 5
    %v7365 = vor.u32 %v7361, %v7364
    %v7366 = vrot.slane %v7365, 4
    %v7368 = vshll.u32 %v6738, 16
    %v7370 = vrot.slane %v7368, 5
    %v7371 = vsel %vm122, %v7366, %v7370
    %v7372 = vshrl.u32 %v6738, 16
    %v7374 = vrot.slane %v7372, 4
    %v7375 = vor.u32 %v7374, %v7370
    %v7376 = vrot.slane %v7375, 4
    %v7378 = vshll.u32 %v6739, 16
    %v7380 = vrot.slane %v7378, 5
    %v7381 = vsel %vm122, %v7376, %v7380
    %v7383 = vshrl.u32 %v6740, 16
    %v7385 = vrot.slane %v7383, 4
    %v7386 = vshll.u32 %v6740, 16
    %v7388 = vrot.slane %v7386, 5
    %v7389 = vor.u32 %v7385, %v7388
    %v7390 = vrot.slane %v7389, 4
    %v7392 = vshll.u32 %v6741, 16
    %v7394 = vrot.slane %v7392, 5
    %v7395 = vsel %vm122, %v7390, %v7394
    %v7396 = vshrl.u32 %v6741, 16
    %v7398 = vrot.slane %v7396, 4
    %v7399 = vor.u32 %v7398, %v7394
    %v7400 = vrot.slane %v7399, 4
    %v7402 = vshll.u32 %v6742, 16
    %v7404 = vrot.slane %v7402, 5
    %v7405 = vsel %vm122, %v7400, %v7404
    %v7407 = vshrl.u32 %v6743, 16
    %v7409 = vrot.slane %v7407, 4
    %v7410 = vshll.u32 %v6743, 16
    %v7412 = vrot.slane %v7410, 5
    %v7413 = vor.u32 %v7409, %v7412
    %v7414 = vrot.slane %v7413, 4
    %v7416 = vshll.u32 %v6744, 16
    %v7418 = vrot.slane %v7416, 5
    %v7419 = vsel %vm122, %v7414, %v7418
    %v7420 = vshrl.u32 %v6744, 16
    %v7422 = vrot.slane %v7420, 4
    %v7423 = vor.u32 %v7422, %v7418
    %v7424 = vrot.slane %v7423, 4
    %v7426 = vshll.u32 %v6745, 16
    %v7428 = vrot.slane %v7426, 5
    %v7429 = vsel %vm122, %v7424, %v7428
    %v7431 = vshrl.u32 %v6746, 16
    %v7433 = vrot.slane %v7431, 4
    %v7434 = vshll.u32 %v6746, 16
    %v7436 = vrot.slane %v7434, 5
    %v7437 = vor.u32 %v7433, %v7436
    %v7438 = vrot.slane %v7437, 4
    %v7440 = vshll.u32 %v6747, 16
    %v7442 = vrot.slane %v7440, 5
    %v7443 = vsel %vm122, %v7438, %v7442
    %v7444 = vshrl.u32 %v6747, 16
    %v7446 = vrot.slane %v7444, 4
    %v7447 = vor.u32 %v7446, %v7442
    %v7448 = vrot.slane %v7447, 4
    %v7450 = vshll.u32 %v6748, 16
    %v7452 = vrot.slane %v7450, 5
    %v7453 = vsel %vm122, %v7448, %v7452
    %v7455 = vshrl.u32 %v6749, 16
    %v7457 = vrot.slane %v7455, 4
    %v7458 = vshll.u32 %v6749, 16
    %v7460 = vrot.slane %v7458, 5
    %v7461 = vor.u32 %v7457, %v7460
    %v7462 = vrot.slane %v7461, 4
    %v7464 = vshll.u32 %v6750, 16
    %v7466 = vrot.slane %v7464, 5
    %v7467 = vsel %vm122, %v7462, %v7466
    %v7468 = vshrl.u32 %v6750, 16
    %v7470 = vrot.slane %v7468, 4
    %v7471 = vor.u32 %v7470, %v7466
    %v7472 = vrot.slane %v7471, 4
    %v7474 = vshll.u32 %v6751, 16
    %v7476 = vrot.slane %v7474, 5
    %v7477 = vsel %vm122, %v7472, %v7476
    %v7479 = vshrl.u32 %v6752, 16
    %v7481 = vrot.slane %v7479, 4
    %v7482 = vshll.u32 %v6752, 16
    %v7484 = vrot.slane %v7482, 5
    %v7485 = vor.u32 %v7481, %v7484
    %v7486 = vrot.slane %v7485, 4
    %v7488 = vshll.u32 %v6753, 16
    %v7490 = vrot.slane %v7488, 5
    %v7491 = vsel %vm122, %v7486, %v7490
    %v7492 = vshrl.u32 %v6753, 16
    %v7494 = vrot.slane %v7492, 4
    %v7495 = vor.u32 %v7494, %v7490
    %v7496 = vrot.slane %v7495, 4
    %v7498 = vshll.u32 %v6754, 16
    %v7500 = vrot.slane %v7498, 5
    %v7501 = vsel %vm122, %v7496, %v7500
    %v7503 = vshrl.u32 %v6755, 16
    %v7505 = vrot.slane %v7503, 4
    %v7506 = vshll.u32 %v6755, 16
    %v7508 = vrot.slane %v7506, 5
    %v7509 = vor.u32 %v7505, %v7508
    %v7510 = vrot.slane %v7509, 4
    %v7512 = vshll.u32 %v6756, 16
    %v7514 = vrot.slane %v7512, 5
    %v7515 = vsel %vm122, %v7510, %v7514
    %v7516 = vshrl.u32 %v6756, 16
    %v7518 = vrot.slane %v7516, 4
    %v7519 = vor.u32 %v7518, %v7514
    %v7520 = vrot.slane %v7519, 4
    %v7522 = vshll.u32 %v6757, 16
    %v7524 = vrot.slane %v7522, 5
    %v7525 = vsel %vm122, %v7520, %v7524
    %s7526 = scalar_lea.vmem %s1, 224
    %v7527 = vld [vmem:[%s7526] sm:$0xf]
    %v7528 = vld [vmem:[%s7526 + $0x4] sm:$0xf]
    %v7529 = vld [vmem:[%s7526 + $0x8] sm:$0xf]
    %v7530 = vld [vmem:[%s7526 + $0xc] sm:$0xf]
    %v7531 = vld [vmem:[%s7526 + $0x10] sm:$0xf]
    %v7532 = vld [vmem:[%s7526 + $0x14] sm:$0xf]
    %v7533 = vld [vmem:[%s7526 + $0x18] sm:$0xf]
    %v7534 = vld [vmem:[%s7526 + $0x1c] sm:$0xf]
    %v7535 = vunpack.c.l.b16 %v6771
    %v7536 = vunpack.c.l.b16 %v6781
    %v7537 = vunpack.c.l.b16 %v6795
    %v7538 = vunpack.c.l.b16 %v6805
    %v7539 = vunpack.c.l.b16 %v6819
    %v7540 = vunpack.c.l.b16 %v6829
    %v7541 = vunpack.c.l.b16 %v6843
    %v7542 = vunpack.c.l.b16 %v6853
    %v7543 = vunpack.c.l.b16 %v6867
    %v7544 = vunpack.c.l.b16 %v6877
    %v7545 = vunpack.c.l.b16 %v6891
    %v7546 = vunpack.c.l.b16 %v6901
    %v7547 = vunpack.c.l.b16 %v6915
    %v7548 = vunpack.c.l.b16 %v6925
    %v7549 = vunpack.c.l.b16 %v6939
    %v7550 = vunpack.c.l.b16 %v6949
    %v7551 = vunpack.c.l.b16 %v6963
    %v7552 = vunpack.c.l.b16 %v6973
    %v7553 = vunpack.c.l.b16 %v6987
    %v7554 = vunpack.c.l.b16 %v6997
    %v7555 = vunpack.c.l.b16 %v7011
    %v7556 = vunpack.c.l.b16 %v7021
    %v7557 = vunpack.c.l.b16 %v7035
    %v7558 = vunpack.c.l.b16 %v7045
    %v7559 = vunpack.c.l.b16 %v7059
    %v7560 = vunpack.c.l.b16 %v7069
    %v7561 = vunpack.c.l.b16 %v7083
    %v7562 = vunpack.c.l.b16 %v7093
    %v7563 = vunpack.c.l.b16 %v7107
    %v7564 = vunpack.c.l.b16 %v7117
    %v7565 = vunpack.c.l.b16 %v7131
    %v7566 = vunpack.c.l.b16 %v7141
    %v7567 = vunpack.c.l.b16 %v7155
    %v7568 = vunpack.c.l.b16 %v7165
    %v7569 = vunpack.c.l.b16 %v7179
    %v7570 = vunpack.c.l.b16 %v7189
    %v7571 = vunpack.c.l.b16 %v7203
    %v7572 = vunpack.c.l.b16 %v7213
    %v7573 = vunpack.c.l.b16 %v7227
    %v7574 = vunpack.c.l.b16 %v7237
    %v7575 = vunpack.c.l.b16 %v7251
    %v7576 = vunpack.c.l.b16 %v7261
    %v7577 = vunpack.c.l.b16 %v7275
    %v7578 = vunpack.c.l.b16 %v7285
    %v7579 = vunpack.c.l.b16 %v7299
    %v7580 = vunpack.c.l.b16 %v7309
    %v7581 = vunpack.c.l.b16 %v7323
    %v7582 = vunpack.c.l.b16 %v7333
    %v7583 = vunpack.c.l.b16 %v7347
    %v7584 = vunpack.c.l.b16 %v7357
    %v7585 = vunpack.c.l.b16 %v7371
    %v7586 = vunpack.c.l.b16 %v7381
    %v7587 = vunpack.c.l.b16 %v7395
    %v7588 = vunpack.c.l.b16 %v7405
    %v7589 = vunpack.c.l.b16 %v7419
    %v7590 = vunpack.c.l.b16 %v7429
    %v7591 = vunpack.c.l.b16 %v7443
    %v7592 = vunpack.c.l.b16 %v7453
    %v7593 = vunpack.c.l.b16 %v7467
    %v7594 = vunpack.c.l.b16 %v7477
    %v7595 = vunpack.c.l.b16 %v7491
    %v7596 = vunpack.c.l.b16 %v7501
    %v7597 = vunpack.c.l.b16 %v7515
    %v7598 = vunpack.c.l.b16 %v7525
    %v7599 = vpack.c.b16 %v7536, %v7535
    %v7600 = vpack.c.b16 %v7538, %v7537
    %v7601 = vpack.c.b16 %v7540, %v7539
    %v7602 = vpack.c.b16 %v7542, %v7541
    %v7603 = vpack.c.b16 %v7544, %v7543
    %v7604 = vpack.c.b16 %v7546, %v7545
    %v7605 = vpack.c.b16 %v7548, %v7547
    %v7606 = vpack.c.b16 %v7550, %v7549
    %v7607 = vpack.c.b16 %v7552, %v7551
    %v7608 = vpack.c.b16 %v7554, %v7553
    %v7609 = vpack.c.b16 %v7556, %v7555
    %v7610 = vpack.c.b16 %v7558, %v7557
    %v7611 = vpack.c.b16 %v7560, %v7559
    %v7612 = vpack.c.b16 %v7562, %v7561
    %v7613 = vpack.c.b16 %v7564, %v7563
    %v7614 = vpack.c.b16 %v7566, %v7565
    %v7615 = vpack.c.b16 %v7568, %v7567
    %v7616 = vpack.c.b16 %v7570, %v7569
    %v7617 = vpack.c.b16 %v7572, %v7571
    %v7618 = vpack.c.b16 %v7574, %v7573
    %v7619 = vpack.c.b16 %v7576, %v7575
    %v7620 = vpack.c.b16 %v7578, %v7577
    %v7621 = vpack.c.b16 %v7580, %v7579
    %v7622 = vpack.c.b16 %v7582, %v7581
    %v7623 = vpack.c.b16 %v7584, %v7583
    %v7624 = vpack.c.b16 %v7586, %v7585
    %v7625 = vpack.c.b16 %v7588, %v7587
    %v7626 = vpack.c.b16 %v7590, %v7589
    %v7627 = vpack.c.b16 %v7592, %v7591
    %v7628 = vpack.c.b16 %v7594, %v7593
    %v7629 = vpack.c.b16 %v7596, %v7595
    %v7630 = vpack.c.b16 %v7598, %v7597
    %v7639 = vunpack.c.l.b16 %v7527
    %v7640 = vunpack.c.l.b16 %v7528
    %v7641 = vunpack.c.l.b16 %v7529
    %v7642 = vunpack.c.l.b16 %v7530
    %v7643 = vunpack.c.l.b16 %v7531
    %v7644 = vunpack.c.l.b16 %v7532
    %v7645 = vunpack.c.l.b16 %v7533
    %v7646 = vunpack.c.l.b16 %v7534
    %v7647 = vpack.c.b16 %v7640, %v7639
    %v7648 = vpack.c.b16 %v7642, %v7641
    %v7649 = vpack.c.b16 %v7644, %v7643
    %v7650 = vpack.c.b16 %v7646, %v7645
    %v7656 = vsel %vm1020, %v7599, 0
    %v7659 = vsel %vm1020, %v7600, 0
    %v7662 = vsel %vm1020, %v7601, 0
    %v7665 = vsel %vm1020, %v7602, 0
    %v7668 = vsel %vm1020, %v7603, 0
    %v7671 = vsel %vm1020, %v7604, 0
    %v7674 = vsel %vm1020, %v7605, 0
    %v7677 = vsel %vm1020, %v7606, 0
    %v7680 = vsel %vm1020, %v7607, 0
    %v7683 = vsel %vm1020, %v7608, 0
    %v7686 = vsel %vm1020, %v7609, 0
    %v7689 = vsel %vm1020, %v7610, 0
    %v7692 = vsel %vm1020, %v7611, 0
    %v7695 = vsel %vm1020, %v7612, 0
    %v7698 = vsel %vm1020, %v7613, 0
    %v7701 = vsel %vm1020, %v7614, 0
    %v7704 = vsel %vm1020, %v7615, 0
    %v7707 = vsel %vm1020, %v7616, 0
    %v7710 = vsel %vm1020, %v7617, 0
    %v7713 = vsel %vm1020, %v7618, 0
    %v7716 = vsel %vm1020, %v7619, 0
    %v7719 = vsel %vm1020, %v7620, 0
    %v7722 = vsel %vm1020, %v7621, 0
    %v7725 = vsel %vm1020, %v7622, 0
    %v7728 = vsel %vm1020, %v7623, 0
    %v7731 = vsel %vm1020, %v7624, 0
    %v7734 = vsel %vm1020, %v7625, 0
    %v7737 = vsel %vm1020, %v7626, 0
    %v7740 = vsel %vm1020, %v7627, 0
    %v7743 = vsel %vm1020, %v7628, 0
    %v7746 = vsel %vm1020, %v7629, 0
    %v7749 = vsel %vm1020, %v7630, 0
    %7751 = vmatprep.subr.bf16.mxu0 0
    %7752 = vmatpush1.bf16.msra.mxu0 %v7647
    %7753 = vmatprep.subr.bf16.mxu0 0
    %7754 = vmatpush1.bf16.msra.mxu0 %v7648
    %7755 = vmatprep.subr.bf16.mxu0 0
    %7756 = vmatpush1.bf16.msra.mxu0 %v7649
    %7757 = vmatprep.subr.bf16.mxu0 0
    %7758 = vmatpush1.bf16.msra.mxu0 %v7650
    %7759 = vmatprep.subr.bf16.mxu0 0
    %7760 = vmatpush1.bf16.msra.mxu0 0
    %7761 = vmatprep.subr.bf16.mxu0 0
    %7762 = vmatpush1.bf16.msra.mxu0 0
    %7763 = vmatprep.subr.bf16.mxu0 0
    %7764 = vmatpush1.bf16.msra.mxu0 0
    %7765 = vmatprep.subr.bf16.mxu0 0
    %7766 = vmatpush1.bf16.msra.mxu0 0
    %7767 = vmatprep.subr.bf16.mxu0 0
    %7768 = vmatpush1.bf16.msra.mxu0 0
    %7769 = vmatprep.subr.bf16.mxu0 0
    %7770 = vmatpush1.bf16.msra.mxu0 0
    %7771 = vmatprep.subr.bf16.mxu0 0
    %7772 = vmatpush1.bf16.msra.mxu0 0
    %7773 = vmatprep.subr.bf16.mxu0 0
    %7774 = vmatpush1.bf16.msra.mxu0 0
    %7775 = vmatprep.subr.bf16.mxu0 0
    %7776 = vmatpush1.bf16.msra.mxu0 0
    %7777 = vmatprep.subr.bf16.mxu0 0
    %7778 = vmatpush1.bf16.msra.mxu0 0
    %7779 = vmatprep.subr.bf16.mxu0 0
    %7780 = vmatpush1.bf16.msra.mxu0 0
    %7781 = vmatprep.subr.bf16.mxu0 0
    %7782 = vmatpush1.bf16.msra.mxu0 0
    %7783 = vmatprep.mubr.bf16.mxu0 0
    %7784 = vmatmul.mubr.bf16.gmra.mrb[0].mxu0 %v7656
    %v7785 = vpop.f32.mrb[0].mxu0
    %v7786 = vadd.f32 0.0, %v7785
    %v7787 = vpop.f32.mrb[0].mxu0
    %v7788 = vpop.f32.mrb[0].mxu0
    %v7789 = vadd.f32 0.0, %v7788
    %v7790 = vpop.f32.mrb[0].mxu0
    %7791 = vmatprep.mubr.bf16.mxu0 0
    %7792 = vmatmul.mubr.bf16.gmra.mrb[0].mxu0 %v7659
    %v7793 = vpop.f32.mrb[0].mxu0
    %v7794 = vadd.f32 0.0, %v7793
    %v7795 = vpop.f32.mrb[0].mxu0
    %v7796 = vpop.f32.mrb[0].mxu0
    %v7797 = vadd.f32 0.0, %v7796
    %v7798 = vpop.f32.mrb[0].mxu0
    %7799 = vmatprep.mubr.bf16.mxu0 0
    %7800 = vmatmul.mubr.bf16.gmra.mrb[0].mxu0 %v7662
    %v7801 = vpop.f32.mrb[0].mxu0
    %v7802 = vadd.f32 0.0, %v7801
    %v7803 = vpop.f32.mrb[0].mxu0
    %v7804 = vpop.f32.mrb[0].mxu0
    %v7805 = vadd.f32 0.0, %v7804
    %v7806 = vpop.f32.mrb[0].mxu0
    %7807 = vmatprep.mubr.bf16.mxu0 0
    %7808 = vmatmul.mubr.bf16.gmra.mrb[0].mxu0 %v7665
    %v7809 = vpop.f32.mrb[0].mxu0
    %v7810 = vadd.f32 0.0, %v7809
    %v7811 = vpop.f32.mrb[0].mxu0
    %v7812 = vpop.f32.mrb[0].mxu0
    %v7813 = vadd.f32 0.0, %v7812
    %v7814 = vpop.f32.mrb[0].mxu0
    %7815 = vmatprep.mubr.bf16.mxu0 0
    %7816 = vmatmul.mubr.bf16.gmra.mrb[0].mxu0 %v7668
    %v7817 = vpop.f32.mrb[0].mxu0
    %v7818 = vadd.f32 0.0, %v7817
    %v7819 = vpop.f32.mrb[0].mxu0
    %v7820 = vpop.f32.mrb[0].mxu0
    %v7821 = vadd.f32 0.0, %v7820
    %v7822 = vpop.f32.mrb[0].mxu0
    %7823 = vmatprep.mubr.bf16.mxu0 0
    %7824 = vmatmul.mubr.bf16.gmra.mrb[0].mxu0 %v7671
    %v7825 = vpop.f32.mrb[0].mxu0
    %v7826 = vadd.f32 0.0, %v7825
    %v7827 = vpop.f32.mrb[0].mxu0
    %v7828 = vpop.f32.mrb[0].mxu0
    %v7829 = vadd.f32 0.0, %v7828
    %v7830 = vpop.f32.mrb[0].mxu0
    %7831 = vmatprep.mubr.bf16.mxu0 0
    %7832 = vmatmul.mubr.bf16.gmra.mrb[0].mxu0 %v7674
    %v7833 = vpop.f32.mrb[0].mxu0
    %v7834 = vadd.f32 0.0, %v7833
    %v7835 = vpop.f32.mrb[0].mxu0
    %v7836 = vpop.f32.mrb[0].mxu0
    %v7837 = vadd.f32 0.0, %v7836
    %v7838 = vpop.f32.mrb[0].mxu0
    %7839 = vmatprep.mubr.bf16.mxu0 0
    %7840 = vmatmul.mubr.bf16.gmra.mrb[0].mxu0 %v7677
    %v7841 = vpop.f32.mrb[0].mxu0
    %v7842 = vadd.f32 0.0, %v7841
    %v7843 = vpop.f32.mrb[0].mxu0
    %v7844 = vpop.f32.mrb[0].mxu0
    %v7845 = vadd.f32 0.0, %v7844
    %v7846 = vpop.f32.mrb[0].mxu0
    %7847 = vmatprep.mubr.bf16.mxu0 0
    %7848 = vmatmul.mubr.bf16.gmra.mrb[0].mxu0 %v7680
    %v7849 = vpop.f32.mrb[0].mxu0
    %v7850 = vadd.f32 0.0, %v7849
    %v7851 = vpop.f32.mrb[0].mxu0
    %v7852 = vpop.f32.mrb[0].mxu0
    %v7853 = vadd.f32 0.0, %v7852
    %v7854 = vpop.f32.mrb[0].mxu0
    %7855 = vmatprep.mubr.bf16.mxu0 0
    %7856 = vmatmul.mubr.bf16.gmra.mrb[0].mxu0 %v7683
    %v7857 = vpop.f32.mrb[0].mxu0
    %v7858 = vadd.f32 0.0, %v7857
    %v7859 = vpop.f32.mrb[0].mxu0
    %v7860 = vpop.f32.mrb[0].mxu0
    %v7861 = vadd.f32 0.0, %v7860
    %v7862 = vpop.f32.mrb[0].mxu0
    %7863 = vmatprep.mubr.bf16.mxu0 0
    %7864 = vmatmul.mubr.bf16.gmra.mrb[0].mxu0 %v7686
    %v7865 = vpop.f32.mrb[0].mxu0
    %v7866 = vadd.f32 0.0, %v7865
    %v7867 = vpop.f32.mrb[0].mxu0
    %v7868 = vpop.f32.mrb[0].mxu0
    %v7869 = vadd.f32 0.0, %v7868
    %v7870 = vpop.f32.mrb[0].mxu0
    %7871 = vmatprep.mubr.bf16.mxu0 0
    %7872 = vmatmul.mubr.bf16.gmra.mrb[0].mxu0 %v7689
    %v7873 = vpop.f32.mrb[0].mxu0
    %v7874 = vadd.f32 0.0, %v7873
    %v7875 = vpop.f32.mrb[0].mxu0
    %v7876 = vpop.f32.mrb[0].mxu0
    %v7877 = vadd.f32 0.0, %v7876
    %v7878 = vpop.f32.mrb[0].mxu0
    %7879 = vmatprep.mubr.bf16.mxu0 0
    %7880 = vmatmul.mubr.bf16.gmra.mrb[0].mxu0 %v7692
    %v7881 = vpop.f32.mrb[0].mxu0
    %v7882 = vadd.f32 0.0, %v7881
    %v7883 = vpop.f32.mrb[0].mxu0
    %v7884 = vpop.f32.mrb[0].mxu0
    %v7885 = vadd.f32 0.0, %v7884
    %v7886 = vpop.f32.mrb[0].mxu0
    %7887 = vmatprep.mubr.bf16.mxu0 0
    %7888 = vmatmul.mubr.bf16.gmra.mrb[0].mxu0 %v7695
    %v7889 = vpop.f32.mrb[0].mxu0
    %v7890 = vadd.f32 0.0, %v7889
    %v7891 = vpop.f32.mrb[0].mxu0
    %v7892 = vpop.f32.mrb[0].mxu0
    %v7893 = vadd.f32 0.0, %v7892
    %v7894 = vpop.f32.mrb[0].mxu0
    %7895 = vmatprep.mubr.bf16.mxu0 0
    %7896 = vmatmul.mubr.bf16.gmra.mrb[0].mxu0 %v7698
    %v7897 = vpop.f32.mrb[0].mxu0
    %v7898 = vadd.f32 0.0, %v7897
    %v7899 = vpop.f32.mrb[0].mxu0
    %v7900 = vpop.f32.mrb[0].mxu0
    %v7901 = vadd.f32 0.0, %v7900
    %v7902 = vpop.f32.mrb[0].mxu0
    %7903 = vmatprep.mubr.bf16.mxu0 0
    %7904 = vmatmul.mubr.bf16.gmra.mrb[0].mxu0 %v7701
    %v7905 = vpop.f32.mrb[0].mxu0
    %v7906 = vadd.f32 0.0, %v7905
    %v7907 = vpop.f32.mrb[0].mxu0
    %v7908 = vpop.f32.mrb[0].mxu0
    %v7909 = vadd.f32 0.0, %v7908
    %v7910 = vpop.f32.mrb[0].mxu0
    %7911 = vmatprep.mubr.bf16.mxu0 0
    %7912 = vmatmul.mubr.bf16.gmra.mrb[0].mxu0 %v7704
    %v7913 = vpop.f32.mrb[0].mxu0
    %v7914 = vadd.f32 0.0, %v7913
    %v7915 = vpop.f32.mrb[0].mxu0
    %v7916 = vpop.f32.mrb[0].mxu0
    %v7917 = vadd.f32 0.0, %v7916
    %v7918 = vpop.f32.mrb[0].mxu0
    %7919 = vmatprep.mubr.bf16.mxu0 0
    %7920 = vmatmul.mubr.bf16.gmra.mrb[0].mxu0 %v7707
    %v7921 = vpop.f32.mrb[0].mxu0
    %v7922 = vadd.f32 0.0, %v7921
    %v7923 = vpop.f32.mrb[0].mxu0
    %v7924 = vpop.f32.mrb[0].mxu0
    %v7925 = vadd.f32 0.0, %v7924
    %v7926 = vpop.f32.mrb[0].mxu0
    %7927 = vmatprep.mubr.bf16.mxu0 0
    %7928 = vmatmul.mubr.bf16.gmra.mrb[0].mxu0 %v7710
    %v7929 = vpop.f32.mrb[0].mxu0
    %v7930 = vadd.f32 0.0, %v7929
    %v7931 = vpop.f32.mrb[0].mxu0
    %v7932 = vpop.f32.mrb[0].mxu0
    %v7933 = vadd.f32 0.0, %v7932
    %v7934 = vpop.f32.mrb[0].mxu0
    %7935 = vmatprep.mubr.bf16.mxu0 0
    %7936 = vmatmul.mubr.bf16.gmra.mrb[0].mxu0 %v7713
    %v7937 = vpop.f32.mrb[0].mxu0
    %v7938 = vadd.f32 0.0, %v7937
    %v7939 = vpop.f32.mrb[0].mxu0
    %v7940 = vpop.f32.mrb[0].mxu0
    %v7941 = vadd.f32 0.0, %v7940
    %v7942 = vpop.f32.mrb[0].mxu0
    %7943 = vmatprep.mubr.bf16.mxu0 0
    %7944 = vmatmul.mubr.bf16.gmra.mrb[0].mxu0 %v7716
    %v7945 = vpop.f32.mrb[0].mxu0
    %v7946 = vadd.f32 0.0, %v7945
    %v7947 = vpop.f32.mrb[0].mxu0
    %v7948 = vpop.f32.mrb[0].mxu0
    %v7949 = vadd.f32 0.0, %v7948
    %v7950 = vpop.f32.mrb[0].mxu0
    %7951 = vmatprep.mubr.bf16.mxu0 0
    %7952 = vmatmul.mubr.bf16.gmra.mrb[0].mxu0 %v7719
    %v7953 = vpop.f32.mrb[0].mxu0
    %v7954 = vadd.f32 0.0, %v7953
    %v7955 = vpop.f32.mrb[0].mxu0
    %v7956 = vpop.f32.mrb[0].mxu0
    %v7957 = vadd.f32 0.0, %v7956
    %v7958 = vpop.f32.mrb[0].mxu0
    %7959 = vmatprep.mubr.bf16.mxu0 0
    %7960 = vmatmul.mubr.bf16.gmra.mrb[0].mxu0 %v7722
    %v7961 = vpop.f32.mrb[0].mxu0
    %v7962 = vadd.f32 0.0, %v7961
    %v7963 = vpop.f32.mrb[0].mxu0
    %v7964 = vpop.f32.mrb[0].mxu0
    %v7965 = vadd.f32 0.0, %v7964
    %v7966 = vpop.f32.mrb[0].mxu0
    %7967 = vmatprep.mubr.bf16.mxu0 0
    %7968 = vmatmul.mubr.bf16.gmra.mrb[0].mxu0 %v7725
    %v7969 = vpop.f32.mrb[0].mxu0
    %v7970 = vadd.f32 0.0, %v7969
    %v7971 = vpop.f32.mrb[0].mxu0
    %v7972 = vpop.f32.mrb[0].mxu0
    %v7973 = vadd.f32 0.0, %v7972
    %v7974 = vpop.f32.mrb[0].mxu0
    %7975 = vmatprep.mubr.bf16.mxu0 0
    %7976 = vmatmul.mubr.bf16.gmra.mrb[0].mxu0 %v7728
    %v7977 = vpop.f32.mrb[0].mxu0
    %v7978 = vadd.f32 0.0, %v7977
    %v7979 = vpop.f32.mrb[0].mxu0
    %v7980 = vpop.f32.mrb[0].mxu0
    %v7981 = vadd.f32 0.0, %v7980
    %v7982 = vpop.f32.mrb[0].mxu0
    %7983 = vmatprep.mubr.bf16.mxu0 0
    %7984 = vmatmul.mubr.bf16.gmra.mrb[0].mxu0 %v7731
    %v7985 = vpop.f32.mrb[0].mxu0
    %v7986 = vadd.f32 0.0, %v7985
    %v7987 = vpop.f32.mrb[0].mxu0
    %v7988 = vpop.f32.mrb[0].mxu0
    %v7989 = vadd.f32 0.0, %v7988
    %v7990 = vpop.f32.mrb[0].mxu0
    %7991 = vmatprep.mubr.bf16.mxu0 0
    %7992 = vmatmul.mubr.bf16.gmra.mrb[0].mxu0 %v7734
    %v7993 = vpop.f32.mrb[0].mxu0
    %v7994 = vadd.f32 0.0, %v7993
    %v7995 = vpop.f32.mrb[0].mxu0
    %v7996 = vpop.f32.mrb[0].mxu0
    %v7997 = vadd.f32 0.0, %v7996
    %v7998 = vpop.f32.mrb[0].mxu0
    %7999 = vmatprep.mubr.bf16.mxu0 0
    %8000 = vmatmul.mubr.bf16.gmra.mrb[0].mxu0 %v7737
    %v8001 = vpop.f32.mrb[0].mxu0
    %v8002 = vadd.f32 0.0, %v8001
    %v8003 = vpop.f32.mrb[0].mxu0
    %v8004 = vpop.f32.mrb[0].mxu0
    %v8005 = vadd.f32 0.0, %v8004
    %v8006 = vpop.f32.mrb[0].mxu0
    %8007 = vmatprep.mubr.bf16.mxu0 0
    %8008 = vmatmul.mubr.bf16.gmra.mrb[0].mxu0 %v7740
    %v8009 = vpop.f32.mrb[0].mxu0
    %v8010 = vadd.f32 0.0, %v8009
    %v8011 = vpop.f32.mrb[0].mxu0
    %v8012 = vpop.f32.mrb[0].mxu0
    %v8013 = vadd.f32 0.0, %v8012
    %v8014 = vpop.f32.mrb[0].mxu0
    %8015 = vmatprep.mubr.bf16.mxu0 0
    %8016 = vmatmul.mubr.bf16.gmra.mrb[0].mxu0 %v7743
    %v8017 = vpop.f32.mrb[0].mxu0
    %v8018 = vadd.f32 0.0, %v8017
    %v8019 = vpop.f32.mrb[0].mxu0
    %v8020 = vpop.f32.mrb[0].mxu0
    %v8021 = vadd.f32 0.0, %v8020
    %v8022 = vpop.f32.mrb[0].mxu0
    %8023 = vmatprep.mubr.bf16.mxu0 0
    %8024 = vmatmul.mubr.bf16.gmra.mrb[0].mxu0 %v7746
    %v8025 = vpop.f32.mrb[0].mxu0
    %v8026 = vadd.f32 0.0, %v8025
    %v8027 = vpop.f32.mrb[0].mxu0
    %v8028 = vpop.f32.mrb[0].mxu0
    %v8029 = vadd.f32 0.0, %v8028
    %v8030 = vpop.f32.mrb[0].mxu0
    %8031 = vmatprep.mubr.bf16.mxu0 0
    %8032 = vmatmul.mubr.bf16.gmra.mrb[0].mxu0 %v7749
    %v8033 = vpop.f32.mrb[0].mxu0
    %v8034 = vadd.f32 0.0, %v8033
    %v8035 = vpop.f32.mrb[0].mxu0
    %v8036 = vpop.f32.mrb[0].mxu0
    %v8037 = vadd.f32 0.0, %v8036
    %v8038 = vpop.f32.mrb[0].mxu0
    %8039 = vdwg.mxu0
    %v8040 = vadd.f32 %v6598, %v7786
    %v8041 = vadd.f32 %v6599, %v7789
    %v8042 = vadd.f32 %v6600, %v7794
    %v8043 = vadd.f32 %v6601, %v7797
    %v8044 = vadd.f32 %v6602, %v7802
    %v8045 = vadd.f32 %v6603, %v7805
    %v8046 = vadd.f32 %v6604, %v7810
    %v8047 = vadd.f32 %v6605, %v7813
    %v8048 = vadd.f32 %v6606, %v7818
    %v8049 = vadd.f32 %v6607, %v7821
    %v8050 = vadd.f32 %v6608, %v7826
    %v8051 = vadd.f32 %v6609, %v7829
    %v8052 = vadd.f32 %v6610, %v7834
    %v8053 = vadd.f32 %v6611, %v7837
    %v8054 = vadd.f32 %v6612, %v7842
    %v8055 = vadd.f32 %v6613, %v7845
    %v8056 = vadd.f32 %v6614, %v7850
    %v8057 = vadd.f32 %v6615, %v7853
    %v8058 = vadd.f32 %v6616, %v7858
    %v8059 = vadd.f32 %v6617, %v7861
    %v8060 = vadd.f32 %v6618, %v7866
    %v8061 = vadd.f32 %v6619, %v7869
    %v8062 = vadd.f32 %v6620, %v7874
    %v8063 = vadd.f32 %v6621, %v7877
    %v8064 = vadd.f32 %v6622, %v7882
    %v8065 = vadd.f32 %v6623, %v7885
    %v8066 = vadd.f32 %v6624, %v7890
    %v8067 = vadd.f32 %v6625, %v7893
    %v8068 = vadd.f32 %v6626, %v7898
    %v8069 = vadd.f32 %v6627, %v7901
    %v8070 = vadd.f32 %v6628, %v7906
    %v8071 = vadd.f32 %v6629, %v7909
    %v8072 = vadd.f32 %v6630, %v7914
    %v8073 = vadd.f32 %v6631, %v7917
    %v8074 = vadd.f32 %v6632, %v7922
    %v8075 = vadd.f32 %v6633, %v7925
    %v8076 = vadd.f32 %v6634, %v7930
    %v8077 = vadd.f32 %v6635, %v7933
    %v8078 = vadd.f32 %v6636, %v7938
    %v8079 = vadd.f32 %v6637, %v7941
    %v8080 = vadd.f32 %v6638, %v7946
    %v8081 = vadd.f32 %v6639, %v7949
    %v8082 = vadd.f32 %v6640, %v7954
    %v8083 = vadd.f32 %v6641, %v7957
    %v8084 = vadd.f32 %v6642, %v7962
    %v8085 = vadd.f32 %v6643, %v7965
    %v8086 = vadd.f32 %v6644, %v7970
    %v8087 = vadd.f32 %v6645, %v7973
    %v8088 = vadd.f32 %v6646, %v7978
    %v8089 = vadd.f32 %v6647, %v7981
    %v8090 = vadd.f32 %v6648, %v7986
    %v8091 = vadd.f32 %v6649, %v7989
    %v8092 = vadd.f32 %v6650, %v7994
    %v8093 = vadd.f32 %v6651, %v7997
    %v8094 = vadd.f32 %v6652, %v8002
    %v8095 = vadd.f32 %v6653, %v8005
    %v8096 = vadd.f32 %v6654, %v8010
    %v8097 = vadd.f32 %v6655, %v8013
    %v8098 = vadd.f32 %v6656, %v8018
    %v8099 = vadd.f32 %v6657, %v8021
    %v8100 = vadd.f32 %v6658, %v8026
    %v8101 = vadd.f32 %v6659, %v8029
    %v8102 = vadd.f32 %v6660, %v8034
    %v8103 = vadd.f32 %v6661, %v8037
    %v8104 = vld [vmem:[%s5955] sm:$0xe]
    %v8105 = vld [vmem:[%s5955 + $0xc] sm:$0xe]
    %v8106 = vld [vmem:[%s5955 + $0x18] sm:$0xe]
    %v8107 = vld [vmem:[%s5955 + $0x24] sm:$0xe]
    %v8108 = vld [vmem:[%s5955 + $0x30] sm:$0xe]
    %v8109 = vld [vmem:[%s5955 + $0x3c] sm:$0xe]
    %v8110 = vld [vmem:[%s5955 + $0x48] sm:$0xe]
    %v8111 = vld [vmem:[%s5955 + $0x54] sm:$0xe]
    %v8112 = vld [vmem:[%s5955 + $0x60] sm:$0xe]
    %v8113 = vld [vmem:[%s5955 + $0x6c] sm:$0xe]
    %v8114 = vld [vmem:[%s5955 + $0x78] sm:$0xe]
    %v8115 = vld [vmem:[%s5955 + $0x84] sm:$0xe]
    %v8116 = vld [vmem:[%s5955 + $0x90] sm:$0xe]
    %v8117 = vld [vmem:[%s5955 + $0x9c] sm:$0xe]
    %v8118 = vld [vmem:[%s5955 + $0xa8] sm:$0xe]
    %v8119 = vld [vmem:[%s5955 + $0xb4] sm:$0xe]
    %v8120 = vld [vmem:[%s5955 + $0xd8] sm:$0xe]
    %v8121 = vld [vmem:[%s5955 + $0xe4] sm:$0xe]
    %v8122 = vld [vmem:[%s5955 + $0xf0] sm:$0xe]
    %v8123 = vld [vmem:[%s5955 + $0xfc] sm:$0xe]
    %v8124 = vld [vmem:[%s5955 + $0x108] sm:$0xe]
    %v8125 = vld [vmem:[%s5955 + $0x114] sm:$0xe]
    %v8126 = vld [vmem:[%s5955 + $0x120] sm:$0xe]
    %v8127 = vld [vmem:[%s5955 + $0x12c] sm:$0xe]
    %v8128 = vld [vmem:[%s5955 + $0x138] sm:$0xe]
    %v8129 = vld [vmem:[%s5955 + $0x144] sm:$0xe]
    %v8130 = vld [vmem:[%s5955 + $0x150] sm:$0xe]
    %v8131 = vld [vmem:[%s5955 + $0x15c] sm:$0xe]
    %v8132 = vld [vmem:[%s5955 + $0x168] sm:$0xe]
    %v8133 = vld [vmem:[%s5955 + $0x174] sm:$0xe]
    %v8134 = vld [vmem:[%s5955 + $0x180] sm:$0xe]
    %v8135 = vld [vmem:[%s5955 + $0x18c] sm:$0xe]
    %v8232 = vrot.slane %v8104, 5
    %v8233 = vrot.slane %v8232, 4
    %v8234 = vrot.slane %v6663, 5
    %v8235 = vsel %vm2073, %v8233, %v8234
    %v8236 = vrot.slane %v8234, 4
    %v8237 = vrot.slane %v6664, 5
    %v8238 = vsel %vm2073, %v8236, %v8237
    %v8239 = vrot.slane %v8105, 5
    %v8240 = vrot.slane %v8239, 4
    %v8241 = vrot.slane %v6666, 5
    %v8242 = vsel %vm2073, %v8240, %v8241
    %v8243 = vrot.slane %v8241, 4
    %v8244 = vrot.slane %v6667, 5
    %v8245 = vsel %vm2073, %v8243, %v8244
    %v8246 = vrot.slane %v8106, 5
    %v8247 = vrot.slane %v8246, 4
    %v8248 = vrot.slane %v6669, 5
    %v8249 = vsel %vm2073, %v8247, %v8248
    %v8250 = vrot.slane %v8248, 4
    %v8251 = vrot.slane %v6670, 5
    %v8252 = vsel %vm2073, %v8250, %v8251
    %v8253 = vrot.slane %v8107, 5
    %v8254 = vrot.slane %v8253, 4
    %v8255 = vrot.slane %v6672, 5
    %v8256 = vsel %vm2073, %v8254, %v8255
    %v8257 = vrot.slane %v8255, 4
    %v8258 = vrot.slane %v6673, 5
    %v8259 = vsel %vm2073, %v8257, %v8258
    %v8260 = vrot.slane %v8108, 5
    %v8261 = vrot.slane %v8260, 4
    %v8262 = vrot.slane %v6675, 5
    %v8263 = vsel %vm2073, %v8261, %v8262
    %v8264 = vrot.slane %v8262, 4
    %v8265 = vrot.slane %v6676, 5
    %v8266 = vsel %vm2073, %v8264, %v8265
    %v8267 = vrot.slane %v8109, 5
    %v8268 = vrot.slane %v8267, 4
    %v8269 = vrot.slane %v6678, 5
    %v8270 = vsel %vm2073, %v8268, %v8269
    %v8271 = vrot.slane %v8269, 4
    %v8272 = vrot.slane %v6679, 5
    %v8273 = vsel %vm2073, %v8271, %v8272
    %v8274 = vrot.slane %v8110, 5
    %v8275 = vrot.slane %v8274, 4
    %v8276 = vrot.slane %v6681, 5
    %v8277 = vsel %vm2073, %v8275, %v8276
    %v8278 = vrot.slane %v8276, 4
    %v8279 = vrot.slane %v6682, 5
    %v8280 = vsel %vm2073, %v8278, %v8279
    %v8281 = vrot.slane %v8111, 5
    %v8282 = vrot.slane %v8281, 4
    %v8283 = vrot.slane %v6684, 5
    %v8284 = vsel %vm2073, %v8282, %v8283
    %v8285 = vrot.slane %v8283, 4
    %v8286 = vrot.slane %v6685, 5
    %v8287 = vsel %vm2073, %v8285, %v8286
    %v8288 = vrot.slane %v8112, 5
    %v8289 = vrot.slane %v8288, 4
    %v8290 = vrot.slane %v6687, 5
    %v8291 = vsel %vm2073, %v8289, %v8290
    %v8292 = vrot.slane %v8290, 4
    %v8293 = vrot.slane %v6688, 5
    %v8294 = vsel %vm2073, %v8292, %v8293
    %v8295 = vrot.slane %v8113, 5
    %v8296 = vrot.slane %v8295, 4
    %v8297 = vrot.slane %v6690, 5
    %v8298 = vsel %vm2073, %v8296, %v8297
    %v8299 = vrot.slane %v8297, 4
    %v8300 = vrot.slane %v6691, 5
    %v8301 = vsel %vm2073, %v8299, %v8300
    %v8302 = vrot.slane %v8114, 5
    %v8303 = vrot.slane %v8302, 4
    %v8304 = vrot.slane %v6693, 5
    %v8305 = vsel %vm2073, %v8303, %v8304
    %v8306 = vrot.slane %v8304, 4
    %v8307 = vrot.slane %v6694, 5
    %v8308 = vsel %vm2073, %v8306, %v8307
    %v8309 = vrot.slane %v8115, 5
    %v8310 = vrot.slane %v8309, 4
    %v8311 = vrot.slane %v6696, 5
    %v8312 = vsel %vm2073, %v8310, %v8311
    %v8313 = vrot.slane %v8311, 4
    %v8314 = vrot.slane %v6697, 5
    %v8315 = vsel %vm2073, %v8313, %v8314
    %v8316 = vrot.slane %v8116, 5
    %v8317 = vrot.slane %v8316, 4
    %v8318 = vrot.slane %v6699, 5
    %v8319 = vsel %vm2073, %v8317, %v8318
    %v8320 = vrot.slane %v8318, 4
    %v8321 = vrot.slane %v6700, 5
    %v8322 = vsel %vm2073, %v8320, %v8321
    %v8323 = vrot.slane %v8117, 5
    %v8324 = vrot.slane %v8323, 4
    %v8325 = vrot.slane %v6702, 5
    %v8326 = vsel %vm2073, %v8324, %v8325
    %v8327 = vrot.slane %v8325, 4
    %v8328 = vrot.slane %v6703, 5
    %v8329 = vsel %vm2073, %v8327, %v8328
    %v8330 = vrot.slane %v8118, 5
    %v8331 = vrot.slane %v8330, 4
    %v8332 = vrot.slane %v6705, 5
    %v8333 = vsel %vm2073, %v8331, %v8332
    %v8334 = vrot.slane %v8332, 4
    %v8335 = vrot.slane %v6706, 5
    %v8336 = vsel %vm2073, %v8334, %v8335
    %v8337 = vrot.slane %v8119, 5
    %v8338 = vrot.slane %v8337, 4
    %v8339 = vrot.slane %v6708, 5
    %v8340 = vsel %vm2073, %v8338, %v8339
    %v8341 = vrot.slane %v8339, 4
    %v8342 = vrot.slane %v6709, 5
    %v8343 = vsel %vm2073, %v8341, %v8342
    %v8344 = vrot.slane %v8120, 5
    %v8345 = vrot.slane %v8344, 4
    %v8346 = vrot.slane %v6711, 5
    %v8347 = vsel %vm2073, %v8345, %v8346
    %v8348 = vrot.slane %v8346, 4
    %v8349 = vrot.slane %v6712, 5
    %v8350 = vsel %vm2073, %v8348, %v8349
    %v8351 = vrot.slane %v8121, 5
    %v8352 = vrot.slane %v8351, 4
    %v8353 = vrot.slane %v6714, 5
    %v8354 = vsel %vm2073, %v8352, %v8353
    %v8355 = vrot.slane %v8353, 4
    %v8356 = vrot.slane %v6715, 5
    %v8357 = vsel %vm2073, %v8355, %v8356
    %v8358 = vrot.slane %v8122, 5
    %v8359 = vrot.slane %v8358, 4
    %v8360 = vrot.slane %v6717, 5
    %v8361 = vsel %vm2073, %v8359, %v8360
    %v8362 = vrot.slane %v8360, 4
    %v8363 = vrot.slane %v6718, 5
    %v8364 = vsel %vm2073, %v8362, %v8363
    %v8365 = vrot.slane %v8123, 5
    %v8366 = vrot.slane %v8365, 4
    %v8367 = vrot.slane %v6720, 5
    %v8368 = vsel %vm2073, %v8366, %v8367
    %v8369 = vrot.slane %v8367, 4
    %v8370 = vrot.slane %v6721, 5
    %v8371 = vsel %vm2073, %v8369, %v8370
    %v8372 = vrot.slane %v8124, 5
    %v8373 = vrot.slane %v8372, 4
    %v8374 = vrot.slane %v6723, 5
    %v8375 = vsel %vm2073, %v8373, %v8374
    %v8376 = vrot.slane %v8374, 4
    %v8377 = vrot.slane %v6724, 5
    %v8378 = vsel %vm2073, %v8376, %v8377
    %v8379 = vrot.slane %v8125, 5
    %v8380 = vrot.slane %v8379, 4
    %v8381 = vrot.slane %v6726, 5
    %v8382 = vsel %vm2073, %v8380, %v8381
    %v8383 = vrot.slane %v8381, 4
    %v8384 = vrot.slane %v6727, 5
    %v8385 = vsel %vm2073, %v8383, %v8384
    %v8386 = vrot.slane %v8126, 5
    %v8387 = vrot.slane %v8386, 4
    %v8388 = vrot.slane %v6729, 5
    %v8389 = vsel %vm2073, %v8387, %v8388
    %v8390 = vrot.slane %v8388, 4
    %v8391 = vrot.slane %v6730, 5
    %v8392 = vsel %vm2073, %v8390, %v8391
    %v8393 = vrot.slane %v8127, 5
    %v8394 = vrot.slane %v8393, 4
    %v8395 = vrot.slane %v6732, 5
    %v8396 = vsel %vm2073, %v8394, %v8395
    %v8397 = vrot.slane %v8395, 4
    %v8398 = vrot.slane %v6733, 5
    %v8399 = vsel %vm2073, %v8397, %v8398
    %v8400 = vrot.slane %v8128, 5
    %v8401 = vrot.slane %v8400, 4
    %v8402 = vrot.slane %v6735, 5
    %v8403 = vsel %vm2073, %v8401, %v8402
    %v8404 = vrot.slane %v8402, 4
    %v8405 = vrot.slane %v6736, 5
    %v8406 = vsel %vm2073, %v8404, %v8405
    %v8407 = vrot.slane %v8129, 5
    %v8408 = vrot.slane %v8407, 4
    %v8409 = vrot.slane %v6738, 5
    %v8410 = vsel %vm2073, %v8408, %v8409
    %v8411 = vrot.slane %v8409, 4
    %v8412 = vrot.slane %v6739, 5
    %v8413 = vsel %vm2073, %v8411, %v8412
    %v8414 = vrot.slane %v8130, 5
    %v8415 = vrot.slane %v8414, 4
    %v8416 = vrot.slane %v6741, 5
    %v8417 = vsel %vm2073, %v8415, %v8416
    %v8418 = vrot.slane %v8416, 4
    %v8419 = vrot.slane %v6742, 5
    %v8420 = vsel %vm2073, %v8418, %v8419
    %v8421 = vrot.slane %v8131, 5
    %v8422 = vrot.slane %v8421, 4
    %v8423 = vrot.slane %v6744, 5
    %v8424 = vsel %vm2073, %v8422, %v8423
    %v8425 = vrot.slane %v8423, 4
    %v8426 = vrot.slane %v6745, 5
    %v8427 = vsel %vm2073, %v8425, %v8426
    %v8428 = vrot.slane %v8132, 5
    %v8429 = vrot.slane %v8428, 4
    %v8430 = vrot.slane %v6747, 5
    %v8431 = vsel %vm2073, %v8429, %v8430
    %v8432 = vrot.slane %v8430, 4
    %v8433 = vrot.slane %v6748, 5
    %v8434 = vsel %vm2073, %v8432, %v8433
    %v8435 = vrot.slane %v8133, 5
    %v8436 = vrot.slane %v8435, 4
    %v8437 = vrot.slane %v6750, 5
    %v8438 = vsel %vm2073, %v8436, %v8437
    %v8439 = vrot.slane %v8437, 4
    %v8440 = vrot.slane %v6751, 5
    %v8441 = vsel %vm2073, %v8439, %v8440
    %v8442 = vrot.slane %v8134, 5
    %v8443 = vrot.slane %v8442, 4
    %v8444 = vrot.slane %v6753, 5
    %v8445 = vsel %vm2073, %v8443, %v8444
    %v8446 = vrot.slane %v8444, 4
    %v8447 = vrot.slane %v6754, 5
    %v8448 = vsel %vm2073, %v8446, %v8447
    %v8449 = vrot.slane %v8135, 5
    %v8450 = vrot.slane %v8449, 4
    %v8451 = vrot.slane %v6756, 5
    %v8452 = vsel %vm2073, %v8450, %v8451
    %v8453 = vrot.slane %v8451, 4
    %v8454 = vrot.slane %v6757, 5
    %v8455 = vsel %vm2073, %v8453, %v8454
    %s8456 = scalar_lea.vmem %s1, 256
    %v8457 = vld [vmem:[%s8456] sm:$0xf]
    %v8458 = vld [vmem:[%s8456 + $0x4] sm:$0xf]
    %v8459 = vld [vmem:[%s8456 + $0x8] sm:$0xf]
    %v8460 = vld [vmem:[%s8456 + $0xc] sm:$0xf]
    %v8461 = vld [vmem:[%s8456 + $0x10] sm:$0xf]
    %v8462 = vld [vmem:[%s8456 + $0x14] sm:$0xf]
    %v8463 = vld [vmem:[%s8456 + $0x18] sm:$0xf]
    %v8464 = vld [vmem:[%s8456 + $0x1c] sm:$0xf]
    %v8465 = vunpack.c.l.b16 %v8235
    %v8466 = vunpack.c.l.b16 %v8238
    %v8467 = vunpack.c.l.b16 %v8242
    %v8468 = vunpack.c.l.b16 %v8245
    %v8469 = vunpack.c.l.b16 %v8249
    %v8470 = vunpack.c.l.b16 %v8252
    %v8471 = vunpack.c.l.b16 %v8256
    %v8472 = vunpack.c.l.b16 %v8259
    %v8473 = vunpack.c.l.b16 %v8263
    %v8474 = vunpack.c.l.b16 %v8266
    %v8475 = vunpack.c.l.b16 %v8270
    %v8476 = vunpack.c.l.b16 %v8273
    %v8477 = vunpack.c.l.b16 %v8277
    %v8478 = vunpack.c.l.b16 %v8280
    %v8479 = vunpack.c.l.b16 %v8284
    %v8480 = vunpack.c.l.b16 %v8287
    %v8481 = vunpack.c.l.b16 %v8291
    %v8482 = vunpack.c.l.b16 %v8294
    %v8483 = vunpack.c.l.b16 %v8298
    %v8484 = vunpack.c.l.b16 %v8301
    %v8485 = vunpack.c.l.b16 %v8305
    %v8486 = vunpack.c.l.b16 %v8308
    %v8487 = vunpack.c.l.b16 %v8312
    %v8488 = vunpack.c.l.b16 %v8315
    %v8489 = vunpack.c.l.b16 %v8319
    %v8490 = vunpack.c.l.b16 %v8322
    %v8491 = vunpack.c.l.b16 %v8326
    %v8492 = vunpack.c.l.b16 %v8329
    %v8493 = vunpack.c.l.b16 %v8333
    %v8494 = vunpack.c.l.b16 %v8336
    %v8495 = vunpack.c.l.b16 %v8340
    %v8496 = vunpack.c.l.b16 %v8343
    %v8497 = vunpack.c.l.b16 %v8347
    %v8498 = vunpack.c.l.b16 %v8350
    %v8499 = vunpack.c.l.b16 %v8354
    %v8500 = vunpack.c.l.b16 %v8357
    %v8501 = vunpack.c.l.b16 %v8361
    %v8502 = vunpack.c.l.b16 %v8364
    %v8503 = vunpack.c.l.b16 %v8368
    %v8504 = vunpack.c.l.b16 %v8371
    %v8505 = vunpack.c.l.b16 %v8375
    %v8506 = vunpack.c.l.b16 %v8378
    %v8507 = vunpack.c.l.b16 %v8382
    %v8508 = vunpack.c.l.b16 %v8385
    %v8509 = vunpack.c.l.b16 %v8389
    %v8510 = vunpack.c.l.b16 %v8392
    %v8511 = vunpack.c.l.b16 %v8396
    %v8512 = vunpack.c.l.b16 %v8399
    %v8513 = vunpack.c.l.b16 %v8403
    %v8514 = vunpack.c.l.b16 %v8406
    %v8515 = vunpack.c.l.b16 %v8410
    %v8516 = vunpack.c.l.b16 %v8413
    %v8517 = vunpack.c.l.b16 %v8417
    %v8518 = vunpack.c.l.b16 %v8420
    %v8519 = vunpack.c.l.b16 %v8424
    %v8520 = vunpack.c.l.b16 %v8427
    %v8521 = vunpack.c.l.b16 %v8431
    %v8522 = vunpack.c.l.b16 %v8434
    %v8523 = vunpack.c.l.b16 %v8438
    %v8524 = vunpack.c.l.b16 %v8441
    %v8525 = vunpack.c.l.b16 %v8445
    %v8526 = vunpack.c.l.b16 %v8448
    %v8527 = vunpack.c.l.b16 %v8452
    %v8528 = vunpack.c.l.b16 %v8455
    %v8529 = vpack.c.b16 %v8466, %v8465
    %v8530 = vpack.c.b16 %v8468, %v8467
    %v8531 = vpack.c.b16 %v8470, %v8469
    %v8532 = vpack.c.b16 %v8472, %v8471
    %v8533 = vpack.c.b16 %v8474, %v8473
    %v8534 = vpack.c.b16 %v8476, %v8475
    %v8535 = vpack.c.b16 %v8478, %v8477
    %v8536 = vpack.c.b16 %v8480, %v8479
    %v8537 = vpack.c.b16 %v8482, %v8481
    %v8538 = vpack.c.b16 %v8484, %v8483
    %v8539 = vpack.c.b16 %v8486, %v8485
    %v8540 = vpack.c.b16 %v8488, %v8487
    %v8541 = vpack.c.b16 %v8490, %v8489
    %v8542 = vpack.c.b16 %v8492, %v8491
    %v8543 = vpack.c.b16 %v8494, %v8493
    %v8544 = vpack.c.b16 %v8496, %v8495
    %v8545 = vpack.c.b16 %v8498, %v8497
    %v8546 = vpack.c.b16 %v8500, %v8499
    %v8547 = vpack.c.b16 %v8502, %v8501
    %v8548 = vpack.c.b16 %v8504, %v8503
    %v8549 = vpack.c.b16 %v8506, %v8505
    %v8550 = vpack.c.b16 %v8508, %v8507
    %v8551 = vpack.c.b16 %v8510, %v8509
    %v8552 = vpack.c.b16 %v8512, %v8511
    %v8553 = vpack.c.b16 %v8514, %v8513
    %v8554 = vpack.c.b16 %v8516, %v8515
    %v8555 = vpack.c.b16 %v8518, %v8517
    %v8556 = vpack.c.b16 %v8520, %v8519
    %v8557 = vpack.c.b16 %v8522, %v8521
    %v8558 = vpack.c.b16 %v8524, %v8523
    %v8559 = vpack.c.b16 %v8526, %v8525
    %v8560 = vpack.c.b16 %v8528, %v8527
    %v8569 = vunpack.c.l.b16 %v8457
    %v8570 = vunpack.c.l.b16 %v8458
    %v8571 = vunpack.c.l.b16 %v8459
    %v8572 = vunpack.c.l.b16 %v8460
    %v8573 = vunpack.c.l.b16 %v8461
    %v8574 = vunpack.c.l.b16 %v8462
    %v8575 = vunpack.c.l.b16 %v8463
    %v8576 = vunpack.c.l.b16 %v8464
    %v8577 = vpack.c.b16 %v8570, %v8569
    %v8578 = vpack.c.b16 %v8572, %v8571
    %v8579 = vpack.c.b16 %v8574, %v8573
    %v8580 = vpack.c.b16 %v8576, %v8575
    %v8586 = vsel %vm1020, %v8529, 0
    %v8589 = vsel %vm1020, %v8530, 0
    %v8592 = vsel %vm1020, %v8531, 0
    %v8595 = vsel %vm1020, %v8532, 0
    %v8598 = vsel %vm1020, %v8533, 0
    %v8601 = vsel %vm1020, %v8534, 0
    %v8604 = vsel %vm1020, %v8535, 0
    %v8607 = vsel %vm1020, %v8536, 0
    %v8610 = vsel %vm1020, %v8537, 0
    %v8613 = vsel %vm1020, %v8538, 0
    %v8616 = vsel %vm1020, %v8539, 0
    %v8619 = vsel %vm1020, %v8540, 0
    %v8622 = vsel %vm1020, %v8541, 0
    %v8625 = vsel %vm1020, %v8542, 0
    %v8628 = vsel %vm1020, %v8543, 0
    %v8631 = vsel %vm1020, %v8544, 0
    %v8634 = vsel %vm1020, %v8545, 0
    %v8637 = vsel %vm1020, %v8546, 0
    %v8640 = vsel %vm1020, %v8547, 0
    %v8643 = vsel %vm1020, %v8548, 0
    %v8646 = vsel %vm1020, %v8549, 0
    %v8649 = vsel %vm1020, %v8550, 0
    %v8652 = vsel %vm1020, %v8551, 0
    %v8655 = vsel %vm1020, %v8552, 0
    %v8658 = vsel %vm1020, %v8553, 0
    %v8661 = vsel %vm1020, %v8554, 0
    %v8664 = vsel %vm1020, %v8555, 0
    %v8667 = vsel %vm1020, %v8556, 0
    %v8670 = vsel %vm1020, %v8557, 0
    %v8673 = vsel %vm1020, %v8558, 0
    %v8676 = vsel %vm1020, %v8559, 0
    %v8679 = vsel %vm1020, %v8560, 0
    %8681 = vmatprep.subr.bf16.mxu0 0
    %8682 = vmatpush1.bf16.msra.mxu0 %v8577
    %8683 = vmatprep.subr.bf16.mxu0 0
    %8684 = vmatpush1.bf16.msra.mxu0 %v8578
    %8685 = vmatprep.subr.bf16.mxu0 0
    %8686 = vmatpush1.bf16.msra.mxu0 %v8579
    %8687 = vmatprep.subr.bf16.mxu0 0
    %8688 = vmatpush1.bf16.msra.mxu0 %v8580
    %8689 = vmatprep.subr.bf16.mxu0 0
    %8690 = vmatpush1.bf16.msra.mxu0 0
    %8691 = vmatprep.subr.bf16.mxu0 0
    %8692 = vmatpush1.bf16.msra.mxu0 0
    %8693 = vmatprep.subr.bf16.mxu0 0
    %8694 = vmatpush1.bf16.msra.mxu0 0
    %8695 = vmatprep.subr.bf16.mxu0 0
    %8696 = vmatpush1.bf16.msra.mxu0 0
    %8697 = vmatprep.subr.bf16.mxu0 0
    %8698 = vmatpush1.bf16.msra.mxu0 0
    %8699 = vmatprep.subr.bf16.mxu0 0
    %8700 = vmatpush1.bf16.msra.mxu0 0
    %8701 = vmatprep.subr.bf16.mxu0 0
    %8702 = vmatpush1.bf16.msra.mxu0 0
    %8703 = vmatprep.subr.bf16.mxu0 0
    %8704 = vmatpush1.bf16.msra.mxu0 0
    %8705 = vmatprep.subr.bf16.mxu0 0
    %8706 = vmatpush1.bf16.msra.mxu0 0
    %8707 = vmatprep.subr.bf16.mxu0 0
    %8708 = vmatpush1.bf16.msra.mxu0 0
    %8709 = vmatprep.subr.bf16.mxu0 0
    %8710 = vmatpush1.bf16.msra.mxu0 0
    %8711 = vmatprep.subr.bf16.mxu0 0
    %8712 = vmatpush1.bf16.msra.mxu0 0
    %8713 = vmatprep.mubr.bf16.mxu0 0
    %8714 = vmatmul.mubr.bf16.gmra.mrb[0].mxu0 %v8586
    %v8715 = vpop.f32.mrb[0].mxu0
    %v8716 = vadd.f32 0.0, %v8715
    %v8717 = vpop.f32.mrb[0].mxu0
    %v8718 = vpop.f32.mrb[0].mxu0
    %v8719 = vadd.f32 0.0, %v8718
    %v8720 = vpop.f32.mrb[0].mxu0
    %8721 = vmatprep.mubr.bf16.mxu0 0
    %8722 = vmatmul.mubr.bf16.gmra.mrb[0].mxu0 %v8589
    %v8723 = vpop.f32.mrb[0].mxu0
    %v8724 = vadd.f32 0.0, %v8723
    %v8725 = vpop.f32.mrb[0].mxu0
    %v8726 = vpop.f32.mrb[0].mxu0
    %v8727 = vadd.f32 0.0, %v8726
    %v8728 = vpop.f32.mrb[0].mxu0
    %8729 = vmatprep.mubr.bf16.mxu0 0
    %8730 = vmatmul.mubr.bf16.gmra.mrb[0].mxu0 %v8592
    %v8731 = vpop.f32.mrb[0].mxu0
    %v8732 = vadd.f32 0.0, %v8731
    %v8733 = vpop.f32.mrb[0].mxu0
    %v8734 = vpop.f32.mrb[0].mxu0
    %v8735 = vadd.f32 0.0, %v8734
    %v8736 = vpop.f32.mrb[0].mxu0
    %8737 = vmatprep.mubr.bf16.mxu0 0
    %8738 = vmatmul.mubr.bf16.gmra.mrb[0].mxu0 %v8595
    %v8739 = vpop.f32.mrb[0].mxu0
    %v8740 = vadd.f32 0.0, %v8739
    %v8741 = vpop.f32.mrb[0].mxu0
    %v8742 = vpop.f32.mrb[0].mxu0
    %v8743 = vadd.f32 0.0, %v8742
    %v8744 = vpop.f32.mrb[0].mxu0
    %8745 = vmatprep.mubr.bf16.mxu0 0
    %8746 = vmatmul.mubr.bf16.gmra.mrb[0].mxu0 %v8598
    %v8747 = vpop.f32.mrb[0].mxu0
    %v8748 = vadd.f32 0.0, %v8747
    %v8749 = vpop.f32.mrb[0].mxu0
    %v8750 = vpop.f32.mrb[0].mxu0
    %v8751 = vadd.f32 0.0, %v8750
    %v8752 = vpop.f32.mrb[0].mxu0
    %8753 = vmatprep.mubr.bf16.mxu0 0
    %8754 = vmatmul.mubr.bf16.gmra.mrb[0].mxu0 %v8601
    %v8755 = vpop.f32.mrb[0].mxu0
    %v8756 = vadd.f32 0.0, %v8755
    %v8757 = vpop.f32.mrb[0].mxu0
    %v8758 = vpop.f32.mrb[0].mxu0
    %v8759 = vadd.f32 0.0, %v8758
    %v8760 = vpop.f32.mrb[0].mxu0
    %8761 = vmatprep.mubr.bf16.mxu0 0
    %8762 = vmatmul.mubr.bf16.gmra.mrb[0].mxu0 %v8604
    %v8763 = vpop.f32.mrb[0].mxu0
    %v8764 = vadd.f32 0.0, %v8763
    %v8765 = vpop.f32.mrb[0].mxu0
    %v8766 = vpop.f32.mrb[0].mxu0
    %v8767 = vadd.f32 0.0, %v8766
    %v8768 = vpop.f32.mrb[0].mxu0
    %8769 = vmatprep.mubr.bf16.mxu0 0
    %8770 = vmatmul.mubr.bf16.gmra.mrb[0].mxu0 %v8607
    %v8771 = vpop.f32.mrb[0].mxu0
    %v8772 = vadd.f32 0.0, %v8771
    %v8773 = vpop.f32.mrb[0].mxu0
    %v8774 = vpop.f32.mrb[0].mxu0
    %v8775 = vadd.f32 0.0, %v8774
    %v8776 = vpop.f32.mrb[0].mxu0
    %8777 = vmatprep.mubr.bf16.mxu0 0
    %8778 = vmatmul.mubr.bf16.gmra.mrb[0].mxu0 %v8610
    %v8779 = vpop.f32.mrb[0].mxu0
    %v8780 = vadd.f32 0.0, %v8779
    %v8781 = vpop.f32.mrb[0].mxu0
    %v8782 = vpop.f32.mrb[0].mxu0
    %v8783 = vadd.f32 0.0, %v8782
    %v8784 = vpop.f32.mrb[0].mxu0
    %8785 = vmatprep.mubr.bf16.mxu0 0
    %8786 = vmatmul.mubr.bf16.gmra.mrb[0].mxu0 %v8613
    %v8787 = vpop.f32.mrb[0].mxu0
    %v8788 = vadd.f32 0.0, %v8787
    %v8789 = vpop.f32.mrb[0].mxu0
    %v8790 = vpop.f32.mrb[0].mxu0
    %v8791 = vadd.f32 0.0, %v8790
    %v8792 = vpop.f32.mrb[0].mxu0
    %8793 = vmatprep.mubr.bf16.mxu0 0
    %8794 = vmatmul.mubr.bf16.gmra.mrb[0].mxu0 %v8616
    %v8795 = vpop.f32.mrb[0].mxu0
    %v8796 = vadd.f32 0.0, %v8795
    %v8797 = vpop.f32.mrb[0].mxu0
    %v8798 = vpop.f32.mrb[0].mxu0
    %v8799 = vadd.f32 0.0, %v8798
    %v8800 = vpop.f32.mrb[0].mxu0
    %8801 = vmatprep.mubr.bf16.mxu0 0
    %8802 = vmatmul.mubr.bf16.gmra.mrb[0].mxu0 %v8619
    %v8803 = vpop.f32.mrb[0].mxu0
    %v8804 = vadd.f32 0.0, %v8803
    %v8805 = vpop.f32.mrb[0].mxu0
    %v8806 = vpop.f32.mrb[0].mxu0
    %v8807 = vadd.f32 0.0, %v8806
    %v8808 = vpop.f32.mrb[0].mxu0
    %8809 = vmatprep.mubr.bf16.mxu0 0
    %8810 = vmatmul.mubr.bf16.gmra.mrb[0].mxu0 %v8622
    %v8811 = vpop.f32.mrb[0].mxu0
    %v8812 = vadd.f32 0.0, %v8811
    %v8813 = vpop.f32.mrb[0].mxu0
    %v8814 = vpop.f32.mrb[0].mxu0
    %v8815 = vadd.f32 0.0, %v8814
    %v8816 = vpop.f32.mrb[0].mxu0
    %8817 = vmatprep.mubr.bf16.mxu0 0
    %8818 = vmatmul.mubr.bf16.gmra.mrb[0].mxu0 %v8625
    %v8819 = vpop.f32.mrb[0].mxu0
    %v8820 = vadd.f32 0.0, %v8819
    %v8821 = vpop.f32.mrb[0].mxu0
    %v8822 = vpop.f32.mrb[0].mxu0
    %v8823 = vadd.f32 0.0, %v8822
    %v8824 = vpop.f32.mrb[0].mxu0
    %8825 = vmatprep.mubr.bf16.mxu0 0
    %8826 = vmatmul.mubr.bf16.gmra.mrb[0].mxu0 %v8628
    %v8827 = vpop.f32.mrb[0].mxu0
    %v8828 = vadd.f32 0.0, %v8827
    %v8829 = vpop.f32.mrb[0].mxu0
    %v8830 = vpop.f32.mrb[0].mxu0
    %v8831 = vadd.f32 0.0, %v8830
    %v8832 = vpop.f32.mrb[0].mxu0
    %8833 = vmatprep.mubr.bf16.mxu0 0
    %8834 = vmatmul.mubr.bf16.gmra.mrb[0].mxu0 %v8631
    %v8835 = vpop.f32.mrb[0].mxu0
    %v8836 = vadd.f32 0.0, %v8835
    %v8837 = vpop.f32.mrb[0].mxu0
    %v8838 = vpop.f32.mrb[0].mxu0
    %v8839 = vadd.f32 0.0, %v8838
    %v8840 = vpop.f32.mrb[0].mxu0
    %8841 = vmatprep.mubr.bf16.mxu0 0
    %8842 = vmatmul.mubr.bf16.gmra.mrb[0].mxu0 %v8634
    %v8843 = vpop.f32.mrb[0].mxu0
    %v8844 = vadd.f32 0.0, %v8843
    %v8845 = vpop.f32.mrb[0].mxu0
    %v8846 = vpop.f32.mrb[0].mxu0
    %v8847 = vadd.f32 0.0, %v8846
    %v8848 = vpop.f32.mrb[0].mxu0
    %8849 = vmatprep.mubr.bf16.mxu0 0
    %8850 = vmatmul.mubr.bf16.gmra.mrb[0].mxu0 %v8637
    %v8851 = vpop.f32.mrb[0].mxu0
    %v8852 = vadd.f32 0.0, %v8851
    %v8853 = vpop.f32.mrb[0].mxu0
    %v8854 = vpop.f32.mrb[0].mxu0
    %v8855 = vadd.f32 0.0, %v8854
    %v8856 = vpop.f32.mrb[0].mxu0
    %8857 = vmatprep.mubr.bf16.mxu0 0
    %8858 = vmatmul.mubr.bf16.gmra.mrb[0].mxu0 %v8640
    %v8859 = vpop.f32.mrb[0].mxu0
    %v8860 = vadd.f32 0.0, %v8859
    %v8861 = vpop.f32.mrb[0].mxu0
    %v8862 = vpop.f32.mrb[0].mxu0
    %v8863 = vadd.f32 0.0, %v8862
    %v8864 = vpop.f32.mrb[0].mxu0
    %8865 = vmatprep.mubr.bf16.mxu0 0
    %8866 = vmatmul.mubr.bf16.gmra.mrb[0].mxu0 %v8643
    %v8867 = vpop.f32.mrb[0].mxu0
    %v8868 = vadd.f32 0.0, %v8867
    %v8869 = vpop.f32.mrb[0].mxu0
    %v8870 = vpop.f32.mrb[0].mxu0
    %v8871 = vadd.f32 0.0, %v8870
    %v8872 = vpop.f32.mrb[0].mxu0
    %8873 = vmatprep.mubr.bf16.mxu0 0
    %8874 = vmatmul.mubr.bf16.gmra.mrb[0].mxu0 %v8646
    %v8875 = vpop.f32.mrb[0].mxu0
    %v8876 = vadd.f32 0.0, %v8875
    %v8877 = vpop.f32.mrb[0].mxu0
    %v8878 = vpop.f32.mrb[0].mxu0
    %v8879 = vadd.f32 0.0, %v8878
    %v8880 = vpop.f32.mrb[0].mxu0
    %8881 = vmatprep.mubr.bf16.mxu0 0
    %8882 = vmatmul.mubr.bf16.gmra.mrb[0].mxu0 %v8649
    %v8883 = vpop.f32.mrb[0].mxu0
    %v8884 = vadd.f32 0.0, %v8883
    %v8885 = vpop.f32.mrb[0].mxu0
    %v8886 = vpop.f32.mrb[0].mxu0
    %v8887 = vadd.f32 0.0, %v8886
    %v8888 = vpop.f32.mrb[0].mxu0
    %8889 = vmatprep.mubr.bf16.mxu0 0
    %8890 = vmatmul.mubr.bf16.gmra.mrb[0].mxu0 %v8652
    %v8891 = vpop.f32.mrb[0].mxu0
    %v8892 = vadd.f32 0.0, %v8891
    %v8893 = vpop.f32.mrb[0].mxu0
    %v8894 = vpop.f32.mrb[0].mxu0
    %v8895 = vadd.f32 0.0, %v8894
    %v8896 = vpop.f32.mrb[0].mxu0
    %8897 = vmatprep.mubr.bf16.mxu0 0
    %8898 = vmatmul.mubr.bf16.gmra.mrb[0].mxu0 %v8655
    %v8899 = vpop.f32.mrb[0].mxu0
    %v8900 = vadd.f32 0.0, %v8899
    %v8901 = vpop.f32.mrb[0].mxu0
    %v8902 = vpop.f32.mrb[0].mxu0
    %v8903 = vadd.f32 0.0, %v8902
    %v8904 = vpop.f32.mrb[0].mxu0
    %8905 = vmatprep.mubr.bf16.mxu0 0
    %8906 = vmatmul.mubr.bf16.gmra.mrb[0].mxu0 %v8658
    %v8907 = vpop.f32.mrb[0].mxu0
    %v8908 = vadd.f32 0.0, %v8907
    %v8909 = vpop.f32.mrb[0].mxu0
    %v8910 = vpop.f32.mrb[0].mxu0
    %v8911 = vadd.f32 0.0, %v8910
    %v8912 = vpop.f32.mrb[0].mxu0
    %8913 = vmatprep.mubr.bf16.mxu0 0
    %8914 = vmatmul.mubr.bf16.gmra.mrb[0].mxu0 %v8661
    %v8915 = vpop.f32.mrb[0].mxu0
    %v8916 = vadd.f32 0.0, %v8915
    %v8917 = vpop.f32.mrb[0].mxu0
    %v8918 = vpop.f32.mrb[0].mxu0
    %v8919 = vadd.f32 0.0, %v8918
    %v8920 = vpop.f32.mrb[0].mxu0
    %8921 = vmatprep.mubr.bf16.mxu0 0
    %8922 = vmatmul.mubr.bf16.gmra.mrb[0].mxu0 %v8664
    %v8923 = vpop.f32.mrb[0].mxu0
    %v8924 = vadd.f32 0.0, %v8923
    %v8925 = vpop.f32.mrb[0].mxu0
    %v8926 = vpop.f32.mrb[0].mxu0
    %v8927 = vadd.f32 0.0, %v8926
    %v8928 = vpop.f32.mrb[0].mxu0
    %8929 = vmatprep.mubr.bf16.mxu0 0
    %8930 = vmatmul.mubr.bf16.gmra.mrb[0].mxu0 %v8667
    %v8931 = vpop.f32.mrb[0].mxu0
    %v8932 = vadd.f32 0.0, %v8931
    %v8933 = vpop.f32.mrb[0].mxu0
    %v8934 = vpop.f32.mrb[0].mxu0
    %v8935 = vadd.f32 0.0, %v8934
    %v8936 = vpop.f32.mrb[0].mxu0
    %8937 = vmatprep.mubr.bf16.mxu0 0
    %8938 = vmatmul.mubr.bf16.gmra.mrb[0].mxu0 %v8670
    %v8939 = vpop.f32.mrb[0].mxu0
    %v8940 = vadd.f32 0.0, %v8939
    %v8941 = vpop.f32.mrb[0].mxu0
    %v8942 = vpop.f32.mrb[0].mxu0
    %v8943 = vadd.f32 0.0, %v8942
    %v8944 = vpop.f32.mrb[0].mxu0
    %8945 = vmatprep.mubr.bf16.mxu0 0
    %8946 = vmatmul.mubr.bf16.gmra.mrb[0].mxu0 %v8673
    %v8947 = vpop.f32.mrb[0].mxu0
    %v8948 = vadd.f32 0.0, %v8947
    %v8949 = vpop.f32.mrb[0].mxu0
    %v8950 = vpop.f32.mrb[0].mxu0
    %v8951 = vadd.f32 0.0, %v8950
    %v8952 = vpop.f32.mrb[0].mxu0
    %8953 = vmatprep.mubr.bf16.mxu0 0
    %8954 = vmatmul.mubr.bf16.gmra.mrb[0].mxu0 %v8676
    %v8955 = vpop.f32.mrb[0].mxu0
    %v8956 = vadd.f32 0.0, %v8955
    %v8957 = vpop.f32.mrb[0].mxu0
    %v8958 = vpop.f32.mrb[0].mxu0
    %v8959 = vadd.f32 0.0, %v8958
    %v8960 = vpop.f32.mrb[0].mxu0
    %8961 = vmatprep.mubr.bf16.mxu0 0
    %8962 = vmatmul.mubr.bf16.gmra.mrb[0].mxu0 %v8679
    %v8963 = vpop.f32.mrb[0].mxu0
    %v8964 = vadd.f32 0.0, %v8963
    %v8965 = vpop.f32.mrb[0].mxu0
    %v8966 = vpop.f32.mrb[0].mxu0
    %v8967 = vadd.f32 0.0, %v8966
    %v8968 = vpop.f32.mrb[0].mxu0
    %8969 = vdwg.mxu0
    %v8970 = vadd.f32 %v8040, %v8716
    %v8971 = vadd.f32 %v8041, %v8719
    %v8972 = vadd.f32 %v8042, %v8724
    %v8973 = vadd.f32 %v8043, %v8727
    %v8974 = vadd.f32 %v8044, %v8732
    %v8975 = vadd.f32 %v8045, %v8735
    %v8976 = vadd.f32 %v8046, %v8740
    %v8977 = vadd.f32 %v8047, %v8743
    %v8978 = vadd.f32 %v8048, %v8748
    %v8979 = vadd.f32 %v8049, %v8751
    %v8980 = vadd.f32 %v8050, %v8756
    %v8981 = vadd.f32 %v8051, %v8759
    %v8982 = vadd.f32 %v8052, %v8764
    %v8983 = vadd.f32 %v8053, %v8767
    %v8984 = vadd.f32 %v8054, %v8772
    %v8985 = vadd.f32 %v8055, %v8775
    %v8986 = vadd.f32 %v8056, %v8780
    %v8987 = vadd.f32 %v8057, %v8783
    %v8988 = vadd.f32 %v8058, %v8788
    %v8989 = vadd.f32 %v8059, %v8791
    %v8990 = vadd.f32 %v8060, %v8796
    %v8991 = vadd.f32 %v8061, %v8799
    %v8992 = vadd.f32 %v8062, %v8804
    %v8993 = vadd.f32 %v8063, %v8807
    %v8994 = vadd.f32 %v8064, %v8812
    %v8995 = vadd.f32 %v8065, %v8815
    %v8996 = vadd.f32 %v8066, %v8820
    %v8997 = vadd.f32 %v8067, %v8823
    %v8998 = vadd.f32 %v8068, %v8828
    %v8999 = vadd.f32 %v8069, %v8831
    %v9000 = vadd.f32 %v8070, %v8836
    %v9001 = vadd.f32 %v8071, %v8839
    %v9002 = vadd.f32 %v8072, %v8844
    %v9003 = vadd.f32 %v8073, %v8847
    %v9004 = vadd.f32 %v8074, %v8852
    %v9005 = vadd.f32 %v8075, %v8855
    %v9006 = vadd.f32 %v8076, %v8860
    %v9007 = vadd.f32 %v8077, %v8863
    %v9008 = vadd.f32 %v8078, %v8868
    %v9009 = vadd.f32 %v8079, %v8871
    %v9010 = vadd.f32 %v8080, %v8876
    %v9011 = vadd.f32 %v8081, %v8879
    %v9012 = vadd.f32 %v8082, %v8884
    %v9013 = vadd.f32 %v8083, %v8887
    %v9014 = vadd.f32 %v8084, %v8892
    %v9015 = vadd.f32 %v8085, %v8895
    %v9016 = vadd.f32 %v8086, %v8900
    %v9017 = vadd.f32 %v8087, %v8903
    %v9018 = vadd.f32 %v8088, %v8908
    %v9019 = vadd.f32 %v8089, %v8911
    %v9020 = vadd.f32 %v8090, %v8916
    %v9021 = vadd.f32 %v8091, %v8919
    %v9022 = vadd.f32 %v8092, %v8924
    %v9023 = vadd.f32 %v8093, %v8927
    %v9024 = vadd.f32 %v8094, %v8932
    %v9025 = vadd.f32 %v8095, %v8935
    %v9026 = vadd.f32 %v8096, %v8940
    %v9027 = vadd.f32 %v8097, %v8943
    %v9028 = vadd.f32 %v8098, %v8948
    %v9029 = vadd.f32 %v8099, %v8951
    %v9030 = vadd.f32 %v8100, %v8956
    %v9031 = vadd.f32 %v8101, %v8959
    %v9032 = vadd.f32 %v8102, %v8964
    %v9033 = vadd.f32 %v8103, %v8967
    %v9034 = vld [vmem:[%s2] sm:$0x1]
    %v9036 = vlaneseq
    %v9037 = vshrl.u32 %v9036, 7
    %v9038 = vsub.s32 0, %v9037
    %v9039 = vrot.slane %v9034, %v9038
    %v9041 = vadd.f32 %v8970, %v9039
    %v9042 = vadd.f32 %v8971, %v9039
    %v9043 = vadd.f32 %v8972, %v9039
    %v9044 = vadd.f32 %v8973, %v9039
    %v9045 = vadd.f32 %v8974, %v9039
    %v9046 = vadd.f32 %v8975, %v9039
    %v9047 = vadd.f32 %v8976, %v9039
    %v9048 = vadd.f32 %v8977, %v9039
    %v9049 = vadd.f32 %v8978, %v9039
    %v9050 = vadd.f32 %v8979, %v9039
    %v9051 = vadd.f32 %v8980, %v9039
    %v9052 = vadd.f32 %v8981, %v9039
    %v9053 = vadd.f32 %v8982, %v9039
    %v9054 = vadd.f32 %v8983, %v9039
    %v9055 = vadd.f32 %v8984, %v9039
    %v9056 = vadd.f32 %v8985, %v9039
    %v9057 = vadd.f32 %v8986, %v9039
    %v9058 = vadd.f32 %v8987, %v9039
    %v9059 = vadd.f32 %v8988, %v9039
    %v9060 = vadd.f32 %v8989, %v9039
    %v9061 = vadd.f32 %v8990, %v9039
    %v9062 = vadd.f32 %v8991, %v9039
    %v9063 = vadd.f32 %v8992, %v9039
    %v9064 = vadd.f32 %v8993, %v9039
    %v9065 = vadd.f32 %v8994, %v9039
    %v9066 = vadd.f32 %v8995, %v9039
    %v9067 = vadd.f32 %v8996, %v9039
    %v9068 = vadd.f32 %v8997, %v9039
    %v9069 = vadd.f32 %v8998, %v9039
    %v9070 = vadd.f32 %v8999, %v9039
    %v9071 = vadd.f32 %v9000, %v9039
    %v9072 = vadd.f32 %v9001, %v9039
    %v9073 = vadd.f32 %v9002, %v9039
    %v9074 = vadd.f32 %v9003, %v9039
    %v9075 = vadd.f32 %v9004, %v9039
    %v9076 = vadd.f32 %v9005, %v9039
    %v9077 = vadd.f32 %v9006, %v9039
    %v9078 = vadd.f32 %v9007, %v9039
    %v9079 = vadd.f32 %v9008, %v9039
    %v9080 = vadd.f32 %v9009, %v9039
    %v9081 = vadd.f32 %v9010, %v9039
    %v9082 = vadd.f32 %v9011, %v9039
    %v9083 = vadd.f32 %v9012, %v9039
    %v9084 = vadd.f32 %v9013, %v9039
    %v9085 = vadd.f32 %v9014, %v9039
    %v9086 = vadd.f32 %v9015, %v9039
    %v9087 = vadd.f32 %v9016, %v9039
    %v9088 = vadd.f32 %v9017, %v9039
    %v9089 = vadd.f32 %v9018, %v9039
    %v9090 = vadd.f32 %v9019, %v9039
    %v9091 = vadd.f32 %v9020, %v9039
    %v9092 = vadd.f32 %v9021, %v9039
    %v9093 = vadd.f32 %v9022, %v9039
    %v9094 = vadd.f32 %v9023, %v9039
    %v9095 = vadd.f32 %v9024, %v9039
    %v9096 = vadd.f32 %v9025, %v9039
    %v9097 = vadd.f32 %v9026, %v9039
    %v9098 = vadd.f32 %v9027, %v9039
    %v9099 = vadd.f32 %v9028, %v9039
    %v9100 = vadd.f32 %v9029, %v9039
    %v9101 = vadd.f32 %v9030, %v9039
    %v9102 = vadd.f32 %v9031, %v9039
    %v9103 = vadd.f32 %v9032, %v9039
    %v9104 = vadd.f32 %v9033, %v9039
    %9105 = vst.msk [vmem:[#allocation2] sm:$0xff] %vm1020, %v9041
    %9106 = vst.msk [vmem:[#allocation2 + $0x8] sm:$0xff] %vm1020, %v9042
    %9107 = vst.msk [vmem:[#allocation2 + $0x10] sm:$0xff] %vm1020, %v9043
    %9108 = vst.msk [vmem:[#allocation2 + $0x18] sm:$0xff] %vm1020, %v9044
    %9109 = vst.msk [vmem:[#allocation2 + $0x20] sm:$0xff] %vm1020, %v9045
    %9110 = vst.msk [vmem:[#allocation2 + $0x28] sm:$0xff] %vm1020, %v9046
    %9111 = vst.msk [vmem:[#allocation2 + $0x30] sm:$0xff] %vm1020, %v9047
    %9112 = vst.msk [vmem:[#allocation2 + $0x38] sm:$0xff] %vm1020, %v9048
    %9113 = vst.msk [vmem:[#allocation2 + $0x40] sm:$0xff] %vm1020, %v9049
    %9114 = vst.msk [vmem:[#allocation2 + $0x48] sm:$0xff] %vm1020, %v9050
    %9115 = vst.msk [vmem:[#allocation2 + $0x50] sm:$0xff] %vm1020, %v9051
    %9116 = vst.msk [vmem:[#allocation2 + $0x58] sm:$0xff] %vm1020, %v9052
    %9117 = vst.msk [vmem:[#allocation2 + $0x60] sm:$0xff] %vm1020, %v9053
    %9118 = vst.msk [vmem:[#allocation2 + $0x68] sm:$0xff] %vm1020, %v9054
    %9119 = vst.msk [vmem:[#allocation2 + $0x70] sm:$0xff] %vm1020, %v9055
    %9120 = vst.msk [vmem:[#allocation2 + $0x78] sm:$0xff] %vm1020, %v9056
    %9121 = vst.msk [vmem:[#allocation2 + $0x80] sm:$0xff] %vm1020, %v9057
    %9122 = vst.msk [vmem:[#allocation2 + $0x88] sm:$0xff] %vm1020, %v9058
    %9123 = vst.msk [vmem:[#allocation2 + $0x90] sm:$0xff] %vm1020, %v9059
    %9124 = vst.msk [vmem:[#allocation2 + $0x98] sm:$0xff] %vm1020, %v9060
    %9125 = vst.msk [vmem:[#allocation2 + $0xa0] sm:$0xff] %vm1020, %v9061
    %9126 = vst.msk [vmem:[#allocation2 + $0xa8] sm:$0xff] %vm1020, %v9062
    %9127 = vst.msk [vmem:[#allocation2 + $0xb0] sm:$0xff] %vm1020, %v9063
    %9128 = vst.msk [vmem:[#allocation2 + $0xb8] sm:$0xff] %vm1020, %v9064
    %9129 = vst.msk [vmem:[#allocation2 + $0xc0] sm:$0xff] %vm1020, %v9065
    %9130 = vst.msk [vmem:[#allocation2 + $0xc8] sm:$0xff] %vm1020, %v9066
    %9131 = vst.msk [vmem:[#allocation2 + $0xd0] sm:$0xff] %vm1020, %v9067
    %9132 = vst.msk [vmem:[#allocation2 + $0xd8] sm:$0xff] %vm1020, %v9068
    %9133 = vst.msk [vmem:[#allocation2 + $0xe0] sm:$0xff] %vm1020, %v9069
    %9134 = vst.msk [vmem:[#allocation2 + $0xe8] sm:$0xff] %vm1020, %v9070
    %9135 = vst.msk [vmem:[#allocation2 + $0xf0] sm:$0xff] %vm1020, %v9071
    %9136 = vst.msk [vmem:[#allocation2 + $0xf8] sm:$0xff] %vm1020, %v9072
    %9137 = vst.msk [vmem:[#allocation2 + $0x100] sm:$0xff] %vm1020, %v9073
    %9138 = vst.msk [vmem:[#allocation2 + $0x108] sm:$0xff] %vm1020, %v9074
    %9139 = vst.msk [vmem:[#allocation2 + $0x110] sm:$0xff] %vm1020, %v9075
    %9140 = vst.msk [vmem:[#allocation2 + $0x118] sm:$0xff] %vm1020, %v9076
    %9141 = vst.msk [vmem:[#allocation2 + $0x120] sm:$0xff] %vm1020, %v9077
    %9142 = vst.msk [vmem:[#allocation2 + $0x128] sm:$0xff] %vm1020, %v9078
    %9143 = vst.msk [vmem:[#allocation2 + $0x130] sm:$0xff] %vm1020, %v9079
    %9144 = vst.msk [vmem:[#allocation2 + $0x138] sm:$0xff] %vm1020, %v9080
    %9145 = vst.msk [vmem:[#allocation2 + $0x140] sm:$0xff] %vm1020, %v9081
    %9146 = vst.msk [vmem:[#allocation2 + $0x148] sm:$0xff] %vm1020, %v9082
    %9147 = vst.msk [vmem:[#allocation2 + $0x150] sm:$0xff] %vm1020, %v9083
    %9148 = vst.msk [vmem:[#allocation2 + $0x158] sm:$0xff] %vm1020, %v9084
    %9149 = vst.msk [vmem:[#allocation2 + $0x160] sm:$0xff] %vm1020, %v9085
    %9150 = vst.msk [vmem:[#allocation2 + $0x168] sm:$0xff] %vm1020, %v9086
    %9151 = vst.msk [vmem:[#allocation2 + $0x170] sm:$0xff] %vm1020, %v9087
    %9152 = vst.msk [vmem:[#allocation2 + $0x178] sm:$0xff] %vm1020, %v9088
    %9153 = vst.msk [vmem:[#allocation2 + $0x180] sm:$0xff] %vm1020, %v9089
    %9154 = vst.msk [vmem:[#allocation2 + $0x188] sm:$0xff] %vm1020, %v9090
    %9155 = vst.msk [vmem:[#allocation2 + $0x190] sm:$0xff] %vm1020, %v9091
    %9156 = vst.msk [vmem:[#allocation2 + $0x198] sm:$0xff] %vm1020, %v9092
    %9157 = vst.msk [vmem:[#allocation2 + $0x1a0] sm:$0xff] %vm1020, %v9093
    %9158 = vst.msk [vmem:[#allocation2 + $0x1a8] sm:$0xff] %vm1020, %v9094
    %9159 = vst.msk [vmem:[#allocation2 + $0x1b0] sm:$0xff] %vm1020, %v9095
    %9160 = vst.msk [vmem:[#allocation2 + $0x1b8] sm:$0xff] %vm1020, %v9096
    %9161 = vst.msk [vmem:[#allocation2 + $0x1c0] sm:$0xff] %vm1020, %v9097
    %9162 = vst.msk [vmem:[#allocation2 + $0x1c8] sm:$0xff] %vm1020, %v9098
    %9163 = vst.msk [vmem:[#allocation2 + $0x1d0] sm:$0xff] %vm1020, %v9099
    %9164 = vst.msk [vmem:[#allocation2 + $0x1d8] sm:$0xff] %vm1020, %v9100
    %9165 = vst.msk [vmem:[#allocation2 + $0x1e0] sm:$0xff] %vm1020, %v9101
    %9166 = vst.msk [vmem:[#allocation2 + $0x1e8] sm:$0xff] %vm1020, %v9102
    %9167 = vst.msk [vmem:[#allocation2 + $0x1f0] sm:$0xff] %vm1020, %v9103
    %9168 = vst.msk [vmem:[#allocation2 + $0x1f8] sm:$0xff] %vm1020, %v9104
    // Predicated region
    $region14: #{tpu_custom_call.1} parent=1 // pred_check
      _
    $region15: #{tpu_custom_call.1} parent=1 // pred_check_branch
      %9170 = sbr.rel (0) target = $region17
    $region16: #{tpu_custom_call.1} parent=1 // pred_region
      %s9172 = ssub.s32 8192, 8192
      %9173 = vsyncadd [#allocation3], %s9172
      %s9174 = sshll.u32 [#allocation2], 4
      %s9175 = int_to_ptr.vmem [resolvable:$true] %s9174
      %9180 = dma.vmem_to_hbm [thread:$0]  %s9175, 8192, %s3, [#allocation3], 128, 128, 8
    $region17: #{tpu_custom_call.1} parent=1 // pred_fallthru
      _
    // Predicated region
    $region18: #{tpu_custom_call.1} parent=1 // pred_check
      _
    $region19: #{tpu_custom_call.1} parent=1 // pred_check_branch
      %9182 = sbr.rel (0) target = $region21
    $region20: #{tpu_custom_call.1} parent=1 // pred_region
      %9183 = dma.done [#allocation3], 8192
    $region21: #{tpu_custom_call.1} parent=1 // pred_fallthru
      _
    %9184 = vsyncpa [#allocation3], 1

</llo_original>
